<compile_context>
chip_gen: v7x
topology: tpu7x:2x2x1
jax: 0.10.0
libtpu: 0.0.40
codegen_flags: <defaults>
</compile_context>

<pallas_src>
import math
from functools import partial

import jax
import jax.numpy as jnp
from jax import lax
from jax.experimental import pallas as pl
from jax.experimental.pallas import tpu as pltpu

BN_EPS = 1e-3
TM_DEFAULT = 512  # row tile for the fused matmul kernel


# ----------------------------------------------------------------------------
# hardware-dependent knobs
# ----------------------------------------------------------------------------
def _vmem_limit_bytes():
    """Scoped-VMEM request: physical capacity minus >=16 MiB headroom, capped at
    64 MiB.  -> 48 MiB on v7x (64 MiB physical), 64 MiB on v5e/v6e (128 MiB)."""
    cap = 64 * 1024 * 1024
    try:
        cap = pltpu.get_tpu_info().vmem_capacity_bytes
    except Exception:
        pass
    return int(min(64 * 1024 * 1024, max(32 * 1024 * 1024, cap - 16 * 1024 * 1024)))


_VMEM_LIMIT = _vmem_limit_bytes()


def _probe_single_buffering():
    """pipeline_mode=pl.Buffered(1) (single-buffer constant-index operands) is a
    recent Pallas feature; probe once so we degrade gracefully if unavailable."""
    try:
        def _probe_kernel(x_ref, o_ref):
            o_ref[...] = x_ref[...]

        x = jnp.zeros((8, 128), jnp.float32)
        fn = pl.pallas_call(
            _probe_kernel,
            out_shape=jax.ShapeDtypeStruct((8, 128), jnp.float32),
            grid=(1,),
            in_specs=[pl.BlockSpec((8, 128), lambda i: (0, 0),
                                   pipeline_mode=pl.Buffered(1))],
            out_specs=pl.BlockSpec((8, 128), lambda i: (0, 0)))
        jax.block_until_ready(fn(x))
        return True
    except Exception:
        return False


_SINGLE_BUFFER_OK = _probe_single_buffering()


def _const_block_spec(block_shape, index_map):
    """BlockSpec for an operand whose block index is constant across the grid:
    single-buffer it (halves resident weight VMEM) when supported."""
    if _SINGLE_BUFFER_OK:
        return pl.BlockSpec(block_shape, index_map, pipeline_mode=pl.Buffered(1))
    return pl.BlockSpec(block_shape, index_map)


# ----------------------------------------------------------------------------
# small helpers
# ----------------------------------------------------------------------------
def _apply_act(y, act):
    if act == "silu":
        return y * jax.nn.sigmoid(y)
    if act == "relu":
        return jnp.maximum(y, 0.0)
    return y


def _choose_tn(n):
    """Output-channel tile: full if small, else largest 128-multiple divisor."""
    if n <= 512:
        return n
    for t in (512, 256, 128):
        if n % t == 0:
            return t
    return n


def _choose_row_tile(Ho, Wo, C, cout, k, s, budget=6 * 1024 * 1024):
    """Output-row tile so the per-step working set (double-buffered input chunk +
    f32 accumulator + grouped lhs + output tile) stays small and image-size
    independent (review: bound VMEM, also gives v7x's 2nd core a parallel axis)."""
    hh = (k - 1) // s
    ss = s * s
    Ws = hh + Wo
    g = max(1, min(k * k, -(-256 // max(C, 1))))
    tHo = min(Ho, 128)
    while tHo > 8:
        chunk = 2 * ss * (tHo + hh) * Ws * C * 2       # bf16, double buffered
        acc = tHo * Wo * cout * 4                       # f32 accumulator
        lhs = tHo * Wo * g * C * 2                      # grouped bf16 lhs
        out = 2 * tHo * Wo * cout * 2                   # bf16 out, double buffered
        if chunk + acc + lhs + out <= budget:
            break
        tHo //= 2
    return max(1, min(tHo, Ho))


def _phase_row_tiles(x, k, s, p, tHo, pad_val):
    """Pad x (NHWC) spatially by p, split into the s*s stride phases and cut the
    phase slabs into overlapping output-row tiles of tHo rows (+ (k-1)//s halo)
    so each grid step only needs an O(tile) VMEM window.  Extra HBM traffic is
    ~(1 + halo/tHo)x the input (vs k*k x for an HBM im2col).
        chunks[n, t, u, a*s+b, v, c] = x_pad[n, a + s*(t*tHo + u), b + s*v, c]
    Tap (di, dj) of a stride-s conv / pool then reads the contiguous window
        rows [di//s, di//s + tHo), phase (di%s)*s + dj%s, cols [dj//s, dj//s + Wo).
    Returns chunks (N, nT, tHs, s*s, Ws, C) plus the output geometry."""
    N, H, W, C = x.shape
    Hp, Wp = H + 2 * p, W + 2 * p
    Ho = (Hp - k) // s + 1
    Wo = (Wp - k) // s + 1
    hh = (k - 1) // s
    Hs, Ws = hh + Ho, hh + Wo
    tHs = hh + tHo
    nT = pl.cdiv(Ho, tHo)
    xp = jnp.pad(x, ((0, 0), (p, p), (p, p), (0, 0)), constant_values=pad_val)
    slabs = []
    for a in range(s):
        for b in range(s):
            sl = xp[:, a::s, b::s, :][:, :Hs, :Ws, :]
            if sl.shape[1] != Hs or sl.shape[2] != Ws:
                sl = jnp.pad(sl, ((0, 0), (0, Hs - sl.shape[1]),
                                  (0, Ws - sl.shape[2]), (0, 0)),
                             constant_values=pad_val)
            slabs.append(sl)
    st = jnp.stack(slabs, axis=2)                       # (N, Hs, s*s, Ws, C)
    if nT == 1:
        chunks = st[:, None]                            # (N, 1, Hs, s*s, Ws, C)
    else:
        rows = jnp.minimum(
            jnp.arange(nT)[:, None] * tHo + jnp.arange(tHs)[None, :], Hs - 1)
        chunks = st[:, rows]                            # (N, nT, tHs, s*s, Ws, C)
    return chunks, Ho, Wo, tHs, Ws, nT


# ----------------------------------------------------------------------------
# Pallas kernels
# ----------------------------------------------------------------------------
def _matmul_kernel(*refs, act, has_residual):
    """out = act(X @ W + b [+ residual]) on one (tm, tn) tile; bf16 in/out,
    f32 accumulate + epilogue.  NOTE: for a ragged last M block the out-of-range
    rows hold garbage; they are masked on writeback, so never reduce across the
    tile inside this kernel."""
    if has_residual:
        x_ref, w_ref, b_ref, r_ref, o_ref = refs
    else:
        x_ref, w_ref, b_ref, o_ref = refs
        r_ref = None
    acc = jnp.dot(x_ref[...], w_ref[...], preferred_element_type=jnp.float32)
    acc = acc + b_ref[...]
    if r_ref is not None:
        acc = acc + r_ref[...].astype(jnp.float32)
    o_ref[...] = _apply_act(acc, act).astype(o_ref.dtype)


def _conv_tap_kernel(x_ref, w_ref, b_ref, o_ref, *, k, s, act, tHo):
    """Direct k x k conv on one (batch, output-row-tile) block.
      x_ref: (tHs, s*s, Ws, C)  stride-phase slabs of the padded input (bf16)
      w_ref: (k*k*C, cout)      BN-folded weights, tap-major (bf16)
      b_ref: (1, cout)          folded bias (f32; added after the tap sum so the
                                zero-padded border stays correct)
      o_ref: (tHo, Wo, cout)    bf16
    Taps are concatenated along the contraction axis in groups so every MXU pass
    contracts >= min(256, k*k*C) (v6e/v7x MXUs are 256 deep)."""
    C = x_ref.shape[-1]
    Wo = o_ref.shape[1]
    cout = o_ref.shape[-1]
    taps = [(di, dj) for di in range(k) for dj in range(k)]
    group = max(1, min(k * k, -(-256 // C)))
    acc = jnp.zeros((tHo * Wo, cout), jnp.float32)
    for t0 in range(0, k * k, group):
        g = min(group, k * k - t0)
        parts = []
        for di, dj in taps[t0:t0 + g]:
            ph = (di % s) * s + (dj % s)
            parts.append(x_ref[pl.ds(di // s, tHo), ph, pl.ds(dj // s, Wo), :])
        win = parts[0] if g == 1 else jnp.concatenate(parts, axis=-1)
        # NOTE: copy-free only when Wo is a multiple of 8 (sublane tiling).
        lhs = win.reshape(tHo * Wo, g * C)
        acc = acc + jnp.dot(lhs, w_ref[pl.ds(t0 * C, g * C), :],
                            preferred_element_type=jnp.float32)
    y = _apply_act(acc + b_ref[...], act)   # epilogue stays f32 (v5e VPU/EUP)
    o_ref[...] = y.reshape(tHo, Wo, cout).astype(o_ref.dtype)


def _maxpool_tap_kernel(x_ref, o_ref, *, k, s, tHo):
    """MaxPool(k, s) on one (batch, output-row-tile) block: running maximum over
    the k*k shifted windows of the stride-phase slabs (VPU only)."""
    Wo = o_ref.shape[1]
    acc = None
    for di in range(k):
        for dj in range(k):
            ph = (di % s) * s + (dj % s)
            win = x_ref[pl.ds(di // s, tHo), ph, pl.ds(dj // s, Wo), :]
            acc = win if acc is None else jnp.maximum(acc, win)
    o_ref[...] = acc.astype(o_ref.dtype)


# ----------------------------------------------------------------------------
# Pallas wrappers
# ----------------------------------------------------------------------------
def matmul_bias_act(x2d, w2d, bias, act="none", residual2d=None):
    """Fused act((M,K)@(K,N) + bias [+ residual]).  bf16 I/O, f32 accumulate.
    No padding of M: the ragged last row block is handled by Pallas."""
    x2d = x2d.astype(jnp.bfloat16)
    w2d = w2d.astype(jnp.bfloat16)
    M, K = x2d.shape
    N = w2d.shape[1]
    tn = _choose_tn(N)
    n_tiles_n = pl.cdiv(N, tn)
    # When N is tiled, every (K, tn) weight block is re-DMA'd once per row tile:
    # use a larger row tile so the weight refetch traffic shrinks.
    tm = TM_DEFAULT if n_tiles_n == 1 else 2 * TM_DEFAULT
    tm = min(M, tm)
    b2 = bias.reshape(1, N).astype(jnp.float32)

    if n_tiles_n == 1:  # weight/bias block index constant across the whole grid
        w_spec = _const_block_spec((K, tn), lambda i, j: (0, j))
        b_spec = _const_block_spec((1, tn), lambda i, j: (0, j))
    else:
        w_spec = pl.BlockSpec((K, tn), lambda i, j: (0, j))
        b_spec = pl.BlockSpec((1, tn), lambda i, j: (0, j))

    in_specs = [pl.BlockSpec((tm, K), lambda i, j: (i, 0)), w_spec, b_spec]
    args = [x2d, w2d, b2]
    if residual2d is not None:
        in_specs.append(pl.BlockSpec((tm, tn), lambda i, j: (i, j)))
        args.append(residual2d.astype(jnp.bfloat16))

    return pl.pallas_call(
        partial(_matmul_kernel, act=act, has_residual=residual2d is not None),
        out_shape=jax.ShapeDtypeStruct((M, N), jnp.bfloat16),
        grid=(pl.cdiv(M, tm), n_tiles_n),
        in_specs=in_specs,
        out_specs=pl.BlockSpec((tm, tn), lambda i, j: (i, j)),
        compiler_params=pltpu.CompilerParams(
            dimension_semantics=("parallel", "parallel"),
            vmem_limit_bytes=_VMEM_LIMIT),
    )(*args)


def conv1x1_bn_act(x, p, s, act, residual2d=None):
    """1x1 conv + folded BN [+ residual] + act as one fused matmul."""
    if s > 1:
        # TODO(synk): fold the stride into a BlockSpec index_map (read only the
        # (0,0) stride phase) instead of materializing this strided slice in HBM.
        x = x[:, ::s, ::s, :]
    Nb, Ho, Wo, C = x.shape
    wf, bf = fold_bn(p)
    out2d = matmul_bias_act(x.reshape(Nb * Ho * Wo, C), wf.reshape(C, -1), bf,
                            act, residual2d)
    return out2d.reshape(Nb, Ho, Wo, -1)


def conv_kxk_im2col(x, p, s, pad, act):
    """Large-kernel / tiny-Cin conv (the 7x7 stem): im2col so the contraction is
    K = k*k*Cin instead of k*k MXU passes with K=Cin and ~Cin/128 lane
    utilization.  The zero padding is correct because the BN-folded bias is
    added after the tap sum (inside the matmul kernel)."""
    k = p["k"]
    Nb, H, W, C = x.shape
    wf, bf = fold_bn(p)
    cout = wf.shape[-1]
    Hp, Wp = H + 2 * pad, W + 2 * pad
    Ho = (Hp - k) // s + 1
    Wo = (Wp - k) // s + 1
    xp = jnp.pad(x.astype(jnp.bfloat16),
                 ((0, 0), (pad, pad), (pad, pad), (0, 0)))
    patches = [xp[:, di:di + s * (Ho - 1) + 1:s, dj:dj + s * (Wo - 1) + 1:s, :]
               for di in range(k) for dj in range(k)]
    x_i2c = jnp.concatenate(patches, axis=-1).reshape(Nb * Ho * Wo, k * k * C)
    out2d = matmul_bias_act(x_i2c, wf.reshape(k * k * C, cout), bf, act)
    return out2d.reshape(Nb, Ho, Wo, cout)


def conv_kxk_tap(x, p, s, pad, act):
    """k x k conv + folded BN + act, row-tiled (no HBM im2col).  The zero-padded
    border is correct because the folded bias is added after the tap sum."""
    k = p["k"]
    Nb, H, W, C = x.shape
    wf, bf = fold_bn(p)
    cout = wf.shape[-1]
    Hp, Wp = H + 2 * pad, W + 2 * pad
    Ho = (Hp - k) // s + 1
    Wo = (Wp - k) // s + 1
    tHo = _choose_row_tile(Ho, Wo, C, cout, k, s)
    chunks, Ho, Wo, tHs, Ws, nT = _phase_row_tiles(
        x.astype(jnp.bfloat16), k, s, pad, tHo, 0.0)
    ss = s * s
    chunks = chunks.reshape(Nb * nT, tHs, ss, Ws, C)
    w2d = wf.reshape(k * k * C, cout).astype(jnp.bfloat16)
    b2 = bf.reshape(1, cout).astype(jnp.float32)
    return pl.pallas_call(
        partial(_conv_tap_kernel, k=k, s=s, act=act, tHo=tHo),
        out_shape=jax.ShapeDtypeStruct((Nb, Ho, Wo, cout), jnp.bfloat16),
        grid=(Nb, nT),
        in_specs=[
            pl.BlockSpec((None, tHs, ss, Ws, C),
                         lambda n, t: (n * nT + t, 0, 0, 0, 0)),
            _const_block_spec((k * k * C, cout), lambda n, t: (0, 0)),
            _const_block_spec((1, cout), lambda n, t: (0, 0)),
        ],
        out_specs=pl.BlockSpec((None, tHo, Wo, cout), lambda n, t: (n, t, 0, 0)),
        compiler_params=pltpu.CompilerParams(
            dimension_semantics=("parallel", "parallel"),
            vmem_limit_bytes=_VMEM_LIMIT),
    )(chunks, w2d, b2)


def conv_bn_act_pallas(x, p, s, pad, act, residual2d=None):
    k = p["k"]
    if k == 1:
        assert pad == 0
        return conv1x1_bn_act(x, p, s, act, residual2d)
    assert residual2d is None
    if k >= 5 or x.shape[-1] <= 4:
        return conv_kxk_im2col(x, p, s, pad, act)
    return conv_kxk_tap(x, p, s, pad, act)


def maxpool_pallas(x, k=3, s=2, p=1):
    """MaxPool2d(kernel=3, stride=2, padding=1) on NHWC input, row-tiled."""
    Nb, H, W, C = x.shape
    Hp, Wp = H + 2 * p, W + 2 * p
    Ho = (Hp - k) // s + 1
    Wo = (Wp - k) // s + 1
    tHo = _choose_row_tile(Ho, Wo, C, C, k, s)
    chunks, Ho, Wo, tHs, Ws, nT = _phase_row_tiles(x, k, s, p, tHo, -jnp.inf)
    ss = s * s
    chunks = chunks.reshape(Nb * nT, tHs, ss, Ws, C)
    return pl.pallas_call(
        partial(_maxpool_tap_kernel, k=k, s=s, tHo=tHo),
        out_shape=jax.ShapeDtypeStruct((Nb, Ho, Wo, C), x.dtype),
        grid=(Nb, nT),
        in_specs=[pl.BlockSpec((None, tHs, ss, Ws, C),
                               lambda n, t: (n * nT + t, 0, 0, 0, 0))],
        out_specs=pl.BlockSpec((None, tHo, Wo, C), lambda n, t: (n, t, 0, 0)),
        compiler_params=pltpu.CompilerParams(
            dimension_semantics=("parallel", "parallel"),
            vmem_limit_bytes=_VMEM_LIMIT),
    )(chunks)


# ----------------------------------------------------------------------------
# Parameter setup (deterministic) — Conv = conv2d + BN(eval) + optional SiLU
# ----------------------------------------------------------------------------
def init_conv(key, cin, cout, k):
    k1, k2, k3, k4, k5 = jax.random.split(key, 5)
    w = jax.random.normal(k1, (k, k, cin, cout), jnp.float32)
    w = w * (1.0 / math.sqrt(k * k * cin))
    gamma = jax.random.uniform(k2, (cout,), jnp.float32, 0.5, 1.5)
    beta = jax.random.normal(k3, (cout,), jnp.float32) * 0.1
    mean = jax.random.normal(k4, (cout,), jnp.float32) * 0.1
    var = jax.random.uniform(k5, (cout,), jnp.float32, 0.5, 1.5)
    return dict(w=w, gamma=gamma, beta=beta, mean=mean, var=var, k=k)


def fold_bn(p):
    scale = p["gamma"] / jnp.sqrt(p["var"] + BN_EPS)
    wf = p["w"] * scale            # per-output-channel scale (last axis)
    bf = p["beta"] - p["mean"] * scale
    return wf, bf


def init_resnet_block(key, c1, c2, s, e):
    c3 = e * c2
    k1, k2, k3, k4 = jax.random.split(key, 4)
    bp = {
        "cv1": init_conv(k1, c1, c2, 1),
        "cv2": init_conv(k2, c2, c2, 3),
        "cv3": init_conv(k3, c2, c3, 1),
        "s": s,
    }
    if s != 1 or c1 != c3:
        bp["sc"] = init_conv(k4, c1, c3, 1)
    return bp


def init_resnet_layer(key, c1, c2, s=1, is_first=False, n=1, e=4):
    if is_first:
        return {"is_first": True, "conv": init_conv(key, c1, c2, 7)}
    keys = jax.random.split(key, n)
    blocks, cin = [], c1
    for i in range(n):
        si = s if i == 0 else 1
        blocks.append(init_resnet_block(keys[i], cin, c2, si, e))
        cin = e * c2
    return {"is_first": False, "blocks": blocks}


# ----------------------------------------------------------------------------
# Pallas forward path (NHWC internally, bf16 activations)
# ----------------------------------------------------------------------------
def resnet_block_pallas(x, bp):
    s = bp["s"]
    y = conv_bn_act_pallas(x, bp["cv1"], 1, 0, "silu")
    y = conv_bn_act_pallas(y, bp["cv2"], s, 1, "silu")
    if "sc" in bp:
        short = conv_bn_act_pallas(x, bp["sc"], s, 0, "none")
    else:
        short = x  # identity shortcut (s==1 and c1==e*c2)
    short2d = short.reshape(-1, short.shape[-1])
    # cv3 (no act) + shortcut add + ReLU fused into one Pallas matmul kernel
    return conv_bn_act_pallas(y, bp["cv3"], 1, 0, "relu", residual2d=short2d)


def resnet_layer_pallas(x_nchw, params):
    x = jnp.transpose(x_nchw, (0, 2, 3, 1)).astype(jnp.bfloat16)  # NCHW -> NHWC
    if params["is_first"]:
        x = conv_bn_act_pallas(x, params["conv"], 2, 3, "silu")
        x = maxpool_pallas(x, 3, 2, 1)
    else:
        for bp in params["blocks"]:
            x = resnet_block_pallas(x, bp)
    return jnp.transpose(x, (0, 3, 1, 2)).astype(jnp.float32)     # NHWC -> NCHW


# ----------------------------------------------------------------------------
# Pure-JAX reference (f32, HIGHEST precision) for correctness checking
# ----------------------------------------------------------------------------
def conv_bn_act_ref(x, p, s, pad, act):
    y = lax.conv_general_dilated(
        x, p["w"], (s, s), [(pad, pad), (pad, pad)],
        dimension_numbers=("NHWC", "HWIO", "NHWC"),
        precision=jax.lax.Precision.HIGHEST)
    y = (y - p["mean"]) / jnp.sqrt(p["var"] + BN_EPS) * p["gamma"] + p["beta"]
    if act == "silu":
        y = y * jax.nn.sigmoid(y)
    return y


def resnet_block_ref(x, bp):
    s = bp["s"]
    y = conv_bn_act_ref(x, bp["cv1"], 1, 0, "silu")
    y = conv_bn_act_ref(y, bp["cv2"], s, 1, "silu")
    y = conv_bn_act_ref(y, bp["cv3"], 1, 0, "none")
    short = conv_bn_act_ref(x, bp["sc"], s, 0, "none") if "sc" in bp else x
    return jnp.maximum(y + short, 0.0)


def resnet_layer_ref(x_nchw, params):
    x = jnp.transpose(x_nchw, (0, 2, 3, 1))
    if params["is_first"]:
        x = conv_bn_act_ref(x, params["conv"], 2, 3, "silu")
        x = lax.reduce_window(
            x, -jnp.inf, lax.max, (1, 3, 3, 1), (1, 2, 2, 1),
            [(0, 0), (1, 1), (1, 1), (0, 0)])
    else:
        for bp in params["blocks"]:
            x = resnet_block_ref(x, bp)
    return jnp.transpose(x, (0, 3, 1, 2))


def _rel_err(a, b):
    a = a.astype(jnp.float32).ravel()
    b = b.astype(jnp.float32).ravel()
    return float(jnp.linalg.norm(a - b) / (jnp.linalg.norm(b) + 1e-12))


# ----------------------------------------------------------------------------
if __name__ == "__main__":
    key = jax.random.PRNGKey(0)
    kx, kp1, kp2 = jax.random.split(key, 3)

    # Case 1: ResNetLayer(is_first=False, c1=4, c2=8, s=1, n=2, e=4)
    x = jax.random.normal(kx, (2, 4, 16, 16), jnp.float32)  # NCHW
    params = init_resnet_layer(kp1, c1=4, c2=8, s=1, is_first=False, n=2, e=4)
    fwd1 = jax.jit(lambda t: resnet_layer_pallas(t, params))
    out = jax.block_until_ready(fwd1(x))
    ref = resnet_layer_ref(x, params)
    assert out.shape == (2, 32, 16, 16), out.shape
    err1 = _rel_err(out, ref)
    # bf16 activations + bf16 MXU inputs vs f32 HIGHEST reference
    assert err1 < 3e-2, err1

    # Case 2: ResNetLayer(is_first=True, c1=4, c2=8) -> 7x7/s2 conv + maxpool
    x2 = jax.random.normal(kx, (2, 4, 32, 32), jnp.float32)  # NCHW
    params2 = init_resnet_layer(kp2, c1=4, c2=8, s=2, is_first=True)
    fwd2 = jax.jit(lambda t: resnet_layer_pallas(t, params2))
    out2 = jax.block_until_ready(fwd2(x2))
    ref2 = resnet_layer_ref(x2, params2)
    assert out2.shape == (2, 8, 8, 8), out2.shape
    err2 = _rel_err(out2, ref2)
    assert err2 < 3e-2, err2

    print("KERNEL_OK")
</pallas_src>

<mosaic_0001>
module attributes {stable_mosaic.version = 11 : i64} {
  func.func @_probe_kernel(%arg0: i32, %arg1: memref<8x128xf32, #tpu.memory_space<vmem>>, %arg2: memref<8x128xf32, #tpu.memory_space<vmem>>) attributes {dimension_semantics = [#tpu.dimension_semantics<arbitrary>], iteration_bounds = array<i64: 1>, scalar_prefetch = 0 : i64, scratch_operands = 0 : i64, tpu.core_type = #tpu.core_type<tc>, window_params = [{pipeline_mode = #tpu.pipeline_mode<synchronous>, transform_indices = @transform_0, window_bounds = array<i64: 8, 128>}, {pipeline_mode = #tpu.pipeline_mode<synchronous>, transform_indices = @transform_1, window_bounds = array<i64: 8, 128>}]} {
    %c0 = arith.constant 0 : index
    %c0_0 = arith.constant 0 : index
    %0 = vector.load %arg1[%c0, %c0_0] : memref<8x128xf32, #tpu.memory_space<vmem>>, vector<8x128xf32>
    %c0_1 = arith.constant 0 : index
    %c0_2 = arith.constant 0 : index
    %1 = vector.load %arg2[%c0_1, %c0_2] : memref<8x128xf32, #tpu.memory_space<vmem>>, vector<8x128xf32>
    tpu.vector_store %arg2[%c0_1, %c0_2], %0 {strides = array<i32>} : memref<8x128xf32, #tpu.memory_space<vmem>>, vector<8x128xf32>,
    return
  }
  func.func @transform_0(%arg0: i32) -> (i32, i32) {
    %c0_i32 = arith.constant 0 : i32
    %c0_i32_0 = arith.constant 0 : i32
    %c0_i32_1 = arith.constant 0 : i32
    return %c0_i32, %c0_i32_0 : i32, i32
  }
  func.func @transform_1(%arg0: i32) -> (i32, i32) {
    %c0_i32 = arith.constant 0 : i32
    %c0_i32_0 = arith.constant 0 : i32
    %c0_i32_1 = arith.constant 0 : i32
    return %c0_i32, %c0_i32_0 : i32, i32
  }
}

module attributes {stable_mosaic.version = 11 : i64} {
  func.func @_matmul_kernel(%arg0: i32, %arg1: i32, %arg2: memref<512x4xbf16, #tpu.memory_space<vmem>>, %arg3: memref<4x8xbf16, #tpu.memory_space<vmem>>, %arg4: memref<1x8xf32, #tpu.memory_space<vmem>>, %arg5: memref<512x8xbf16, #tpu.memory_space<vmem>>) attributes {dimension_semantics = [#tpu.dimension_semantics<parallel>, #tpu.dimension_semantics<parallel>], iteration_bounds = array<i64: 1, 1>, scalar_prefetch = 0 : i64, scratch_operands = 0 : i64, tpu.core_type = #tpu.core_type<tc>, window_params = [{transform_indices = @transform_0, window_bounds = array<i64: 512, 4>}, {transform_indices = @transform_1, window_bounds = array<i64: 4, 8>}, {transform_indices = @transform_2, window_bounds = array<i64: 1, 8>}, {transform_indices = @transform_3, window_bounds = array<i64: 512, 8>}]} {
    %c0 = arith.constant 0 : index
    %c0_0 = arith.constant 0 : index
    %0 = vector.load %arg2[%c0, %c0_0] : memref<512x4xbf16, #tpu.memory_space<vmem>>, vector<512x4xbf16>
    %c0_1 = arith.constant 0 : index
    %c0_2 = arith.constant 0 : index
    %1 = vector.load %arg3[%c0_1, %c0_2] : memref<4x8xbf16, #tpu.memory_space<vmem>>, vector<4x8xbf16>
    %cst = arith.constant dense<0.000000e+00> : vector<512x8xf32>
    %2 = tpu.matmul %0, %1, %cst {dimension_numbers = #tpu.dot_dimension_numbers<[1], [0], [0], [1], [0, 0, 1, 1], [], []>} : vector<512x4xbf16>, vector<4x8xbf16>, vector<512x8xf32> -> vector<512x8xf32>
    %c0_3 = arith.constant 0 : index
    %c0_4 = arith.constant 0 : index
    %3 = vector.load %arg4[%c0_3, %c0_4] : memref<1x8xf32, #tpu.memory_space<vmem>>, vector<1x8xf32>
    %4 = vector.broadcast %3 : vector<1x8xf32> to vector<512x8xf32>
    %5 = arith.addf %2, %4 : vector<512x8xf32>
    %6 = arith.negf %5 : vector<512x8xf32>
    %7 = math.exp %6 : vector<512x8xf32>
    %cst_5 = arith.constant 1.000000e+00 : f32
    %8 = vector.broadcast %cst_5 : f32 to vector<512x8xf32>
    %9 = arith.addf %8, %7 : vector<512x8xf32>
    %10 = arith.divf %8, %9 : vector<512x8xf32>
    %11 = arith.mulf %5, %10 : vector<512x8xf32>
    %12 = arith.truncf %11 : vector<512x8xf32> to vector<512x8xbf16>
    %c0_6 = arith.constant 0 : index
    %c0_7 = arith.constant 0 : index
    %13 = vector.load %arg5[%c0_6, %c0_7] : memref<512x8xbf16, #tpu.memory_space<vmem>>, vector<512x8xbf16>
    tpu.vector_store %arg5[%c0_6, %c0_7], %12 {strides = array<i32>} : memref<512x8xbf16, #tpu.memory_space<vmem>>, vector<512x8xbf16>,
    return
  }
  func.func @transform_0(%arg0: i32, %arg1: i32) -> (i32, i32) {
    %c0_i32 = arith.constant 0 : i32
    %c0_i32_0 = arith.constant 0 : i32
    return %arg0, %c0_i32 : i32, i32
  }
  func.func @transform_1(%arg0: i32, %arg1: i32) -> (i32, i32) {
    %c0_i32 = arith.constant 0 : i32
    %c0_i32_0 = arith.constant 0 : i32
    return %c0_i32, %arg1 : i32, i32
  }
  func.func @transform_2(%arg0: i32, %arg1: i32) -> (i32, i32) {
    %c0_i32 = arith.constant 0 : i32
    %c0_i32_0 = arith.constant 0 : i32
    return %c0_i32, %arg1 : i32, i32
  }
  func.func @transform_3(%arg0: i32, %arg1: i32) -> (i32, i32) {
    %c0_i32 = arith.constant 0 : i32
    return %arg0, %arg1 : i32, i32
  }
}

module attributes {stable_mosaic.version = 11 : i64} {
  func.func @_matmul_kernel(%arg0: i32, %arg1: i32, %arg2: memref<512x4xbf16, #tpu.memory_space<vmem>>, %arg3: memref<4x32xbf16, #tpu.memory_space<vmem>>, %arg4: memref<1x32xf32, #tpu.memory_space<vmem>>, %arg5: memref<512x32xbf16, #tpu.memory_space<vmem>>) attributes {dimension_semantics = [#tpu.dimension_semantics<parallel>, #tpu.dimension_semantics<parallel>], iteration_bounds = array<i64: 1, 1>, scalar_prefetch = 0 : i64, scratch_operands = 0 : i64, tpu.core_type = #tpu.core_type<tc>, window_params = [{transform_indices = @transform_0, window_bounds = array<i64: 512, 4>}, {transform_indices = @transform_1, window_bounds = array<i64: 4, 32>}, {transform_indices = @transform_2, window_bounds = array<i64: 1, 32>}, {transform_indices = @transform_3, window_bounds = array<i64: 512, 32>}]} {
    %c0 = arith.constant 0 : index
    %c0_0 = arith.constant 0 : index
    %0 = vector.load %arg2[%c0, %c0_0] : memref<512x4xbf16, #tpu.memory_space<vmem>>, vector<512x4xbf16>
    %c0_1 = arith.constant 0 : index
    %c0_2 = arith.constant 0 : index
    %1 = vector.load %arg3[%c0_1, %c0_2] : memref<4x32xbf16, #tpu.memory_space<vmem>>, vector<4x32xbf16>
    %cst = arith.constant dense<0.000000e+00> : vector<512x32xf32>
    %2 = tpu.matmul %0, %1, %cst {dimension_numbers = #tpu.dot_dimension_numbers<[1], [0], [0], [1], [0, 0, 1, 1], [], []>} : vector<512x4xbf16>, vector<4x32xbf16>, vector<512x32xf32> -> vector<512x32xf32>
    %c0_3 = arith.constant 0 : index
    %c0_4 = arith.constant 0 : index
    %3 = vector.load %arg4[%c0_3, %c0_4] : memref<1x32xf32, #tpu.memory_space<vmem>>, vector<1x32xf32>
    %4 = vector.broadcast %3 : vector<1x32xf32> to vector<512x32xf32>
    %5 = arith.addf %2, %4 : vector<512x32xf32>
    %6 = arith.truncf %5 : vector<512x32xf32> to vector<512x32xbf16>
    %c0_5 = arith.constant 0 : index
    %c0_6 = arith.constant 0 : index
    %7 = vector.load %arg5[%c0_5, %c0_6] : memref<512x32xbf16, #tpu.memory_space<vmem>>, vector<512x32xbf16>
    tpu.vector_store %arg5[%c0_5, %c0_6], %6 {strides = array<i32>} : memref<512x32xbf16, #tpu.memory_space<vmem>>, vector<512x32xbf16>,
    return
  }
  func.func @transform_0(%arg0: i32, %arg1: i32) -> (i32, i32) {
    %c0_i32 = arith.constant 0 : i32
    %c0_i32_0 = arith.constant 0 : i32
    return %arg0, %c0_i32 : i32, i32
  }
  func.func @transform_1(%arg0: i32, %arg1: i32) -> (i32, i32) {
    %c0_i32 = arith.constant 0 : i32
    %c0_i32_0 = arith.constant 0 : i32
    return %c0_i32, %arg1 : i32, i32
  }
  func.func @transform_2(%arg0: i32, %arg1: i32) -> (i32, i32) {
    %c0_i32 = arith.constant 0 : i32
    %c0_i32_0 = arith.constant 0 : i32
    return %c0_i32, %arg1 : i32, i32
  }
  func.func @transform_3(%arg0: i32, %arg1: i32) -> (i32, i32) {
    %c0_i32 = arith.constant 0 : i32
    return %arg0, %arg1 : i32, i32
  }
}

module attributes {stable_mosaic.version = 11 : i64} {
  func.func @_matmul_kernel(%arg0: i32, %arg1: i32, %arg2: memref<512x8xbf16, #tpu.memory_space<vmem>>, %arg3: memref<8x32xbf16, #tpu.memory_space<vmem>>, %arg4: memref<1x32xf32, #tpu.memory_space<vmem>>, %arg5: memref<512x32xbf16, #tpu.memory_space<vmem>>, %arg6: memref<512x32xbf16, #tpu.memory_space<vmem>>) attributes {dimension_semantics = [#tpu.dimension_semantics<parallel>, #tpu.dimension_semantics<parallel>], iteration_bounds = array<i64: 1, 1>, scalar_prefetch = 0 : i64, scratch_operands = 0 : i64, tpu.core_type = #tpu.core_type<tc>, window_params = [{transform_indices = @transform_0, window_bounds = array<i64: 512, 8>}, {transform_indices = @transform_1, window_bounds = array<i64: 8, 32>}, {transform_indices = @transform_2, window_bounds = array<i64: 1, 32>}, {transform_indices = @transform_3, window_bounds = array<i64: 512, 32>}, {transform_indices = @transform_4, window_bounds = array<i64: 512, 32>}]} {
    %c0 = arith.constant 0 : index
    %c0_0 = arith.constant 0 : index
    %0 = vector.load %arg2[%c0, %c0_0] : memref<512x8xbf16, #tpu.memory_space<vmem>>, vector<512x8xbf16>
    %c0_1 = arith.constant 0 : index
    %c0_2 = arith.constant 0 : index
    %1 = vector.load %arg3[%c0_1, %c0_2] : memref<8x32xbf16, #tpu.memory_space<vmem>>, vector<8x32xbf16>
    %cst = arith.constant dense<0.000000e+00> : vector<512x32xf32>
    %2 = tpu.matmul %0, %1, %cst {dimension_numbers = #tpu.dot_dimension_numbers<[1], [0], [0], [1], [0, 0, 1, 1], [], []>} : vector<512x8xbf16>, vector<8x32xbf16>, vector<512x32xf32> -> vector<512x32xf32>
    %c0_3 = arith.constant 0 : index
    %c0_4 = arith.constant 0 : index
    %3 = vector.load %arg4[%c0_3, %c0_4] : memref<1x32xf32, #tpu.memory_space<vmem>>, vector<1x32xf32>
    %4 = vector.broadcast %3 : vector<1x32xf32> to vector<512x32xf32>
    %5 = arith.addf %2, %4 : vector<512x32xf32>
    %c0_5 = arith.constant 0 : index
    %c0_6 = arith.constant 0 : index
    %6 = vector.load %arg5[%c0_5, %c0_6] : memref<512x32xbf16, #tpu.memory_space<vmem>>, vector<512x32xbf16>
    %7 = arith.extf %6 : vector<512x32xbf16> to vector<512x32xf32>
    %8 = arith.addf %5, %7 : vector<512x32xf32>
    %cst_7 = arith.constant 0.000000e+00 : f32
    %9 = vector.broadcast %cst_7 : f32 to vector<512x32xf32>
    %10 = arith.maximumf %8, %9 : vector<512x32xf32>
    %11 = arith.truncf %10 : vector<512x32xf32> to vector<512x32xbf16>
    %c0_8 = arith.constant 0 : index
    %c0_9 = arith.constant 0 : index
    %12 = vector.load %arg6[%c0_8, %c0_9] : memref<512x32xbf16, #tpu.memory_space<vmem>>, vector<512x32xbf16>
    tpu.vector_store %arg6[%c0_8, %c0_9], %11 {strides = array<i32>} : memref<512x32xbf16, #tpu.memory_space<vmem>>, vector<512x32xbf16>,
    return
  }
  func.func @transform_0(%arg0: i32, %arg1: i32) -> (i32, i32) {
    %c0_i32 = arith.constant 0 : i32
    %c0_i32_0 = arith.constant 0 : i32
    return %arg0, %c0_i32 : i32, i32
  }
  func.func @transform_1(%arg0: i32, %arg1: i32) -> (i32, i32) {
    %c0_i32 = arith.constant 0 : i32
    %c0_i32_0 = arith.constant 0 : i32
    return %c0_i32, %arg1 : i32, i32
  }
  func.func @transform_2(%arg0: i32, %arg1: i32) -> (i32, i32) {
    %c0_i32 = arith.constant 0 : i32
    %c0_i32_0 = arith.constant 0 : i32
    return %c0_i32, %arg1 : i32, i32
  }
  func.func @transform_3(%arg0: i32, %arg1: i32) -> (i32, i32) {
    %c0_i32 = arith.constant 0 : i32
    return %arg0, %arg1 : i32, i32
  }
  func.func @transform_4(%arg0: i32, %arg1: i32) -> (i32, i32) {
    %c0_i32 = arith.constant 0 : i32
    return %arg0, %arg1 : i32, i32
  }
}

module attributes {stable_mosaic.version = 11 : i64} {
  func.func @_conv_tap_kernel(%arg0: i32, %arg1: i32, %arg2: memref<1x18x1x18x8xbf16, #tpu.memory_space<vmem>>, %arg3: memref<72x8xbf16, #tpu.memory_space<vmem>>, %arg4: memref<1x8xf32, #tpu.memory_space<vmem>>, %arg5: memref<1x16x16x8xbf16, #tpu.memory_space<vmem>>) attributes {dimension_semantics = [#tpu.dimension_semantics<parallel>, #tpu.dimension_semantics<parallel>], iteration_bounds = array<i64: 2, 1>, scalar_prefetch = 0 : i64, scratch_operands = 0 : i64, tpu.core_type = #tpu.core_type<tc>, window_params = [{transform_indices = @transform_0, window_bounds = array<i64: 1, 18, 1, 18, 8>}, {pipeline_mode = #tpu.pipeline_mode<synchronous>, transform_indices = @transform_1, window_bounds = array<i64: 72, 8>}, {pipeline_mode = #tpu.pipeline_mode<synchronous>, transform_indices = @transform_2, window_bounds = array<i64: 1, 8>}, {transform_indices = @transform_3, window_bounds = array<i64: 1, 16, 16, 8>}]} {
    %cst = arith.constant 0.000000e+00 : f32
    %0 = vector.broadcast %cst : f32 to vector<256x8xf32>
    %c0 = arith.constant 0 : index
    %c0_0 = arith.constant 0 : index
    %c0_1 = arith.constant 0 : index
    %c0_2 = arith.constant 0 : index
    %c0_3 = arith.constant 0 : index
    %1 = vector.load %arg2[%c0, %c0_0, %c0_1, %c0_2, %c0_3] : memref<1x18x1x18x8xbf16, #tpu.memory_space<vmem>>, vector<1x16x1x16x8xbf16>
    %2 = vector.shape_cast %1 : vector<1x16x1x16x8xbf16> to vector<16x16x8xbf16>
    %c0_4 = arith.constant 0 : index
    %c0_5 = arith.constant 0 : index
    %c0_6 = arith.constant 0 : index
    %c1 = arith.constant 1 : index
    %c0_7 = arith.constant 0 : index
    %3 = vector.load %arg2[%c0_4, %c0_5, %c0_6, %c1, %c0_7] : memref<1x18x1x18x8xbf16, #tpu.memory_space<vmem>>, vector<1x16x1x16x8xbf16>
    %4 = vector.shape_cast %3 : vector<1x16x1x16x8xbf16> to vector<16x16x8xbf16>
    %c0_8 = arith.constant 0 : index
    %c0_9 = arith.constant 0 : index
    %c0_10 = arith.constant 0 : index
    %c2 = arith.constant 2 : index
    %c0_11 = arith.constant 0 : index
    %5 = vector.load %arg2[%c0_8, %c0_9, %c0_10, %c2, %c0_11] : memref<1x18x1x18x8xbf16, #tpu.memory_space<vmem>>, vector<1x16x1x16x8xbf16>
    %6 = vector.shape_cast %5 : vector<1x16x1x16x8xbf16> to vector<16x16x8xbf16>
    %c0_12 = arith.constant 0 : index
    %c1_13 = arith.constant 1 : index
    %c0_14 = arith.constant 0 : index
    %c0_15 = arith.constant 0 : index
    %c0_16 = arith.constant 0 : index
    %7 = vector.load %arg2[%c0_12, %c1_13, %c0_14, %c0_15, %c0_16] : memref<1x18x1x18x8xbf16, #tpu.memory_space<vmem>>, vector<1x16x1x16x8xbf16>
    %8 = vector.shape_cast %7 : vector<1x16x1x16x8xbf16> to vector<16x16x8xbf16>
    %c0_17 = arith.constant 0 : index
    %c1_18 = arith.constant 1 : index
    %c0_19 = arith.constant 0 : index
    %c1_20 = arith.constant 1 : index
    %c0_21 = arith.constant 0 : index
    %9 = vector.load %arg2[%c0_17, %c1_18, %c0_19, %c1_20, %c0_21] : memref<1x18x1x18x8xbf16, #tpu.memory_space<vmem>>, vector<1x16x1x16x8xbf16>
    %10 = vector.shape_cast %9 : vector<1x16x1x16x8xbf16> to vector<16x16x8xbf16>
    %c0_22 = arith.constant 0 : index
    %c1_23 = arith.constant 1 : index
    %c0_24 = arith.constant 0 : index
    %c2_25 = arith.constant 2 : index
    %c0_26 = arith.constant 0 : index
    %11 = vector.load %arg2[%c0_22, %c1_23, %c0_24, %c2_25, %c0_26] : memref<1x18x1x18x8xbf16, #tpu.memory_space<vmem>>, vector<1x16x1x16x8xbf16>
    %12 = vector.shape_cast %11 : vector<1x16x1x16x8xbf16> to vector<16x16x8xbf16>
    %c0_27 = arith.constant 0 : index
    %c2_28 = arith.constant 2 : index
    %c0_29 = arith.constant 0 : index
    %c0_30 = arith.constant 0 : index
    %c0_31 = arith.constant 0 : index
    %13 = vector.load %arg2[%c0_27, %c2_28, %c0_29, %c0_30, %c0_31] : memref<1x18x1x18x8xbf16, #tpu.memory_space<vmem>>, vector<1x16x1x16x8xbf16>
    %14 = vector.shape_cast %13 : vector<1x16x1x16x8xbf16> to vector<16x16x8xbf16>
    %c0_32 = arith.constant 0 : index
    %c2_33 = arith.constant 2 : index
    %c0_34 = arith.constant 0 : index
    %c1_35 = arith.constant 1 : index
    %c0_36 = arith.constant 0 : index
    %15 = vector.load %arg2[%c0_32, %c2_33, %c0_34, %c1_35, %c0_36] : memref<1x18x1x18x8xbf16, #tpu.memory_space<vmem>>, vector<1x16x1x16x8xbf16>
    %16 = vector.shape_cast %15 : vector<1x16x1x16x8xbf16> to vector<16x16x8xbf16>
    %c0_37 = arith.constant 0 : index
    %c2_38 = arith.constant 2 : index
    %c0_39 = arith.constant 0 : index
    %c2_40 = arith.constant 2 : index
    %c0_41 = arith.constant 0 : index
    %17 = vector.load %arg2[%c0_37, %c2_38, %c0_39, %c2_40, %c0_41] : memref<1x18x1x18x8xbf16, #tpu.memory_space<vmem>>, vector<1x16x1x16x8xbf16>
    %18 = vector.shape_cast %17 : vector<1x16x1x16x8xbf16> to vector<16x16x8xbf16>
    %19 = tpu.concatenate %2, %4, %6, %8, %10, %12, %14, %16, %18 in 2 : vector<16x16x8xbf16>, vector<16x16x8xbf16>, vector<16x16x8xbf16>, vector<16x16x8xbf16>, vector<16x16x8xbf16>, vector<16x16x8xbf16>, vector<16x16x8xbf16>, vector<16x16x8xbf16>, vector<16x16x8xbf16> -> vector<16x16x72xbf16>
    %20 = vector.shape_cast %19 : vector<16x16x72xbf16> to vector<256x72xbf16>
    %c0_42 = arith.constant 0 : index
    %c0_43 = arith.constant 0 : index
    %21 = vector.load %arg3[%c0_42, %c0_43] : memref<72x8xbf16, #tpu.memory_space<vmem>>, vector<72x8xbf16>
    %cst_44 = arith.constant dense<0.000000e+00> : vector<256x8xf32>
    %22 = tpu.matmul %20, %21, %cst_44 {dimension_numbers = #tpu.dot_dimension_numbers<[1], [0], [0], [1], [0, 0, 1, 1], [], []>} : vector<256x72xbf16>, vector<72x8xbf16>, vector<256x8xf32> -> vector<256x8xf32>
    %23 = arith.addf %0, %22 : vector<256x8xf32>
    %c0_45 = arith.constant 0 : index
    %c0_46 = arith.constant 0 : index
    %24 = vector.load %arg4[%c0_45, %c0_46] : memref<1x8xf32, #tpu.memory_space<vmem>>, vector<1x8xf32>
    %25 = vector.broadcast %24 : vector<1x8xf32> to vector<256x8xf32>
    %26 = arith.addf %23, %25 : vector<256x8xf32>
    %27 = arith.negf %26 : vector<256x8xf32>
    %28 = math.exp %27 : vector<256x8xf32>
    %cst_47 = arith.constant 1.000000e+00 : f32
    %29 = vector.broadcast %cst_47 : f32 to vector<256x8xf32>
    %30 = arith.addf %29, %28 : vector<256x8xf32>
    %31 = arith.divf %29, %30 : vector<256x8xf32>
    %32 = arith.mulf %26, %31 : vector<256x8xf32>
    %33 = vector.shape_cast %32 : vector<256x8xf32> to vector<16x16x8xf32>
    %34 = arith.truncf %33 : vector<16x16x8xf32> to vector<16x16x8xbf16>
    %c0_48 = arith.constant 0 : index
    %c0_49 = arith.constant 0 : index
    %c0_50 = arith.constant 0 : index
    %c0_51 = arith.constant 0 : index
    %35 = vector.load %arg5[%c0_48, %c0_49, %c0_50, %c0_51] : memref<1x16x16x8xbf16, #tpu.memory_space<vmem>>, vector<1x16x16x8xbf16>
    %36 = vector.shape_cast %35 : vector<1x16x16x8xbf16> to vector<16x16x8xbf16>
    %37 = vector.shape_cast %34 : vector<16x16x8xbf16> to vector<1x16x16x8xbf16>
    tpu.vector_store %arg5[%c0_48, %c0_49, %c0_50, %c0_51], %37 {strides = array<i32>} : memref<1x16x16x8xbf16, #tpu.memory_space<vmem>>, vector<1x16x16x8xbf16>,
    return
  }
  func.func @transform_0(%arg0: i32, %arg1: i32) -> (i32, i32, i32, i32, i32) {
    %c1_i32 = arith.constant 1 : i32
    %0 = arith.muli %arg0, %c1_i32 : i32
    %1 = arith.addi %0, %arg1 : i32
    %c0_i32 = arith.constant 0 : i32
    %c0_i32_0 = arith.constant 0 : i32
    %c0_i32_1 = arith.constant 0 : i32
    %c0_i32_2 = arith.constant 0 : i32
    %c0_i32_3 = arith.constant 0 : i32
    return %1, %c0_i32, %c0_i32_0, %c0_i32_1, %c0_i32_2 : i32, i32, i32, i32, i32
  }
  func.func @transform_1(%arg0: i32, %arg1: i32) -> (i32, i32) {
    %c0_i32 = arith.constant 0 : i32
    %c0_i32_0 = arith.constant 0 : i32
    %c0_i32_1 = arith.constant 0 : i32
    return %c0_i32, %c0_i32_0 : i32, i32
  }
  func.func @transform_2(%arg0: i32, %arg1: i32) -> (i32, i32) {
    %c0_i32 = arith.constant 0 : i32
    %c0_i32_0 = arith.constant 0 : i32
    %c0_i32_1 = arith.constant 0 : i32
    return %c0_i32, %c0_i32_0 : i32, i32
  }
  func.func @transform_3(%arg0: i32, %arg1: i32) -> (i32, i32, i32, i32) {
    %c0_i32 = arith.constant 0 : i32
    %c0_i32_0 = arith.constant 0 : i32
    %c0_i32_1 = arith.constant 0 : i32
    return %arg0, %arg1, %c0_i32, %c0_i32_0 : i32, i32, i32, i32
  }
}

module attributes {stable_mosaic.version = 11 : i64} {
  func.func @_matmul_kernel(%arg0: i32, %arg1: i32, %arg2: memref<512x32xbf16, #tpu.memory_space<vmem>>, %arg3: memref<32x8xbf16, #tpu.memory_space<vmem>>, %arg4: memref<1x8xf32, #tpu.memory_space<vmem>>, %arg5: memref<512x8xbf16, #tpu.memory_space<vmem>>) attributes {dimension_semantics = [#tpu.dimension_semantics<parallel>, #tpu.dimension_semantics<parallel>], iteration_bounds = array<i64: 1, 1>, scalar_prefetch = 0 : i64, scratch_operands = 0 : i64, tpu.core_type = #tpu.core_type<tc>, window_params = [{transform_indices = @transform_0, window_bounds = array<i64: 512, 32>}, {transform_indices = @transform_1, window_bounds = array<i64: 32, 8>}, {transform_indices = @transform_2, window_bounds = array<i64: 1, 8>}, {transform_indices = @transform_3, window_bounds = array<i64: 512, 8>}]} {
    %c0 = arith.constant 0 : index
    %c0_0 = arith.constant 0 : index
    %0 = vector.load %arg2[%c0, %c0_0] : memref<512x32xbf16, #tpu.memory_space<vmem>>, vector<512x32xbf16>
    %c0_1 = arith.constant 0 : index
    %c0_2 = arith.constant 0 : index
    %1 = vector.load %arg3[%c0_1, %c0_2] : memref<32x8xbf16, #tpu.memory_space<vmem>>, vector<32x8xbf16>
    %cst = arith.constant dense<0.000000e+00> : vector<512x8xf32>
    %2 = tpu.matmul %0, %1, %cst {dimension_numbers = #tpu.dot_dimension_numbers<[1], [0], [0], [1], [0, 0, 1, 1], [], []>} : vector<512x32xbf16>, vector<32x8xbf16>, vector<512x8xf32> -> vector<512x8xf32>
    %c0_3 = arith.constant 0 : index
    %c0_4 = arith.constant 0 : index
    %3 = vector.load %arg4[%c0_3, %c0_4] : memref<1x8xf32, #tpu.memory_space<vmem>>, vector<1x8xf32>
    %4 = vector.broadcast %3 : vector<1x8xf32> to vector<512x8xf32>
    %5 = arith.addf %2, %4 : vector<512x8xf32>
    %6 = arith.negf %5 : vector<512x8xf32>
    %7 = math.exp %6 : vector<512x8xf32>
    %cst_5 = arith.constant 1.000000e+00 : f32
    %8 = vector.broadcast %cst_5 : f32 to vector<512x8xf32>
    %9 = arith.addf %8, %7 : vector<512x8xf32>
    %10 = arith.divf %8, %9 : vector<512x8xf32>
    %11 = arith.mulf %5, %10 : vector<512x8xf32>
    %12 = arith.truncf %11 : vector<512x8xf32> to vector<512x8xbf16>
    %c0_6 = arith.constant 0 : index
    %c0_7 = arith.constant 0 : index
    %13 = vector.load %arg5[%c0_6, %c0_7] : memref<512x8xbf16, #tpu.memory_space<vmem>>, vector<512x8xbf16>
    tpu.vector_store %arg5[%c0_6, %c0_7], %12 {strides = array<i32>} : memref<512x8xbf16, #tpu.memory_space<vmem>>, vector<512x8xbf16>,
    return
  }
  func.func @transform_0(%arg0: i32, %arg1: i32) -> (i32, i32) {
    %c0_i32 = arith.constant 0 : i32
    %c0_i32_0 = arith.constant 0 : i32
    return %arg0, %c0_i32 : i32, i32
  }
  func.func @transform_1(%arg0: i32, %arg1: i32) -> (i32, i32) {
    %c0_i32 = arith.constant 0 : i32
    %c0_i32_0 = arith.constant 0 : i32
    return %c0_i32, %arg1 : i32, i32
  }
  func.func @transform_2(%arg0: i32, %arg1: i32) -> (i32, i32) {
    %c0_i32 = arith.constant 0 : i32
    %c0_i32_0 = arith.constant 0 : i32
    return %c0_i32, %arg1 : i32, i32
  }
  func.func @transform_3(%arg0: i32, %arg1: i32) -> (i32, i32) {
    %c0_i32 = arith.constant 0 : i32
    return %arg0, %arg1 : i32, i32
  }
}

</mosaic_0001>

<llo_original>
// kernel: tpu_custom_call.1
$region0: #{tpu_custom_call.1}
  #allocation0 [shape = 'u32[]', space=smem, size = 0x4, offset = 0x4, fixed_abs, tag = 'smem constant byte address 0x4 - core index']
  #allocation1 [shape = 'u32[144,128]{1,0:T(1,128)}', space=vmem, size = 0x12000, scoped, tag = 'internal scratch']
  %s0 = inlined_call_operand.hbm [shape: f32[8,128], index: 0, kind: input, shape index: {}]
  %s1 = inlined_call_operand.hbm [shape: f32[8,128], index: 1, kind: output, shape index: {}]
  %s2 = sld [smem:[#allocation0]]
  $region18: #{tpu_custom_call.1} parent=0
    _
  %s4 = ssub.s32 1, %s2
  %s5 = scalar_select 0, %s4, %s2
  $region1: #{tpu_custom_call.1} parent=0
    #allocation2 [shape = 'u8[4096]{0}', space=vmem, size = 0x1000, scoped, tag = 'input window, operand 0, single buffered']
    #allocation3 [shape = 's32[1]{0}', space=sflag, size = 0x4, scoped, tag = 'scoped memory for tpu_custom_call.1']
    #allocation4 [shape = 's32[1]{0}', space=sflag, size = 0x4, scoped, tag = 'scoped memory for tpu_custom_call.1']
    #allocation5 [shape = 'u8[4096]{0}', space=vmem, size = 0x1000, scoped, tag = 'output window, operand 0, single buffered']
    %6 = vsyncpa [#allocation3], 0
    %7 = vsyncpa [#allocation4], 0
    // Predicated region
    $region2: #{tpu_custom_call.1} parent=1 // pred_check
      _
    $region3: #{tpu_custom_call.1} parent=1 // pred_check_branch
      %9 = sbr.rel (0) target = $region5
    $region4: #{tpu_custom_call.1} parent=1 // pred_region
      %s11 = ssub.s32 128, 128
      %12 = vsyncadd [#allocation3], %s11
      %s14 = sshll.u32 [#allocation2], 4
      %s15 = int_to_ptr.vmem [resolvable:$true] %s14
      %17 = dma.hbm_to_vmem [thread:$0]  %s0, 128, %s15, [#allocation3]
    $region5: #{tpu_custom_call.1} parent=1 // pred_fallthru
      _
    // Predicated region
    $region6: #{tpu_custom_call.1} parent=1 // pred_check
      _
    $region7: #{tpu_custom_call.1} parent=1 // pred_check_branch
      %19 = sbr.rel (0) target = $region9
    $region8: #{tpu_custom_call.1} parent=1 // pred_region
      %20 = dma.done [#allocation3], 128
    $region9: #{tpu_custom_call.1} parent=1 // pred_fallthru
      _
    %v21 = vld [vmem:[#allocation2] sm:$0xff]
    %22 = vst [vmem:[#allocation5] sm:$0xff] %v21
    // Predicated region
    $region10: #{tpu_custom_call.1} parent=1 // pred_check
      _
    $region11: #{tpu_custom_call.1} parent=1 // pred_check_branch
      %24 = sbr.rel (0) target = $region13
    $region12: #{tpu_custom_call.1} parent=1 // pred_region
      %s26 = ssub.s32 128, 128
      %27 = vsyncadd [#allocation4], %s26
      %s29 = sshll.u32 [#allocation5], 4
      %s30 = int_to_ptr.vmem [resolvable:$true] %s29
      %32 = dma.vmem_to_hbm [thread:$0]  %s30, 128, %s1, [#allocation4]
    $region13: #{tpu_custom_call.1} parent=1 // pred_fallthru
      _
    // Predicated region
    $region14: #{tpu_custom_call.1} parent=1 // pred_check
      _
    $region15: #{tpu_custom_call.1} parent=1 // pred_check_branch
      %34 = sbr.rel (0) target = $region17
    $region16: #{tpu_custom_call.1} parent=1 // pred_region
      %35 = dma.done [#allocation4], 128
    $region17: #{tpu_custom_call.1} parent=1 // pred_fallthru
      _
    %36 = vsyncpa [#allocation3], 1
    %37 = vsyncpa [#allocation4], 1

// kernel: _lambda_.9
$region0: #{_lambda_.9}
  #allocation0 [shape = 'u32[]', space=smem, size = 0x4, offset = 0x4, fixed_abs, tag = 'smem constant byte address 0x4 - core index']
  #allocation1 [shape = 'u32[144,128]{1,0:T(1,128)}', space=vmem, size = 0x12000, scoped, tag = 'internal scratch']
  %s0 = inlined_call_operand.vmem [shape: bf16[512,4], index: 0, kind: input, shape index: {}]
  %s1 = inlined_call_operand.vmem [shape: bf16[4,32], index: 1, kind: input, shape index: {}]
  %s2 = inlined_call_operand.vmem [shape: f32[1,32], index: 2, kind: input, shape index: {}]
  %s3 = inlined_call_operand.vmem [shape: bf16[512,32], index: 3, kind: output, shape index: {}]
  %s4 = sld [smem:[#allocation0]]
  $region22: #{_lambda_.9} parent=0
    _
  %s6 = ssub.s32 1, %s4
  %s7 = scalar_select 0, %s6, %s4
  // Predicated region
  $region2: #{_lambda_.9} parent=0 // pred_check
    _
  $region3: #{_lambda_.9} parent=0 // pred_check_branch
    %9 = sbr.rel (0) target = $region5
  $region4: #{_lambda_.9} parent=0 // pred_region
    _
  $region5: #{_lambda_.9} parent=0 // pred_fallthru
    _
  // Predicated region
  $region6: #{_lambda_.9} parent=0 // pred_check
    _
  $region7: #{_lambda_.9} parent=0 // pred_check_branch
    %11 = sbr.rel (0) target = $region9
  $region8: #{_lambda_.9} parent=0 // pred_region
    _
  $region9: #{_lambda_.9} parent=0 // pred_fallthru
    _
  // Predicated region
  $region10: #{_lambda_.9} parent=0 // pred_check
    _
  $region11: #{_lambda_.9} parent=0 // pred_check_branch
    %13 = sbr.rel (0) target = $region13
  $region12: #{_lambda_.9} parent=0 // pred_region
    _
  $region13: #{_lambda_.9} parent=0 // pred_fallthru
    _
  %v15 = vld [vmem:[%s0] sm:$0xf]
  %v16 = vld [vmem:[%s0 + $0x4] sm:$0xf]
  %v17 = vld [vmem:[%s0 + $0x8] sm:$0xf]
  %v18 = vld [vmem:[%s0 + $0xc] sm:$0xf]
  %v19 = vld [vmem:[%s0 + $0x10] sm:$0xf]
  %v20 = vld [vmem:[%s0 + $0x14] sm:$0xf]
  %v21 = vld [vmem:[%s0 + $0x18] sm:$0xf]
  %v22 = vld [vmem:[%s0 + $0x1c] sm:$0xf]
  %v23 = vld [vmem:[%s0 + $0x20] sm:$0xf]
  %v24 = vld [vmem:[%s0 + $0x24] sm:$0xf]
  %v25 = vld [vmem:[%s0 + $0x28] sm:$0xf]
  %v26 = vld [vmem:[%s0 + $0x2c] sm:$0xf]
  %v27 = vld [vmem:[%s0 + $0x30] sm:$0xf]
  %v28 = vld [vmem:[%s0 + $0x34] sm:$0xf]
  %v29 = vld [vmem:[%s0 + $0x38] sm:$0xf]
  %v30 = vld [vmem:[%s0 + $0x3c] sm:$0xf]
  %v31 = vld [vmem:[%s0 + $0x40] sm:$0xf]
  %v32 = vld [vmem:[%s0 + $0x44] sm:$0xf]
  %v33 = vld [vmem:[%s0 + $0x48] sm:$0xf]
  %v34 = vld [vmem:[%s0 + $0x4c] sm:$0xf]
  %v35 = vld [vmem:[%s0 + $0x50] sm:$0xf]
  %v36 = vld [vmem:[%s0 + $0x54] sm:$0xf]
  %v37 = vld [vmem:[%s0 + $0x58] sm:$0xf]
  %v38 = vld [vmem:[%s0 + $0x5c] sm:$0xf]
  %v39 = vld [vmem:[%s0 + $0x60] sm:$0xf]
  %v40 = vld [vmem:[%s0 + $0x64] sm:$0xf]
  %v41 = vld [vmem:[%s0 + $0x68] sm:$0xf]
  %v42 = vld [vmem:[%s0 + $0x6c] sm:$0xf]
  %v43 = vld [vmem:[%s0 + $0x70] sm:$0xf]
  %v44 = vld [vmem:[%s0 + $0x74] sm:$0xf]
  %v45 = vld [vmem:[%s0 + $0x78] sm:$0xf]
  %v46 = vld [vmem:[%s0 + $0x7c] sm:$0xf]
  %v47 = vld [vmem:[%s0 + $0x80] sm:$0xf]
  %v48 = vld [vmem:[%s0 + $0x84] sm:$0xf]
  %v49 = vld [vmem:[%s0 + $0x88] sm:$0xf]
  %v50 = vld [vmem:[%s0 + $0x8c] sm:$0xf]
  %v51 = vld [vmem:[%s0 + $0x90] sm:$0xf]
  %v52 = vld [vmem:[%s0 + $0x94] sm:$0xf]
  %v53 = vld [vmem:[%s0 + $0x98] sm:$0xf]
  %v54 = vld [vmem:[%s0 + $0x9c] sm:$0xf]
  %v55 = vld [vmem:[%s0 + $0xa0] sm:$0xf]
  %v56 = vld [vmem:[%s0 + $0xa4] sm:$0xf]
  %v57 = vld [vmem:[%s0 + $0xa8] sm:$0xf]
  %v58 = vld [vmem:[%s0 + $0xac] sm:$0xf]
  %v59 = vld [vmem:[%s0 + $0xb0] sm:$0xf]
  %v60 = vld [vmem:[%s0 + $0xb4] sm:$0xf]
  %v61 = vld [vmem:[%s0 + $0xb8] sm:$0xf]
  %v62 = vld [vmem:[%s0 + $0xbc] sm:$0xf]
  %v63 = vld [vmem:[%s0 + $0xc0] sm:$0xf]
  %v64 = vld [vmem:[%s0 + $0xc4] sm:$0xf]
  %v65 = vld [vmem:[%s0 + $0xc8] sm:$0xf]
  %v66 = vld [vmem:[%s0 + $0xcc] sm:$0xf]
  %v67 = vld [vmem:[%s0 + $0xd0] sm:$0xf]
  %v68 = vld [vmem:[%s0 + $0xd4] sm:$0xf]
  %v69 = vld [vmem:[%s0 + $0xd8] sm:$0xf]
  %v70 = vld [vmem:[%s0 + $0xdc] sm:$0xf]
  %v71 = vld [vmem:[%s0 + $0xe0] sm:$0xf]
  %v72 = vld [vmem:[%s0 + $0xe4] sm:$0xf]
  %v73 = vld [vmem:[%s0 + $0xe8] sm:$0xf]
  %v74 = vld [vmem:[%s0 + $0xec] sm:$0xf]
  %v75 = vld [vmem:[%s0 + $0xf0] sm:$0xf]
  %v76 = vld [vmem:[%s0 + $0xf4] sm:$0xf]
  %v77 = vld [vmem:[%s0 + $0xf8] sm:$0xf]
  %v78 = vld [vmem:[%s0 + $0xfc] sm:$0xf]
  %v79 = vld [vmem:[%s1] sm:$0x3]
  %v80 = vld [vmem:[%s2] sm:$0x1]
  %v82 = vlaneseq
  %v83 = vshrl.u32 %v82, 7
  %v84 = vsub.s32 0, %v83
  %v85 = vrot.slane %v80, %v84
  %v151 = vunpack.c.l.b16 %v15
  %v152 = vunpack.c.l.b16 %v16
  %v153 = vunpack.c.l.b16 %v17
  %v154 = vunpack.c.l.b16 %v18
  %v155 = vunpack.c.l.b16 %v19
  %v156 = vunpack.c.l.b16 %v20
  %v157 = vunpack.c.l.b16 %v21
  %v158 = vunpack.c.l.b16 %v22
  %v159 = vunpack.c.l.b16 %v23
  %v160 = vunpack.c.l.b16 %v24
  %v161 = vunpack.c.l.b16 %v25
  %v162 = vunpack.c.l.b16 %v26
  %v163 = vunpack.c.l.b16 %v27
  %v164 = vunpack.c.l.b16 %v28
  %v165 = vunpack.c.l.b16 %v29
  %v166 = vunpack.c.l.b16 %v30
  %v167 = vunpack.c.l.b16 %v31
  %v168 = vunpack.c.l.b16 %v32
  %v169 = vunpack.c.l.b16 %v33
  %v170 = vunpack.c.l.b16 %v34
  %v171 = vunpack.c.l.b16 %v35
  %v172 = vunpack.c.l.b16 %v36
  %v173 = vunpack.c.l.b16 %v37
  %v174 = vunpack.c.l.b16 %v38
  %v175 = vunpack.c.l.b16 %v39
  %v176 = vunpack.c.l.b16 %v40
  %v177 = vunpack.c.l.b16 %v41
  %v178 = vunpack.c.l.b16 %v42
  %v179 = vunpack.c.l.b16 %v43
  %v180 = vunpack.c.l.b16 %v44
  %v181 = vunpack.c.l.b16 %v45
  %v182 = vunpack.c.l.b16 %v46
  %v183 = vunpack.c.l.b16 %v47
  %v184 = vunpack.c.l.b16 %v48
  %v185 = vunpack.c.l.b16 %v49
  %v186 = vunpack.c.l.b16 %v50
  %v187 = vunpack.c.l.b16 %v51
  %v188 = vunpack.c.l.b16 %v52
  %v189 = vunpack.c.l.b16 %v53
  %v190 = vunpack.c.l.b16 %v54
  %v191 = vunpack.c.l.b16 %v55
  %v192 = vunpack.c.l.b16 %v56
  %v193 = vunpack.c.l.b16 %v57
  %v194 = vunpack.c.l.b16 %v58
  %v195 = vunpack.c.l.b16 %v59
  %v196 = vunpack.c.l.b16 %v60
  %v197 = vunpack.c.l.b16 %v61
  %v198 = vunpack.c.l.b16 %v62
  %v199 = vunpack.c.l.b16 %v63
  %v200 = vunpack.c.l.b16 %v64
  %v201 = vunpack.c.l.b16 %v65
  %v202 = vunpack.c.l.b16 %v66
  %v203 = vunpack.c.l.b16 %v67
  %v204 = vunpack.c.l.b16 %v68
  %v205 = vunpack.c.l.b16 %v69
  %v206 = vunpack.c.l.b16 %v70
  %v207 = vunpack.c.l.b16 %v71
  %v208 = vunpack.c.l.b16 %v72
  %v209 = vunpack.c.l.b16 %v73
  %v210 = vunpack.c.l.b16 %v74
  %v211 = vunpack.c.l.b16 %v75
  %v212 = vunpack.c.l.b16 %v76
  %v213 = vunpack.c.l.b16 %v77
  %v214 = vunpack.c.l.b16 %v78
  %v215 = vpack.c.b16 %v152, %v151
  %v216 = vpack.c.b16 %v154, %v153
  %v217 = vpack.c.b16 %v156, %v155
  %v218 = vpack.c.b16 %v158, %v157
  %v219 = vpack.c.b16 %v160, %v159
  %v220 = vpack.c.b16 %v162, %v161
  %v221 = vpack.c.b16 %v164, %v163
  %v222 = vpack.c.b16 %v166, %v165
  %v223 = vpack.c.b16 %v168, %v167
  %v224 = vpack.c.b16 %v170, %v169
  %v225 = vpack.c.b16 %v172, %v171
  %v226 = vpack.c.b16 %v174, %v173
  %v227 = vpack.c.b16 %v176, %v175
  %v228 = vpack.c.b16 %v178, %v177
  %v229 = vpack.c.b16 %v180, %v179
  %v230 = vpack.c.b16 %v182, %v181
  %v231 = vpack.c.b16 %v184, %v183
  %v232 = vpack.c.b16 %v186, %v185
  %v233 = vpack.c.b16 %v188, %v187
  %v234 = vpack.c.b16 %v190, %v189
  %v235 = vpack.c.b16 %v192, %v191
  %v236 = vpack.c.b16 %v194, %v193
  %v237 = vpack.c.b16 %v196, %v195
  %v238 = vpack.c.b16 %v198, %v197
  %v239 = vpack.c.b16 %v200, %v199
  %v240 = vpack.c.b16 %v202, %v201
  %v241 = vpack.c.b16 %v204, %v203
  %v242 = vpack.c.b16 %v206, %v205
  %v243 = vpack.c.b16 %v208, %v207
  %v244 = vpack.c.b16 %v210, %v209
  %v245 = vpack.c.b16 %v212, %v211
  %v246 = vpack.c.b16 %v214, %v213
  %vm247 = vcmask 31744
  %v249 = vsel %vm247, %v215, 0
  %v252 = vsel %vm247, %v216, 0
  %v255 = vsel %vm247, %v217, 0
  %v258 = vsel %vm247, %v218, 0
  %v261 = vsel %vm247, %v219, 0
  %v264 = vsel %vm247, %v220, 0
  %v267 = vsel %vm247, %v221, 0
  %v270 = vsel %vm247, %v222, 0
  %v273 = vsel %vm247, %v223, 0
  %v276 = vsel %vm247, %v224, 0
  %v279 = vsel %vm247, %v225, 0
  %v282 = vsel %vm247, %v226, 0
  %v285 = vsel %vm247, %v227, 0
  %v288 = vsel %vm247, %v228, 0
  %v291 = vsel %vm247, %v229, 0
  %v294 = vsel %vm247, %v230, 0
  %v297 = vsel %vm247, %v231, 0
  %v300 = vsel %vm247, %v232, 0
  %v303 = vsel %vm247, %v233, 0
  %v306 = vsel %vm247, %v234, 0
  %v309 = vsel %vm247, %v235, 0
  %v312 = vsel %vm247, %v236, 0
  %v315 = vsel %vm247, %v237, 0
  %v318 = vsel %vm247, %v238, 0
  %v321 = vsel %vm247, %v239, 0
  %v324 = vsel %vm247, %v240, 0
  %v327 = vsel %vm247, %v241, 0
  %v330 = vsel %vm247, %v242, 0
  %v333 = vsel %vm247, %v243, 0
  %v336 = vsel %vm247, %v244, 0
  %v339 = vsel %vm247, %v245, 0
  %v342 = vsel %vm247, %v246, 0
  %vm344 = vcmask 1041408
  %v346 = vsel %vm344, %v79, 0
  %348 = vmatprep.subr.bf16.mxu0 0
  %349 = vmatpush1.bf16.msra.mxu0 %v346
  %350 = vmatprep.subr.bf16.mxu0 0
  %351 = vmatpush1.bf16.msra.mxu0 0
  %352 = vmatprep.subr.bf16.mxu0 0
  %353 = vmatpush1.bf16.msra.mxu0 0
  %354 = vmatprep.subr.bf16.mxu0 0
  %355 = vmatpush1.bf16.msra.mxu0 0
  %356 = vmatprep.subr.bf16.mxu0 0
  %357 = vmatpush1.bf16.msra.mxu0 0
  %358 = vmatprep.subr.bf16.mxu0 0
  %359 = vmatpush1.bf16.msra.mxu0 0
  %360 = vmatprep.subr.bf16.mxu0 0
  %361 = vmatpush1.bf16.msra.mxu0 0
  %362 = vmatprep.subr.bf16.mxu0 0
  %363 = vmatpush1.bf16.msra.mxu0 0
  %364 = vmatprep.subr.bf16.mxu0 0
  %365 = vmatpush1.bf16.msra.mxu0 0
  %366 = vmatprep.subr.bf16.mxu0 0
  %367 = vmatpush1.bf16.msra.mxu0 0
  %368 = vmatprep.subr.bf16.mxu0 0
  %369 = vmatpush1.bf16.msra.mxu0 0
  %370 = vmatprep.subr.bf16.mxu0 0
  %371 = vmatpush1.bf16.msra.mxu0 0
  %372 = vmatprep.subr.bf16.mxu0 0
  %373 = vmatpush1.bf16.msra.mxu0 0
  %374 = vmatprep.subr.bf16.mxu0 0
  %375 = vmatpush1.bf16.msra.mxu0 0
  %376 = vmatprep.subr.bf16.mxu0 0
  %377 = vmatpush1.bf16.msra.mxu0 0
  %378 = vmatprep.subr.bf16.mxu0 0
  %379 = vmatpush1.bf16.msra.mxu0 0
  %380 = vmatprep.mubr.bf16.mxu0 0
  %381 = vmatmul.mubr.bf16.gmra.mrb[0].mxu0 %v249
  %v382 = vpop.f32.mrb[0].mxu0
  %v383 = vadd.f32 %v85, %v382
  %v384 = vpop.f32.mrb[0].mxu0
  %v385 = vpop.f32.mrb[0].mxu0
  %v386 = vadd.f32 %v85, %v385
  %v387 = vpop.f32.mrb[0].mxu0
  %388 = vmatprep.mubr.bf16.mxu0 0
  %389 = vmatmul.mubr.bf16.gmra.mrb[0].mxu0 %v252
  %v390 = vpop.f32.mrb[0].mxu0
  %v391 = vadd.f32 %v85, %v390
  %v392 = vpop.f32.mrb[0].mxu0
  %v393 = vpop.f32.mrb[0].mxu0
  %v394 = vadd.f32 %v85, %v393
  %v395 = vpop.f32.mrb[0].mxu0
  %396 = vmatprep.mubr.bf16.mxu0 0
  %397 = vmatmul.mubr.bf16.gmra.mrb[0].mxu0 %v255
  %v398 = vpop.f32.mrb[0].mxu0
  %v399 = vadd.f32 %v85, %v398
  %v400 = vpop.f32.mrb[0].mxu0
  %v401 = vpop.f32.mrb[0].mxu0
  %v402 = vadd.f32 %v85, %v401
  %v403 = vpop.f32.mrb[0].mxu0
  %404 = vmatprep.mubr.bf16.mxu0 0
  %405 = vmatmul.mubr.bf16.gmra.mrb[0].mxu0 %v258
  %v406 = vpop.f32.mrb[0].mxu0
  %v407 = vadd.f32 %v85, %v406
  %v408 = vpop.f32.mrb[0].mxu0
  %v409 = vpop.f32.mrb[0].mxu0
  %v410 = vadd.f32 %v85, %v409
  %v411 = vpop.f32.mrb[0].mxu0
  %412 = vmatprep.mubr.bf16.mxu0 0
  %413 = vmatmul.mubr.bf16.gmra.mrb[0].mxu0 %v261
  %v414 = vpop.f32.mrb[0].mxu0
  %v415 = vadd.f32 %v85, %v414
  %v416 = vpop.f32.mrb[0].mxu0
  %v417 = vpop.f32.mrb[0].mxu0
  %v418 = vadd.f32 %v85, %v417
  %v419 = vpop.f32.mrb[0].mxu0
  %420 = vmatprep.mubr.bf16.mxu0 0
  %421 = vmatmul.mubr.bf16.gmra.mrb[0].mxu0 %v264
  %v422 = vpop.f32.mrb[0].mxu0
  %v423 = vadd.f32 %v85, %v422
  %v424 = vpop.f32.mrb[0].mxu0
  %v425 = vpop.f32.mrb[0].mxu0
  %v426 = vadd.f32 %v85, %v425
  %v427 = vpop.f32.mrb[0].mxu0
  %428 = vmatprep.mubr.bf16.mxu0 0
  %429 = vmatmul.mubr.bf16.gmra.mrb[0].mxu0 %v267
  %v430 = vpop.f32.mrb[0].mxu0
  %v431 = vadd.f32 %v85, %v430
  %v432 = vpop.f32.mrb[0].mxu0
  %v433 = vpop.f32.mrb[0].mxu0
  %v434 = vadd.f32 %v85, %v433
  %v435 = vpop.f32.mrb[0].mxu0
  %436 = vmatprep.mubr.bf16.mxu0 0
  %437 = vmatmul.mubr.bf16.gmra.mrb[0].mxu0 %v270
  %v438 = vpop.f32.mrb[0].mxu0
  %v439 = vadd.f32 %v85, %v438
  %v440 = vpop.f32.mrb[0].mxu0
  %v441 = vpop.f32.mrb[0].mxu0
  %v442 = vadd.f32 %v85, %v441
  %v443 = vpop.f32.mrb[0].mxu0
  %444 = vmatprep.mubr.bf16.mxu0 0
  %445 = vmatmul.mubr.bf16.gmra.mrb[0].mxu0 %v273
  %v446 = vpop.f32.mrb[0].mxu0
  %v447 = vadd.f32 %v85, %v446
  %v448 = vpop.f32.mrb[0].mxu0
  %v449 = vpop.f32.mrb[0].mxu0
  %v450 = vadd.f32 %v85, %v449
  %v451 = vpop.f32.mrb[0].mxu0
  %452 = vmatprep.mubr.bf16.mxu0 0
  %453 = vmatmul.mubr.bf16.gmra.mrb[0].mxu0 %v276
  %v454 = vpop.f32.mrb[0].mxu0
  %v455 = vadd.f32 %v85, %v454
  %v456 = vpop.f32.mrb[0].mxu0
  %v457 = vpop.f32.mrb[0].mxu0
  %v458 = vadd.f32 %v85, %v457
  %v459 = vpop.f32.mrb[0].mxu0
  %460 = vmatprep.mubr.bf16.mxu0 0
  %461 = vmatmul.mubr.bf16.gmra.mrb[0].mxu0 %v279
  %v462 = vpop.f32.mrb[0].mxu0
  %v463 = vadd.f32 %v85, %v462
  %v464 = vpop.f32.mrb[0].mxu0
  %v465 = vpop.f32.mrb[0].mxu0
  %v466 = vadd.f32 %v85, %v465
  %v467 = vpop.f32.mrb[0].mxu0
  %468 = vmatprep.mubr.bf16.mxu0 0
  %469 = vmatmul.mubr.bf16.gmra.mrb[0].mxu0 %v282
  %v470 = vpop.f32.mrb[0].mxu0
  %v471 = vadd.f32 %v85, %v470
  %v472 = vpop.f32.mrb[0].mxu0
  %v473 = vpop.f32.mrb[0].mxu0
  %v474 = vadd.f32 %v85, %v473
  %v475 = vpop.f32.mrb[0].mxu0
  %476 = vmatprep.mubr.bf16.mxu0 0
  %477 = vmatmul.mubr.bf16.gmra.mrb[0].mxu0 %v285
  %v478 = vpop.f32.mrb[0].mxu0
  %v479 = vadd.f32 %v85, %v478
  %v480 = vpop.f32.mrb[0].mxu0
  %v481 = vpop.f32.mrb[0].mxu0
  %v482 = vadd.f32 %v85, %v481
  %v483 = vpop.f32.mrb[0].mxu0
  %484 = vmatprep.mubr.bf16.mxu0 0
  %485 = vmatmul.mubr.bf16.gmra.mrb[0].mxu0 %v288
  %v486 = vpop.f32.mrb[0].mxu0
  %v487 = vadd.f32 %v85, %v486
  %v488 = vpop.f32.mrb[0].mxu0
  %v489 = vpop.f32.mrb[0].mxu0
  %v490 = vadd.f32 %v85, %v489
  %v491 = vpop.f32.mrb[0].mxu0
  %492 = vmatprep.mubr.bf16.mxu0 0
  %493 = vmatmul.mubr.bf16.gmra.mrb[0].mxu0 %v291
  %v494 = vpop.f32.mrb[0].mxu0
  %v495 = vadd.f32 %v85, %v494
  %v496 = vpop.f32.mrb[0].mxu0
  %v497 = vpop.f32.mrb[0].mxu0
  %v498 = vadd.f32 %v85, %v497
  %v499 = vpop.f32.mrb[0].mxu0
  %500 = vmatprep.mubr.bf16.mxu0 0
  %501 = vmatmul.mubr.bf16.gmra.mrb[0].mxu0 %v294
  %v502 = vpop.f32.mrb[0].mxu0
  %v503 = vadd.f32 %v85, %v502
  %v504 = vpop.f32.mrb[0].mxu0
  %v505 = vpop.f32.mrb[0].mxu0
  %v506 = vadd.f32 %v85, %v505
  %v507 = vpop.f32.mrb[0].mxu0
  %508 = vmatprep.mubr.bf16.mxu0 0
  %509 = vmatmul.mubr.bf16.gmra.mrb[0].mxu0 %v297
  %v510 = vpop.f32.mrb[0].mxu0
  %v511 = vadd.f32 %v85, %v510
  %v512 = vpop.f32.mrb[0].mxu0
  %v513 = vpop.f32.mrb[0].mxu0
  %v514 = vadd.f32 %v85, %v513
  %v515 = vpop.f32.mrb[0].mxu0
  %516 = vmatprep.mubr.bf16.mxu0 0
  %517 = vmatmul.mubr.bf16.gmra.mrb[0].mxu0 %v300
  %v518 = vpop.f32.mrb[0].mxu0
  %v519 = vadd.f32 %v85, %v518
  %v520 = vpop.f32.mrb[0].mxu0
  %v521 = vpop.f32.mrb[0].mxu0
  %v522 = vadd.f32 %v85, %v521
  %v523 = vpop.f32.mrb[0].mxu0
  %524 = vmatprep.mubr.bf16.mxu0 0
  %525 = vmatmul.mubr.bf16.gmra.mrb[0].mxu0 %v303
  %v526 = vpop.f32.mrb[0].mxu0
  %v527 = vadd.f32 %v85, %v526
  %v528 = vpop.f32.mrb[0].mxu0
  %v529 = vpop.f32.mrb[0].mxu0
  %v530 = vadd.f32 %v85, %v529
  %v531 = vpop.f32.mrb[0].mxu0
  %532 = vmatprep.mubr.bf16.mxu0 0
  %533 = vmatmul.mubr.bf16.gmra.mrb[0].mxu0 %v306
  %v534 = vpop.f32.mrb[0].mxu0
  %v535 = vadd.f32 %v85, %v534
  %v536 = vpop.f32.mrb[0].mxu0
  %v537 = vpop.f32.mrb[0].mxu0
  %v538 = vadd.f32 %v85, %v537
  %v539 = vpop.f32.mrb[0].mxu0
  %540 = vmatprep.mubr.bf16.mxu0 0
  %541 = vmatmul.mubr.bf16.gmra.mrb[0].mxu0 %v309
  %v542 = vpop.f32.mrb[0].mxu0
  %v543 = vadd.f32 %v85, %v542
  %v544 = vpop.f32.mrb[0].mxu0
  %v545 = vpop.f32.mrb[0].mxu0
  %v546 = vadd.f32 %v85, %v545
  %v547 = vpop.f32.mrb[0].mxu0
  %548 = vmatprep.mubr.bf16.mxu0 0
  %549 = vmatmul.mubr.bf16.gmra.mrb[0].mxu0 %v312
  %v550 = vpop.f32.mrb[0].mxu0
  %v551 = vadd.f32 %v85, %v550
  %v552 = vpop.f32.mrb[0].mxu0
  %v553 = vpop.f32.mrb[0].mxu0
  %v554 = vadd.f32 %v85, %v553
  %v555 = vpop.f32.mrb[0].mxu0
  %556 = vmatprep.mubr.bf16.mxu0 0
  %557 = vmatmul.mubr.bf16.gmra.mrb[0].mxu0 %v315
  %v558 = vpop.f32.mrb[0].mxu0
  %v559 = vadd.f32 %v85, %v558
  %v560 = vpop.f32.mrb[0].mxu0
  %v561 = vpop.f32.mrb[0].mxu0
  %v562 = vadd.f32 %v85, %v561
  %v563 = vpop.f32.mrb[0].mxu0
  %564 = vmatprep.mubr.bf16.mxu0 0
  %565 = vmatmul.mubr.bf16.gmra.mrb[0].mxu0 %v318
  %v566 = vpop.f32.mrb[0].mxu0
  %v567 = vadd.f32 %v85, %v566
  %v568 = vpop.f32.mrb[0].mxu0
  %v569 = vpop.f32.mrb[0].mxu0
  %v570 = vadd.f32 %v85, %v569
  %v571 = vpop.f32.mrb[0].mxu0
  %572 = vmatprep.mubr.bf16.mxu0 0
  %573 = vmatmul.mubr.bf16.gmra.mrb[0].mxu0 %v321
  %v574 = vpop.f32.mrb[0].mxu0
  %v575 = vadd.f32 %v85, %v574
  %v576 = vpop.f32.mrb[0].mxu0
  %v577 = vpop.f32.mrb[0].mxu0
  %v578 = vadd.f32 %v85, %v577
  %v579 = vpop.f32.mrb[0].mxu0
  %580 = vmatprep.mubr.bf16.mxu0 0
  %581 = vmatmul.mubr.bf16.gmra.mrb[0].mxu0 %v324
  %v582 = vpop.f32.mrb[0].mxu0
  %v583 = vadd.f32 %v85, %v582
  %v584 = vpop.f32.mrb[0].mxu0
  %v585 = vpop.f32.mrb[0].mxu0
  %v586 = vadd.f32 %v85, %v585
  %v587 = vpop.f32.mrb[0].mxu0
  %588 = vmatprep.mubr.bf16.mxu0 0
  %589 = vmatmul.mubr.bf16.gmra.mrb[0].mxu0 %v327
  %v590 = vpop.f32.mrb[0].mxu0
  %v591 = vadd.f32 %v85, %v590
  %v592 = vpop.f32.mrb[0].mxu0
  %v593 = vpop.f32.mrb[0].mxu0
  %v594 = vadd.f32 %v85, %v593
  %v595 = vpop.f32.mrb[0].mxu0
  %596 = vmatprep.mubr.bf16.mxu0 0
  %597 = vmatmul.mubr.bf16.gmra.mrb[0].mxu0 %v330
  %v598 = vpop.f32.mrb[0].mxu0
  %v599 = vadd.f32 %v85, %v598
  %v600 = vpop.f32.mrb[0].mxu0
  %v601 = vpop.f32.mrb[0].mxu0
  %v602 = vadd.f32 %v85, %v601
  %v603 = vpop.f32.mrb[0].mxu0
  %604 = vmatprep.mubr.bf16.mxu0 0
  %605 = vmatmul.mubr.bf16.gmra.mrb[0].mxu0 %v333
  %v606 = vpop.f32.mrb[0].mxu0
  %v607 = vadd.f32 %v85, %v606
  %v608 = vpop.f32.mrb[0].mxu0
  %v609 = vpop.f32.mrb[0].mxu0
  %v610 = vadd.f32 %v85, %v609
  %v611 = vpop.f32.mrb[0].mxu0
  %612 = vmatprep.mubr.bf16.mxu0 0
  %613 = vmatmul.mubr.bf16.gmra.mrb[0].mxu0 %v336
  %v614 = vpop.f32.mrb[0].mxu0
  %v615 = vadd.f32 %v85, %v614
  %v616 = vpop.f32.mrb[0].mxu0
  %v617 = vpop.f32.mrb[0].mxu0
  %v618 = vadd.f32 %v85, %v617
  %v619 = vpop.f32.mrb[0].mxu0
  %620 = vmatprep.mubr.bf16.mxu0 0
  %621 = vmatmul.mubr.bf16.gmra.mrb[0].mxu0 %v339
  %v622 = vpop.f32.mrb[0].mxu0
  %v623 = vadd.f32 %v85, %v622
  %v624 = vpop.f32.mrb[0].mxu0
  %v625 = vpop.f32.mrb[0].mxu0
  %v626 = vadd.f32 %v85, %v625
  %v627 = vpop.f32.mrb[0].mxu0
  %628 = vmatprep.mubr.bf16.mxu0 0
  %629 = vmatmul.mubr.bf16.gmra.mrb[0].mxu0 %v342
  %v630 = vpop.f32.mrb[0].mxu0
  %v631 = vadd.f32 %v85, %v630
  %v632 = vpop.f32.mrb[0].mxu0
  %v633 = vpop.f32.mrb[0].mxu0
  %v634 = vadd.f32 %v85, %v633
  %v635 = vpop.f32.mrb[0].mxu0
  %636 = vdwg.mxu0
  %v637 = vpack.c.bf16 %v386, %v383
  %v638 = vpack.c.bf16 %v394, %v391
  %v639 = vpack.c.bf16 %v402, %v399
  %v640 = vpack.c.bf16 %v410, %v407
  %v641 = vpack.c.bf16 %v418, %v415
  %v642 = vpack.c.bf16 %v426, %v423
  %v643 = vpack.c.bf16 %v434, %v431
  %v644 = vpack.c.bf16 %v442, %v439
  %v645 = vpack.c.bf16 %v450, %v447
  %v646 = vpack.c.bf16 %v458, %v455
  %v647 = vpack.c.bf16 %v466, %v463
  %v648 = vpack.c.bf16 %v474, %v471
  %v649 = vpack.c.bf16 %v482, %v479
  %v650 = vpack.c.bf16 %v490, %v487
  %v651 = vpack.c.bf16 %v498, %v495
  %v652 = vpack.c.bf16 %v506, %v503
  %v653 = vpack.c.bf16 %v514, %v511
  %v654 = vpack.c.bf16 %v522, %v519
  %v655 = vpack.c.bf16 %v530, %v527
  %v656 = vpack.c.bf16 %v538, %v535
  %v657 = vpack.c.bf16 %v546, %v543
  %v658 = vpack.c.bf16 %v554, %v551
  %v659 = vpack.c.bf16 %v562, %v559
  %v660 = vpack.c.bf16 %v570, %v567
  %v661 = vpack.c.bf16 %v578, %v575
  %v662 = vpack.c.bf16 %v586, %v583
  %v663 = vpack.c.bf16 %v594, %v591
  %v664 = vpack.c.bf16 %v602, %v599
  %v665 = vpack.c.bf16 %v610, %v607
  %v666 = vpack.c.bf16 %v618, %v615
  %v667 = vpack.c.bf16 %v626, %v623
  %v668 = vpack.c.bf16 %v634, %v631
  %v701 = vunpack.c.l.b16 %v637
  %v702 = vunpack.c.h.b16 %v637
  %v703 = vunpack.c.l.b16 %v638
  %v704 = vunpack.c.h.b16 %v638
  %v705 = vunpack.c.l.b16 %v639
  %v706 = vunpack.c.h.b16 %v639
  %v707 = vunpack.c.l.b16 %v640
  %v708 = vunpack.c.h.b16 %v640
  %v709 = vunpack.c.l.b16 %v641
  %v710 = vunpack.c.h.b16 %v641
  %v711 = vunpack.c.l.b16 %v642
  %v712 = vunpack.c.h.b16 %v642
  %v713 = vunpack.c.l.b16 %v643
  %v714 = vunpack.c.h.b16 %v643
  %v715 = vunpack.c.l.b16 %v644
  %v716 = vunpack.c.h.b16 %v644
  %v717 = vunpack.c.l.b16 %v645
  %v718 = vunpack.c.h.b16 %v645
  %v719 = vunpack.c.l.b16 %v646
  %v720 = vunpack.c.h.b16 %v646
  %v721 = vunpack.c.l.b16 %v647
  %v722 = vunpack.c.h.b16 %v647
  %v723 = vunpack.c.l.b16 %v648
  %v724 = vunpack.c.h.b16 %v648
  %v725 = vunpack.c.l.b16 %v649
  %v726 = vunpack.c.h.b16 %v649
  %v727 = vunpack.c.l.b16 %v650
  %v728 = vunpack.c.h.b16 %v650
  %v729 = vunpack.c.l.b16 %v651
  %v730 = vunpack.c.h.b16 %v651
  %v731 = vunpack.c.l.b16 %v652
  %v732 = vunpack.c.h.b16 %v652
  %v733 = vunpack.c.l.b16 %v653
  %v734 = vunpack.c.h.b16 %v653
  %v735 = vunpack.c.l.b16 %v654
  %v736 = vunpack.c.h.b16 %v654
  %v737 = vunpack.c.l.b16 %v655
  %v738 = vunpack.c.h.b16 %v655
  %v739 = vunpack.c.l.b16 %v656
  %v740 = vunpack.c.h.b16 %v656
  %v741 = vunpack.c.l.b16 %v657
  %v742 = vunpack.c.h.b16 %v657
  %v743 = vunpack.c.l.b16 %v658
  %v744 = vunpack.c.h.b16 %v658
  %v745 = vunpack.c.l.b16 %v659
  %v746 = vunpack.c.h.b16 %v659
  %v747 = vunpack.c.l.b16 %v660
  %v748 = vunpack.c.h.b16 %v660
  %v749 = vunpack.c.l.b16 %v661
  %v750 = vunpack.c.h.b16 %v661
  %v751 = vunpack.c.l.b16 %v662
  %v752 = vunpack.c.h.b16 %v662
  %v753 = vunpack.c.l.b16 %v663
  %v754 = vunpack.c.h.b16 %v663
  %v755 = vunpack.c.l.b16 %v664
  %v756 = vunpack.c.h.b16 %v664
  %v757 = vunpack.c.l.b16 %v665
  %v758 = vunpack.c.h.b16 %v665
  %v759 = vunpack.c.l.b16 %v666
  %v760 = vunpack.c.h.b16 %v666
  %v761 = vunpack.c.l.b16 %v667
  %v762 = vunpack.c.h.b16 %v667
  %v763 = vunpack.c.l.b16 %v668
  %v764 = vunpack.c.h.b16 %v668
  %v765 = vpack.c.b16 %v701, %v701
  %v766 = vpack.c.b16 %v702, %v702
  %v767 = vpack.c.b16 %v703, %v703
  %v768 = vpack.c.b16 %v704, %v704
  %v769 = vpack.c.b16 %v705, %v705
  %v770 = vpack.c.b16 %v706, %v706
  %v771 = vpack.c.b16 %v707, %v707
  %v772 = vpack.c.b16 %v708, %v708
  %v773 = vpack.c.b16 %v709, %v709
  %v774 = vpack.c.b16 %v710, %v710
  %v775 = vpack.c.b16 %v711, %v711
  %v776 = vpack.c.b16 %v712, %v712
  %v777 = vpack.c.b16 %v713, %v713
  %v778 = vpack.c.b16 %v714, %v714
  %v779 = vpack.c.b16 %v715, %v715
  %v780 = vpack.c.b16 %v716, %v716
  %v781 = vpack.c.b16 %v717, %v717
  %v782 = vpack.c.b16 %v718, %v718
  %v783 = vpack.c.b16 %v719, %v719
  %v784 = vpack.c.b16 %v720, %v720
  %v785 = vpack.c.b16 %v721, %v721
  %v786 = vpack.c.b16 %v722, %v722
  %v787 = vpack.c.b16 %v723, %v723
  %v788 = vpack.c.b16 %v724, %v724
  %v789 = vpack.c.b16 %v725, %v725
  %v790 = vpack.c.b16 %v726, %v726
  %v791 = vpack.c.b16 %v727, %v727
  %v792 = vpack.c.b16 %v728, %v728
  %v793 = vpack.c.b16 %v729, %v729
  %v794 = vpack.c.b16 %v730, %v730
  %v795 = vpack.c.b16 %v731, %v731
  %v796 = vpack.c.b16 %v732, %v732
  %v797 = vpack.c.b16 %v733, %v733
  %v798 = vpack.c.b16 %v734, %v734
  %v799 = vpack.c.b16 %v735, %v735
  %v800 = vpack.c.b16 %v736, %v736
  %v801 = vpack.c.b16 %v737, %v737
  %v802 = vpack.c.b16 %v738, %v738
  %v803 = vpack.c.b16 %v739, %v739
  %v804 = vpack.c.b16 %v740, %v740
  %v805 = vpack.c.b16 %v741, %v741
  %v806 = vpack.c.b16 %v742, %v742
  %v807 = vpack.c.b16 %v743, %v743
  %v808 = vpack.c.b16 %v744, %v744
  %v809 = vpack.c.b16 %v745, %v745
  %v810 = vpack.c.b16 %v746, %v746
  %v811 = vpack.c.b16 %v747, %v747
  %v812 = vpack.c.b16 %v748, %v748
  %v813 = vpack.c.b16 %v749, %v749
  %v814 = vpack.c.b16 %v750, %v750
  %v815 = vpack.c.b16 %v751, %v751
  %v816 = vpack.c.b16 %v752, %v752
  %v817 = vpack.c.b16 %v753, %v753
  %v818 = vpack.c.b16 %v754, %v754
  %v819 = vpack.c.b16 %v755, %v755
  %v820 = vpack.c.b16 %v756, %v756
  %v821 = vpack.c.b16 %v757, %v757
  %v822 = vpack.c.b16 %v758, %v758
  %v823 = vpack.c.b16 %v759, %v759
  %v824 = vpack.c.b16 %v760, %v760
  %v825 = vpack.c.b16 %v761, %v761
  %v826 = vpack.c.b16 %v762, %v762
  %v827 = vpack.c.b16 %v763, %v763
  %v828 = vpack.c.b16 %v764, %v764
  %vm893 = vcmask 257024
  %894 = vst.msk [vmem:[%s3] sm:$0xf] %vm893, %v765
  %895 = vst.msk [vmem:[%s3 + $0x4] sm:$0xf] %vm893, %v766
  %896 = vst.msk [vmem:[%s3 + $0x8] sm:$0xf] %vm893, %v767
  %897 = vst.msk [vmem:[%s3 + $0xc] sm:$0xf] %vm893, %v768
  %898 = vst.msk [vmem:[%s3 + $0x10] sm:$0xf] %vm893, %v769
  %899 = vst.msk [vmem:[%s3 + $0x14] sm:$0xf] %vm893, %v770
  %900 = vst.msk [vmem:[%s3 + $0x18] sm:$0xf] %vm893, %v771
  %901 = vst.msk [vmem:[%s3 + $0x1c] sm:$0xf] %vm893, %v772
  %902 = vst.msk [vmem:[%s3 + $0x20] sm:$0xf] %vm893, %v773
  %903 = vst.msk [vmem:[%s3 + $0x24] sm:$0xf] %vm893, %v774
  %904 = vst.msk [vmem:[%s3 + $0x28] sm:$0xf] %vm893, %v775
  %905 = vst.msk [vmem:[%s3 + $0x2c] sm:$0xf] %vm893, %v776
  %906 = vst.msk [vmem:[%s3 + $0x30] sm:$0xf] %vm893, %v777
  %907 = vst.msk [vmem:[%s3 + $0x34] sm:$0xf] %vm893, %v778
  %908 = vst.msk [vmem:[%s3 + $0x38] sm:$0xf] %vm893, %v779
  %909 = vst.msk [vmem:[%s3 + $0x3c] sm:$0xf] %vm893, %v780
  %910 = vst.msk [vmem:[%s3 + $0x40] sm:$0xf] %vm893, %v781
  %911 = vst.msk [vmem:[%s3 + $0x44] sm:$0xf] %vm893, %v782
  %912 = vst.msk [vmem:[%s3 + $0x48] sm:$0xf] %vm893, %v783
  %913 = vst.msk [vmem:[%s3 + $0x4c] sm:$0xf] %vm893, %v784
  %914 = vst.msk [vmem:[%s3 + $0x50] sm:$0xf] %vm893, %v785
  %915 = vst.msk [vmem:[%s3 + $0x54] sm:$0xf] %vm893, %v786
  %916 = vst.msk [vmem:[%s3 + $0x58] sm:$0xf] %vm893, %v787
  %917 = vst.msk [vmem:[%s3 + $0x5c] sm:$0xf] %vm893, %v788
  %918 = vst.msk [vmem:[%s3 + $0x60] sm:$0xf] %vm893, %v789
  %919 = vst.msk [vmem:[%s3 + $0x64] sm:$0xf] %vm893, %v790
  %920 = vst.msk [vmem:[%s3 + $0x68] sm:$0xf] %vm893, %v791
  %921 = vst.msk [vmem:[%s3 + $0x6c] sm:$0xf] %vm893, %v792
  %922 = vst.msk [vmem:[%s3 + $0x70] sm:$0xf] %vm893, %v793
  %923 = vst.msk [vmem:[%s3 + $0x74] sm:$0xf] %vm893, %v794
  %924 = vst.msk [vmem:[%s3 + $0x78] sm:$0xf] %vm893, %v795
  %925 = vst.msk [vmem:[%s3 + $0x7c] sm:$0xf] %vm893, %v796
  %926 = vst.msk [vmem:[%s3 + $0x80] sm:$0xf] %vm893, %v797
  %927 = vst.msk [vmem:[%s3 + $0x84] sm:$0xf] %vm893, %v798
  %928 = vst.msk [vmem:[%s3 + $0x88] sm:$0xf] %vm893, %v799
  %929 = vst.msk [vmem:[%s3 + $0x8c] sm:$0xf] %vm893, %v800
  %930 = vst.msk [vmem:[%s3 + $0x90] sm:$0xf] %vm893, %v801
  %931 = vst.msk [vmem:[%s3 + $0x94] sm:$0xf] %vm893, %v802
  %932 = vst.msk [vmem:[%s3 + $0x98] sm:$0xf] %vm893, %v803
  %933 = vst.msk [vmem:[%s3 + $0x9c] sm:$0xf] %vm893, %v804
  %934 = vst.msk [vmem:[%s3 + $0xa0] sm:$0xf] %vm893, %v805
  %935 = vst.msk [vmem:[%s3 + $0xa4] sm:$0xf] %vm893, %v806
  %936 = vst.msk [vmem:[%s3 + $0xa8] sm:$0xf] %vm893, %v807
  %937 = vst.msk [vmem:[%s3 + $0xac] sm:$0xf] %vm893, %v808
  %938 = vst.msk [vmem:[%s3 + $0xb0] sm:$0xf] %vm893, %v809
  %939 = vst.msk [vmem:[%s3 + $0xb4] sm:$0xf] %vm893, %v810
  %940 = vst.msk [vmem:[%s3 + $0xb8] sm:$0xf] %vm893, %v811
  %941 = vst.msk [vmem:[%s3 + $0xbc] sm:$0xf] %vm893, %v812
  %942 = vst.msk [vmem:[%s3 + $0xc0] sm:$0xf] %vm893, %v813
  %943 = vst.msk [vmem:[%s3 + $0xc4] sm:$0xf] %vm893, %v814
  %944 = vst.msk [vmem:[%s3 + $0xc8] sm:$0xf] %vm893, %v815
  %945 = vst.msk [vmem:[%s3 + $0xcc] sm:$0xf] %vm893, %v816
  %946 = vst.msk [vmem:[%s3 + $0xd0] sm:$0xf] %vm893, %v817
  %947 = vst.msk [vmem:[%s3 + $0xd4] sm:$0xf] %vm893, %v818
  %948 = vst.msk [vmem:[%s3 + $0xd8] sm:$0xf] %vm893, %v819
  %949 = vst.msk [vmem:[%s3 + $0xdc] sm:$0xf] %vm893, %v820
  %950 = vst.msk [vmem:[%s3 + $0xe0] sm:$0xf] %vm893, %v821
  %951 = vst.msk [vmem:[%s3 + $0xe4] sm:$0xf] %vm893, %v822
  %952 = vst.msk [vmem:[%s3 + $0xe8] sm:$0xf] %vm893, %v823
  %953 = vst.msk [vmem:[%s3 + $0xec] sm:$0xf] %vm893, %v824
  %954 = vst.msk [vmem:[%s3 + $0xf0] sm:$0xf] %vm893, %v825
  %955 = vst.msk [vmem:[%s3 + $0xf4] sm:$0xf] %vm893, %v826
  %956 = vst.msk [vmem:[%s3 + $0xf8] sm:$0xf] %vm893, %v827
  %957 = vst.msk [vmem:[%s3 + $0xfc] sm:$0xf] %vm893, %v828
  // Predicated region
  $region14: #{_lambda_.9} parent=0 // pred_check
    _
  $region15: #{_lambda_.9} parent=0 // pred_check_branch
    %959 = sbr.rel (0) target = $region17
  $region16: #{_lambda_.9} parent=0 // pred_region
    _
  $region17: #{_lambda_.9} parent=0 // pred_fallthru
    _
  // Predicated region
  $region18: #{_lambda_.9} parent=0 // pred_check
    _
  $region19: #{_lambda_.9} parent=0 // pred_check_branch
    %961 = sbr.rel (0) target = $region21
  $region20: #{_lambda_.9} parent=0 // pred_region
    _
  $region21: #{_lambda_.9} parent=0 // pred_fallthru
    _

// kernel: _lambda_.7
$region0: #{_lambda_.7}
  #allocation0 [shape = 'u32[]', space=smem, size = 0x4, offset = 0x4, fixed_abs, tag = 'smem constant byte address 0x4 - core index']
  #allocation1 [shape = 'u32[144,128]{1,0:T(1,128)}', space=vmem, size = 0x12000, scoped, tag = 'internal scratch']
  %s0 = inlined_call_operand.vmem [shape: bf16[512,4], index: 0, kind: input, shape index: {}]
  %s1 = inlined_call_operand.vmem [shape: bf16[4,8], index: 1, kind: input, shape index: {}]
  %s2 = inlined_call_operand.vmem [shape: f32[1,8], index: 2, kind: input, shape index: {}]
  %s3 = inlined_call_operand.vmem [shape: bf16[512,8], index: 3, kind: output, shape index: {}]
  %s4 = sld [smem:[#allocation0]]
  $region22: #{_lambda_.7} parent=0
    _
  %s6 = ssub.s32 1, %s4
  %s7 = scalar_select 0, %s6, %s4
  // Predicated region
  $region2: #{_lambda_.7} parent=0 // pred_check
    _
  $region3: #{_lambda_.7} parent=0 // pred_check_branch
    %9 = sbr.rel (0) target = $region5
  $region4: #{_lambda_.7} parent=0 // pred_region
    _
  $region5: #{_lambda_.7} parent=0 // pred_fallthru
    _
  // Predicated region
  $region6: #{_lambda_.7} parent=0 // pred_check
    _
  $region7: #{_lambda_.7} parent=0 // pred_check_branch
    %11 = sbr.rel (0) target = $region9
  $region8: #{_lambda_.7} parent=0 // pred_region
    _
  $region9: #{_lambda_.7} parent=0 // pred_fallthru
    _
  // Predicated region
  $region10: #{_lambda_.7} parent=0 // pred_check
    _
  $region11: #{_lambda_.7} parent=0 // pred_check_branch
    %13 = sbr.rel (0) target = $region13
  $region12: #{_lambda_.7} parent=0 // pred_region
    _
  $region13: #{_lambda_.7} parent=0 // pred_fallthru
    _
  %v15 = vld [vmem:[%s0] sm:$0xf]
  %v16 = vld [vmem:[%s0 + $0x4] sm:$0xf]
  %v17 = vld [vmem:[%s0 + $0x8] sm:$0xf]
  %v18 = vld [vmem:[%s0 + $0xc] sm:$0xf]
  %v19 = vld [vmem:[%s0 + $0x10] sm:$0xf]
  %v20 = vld [vmem:[%s0 + $0x14] sm:$0xf]
  %v21 = vld [vmem:[%s0 + $0x18] sm:$0xf]
  %v22 = vld [vmem:[%s0 + $0x1c] sm:$0xf]
  %v23 = vld [vmem:[%s0 + $0x20] sm:$0xf]
  %v24 = vld [vmem:[%s0 + $0x24] sm:$0xf]
  %v25 = vld [vmem:[%s0 + $0x28] sm:$0xf]
  %v26 = vld [vmem:[%s0 + $0x2c] sm:$0xf]
  %v27 = vld [vmem:[%s0 + $0x30] sm:$0xf]
  %v28 = vld [vmem:[%s0 + $0x34] sm:$0xf]
  %v29 = vld [vmem:[%s0 + $0x38] sm:$0xf]
  %v30 = vld [vmem:[%s0 + $0x3c] sm:$0xf]
  %v31 = vld [vmem:[%s0 + $0x40] sm:$0xf]
  %v32 = vld [vmem:[%s0 + $0x44] sm:$0xf]
  %v33 = vld [vmem:[%s0 + $0x48] sm:$0xf]
  %v34 = vld [vmem:[%s0 + $0x4c] sm:$0xf]
  %v35 = vld [vmem:[%s0 + $0x50] sm:$0xf]
  %v36 = vld [vmem:[%s0 + $0x54] sm:$0xf]
  %v37 = vld [vmem:[%s0 + $0x58] sm:$0xf]
  %v38 = vld [vmem:[%s0 + $0x5c] sm:$0xf]
  %v39 = vld [vmem:[%s0 + $0x60] sm:$0xf]
  %v40 = vld [vmem:[%s0 + $0x64] sm:$0xf]
  %v41 = vld [vmem:[%s0 + $0x68] sm:$0xf]
  %v42 = vld [vmem:[%s0 + $0x6c] sm:$0xf]
  %v43 = vld [vmem:[%s0 + $0x70] sm:$0xf]
  %v44 = vld [vmem:[%s0 + $0x74] sm:$0xf]
  %v45 = vld [vmem:[%s0 + $0x78] sm:$0xf]
  %v46 = vld [vmem:[%s0 + $0x7c] sm:$0xf]
  %v47 = vld [vmem:[%s0 + $0x80] sm:$0xf]
  %v48 = vld [vmem:[%s0 + $0x84] sm:$0xf]
  %v49 = vld [vmem:[%s0 + $0x88] sm:$0xf]
  %v50 = vld [vmem:[%s0 + $0x8c] sm:$0xf]
  %v51 = vld [vmem:[%s0 + $0x90] sm:$0xf]
  %v52 = vld [vmem:[%s0 + $0x94] sm:$0xf]
  %v53 = vld [vmem:[%s0 + $0x98] sm:$0xf]
  %v54 = vld [vmem:[%s0 + $0x9c] sm:$0xf]
  %v55 = vld [vmem:[%s0 + $0xa0] sm:$0xf]
  %v56 = vld [vmem:[%s0 + $0xa4] sm:$0xf]
  %v57 = vld [vmem:[%s0 + $0xa8] sm:$0xf]
  %v58 = vld [vmem:[%s0 + $0xac] sm:$0xf]
  %v59 = vld [vmem:[%s0 + $0xb0] sm:$0xf]
  %v60 = vld [vmem:[%s0 + $0xb4] sm:$0xf]
  %v61 = vld [vmem:[%s0 + $0xb8] sm:$0xf]
  %v62 = vld [vmem:[%s0 + $0xbc] sm:$0xf]
  %v63 = vld [vmem:[%s0 + $0xc0] sm:$0xf]
  %v64 = vld [vmem:[%s0 + $0xc4] sm:$0xf]
  %v65 = vld [vmem:[%s0 + $0xc8] sm:$0xf]
  %v66 = vld [vmem:[%s0 + $0xcc] sm:$0xf]
  %v67 = vld [vmem:[%s0 + $0xd0] sm:$0xf]
  %v68 = vld [vmem:[%s0 + $0xd4] sm:$0xf]
  %v69 = vld [vmem:[%s0 + $0xd8] sm:$0xf]
  %v70 = vld [vmem:[%s0 + $0xdc] sm:$0xf]
  %v71 = vld [vmem:[%s0 + $0xe0] sm:$0xf]
  %v72 = vld [vmem:[%s0 + $0xe4] sm:$0xf]
  %v73 = vld [vmem:[%s0 + $0xe8] sm:$0xf]
  %v74 = vld [vmem:[%s0 + $0xec] sm:$0xf]
  %v75 = vld [vmem:[%s0 + $0xf0] sm:$0xf]
  %v76 = vld [vmem:[%s0 + $0xf4] sm:$0xf]
  %v77 = vld [vmem:[%s0 + $0xf8] sm:$0xf]
  %v78 = vld [vmem:[%s0 + $0xfc] sm:$0xf]
  %v79 = vld [vmem:[%s1] sm:$0x3]
  %v80 = vld [vmem:[%s2] sm:$0x1]
  %v82 = vlaneseq
  %v83 = vshrl.u32 %v82, 7
  %v84 = vsub.s32 0, %v83
  %v85 = vrot.slane %v80, %v84
  %v151 = vunpack.c.l.b16 %v15
  %v152 = vunpack.c.l.b16 %v16
  %v153 = vunpack.c.l.b16 %v17
  %v154 = vunpack.c.l.b16 %v18
  %v155 = vunpack.c.l.b16 %v19
  %v156 = vunpack.c.l.b16 %v20
  %v157 = vunpack.c.l.b16 %v21
  %v158 = vunpack.c.l.b16 %v22
  %v159 = vunpack.c.l.b16 %v23
  %v160 = vunpack.c.l.b16 %v24
  %v161 = vunpack.c.l.b16 %v25
  %v162 = vunpack.c.l.b16 %v26
  %v163 = vunpack.c.l.b16 %v27
  %v164 = vunpack.c.l.b16 %v28
  %v165 = vunpack.c.l.b16 %v29
  %v166 = vunpack.c.l.b16 %v30
  %v167 = vunpack.c.l.b16 %v31
  %v168 = vunpack.c.l.b16 %v32
  %v169 = vunpack.c.l.b16 %v33
  %v170 = vunpack.c.l.b16 %v34
  %v171 = vunpack.c.l.b16 %v35
  %v172 = vunpack.c.l.b16 %v36
  %v173 = vunpack.c.l.b16 %v37
  %v174 = vunpack.c.l.b16 %v38
  %v175 = vunpack.c.l.b16 %v39
  %v176 = vunpack.c.l.b16 %v40
  %v177 = vunpack.c.l.b16 %v41
  %v178 = vunpack.c.l.b16 %v42
  %v179 = vunpack.c.l.b16 %v43
  %v180 = vunpack.c.l.b16 %v44
  %v181 = vunpack.c.l.b16 %v45
  %v182 = vunpack.c.l.b16 %v46
  %v183 = vunpack.c.l.b16 %v47
  %v184 = vunpack.c.l.b16 %v48
  %v185 = vunpack.c.l.b16 %v49
  %v186 = vunpack.c.l.b16 %v50
  %v187 = vunpack.c.l.b16 %v51
  %v188 = vunpack.c.l.b16 %v52
  %v189 = vunpack.c.l.b16 %v53
  %v190 = vunpack.c.l.b16 %v54
  %v191 = vunpack.c.l.b16 %v55
  %v192 = vunpack.c.l.b16 %v56
  %v193 = vunpack.c.l.b16 %v57
  %v194 = vunpack.c.l.b16 %v58
  %v195 = vunpack.c.l.b16 %v59
  %v196 = vunpack.c.l.b16 %v60
  %v197 = vunpack.c.l.b16 %v61
  %v198 = vunpack.c.l.b16 %v62
  %v199 = vunpack.c.l.b16 %v63
  %v200 = vunpack.c.l.b16 %v64
  %v201 = vunpack.c.l.b16 %v65
  %v202 = vunpack.c.l.b16 %v66
  %v203 = vunpack.c.l.b16 %v67
  %v204 = vunpack.c.l.b16 %v68
  %v205 = vunpack.c.l.b16 %v69
  %v206 = vunpack.c.l.b16 %v70
  %v207 = vunpack.c.l.b16 %v71
  %v208 = vunpack.c.l.b16 %v72
  %v209 = vunpack.c.l.b16 %v73
  %v210 = vunpack.c.l.b16 %v74
  %v211 = vunpack.c.l.b16 %v75
  %v212 = vunpack.c.l.b16 %v76
  %v213 = vunpack.c.l.b16 %v77
  %v214 = vunpack.c.l.b16 %v78
  %v215 = vpack.c.b16 %v152, %v151
  %v216 = vpack.c.b16 %v154, %v153
  %v217 = vpack.c.b16 %v156, %v155
  %v218 = vpack.c.b16 %v158, %v157
  %v219 = vpack.c.b16 %v160, %v159
  %v220 = vpack.c.b16 %v162, %v161
  %v221 = vpack.c.b16 %v164, %v163
  %v222 = vpack.c.b16 %v166, %v165
  %v223 = vpack.c.b16 %v168, %v167
  %v224 = vpack.c.b16 %v170, %v169
  %v225 = vpack.c.b16 %v172, %v171
  %v226 = vpack.c.b16 %v174, %v173
  %v227 = vpack.c.b16 %v176, %v175
  %v228 = vpack.c.b16 %v178, %v177
  %v229 = vpack.c.b16 %v180, %v179
  %v230 = vpack.c.b16 %v182, %v181
  %v231 = vpack.c.b16 %v184, %v183
  %v232 = vpack.c.b16 %v186, %v185
  %v233 = vpack.c.b16 %v188, %v187
  %v234 = vpack.c.b16 %v190, %v189
  %v235 = vpack.c.b16 %v192, %v191
  %v236 = vpack.c.b16 %v194, %v193
  %v237 = vpack.c.b16 %v196, %v195
  %v238 = vpack.c.b16 %v198, %v197
  %v239 = vpack.c.b16 %v200, %v199
  %v240 = vpack.c.b16 %v202, %v201
  %v241 = vpack.c.b16 %v204, %v203
  %v242 = vpack.c.b16 %v206, %v205
  %v243 = vpack.c.b16 %v208, %v207
  %v244 = vpack.c.b16 %v210, %v209
  %v245 = vpack.c.b16 %v212, %v211
  %v246 = vpack.c.b16 %v214, %v213
  %vm247 = vcmask 31744
  %v249 = vsel %vm247, %v215, 0
  %v252 = vsel %vm247, %v216, 0
  %v255 = vsel %vm247, %v217, 0
  %v258 = vsel %vm247, %v218, 0
  %v261 = vsel %vm247, %v219, 0
  %v264 = vsel %vm247, %v220, 0
  %v267 = vsel %vm247, %v221, 0
  %v270 = vsel %vm247, %v222, 0
  %v273 = vsel %vm247, %v223, 0
  %v276 = vsel %vm247, %v224, 0
  %v279 = vsel %vm247, %v225, 0
  %v282 = vsel %vm247, %v226, 0
  %v285 = vsel %vm247, %v227, 0
  %v288 = vsel %vm247, %v228, 0
  %v291 = vsel %vm247, %v229, 0
  %v294 = vsel %vm247, %v230, 0
  %v297 = vsel %vm247, %v231, 0
  %v300 = vsel %vm247, %v232, 0
  %v303 = vsel %vm247, %v233, 0
  %v306 = vsel %vm247, %v234, 0
  %v309 = vsel %vm247, %v235, 0
  %v312 = vsel %vm247, %v236, 0
  %v315 = vsel %vm247, %v237, 0
  %v318 = vsel %vm247, %v238, 0
  %v321 = vsel %vm247, %v239, 0
  %v324 = vsel %vm247, %v240, 0
  %v327 = vsel %vm247, %v241, 0
  %v330 = vsel %vm247, %v242, 0
  %v333 = vsel %vm247, %v243, 0
  %v336 = vsel %vm247, %v244, 0
  %v339 = vsel %vm247, %v245, 0
  %v342 = vsel %vm247, %v246, 0
  %vm344 = vcmask 1041408
  %v346 = vsel %vm344, %v79, 0
  %348 = vmatprep.subr.bf16.mxu0 0
  %349 = vmatpush1.bf16.msra.mxu0 %v346
  %350 = vmatprep.subr.bf16.mxu0 0
  %351 = vmatpush1.bf16.msra.mxu0 0
  %352 = vmatprep.subr.bf16.mxu0 0
  %353 = vmatpush1.bf16.msra.mxu0 0
  %354 = vmatprep.subr.bf16.mxu0 0
  %355 = vmatpush1.bf16.msra.mxu0 0
  %356 = vmatprep.subr.bf16.mxu0 0
  %357 = vmatpush1.bf16.msra.mxu0 0
  %358 = vmatprep.subr.bf16.mxu0 0
  %359 = vmatpush1.bf16.msra.mxu0 0
  %360 = vmatprep.subr.bf16.mxu0 0
  %361 = vmatpush1.bf16.msra.mxu0 0
  %362 = vmatprep.subr.bf16.mxu0 0
  %363 = vmatpush1.bf16.msra.mxu0 0
  %364 = vmatprep.subr.bf16.mxu0 0
  %365 = vmatpush1.bf16.msra.mxu0 0
  %366 = vmatprep.subr.bf16.mxu0 0
  %367 = vmatpush1.bf16.msra.mxu0 0
  %368 = vmatprep.subr.bf16.mxu0 0
  %369 = vmatpush1.bf16.msra.mxu0 0
  %370 = vmatprep.subr.bf16.mxu0 0
  %371 = vmatpush1.bf16.msra.mxu0 0
  %372 = vmatprep.subr.bf16.mxu0 0
  %373 = vmatpush1.bf16.msra.mxu0 0
  %374 = vmatprep.subr.bf16.mxu0 0
  %375 = vmatpush1.bf16.msra.mxu0 0
  %376 = vmatprep.subr.bf16.mxu0 0
  %377 = vmatpush1.bf16.msra.mxu0 0
  %378 = vmatprep.subr.bf16.mxu0 0
  %379 = vmatpush1.bf16.msra.mxu0 0
  %380 = vmatprep.mubr.bf16.mxu0 0
  %381 = vmatmul.mubr.bf16.gmra.mrb[0].mxu0 %v249
  %v382 = vpop.f32.mrb[0].mxu0
  %v383 = vadd.f32 %v85, %v382
  %v384 = vpop.f32.mrb[0].mxu0
  %v385 = vpop.f32.mrb[0].mxu0
  %v386 = vadd.f32 %v85, %v385
  %v387 = vpop.f32.mrb[0].mxu0
  %388 = vmatprep.mubr.bf16.mxu0 0
  %389 = vmatmul.mubr.bf16.gmra.mrb[0].mxu0 %v252
  %v390 = vpop.f32.mrb[0].mxu0
  %v391 = vadd.f32 %v85, %v390
  %v392 = vpop.f32.mrb[0].mxu0
  %v393 = vpop.f32.mrb[0].mxu0
  %v394 = vadd.f32 %v85, %v393
  %v395 = vpop.f32.mrb[0].mxu0
  %396 = vmatprep.mubr.bf16.mxu0 0
  %397 = vmatmul.mubr.bf16.gmra.mrb[0].mxu0 %v255
  %v398 = vpop.f32.mrb[0].mxu0
  %v399 = vadd.f32 %v85, %v398
  %v400 = vpop.f32.mrb[0].mxu0
  %v401 = vpop.f32.mrb[0].mxu0
  %v402 = vadd.f32 %v85, %v401
  %v403 = vpop.f32.mrb[0].mxu0
  %404 = vmatprep.mubr.bf16.mxu0 0
  %405 = vmatmul.mubr.bf16.gmra.mrb[0].mxu0 %v258
  %v406 = vpop.f32.mrb[0].mxu0
  %v407 = vadd.f32 %v85, %v406
  %v408 = vpop.f32.mrb[0].mxu0
  %v409 = vpop.f32.mrb[0].mxu0
  %v410 = vadd.f32 %v85, %v409
  %v411 = vpop.f32.mrb[0].mxu0
  %412 = vmatprep.mubr.bf16.mxu0 0
  %413 = vmatmul.mubr.bf16.gmra.mrb[0].mxu0 %v261
  %v414 = vpop.f32.mrb[0].mxu0
  %v415 = vadd.f32 %v85, %v414
  %v416 = vpop.f32.mrb[0].mxu0
  %v417 = vpop.f32.mrb[0].mxu0
  %v418 = vadd.f32 %v85, %v417
  %v419 = vpop.f32.mrb[0].mxu0
  %420 = vmatprep.mubr.bf16.mxu0 0
  %421 = vmatmul.mubr.bf16.gmra.mrb[0].mxu0 %v264
  %v422 = vpop.f32.mrb[0].mxu0
  %v423 = vadd.f32 %v85, %v422
  %v424 = vpop.f32.mrb[0].mxu0
  %v425 = vpop.f32.mrb[0].mxu0
  %v426 = vadd.f32 %v85, %v425
  %v427 = vpop.f32.mrb[0].mxu0
  %428 = vmatprep.mubr.bf16.mxu0 0
  %429 = vmatmul.mubr.bf16.gmra.mrb[0].mxu0 %v267
  %v430 = vpop.f32.mrb[0].mxu0
  %v431 = vadd.f32 %v85, %v430
  %v432 = vpop.f32.mrb[0].mxu0
  %v433 = vpop.f32.mrb[0].mxu0
  %v434 = vadd.f32 %v85, %v433
  %v435 = vpop.f32.mrb[0].mxu0
  %436 = vmatprep.mubr.bf16.mxu0 0
  %437 = vmatmul.mubr.bf16.gmra.mrb[0].mxu0 %v270
  %v438 = vpop.f32.mrb[0].mxu0
  %v439 = vadd.f32 %v85, %v438
  %v440 = vpop.f32.mrb[0].mxu0
  %v441 = vpop.f32.mrb[0].mxu0
  %v442 = vadd.f32 %v85, %v441
  %v443 = vpop.f32.mrb[0].mxu0
  %444 = vmatprep.mubr.bf16.mxu0 0
  %445 = vmatmul.mubr.bf16.gmra.mrb[0].mxu0 %v273
  %v446 = vpop.f32.mrb[0].mxu0
  %v447 = vadd.f32 %v85, %v446
  %v448 = vpop.f32.mrb[0].mxu0
  %v449 = vpop.f32.mrb[0].mxu0
  %v450 = vadd.f32 %v85, %v449
  %v451 = vpop.f32.mrb[0].mxu0
  %452 = vmatprep.mubr.bf16.mxu0 0
  %453 = vmatmul.mubr.bf16.gmra.mrb[0].mxu0 %v276
  %v454 = vpop.f32.mrb[0].mxu0
  %v455 = vadd.f32 %v85, %v454
  %v456 = vpop.f32.mrb[0].mxu0
  %v457 = vpop.f32.mrb[0].mxu0
  %v458 = vadd.f32 %v85, %v457
  %v459 = vpop.f32.mrb[0].mxu0
  %460 = vmatprep.mubr.bf16.mxu0 0
  %461 = vmatmul.mubr.bf16.gmra.mrb[0].mxu0 %v279
  %v462 = vpop.f32.mrb[0].mxu0
  %v463 = vadd.f32 %v85, %v462
  %v464 = vpop.f32.mrb[0].mxu0
  %v465 = vpop.f32.mrb[0].mxu0
  %v466 = vadd.f32 %v85, %v465
  %v467 = vpop.f32.mrb[0].mxu0
  %468 = vmatprep.mubr.bf16.mxu0 0
  %469 = vmatmul.mubr.bf16.gmra.mrb[0].mxu0 %v282
  %v470 = vpop.f32.mrb[0].mxu0
  %v471 = vadd.f32 %v85, %v470
  %v472 = vpop.f32.mrb[0].mxu0
  %v473 = vpop.f32.mrb[0].mxu0
  %v474 = vadd.f32 %v85, %v473
  %v475 = vpop.f32.mrb[0].mxu0
  %476 = vmatprep.mubr.bf16.mxu0 0
  %477 = vmatmul.mubr.bf16.gmra.mrb[0].mxu0 %v285
  %v478 = vpop.f32.mrb[0].mxu0
  %v479 = vadd.f32 %v85, %v478
  %v480 = vpop.f32.mrb[0].mxu0
  %v481 = vpop.f32.mrb[0].mxu0
  %v482 = vadd.f32 %v85, %v481
  %v483 = vpop.f32.mrb[0].mxu0
  %484 = vmatprep.mubr.bf16.mxu0 0
  %485 = vmatmul.mubr.bf16.gmra.mrb[0].mxu0 %v288
  %v486 = vpop.f32.mrb[0].mxu0
  %v487 = vadd.f32 %v85, %v486
  %v488 = vpop.f32.mrb[0].mxu0
  %v489 = vpop.f32.mrb[0].mxu0
  %v490 = vadd.f32 %v85, %v489
  %v491 = vpop.f32.mrb[0].mxu0
  %492 = vmatprep.mubr.bf16.mxu0 0
  %493 = vmatmul.mubr.bf16.gmra.mrb[0].mxu0 %v291
  %v494 = vpop.f32.mrb[0].mxu0
  %v495 = vadd.f32 %v85, %v494
  %v496 = vpop.f32.mrb[0].mxu0
  %v497 = vpop.f32.mrb[0].mxu0
  %v498 = vadd.f32 %v85, %v497
  %v499 = vpop.f32.mrb[0].mxu0
  %500 = vmatprep.mubr.bf16.mxu0 0
  %501 = vmatmul.mubr.bf16.gmra.mrb[0].mxu0 %v294
  %v502 = vpop.f32.mrb[0].mxu0
  %v503 = vadd.f32 %v85, %v502
  %v504 = vpop.f32.mrb[0].mxu0
  %v505 = vpop.f32.mrb[0].mxu0
  %v506 = vadd.f32 %v85, %v505
  %v507 = vpop.f32.mrb[0].mxu0
  %508 = vmatprep.mubr.bf16.mxu0 0
  %509 = vmatmul.mubr.bf16.gmra.mrb[0].mxu0 %v297
  %v510 = vpop.f32.mrb[0].mxu0
  %v511 = vadd.f32 %v85, %v510
  %v512 = vpop.f32.mrb[0].mxu0
  %v513 = vpop.f32.mrb[0].mxu0
  %v514 = vadd.f32 %v85, %v513
  %v515 = vpop.f32.mrb[0].mxu0
  %516 = vmatprep.mubr.bf16.mxu0 0
  %517 = vmatmul.mubr.bf16.gmra.mrb[0].mxu0 %v300
  %v518 = vpop.f32.mrb[0].mxu0
  %v519 = vadd.f32 %v85, %v518
  %v520 = vpop.f32.mrb[0].mxu0
  %v521 = vpop.f32.mrb[0].mxu0
  %v522 = vadd.f32 %v85, %v521
  %v523 = vpop.f32.mrb[0].mxu0
  %524 = vmatprep.mubr.bf16.mxu0 0
  %525 = vmatmul.mubr.bf16.gmra.mrb[0].mxu0 %v303
  %v526 = vpop.f32.mrb[0].mxu0
  %v527 = vadd.f32 %v85, %v526
  %v528 = vpop.f32.mrb[0].mxu0
  %v529 = vpop.f32.mrb[0].mxu0
  %v530 = vadd.f32 %v85, %v529
  %v531 = vpop.f32.mrb[0].mxu0
  %532 = vmatprep.mubr.bf16.mxu0 0
  %533 = vmatmul.mubr.bf16.gmra.mrb[0].mxu0 %v306
  %v534 = vpop.f32.mrb[0].mxu0
  %v535 = vadd.f32 %v85, %v534
  %v536 = vpop.f32.mrb[0].mxu0
  %v537 = vpop.f32.mrb[0].mxu0
  %v538 = vadd.f32 %v85, %v537
  %v539 = vpop.f32.mrb[0].mxu0
  %540 = vmatprep.mubr.bf16.mxu0 0
  %541 = vmatmul.mubr.bf16.gmra.mrb[0].mxu0 %v309
  %v542 = vpop.f32.mrb[0].mxu0
  %v543 = vadd.f32 %v85, %v542
  %v544 = vpop.f32.mrb[0].mxu0
  %v545 = vpop.f32.mrb[0].mxu0
  %v546 = vadd.f32 %v85, %v545
  %v547 = vpop.f32.mrb[0].mxu0
  %548 = vmatprep.mubr.bf16.mxu0 0
  %549 = vmatmul.mubr.bf16.gmra.mrb[0].mxu0 %v312
  %v550 = vpop.f32.mrb[0].mxu0
  %v551 = vadd.f32 %v85, %v550
  %v552 = vpop.f32.mrb[0].mxu0
  %v553 = vpop.f32.mrb[0].mxu0
  %v554 = vadd.f32 %v85, %v553
  %v555 = vpop.f32.mrb[0].mxu0
  %556 = vmatprep.mubr.bf16.mxu0 0
  %557 = vmatmul.mubr.bf16.gmra.mrb[0].mxu0 %v315
  %v558 = vpop.f32.mrb[0].mxu0
  %v559 = vadd.f32 %v85, %v558
  %v560 = vpop.f32.mrb[0].mxu0
  %v561 = vpop.f32.mrb[0].mxu0
  %v562 = vadd.f32 %v85, %v561
  %v563 = vpop.f32.mrb[0].mxu0
  %564 = vmatprep.mubr.bf16.mxu0 0
  %565 = vmatmul.mubr.bf16.gmra.mrb[0].mxu0 %v318
  %v566 = vpop.f32.mrb[0].mxu0
  %v567 = vadd.f32 %v85, %v566
  %v568 = vpop.f32.mrb[0].mxu0
  %v569 = vpop.f32.mrb[0].mxu0
  %v570 = vadd.f32 %v85, %v569
  %v571 = vpop.f32.mrb[0].mxu0
  %572 = vmatprep.mubr.bf16.mxu0 0
  %573 = vmatmul.mubr.bf16.gmra.mrb[0].mxu0 %v321
  %v574 = vpop.f32.mrb[0].mxu0
  %v575 = vadd.f32 %v85, %v574
  %v576 = vpop.f32.mrb[0].mxu0
  %v577 = vpop.f32.mrb[0].mxu0
  %v578 = vadd.f32 %v85, %v577
  %v579 = vpop.f32.mrb[0].mxu0
  %580 = vmatprep.mubr.bf16.mxu0 0
  %581 = vmatmul.mubr.bf16.gmra.mrb[0].mxu0 %v324
  %v582 = vpop.f32.mrb[0].mxu0
  %v583 = vadd.f32 %v85, %v582
  %v584 = vpop.f32.mrb[0].mxu0
  %v585 = vpop.f32.mrb[0].mxu0
  %v586 = vadd.f32 %v85, %v585
  %v587 = vpop.f32.mrb[0].mxu0
  %588 = vmatprep.mubr.bf16.mxu0 0
  %589 = vmatmul.mubr.bf16.gmra.mrb[0].mxu0 %v327
  %v590 = vpop.f32.mrb[0].mxu0
  %v591 = vadd.f32 %v85, %v590
  %v592 = vpop.f32.mrb[0].mxu0
  %v593 = vpop.f32.mrb[0].mxu0
  %v594 = vadd.f32 %v85, %v593
  %v595 = vpop.f32.mrb[0].mxu0
  %596 = vmatprep.mubr.bf16.mxu0 0
  %597 = vmatmul.mubr.bf16.gmra.mrb[0].mxu0 %v330
  %v598 = vpop.f32.mrb[0].mxu0
  %v599 = vadd.f32 %v85, %v598
  %v600 = vpop.f32.mrb[0].mxu0
  %v601 = vpop.f32.mrb[0].mxu0
  %v602 = vadd.f32 %v85, %v601
  %v603 = vpop.f32.mrb[0].mxu0
  %604 = vmatprep.mubr.bf16.mxu0 0
  %605 = vmatmul.mubr.bf16.gmra.mrb[0].mxu0 %v333
  %v606 = vpop.f32.mrb[0].mxu0
  %v607 = vadd.f32 %v85, %v606
  %v608 = vpop.f32.mrb[0].mxu0
  %v609 = vpop.f32.mrb[0].mxu0
  %v610 = vadd.f32 %v85, %v609
  %v611 = vpop.f32.mrb[0].mxu0
  %612 = vmatprep.mubr.bf16.mxu0 0
  %613 = vmatmul.mubr.bf16.gmra.mrb[0].mxu0 %v336
  %v614 = vpop.f32.mrb[0].mxu0
  %v615 = vadd.f32 %v85, %v614
  %v616 = vpop.f32.mrb[0].mxu0
  %v617 = vpop.f32.mrb[0].mxu0
  %v618 = vadd.f32 %v85, %v617
  %v619 = vpop.f32.mrb[0].mxu0
  %620 = vmatprep.mubr.bf16.mxu0 0
  %621 = vmatmul.mubr.bf16.gmra.mrb[0].mxu0 %v339
  %v622 = vpop.f32.mrb[0].mxu0
  %v623 = vadd.f32 %v85, %v622
  %v624 = vpop.f32.mrb[0].mxu0
  %v625 = vpop.f32.mrb[0].mxu0
  %v626 = vadd.f32 %v85, %v625
  %v627 = vpop.f32.mrb[0].mxu0
  %628 = vmatprep.mubr.bf16.mxu0 0
  %629 = vmatmul.mubr.bf16.gmra.mrb[0].mxu0 %v342
  %v630 = vpop.f32.mrb[0].mxu0
  %v631 = vadd.f32 %v85, %v630
  %v632 = vpop.f32.mrb[0].mxu0
  %v633 = vpop.f32.mrb[0].mxu0
  %v634 = vadd.f32 %v85, %v633
  %v635 = vpop.f32.mrb[0].mxu0
  %636 = vdwg.mxu0
  %v637 = vxor.u32 %v383, 2147483648
  %v638 = vxor.u32 %v386, 2147483648
  %v639 = vxor.u32 %v391, 2147483648
  %v640 = vxor.u32 %v394, 2147483648
  %v641 = vxor.u32 %v399, 2147483648
  %v642 = vxor.u32 %v402, 2147483648
  %v643 = vxor.u32 %v407, 2147483648
  %v644 = vxor.u32 %v410, 2147483648
  %v645 = vxor.u32 %v415, 2147483648
  %v646 = vxor.u32 %v418, 2147483648
  %v647 = vxor.u32 %v423, 2147483648
  %v648 = vxor.u32 %v426, 2147483648
  %v649 = vxor.u32 %v431, 2147483648
  %v650 = vxor.u32 %v434, 2147483648
  %v651 = vxor.u32 %v439, 2147483648
  %v652 = vxor.u32 %v442, 2147483648
  %v653 = vxor.u32 %v447, 2147483648
  %v654 = vxor.u32 %v450, 2147483648
  %v655 = vxor.u32 %v455, 2147483648
  %v656 = vxor.u32 %v458, 2147483648
  %v657 = vxor.u32 %v463, 2147483648
  %v658 = vxor.u32 %v466, 2147483648
  %v659 = vxor.u32 %v471, 2147483648
  %v660 = vxor.u32 %v474, 2147483648
  %v661 = vxor.u32 %v479, 2147483648
  %v662 = vxor.u32 %v482, 2147483648
  %v663 = vxor.u32 %v487, 2147483648
  %v664 = vxor.u32 %v490, 2147483648
  %v665 = vxor.u32 %v495, 2147483648
  %v666 = vxor.u32 %v498, 2147483648
  %v667 = vxor.u32 %v503, 2147483648
  %v668 = vxor.u32 %v506, 2147483648
  %v669 = vxor.u32 %v511, 2147483648
  %v670 = vxor.u32 %v514, 2147483648
  %v671 = vxor.u32 %v519, 2147483648
  %v672 = vxor.u32 %v522, 2147483648
  %v673 = vxor.u32 %v527, 2147483648
  %v674 = vxor.u32 %v530, 2147483648
  %v675 = vxor.u32 %v535, 2147483648
  %v676 = vxor.u32 %v538, 2147483648
  %v677 = vxor.u32 %v543, 2147483648
  %v678 = vxor.u32 %v546, 2147483648
  %v679 = vxor.u32 %v551, 2147483648
  %v680 = vxor.u32 %v554, 2147483648
  %v681 = vxor.u32 %v559, 2147483648
  %v682 = vxor.u32 %v562, 2147483648
  %v683 = vxor.u32 %v567, 2147483648
  %v684 = vxor.u32 %v570, 2147483648
  %v685 = vxor.u32 %v575, 2147483648
  %v686 = vxor.u32 %v578, 2147483648
  %v687 = vxor.u32 %v583, 2147483648
  %v688 = vxor.u32 %v586, 2147483648
  %v689 = vxor.u32 %v591, 2147483648
  %v690 = vxor.u32 %v594, 2147483648
  %v691 = vxor.u32 %v599, 2147483648
  %v692 = vxor.u32 %v602, 2147483648
  %v693 = vxor.u32 %v607, 2147483648
  %v694 = vxor.u32 %v610, 2147483648
  %v695 = vxor.u32 %v615, 2147483648
  %v696 = vxor.u32 %v618, 2147483648
  %v697 = vxor.u32 %v623, 2147483648
  %v698 = vxor.u32 %v626, 2147483648
  %v699 = vxor.u32 %v631, 2147483648
  %v700 = vxor.u32 %v634, 2147483648
  %v701 = vmul.f32 %v637, 1.442695
  %v702 = vpow.pop %v701
  %v703 = vmul.f32 %v638, 1.442695
  %v704 = vpow.pop %v703
  %v705 = vmul.f32 %v639, 1.442695
  %v706 = vpow.pop %v705
  %v707 = vmul.f32 %v640, 1.442695
  %v708 = vpow.pop %v707
  %v709 = vmul.f32 %v641, 1.442695
  %v710 = vpow.pop %v709
  %v711 = vmul.f32 %v642, 1.442695
  %v712 = vpow.pop %v711
  %v713 = vmul.f32 %v643, 1.442695
  %v714 = vpow.pop %v713
  %v715 = vmul.f32 %v644, 1.442695
  %v716 = vpow.pop %v715
  %v717 = vmul.f32 %v645, 1.442695
  %v718 = vpow.pop %v717
  %v719 = vmul.f32 %v646, 1.442695
  %v720 = vpow.pop %v719
  %v721 = vmul.f32 %v647, 1.442695
  %v722 = vpow.pop %v721
  %v723 = vmul.f32 %v648, 1.442695
  %v724 = vpow.pop %v723
  %v725 = vmul.f32 %v649, 1.442695
  %v726 = vpow.pop %v725
  %v727 = vmul.f32 %v650, 1.442695
  %v728 = vpow.pop %v727
  %v729 = vmul.f32 %v651, 1.442695
  %v730 = vpow.pop %v729
  %v731 = vmul.f32 %v652, 1.442695
  %v732 = vpow.pop %v731
  %v733 = vmul.f32 %v653, 1.442695
  %v734 = vpow.pop %v733
  %v735 = vmul.f32 %v654, 1.442695
  %v736 = vpow.pop %v735
  %v737 = vmul.f32 %v655, 1.442695
  %v738 = vpow.pop %v737
  %v739 = vmul.f32 %v656, 1.442695
  %v740 = vpow.pop %v739
  %v741 = vmul.f32 %v657, 1.442695
  %v742 = vpow.pop %v741
  %v743 = vmul.f32 %v658, 1.442695
  %v744 = vpow.pop %v743
  %v745 = vmul.f32 %v659, 1.442695
  %v746 = vpow.pop %v745
  %v747 = vmul.f32 %v660, 1.442695
  %v748 = vpow.pop %v747
  %v749 = vmul.f32 %v661, 1.442695
  %v750 = vpow.pop %v749
  %v751 = vmul.f32 %v662, 1.442695
  %v752 = vpow.pop %v751
  %v753 = vmul.f32 %v663, 1.442695
  %v754 = vpow.pop %v753
  %v755 = vmul.f32 %v664, 1.442695
  %v756 = vpow.pop %v755
  %v757 = vmul.f32 %v665, 1.442695
  %v758 = vpow.pop %v757
  %v759 = vmul.f32 %v666, 1.442695
  %v760 = vpow.pop %v759
  %v761 = vmul.f32 %v667, 1.442695
  %v762 = vpow.pop %v761
  %v763 = vmul.f32 %v668, 1.442695
  %v764 = vpow.pop %v763
  %v765 = vmul.f32 %v669, 1.442695
  %v766 = vpow.pop %v765
  %v767 = vmul.f32 %v670, 1.442695
  %v768 = vpow.pop %v767
  %v769 = vmul.f32 %v671, 1.442695
  %v770 = vpow.pop %v769
  %v771 = vmul.f32 %v672, 1.442695
  %v772 = vpow.pop %v771
  %v773 = vmul.f32 %v673, 1.442695
  %v774 = vpow.pop %v773
  %v775 = vmul.f32 %v674, 1.442695
  %v776 = vpow.pop %v775
  %v777 = vmul.f32 %v675, 1.442695
  %v778 = vpow.pop %v777
  %v779 = vmul.f32 %v676, 1.442695
  %v780 = vpow.pop %v779
  %v781 = vmul.f32 %v677, 1.442695
  %v782 = vpow.pop %v781
  %v783 = vmul.f32 %v678, 1.442695
  %v784 = vpow.pop %v783
  %v785 = vmul.f32 %v679, 1.442695
  %v786 = vpow.pop %v785
  %v787 = vmul.f32 %v680, 1.442695
  %v788 = vpow.pop %v787
  %v789 = vmul.f32 %v681, 1.442695
  %v790 = vpow.pop %v789
  %v791 = vmul.f32 %v682, 1.442695
  %v792 = vpow.pop %v791
  %v793 = vmul.f32 %v683, 1.442695
  %v794 = vpow.pop %v793
  %v795 = vmul.f32 %v684, 1.442695
  %v796 = vpow.pop %v795
  %v797 = vmul.f32 %v685, 1.442695
  %v798 = vpow.pop %v797
  %v799 = vmul.f32 %v686, 1.442695
  %v800 = vpow.pop %v799
  %v801 = vmul.f32 %v687, 1.442695
  %v802 = vpow.pop %v801
  %v803 = vmul.f32 %v688, 1.442695
  %v804 = vpow.pop %v803
  %v805 = vmul.f32 %v689, 1.442695
  %v806 = vpow.pop %v805
  %v807 = vmul.f32 %v690, 1.442695
  %v808 = vpow.pop %v807
  %v809 = vmul.f32 %v691, 1.442695
  %v810 = vpow.pop %v809
  %v811 = vmul.f32 %v692, 1.442695
  %v812 = vpow.pop %v811
  %v813 = vmul.f32 %v693, 1.442695
  %v814 = vpow.pop %v813
  %v815 = vmul.f32 %v694, 1.442695
  %v816 = vpow.pop %v815
  %v817 = vmul.f32 %v695, 1.442695
  %v818 = vpow.pop %v817
  %v819 = vmul.f32 %v696, 1.442695
  %v820 = vpow.pop %v819
  %v821 = vmul.f32 %v697, 1.442695
  %v822 = vpow.pop %v821
  %v823 = vmul.f32 %v698, 1.442695
  %v824 = vpow.pop %v823
  %v825 = vmul.f32 %v699, 1.442695
  %v826 = vpow.pop %v825
  %v827 = vmul.f32 %v700, 1.442695
  %v828 = vpow.pop %v827
  %v829 = vadd.f32 %v702, 1.0
  %v830 = vadd.f32 %v704, 1.0
  %v831 = vadd.f32 %v706, 1.0
  %v832 = vadd.f32 %v708, 1.0
  %v833 = vadd.f32 %v710, 1.0
  %v834 = vadd.f32 %v712, 1.0
  %v835 = vadd.f32 %v714, 1.0
  %v836 = vadd.f32 %v716, 1.0
  %v837 = vadd.f32 %v718, 1.0
  %v838 = vadd.f32 %v720, 1.0
  %v839 = vadd.f32 %v722, 1.0
  %v840 = vadd.f32 %v724, 1.0
  %v841 = vadd.f32 %v726, 1.0
  %v842 = vadd.f32 %v728, 1.0
  %v843 = vadd.f32 %v730, 1.0
  %v844 = vadd.f32 %v732, 1.0
  %v845 = vadd.f32 %v734, 1.0
  %v846 = vadd.f32 %v736, 1.0
  %v847 = vadd.f32 %v738, 1.0
  %v848 = vadd.f32 %v740, 1.0
  %v849 = vadd.f32 %v742, 1.0
  %v850 = vadd.f32 %v744, 1.0
  %v851 = vadd.f32 %v746, 1.0
  %v852 = vadd.f32 %v748, 1.0
  %v853 = vadd.f32 %v750, 1.0
  %v854 = vadd.f32 %v752, 1.0
  %v855 = vadd.f32 %v754, 1.0
  %v856 = vadd.f32 %v756, 1.0
  %v857 = vadd.f32 %v758, 1.0
  %v858 = vadd.f32 %v760, 1.0
  %v859 = vadd.f32 %v762, 1.0
  %v860 = vadd.f32 %v764, 1.0
  %v861 = vadd.f32 %v766, 1.0
  %v862 = vadd.f32 %v768, 1.0
  %v863 = vadd.f32 %v770, 1.0
  %v864 = vadd.f32 %v772, 1.0
  %v865 = vadd.f32 %v774, 1.0
  %v866 = vadd.f32 %v776, 1.0
  %v867 = vadd.f32 %v778, 1.0
  %v868 = vadd.f32 %v780, 1.0
  %v869 = vadd.f32 %v782, 1.0
  %v870 = vadd.f32 %v784, 1.0
  %v871 = vadd.f32 %v786, 1.0
  %v872 = vadd.f32 %v788, 1.0
  %v873 = vadd.f32 %v790, 1.0
  %v874 = vadd.f32 %v792, 1.0
  %v875 = vadd.f32 %v794, 1.0
  %v876 = vadd.f32 %v796, 1.0
  %v877 = vadd.f32 %v798, 1.0
  %v878 = vadd.f32 %v800, 1.0
  %v879 = vadd.f32 %v802, 1.0
  %v880 = vadd.f32 %v804, 1.0
  %v881 = vadd.f32 %v806, 1.0
  %v882 = vadd.f32 %v808, 1.0
  %v883 = vadd.f32 %v810, 1.0
  %v884 = vadd.f32 %v812, 1.0
  %v885 = vadd.f32 %v814, 1.0
  %v886 = vadd.f32 %v816, 1.0
  %v887 = vadd.f32 %v818, 1.0
  %v888 = vadd.f32 %v820, 1.0
  %v889 = vadd.f32 %v822, 1.0
  %v890 = vadd.f32 %v824, 1.0
  %v891 = vadd.f32 %v826, 1.0
  %v892 = vadd.f32 %v828, 1.0
  %v893 = vrcp.pop %v829
  %v894 = vmul.f32 1.0, %v893
  %v895 = vrcp.pop %v830
  %v896 = vmul.f32 1.0, %v895
  %v897 = vrcp.pop %v831
  %v898 = vmul.f32 1.0, %v897
  %v899 = vrcp.pop %v832
  %v900 = vmul.f32 1.0, %v899
  %v901 = vrcp.pop %v833
  %v902 = vmul.f32 1.0, %v901
  %v903 = vrcp.pop %v834
  %v904 = vmul.f32 1.0, %v903
  %v905 = vrcp.pop %v835
  %v906 = vmul.f32 1.0, %v905
  %v907 = vrcp.pop %v836
  %v908 = vmul.f32 1.0, %v907
  %v909 = vrcp.pop %v837
  %v910 = vmul.f32 1.0, %v909
  %v911 = vrcp.pop %v838
  %v912 = vmul.f32 1.0, %v911
  %v913 = vrcp.pop %v839
  %v914 = vmul.f32 1.0, %v913
  %v915 = vrcp.pop %v840
  %v916 = vmul.f32 1.0, %v915
  %v917 = vrcp.pop %v841
  %v918 = vmul.f32 1.0, %v917
  %v919 = vrcp.pop %v842
  %v920 = vmul.f32 1.0, %v919
  %v921 = vrcp.pop %v843
  %v922 = vmul.f32 1.0, %v921
  %v923 = vrcp.pop %v844
  %v924 = vmul.f32 1.0, %v923
  %v925 = vrcp.pop %v845
  %v926 = vmul.f32 1.0, %v925
  %v927 = vrcp.pop %v846
  %v928 = vmul.f32 1.0, %v927
  %v929 = vrcp.pop %v847
  %v930 = vmul.f32 1.0, %v929
  %v931 = vrcp.pop %v848
  %v932 = vmul.f32 1.0, %v931
  %v933 = vrcp.pop %v849
  %v934 = vmul.f32 1.0, %v933
  %v935 = vrcp.pop %v850
  %v936 = vmul.f32 1.0, %v935
  %v937 = vrcp.pop %v851
  %v938 = vmul.f32 1.0, %v937
  %v939 = vrcp.pop %v852
  %v940 = vmul.f32 1.0, %v939
  %v941 = vrcp.pop %v853
  %v942 = vmul.f32 1.0, %v941
  %v943 = vrcp.pop %v854
  %v944 = vmul.f32 1.0, %v943
  %v945 = vrcp.pop %v855
  %v946 = vmul.f32 1.0, %v945
  %v947 = vrcp.pop %v856
  %v948 = vmul.f32 1.0, %v947
  %v949 = vrcp.pop %v857
  %v950 = vmul.f32 1.0, %v949
  %v951 = vrcp.pop %v858
  %v952 = vmul.f32 1.0, %v951
  %v953 = vrcp.pop %v859
  %v954 = vmul.f32 1.0, %v953
  %v955 = vrcp.pop %v860
  %v956 = vmul.f32 1.0, %v955
  %v957 = vrcp.pop %v861
  %v958 = vmul.f32 1.0, %v957
  %v959 = vrcp.pop %v862
  %v960 = vmul.f32 1.0, %v959
  %v961 = vrcp.pop %v863
  %v962 = vmul.f32 1.0, %v961
  %v963 = vrcp.pop %v864
  %v964 = vmul.f32 1.0, %v963
  %v965 = vrcp.pop %v865
  %v966 = vmul.f32 1.0, %v965
  %v967 = vrcp.pop %v866
  %v968 = vmul.f32 1.0, %v967
  %v969 = vrcp.pop %v867
  %v970 = vmul.f32 1.0, %v969
  %v971 = vrcp.pop %v868
  %v972 = vmul.f32 1.0, %v971
  %v973 = vrcp.pop %v869
  %v974 = vmul.f32 1.0, %v973
  %v975 = vrcp.pop %v870
  %v976 = vmul.f32 1.0, %v975
  %v977 = vrcp.pop %v871
  %v978 = vmul.f32 1.0, %v977
  %v979 = vrcp.pop %v872
  %v980 = vmul.f32 1.0, %v979
  %v981 = vrcp.pop %v873
  %v982 = vmul.f32 1.0, %v981
  %v983 = vrcp.pop %v874
  %v984 = vmul.f32 1.0, %v983
  %v985 = vrcp.pop %v875
  %v986 = vmul.f32 1.0, %v985
  %v987 = vrcp.pop %v876
  %v988 = vmul.f32 1.0, %v987
  %v989 = vrcp.pop %v877
  %v990 = vmul.f32 1.0, %v989
  %v991 = vrcp.pop %v878
  %v992 = vmul.f32 1.0, %v991
  %v993 = vrcp.pop %v879
  %v994 = vmul.f32 1.0, %v993
  %v995 = vrcp.pop %v880
  %v996 = vmul.f32 1.0, %v995
  %v997 = vrcp.pop %v881
  %v998 = vmul.f32 1.0, %v997
  %v999 = vrcp.pop %v882
  %v1000 = vmul.f32 1.0, %v999
  %v1001 = vrcp.pop %v883
  %v1002 = vmul.f32 1.0, %v1001
  %v1003 = vrcp.pop %v884
  %v1004 = vmul.f32 1.0, %v1003
  %v1005 = vrcp.pop %v885
  %v1006 = vmul.f32 1.0, %v1005
  %v1007 = vrcp.pop %v886
  %v1008 = vmul.f32 1.0, %v1007
  %v1009 = vrcp.pop %v887
  %v1010 = vmul.f32 1.0, %v1009
  %v1011 = vrcp.pop %v888
  %v1012 = vmul.f32 1.0, %v1011
  %v1013 = vrcp.pop %v889
  %v1014 = vmul.f32 1.0, %v1013
  %v1015 = vrcp.pop %v890
  %v1016 = vmul.f32 1.0, %v1015
  %v1017 = vrcp.pop %v891
  %v1018 = vmul.f32 1.0, %v1017
  %v1019 = vrcp.pop %v892
  %v1020 = vmul.f32 1.0, %v1019
  %v1021 = vmul.f32 %v383, %v894
  %v1022 = vmul.f32 %v386, %v896
  %v1023 = vmul.f32 %v391, %v898
  %v1024 = vmul.f32 %v394, %v900
  %v1025 = vmul.f32 %v399, %v902
  %v1026 = vmul.f32 %v402, %v904
  %v1027 = vmul.f32 %v407, %v906
  %v1028 = vmul.f32 %v410, %v908
  %v1029 = vmul.f32 %v415, %v910
  %v1030 = vmul.f32 %v418, %v912
  %v1031 = vmul.f32 %v423, %v914
  %v1032 = vmul.f32 %v426, %v916
  %v1033 = vmul.f32 %v431, %v918
  %v1034 = vmul.f32 %v434, %v920
  %v1035 = vmul.f32 %v439, %v922
  %v1036 = vmul.f32 %v442, %v924
  %v1037 = vmul.f32 %v447, %v926
  %v1038 = vmul.f32 %v450, %v928
  %v1039 = vmul.f32 %v455, %v930
  %v1040 = vmul.f32 %v458, %v932
  %v1041 = vmul.f32 %v463, %v934
  %v1042 = vmul.f32 %v466, %v936
  %v1043 = vmul.f32 %v471, %v938
  %v1044 = vmul.f32 %v474, %v940
  %v1045 = vmul.f32 %v479, %v942
  %v1046 = vmul.f32 %v482, %v944
  %v1047 = vmul.f32 %v487, %v946
  %v1048 = vmul.f32 %v490, %v948
  %v1049 = vmul.f32 %v495, %v950
  %v1050 = vmul.f32 %v498, %v952
  %v1051 = vmul.f32 %v503, %v954
  %v1052 = vmul.f32 %v506, %v956
  %v1053 = vmul.f32 %v511, %v958
  %v1054 = vmul.f32 %v514, %v960
  %v1055 = vmul.f32 %v519, %v962
  %v1056 = vmul.f32 %v522, %v964
  %v1057 = vmul.f32 %v527, %v966
  %v1058 = vmul.f32 %v530, %v968
  %v1059 = vmul.f32 %v535, %v970
  %v1060 = vmul.f32 %v538, %v972
  %v1061 = vmul.f32 %v543, %v974
  %v1062 = vmul.f32 %v546, %v976
  %v1063 = vmul.f32 %v551, %v978
  %v1064 = vmul.f32 %v554, %v980
  %v1065 = vmul.f32 %v559, %v982
  %v1066 = vmul.f32 %v562, %v984
  %v1067 = vmul.f32 %v567, %v986
  %v1068 = vmul.f32 %v570, %v988
  %v1069 = vmul.f32 %v575, %v990
  %v1070 = vmul.f32 %v578, %v992
  %v1071 = vmul.f32 %v583, %v994
  %v1072 = vmul.f32 %v586, %v996
  %v1073 = vmul.f32 %v591, %v998
  %v1074 = vmul.f32 %v594, %v1000
  %v1075 = vmul.f32 %v599, %v1002
  %v1076 = vmul.f32 %v602, %v1004
  %v1077 = vmul.f32 %v607, %v1006
  %v1078 = vmul.f32 %v610, %v1008
  %v1079 = vmul.f32 %v615, %v1010
  %v1080 = vmul.f32 %v618, %v1012
  %v1081 = vmul.f32 %v623, %v1014
  %v1082 = vmul.f32 %v626, %v1016
  %v1083 = vmul.f32 %v631, %v1018
  %v1084 = vmul.f32 %v634, %v1020
  %v1085 = vpack.c.bf16 %v1022, %v1021
  %v1086 = vpack.c.bf16 %v1024, %v1023
  %v1087 = vpack.c.bf16 %v1026, %v1025
  %v1088 = vpack.c.bf16 %v1028, %v1027
  %v1089 = vpack.c.bf16 %v1030, %v1029
  %v1090 = vpack.c.bf16 %v1032, %v1031
  %v1091 = vpack.c.bf16 %v1034, %v1033
  %v1092 = vpack.c.bf16 %v1036, %v1035
  %v1093 = vpack.c.bf16 %v1038, %v1037
  %v1094 = vpack.c.bf16 %v1040, %v1039
  %v1095 = vpack.c.bf16 %v1042, %v1041
  %v1096 = vpack.c.bf16 %v1044, %v1043
  %v1097 = vpack.c.bf16 %v1046, %v1045
  %v1098 = vpack.c.bf16 %v1048, %v1047
  %v1099 = vpack.c.bf16 %v1050, %v1049
  %v1100 = vpack.c.bf16 %v1052, %v1051
  %v1101 = vpack.c.bf16 %v1054, %v1053
  %v1102 = vpack.c.bf16 %v1056, %v1055
  %v1103 = vpack.c.bf16 %v1058, %v1057
  %v1104 = vpack.c.bf16 %v1060, %v1059
  %v1105 = vpack.c.bf16 %v1062, %v1061
  %v1106 = vpack.c.bf16 %v1064, %v1063
  %v1107 = vpack.c.bf16 %v1066, %v1065
  %v1108 = vpack.c.bf16 %v1068, %v1067
  %v1109 = vpack.c.bf16 %v1070, %v1069
  %v1110 = vpack.c.bf16 %v1072, %v1071
  %v1111 = vpack.c.bf16 %v1074, %v1073
  %v1112 = vpack.c.bf16 %v1076, %v1075
  %v1113 = vpack.c.bf16 %v1078, %v1077
  %v1114 = vpack.c.bf16 %v1080, %v1079
  %v1115 = vpack.c.bf16 %v1082, %v1081
  %v1116 = vpack.c.bf16 %v1084, %v1083
  %v1149 = vunpack.c.l.b16 %v1085
  %v1150 = vunpack.c.h.b16 %v1085
  %v1151 = vunpack.c.l.b16 %v1086
  %v1152 = vunpack.c.h.b16 %v1086
  %v1153 = vunpack.c.l.b16 %v1087
  %v1154 = vunpack.c.h.b16 %v1087
  %v1155 = vunpack.c.l.b16 %v1088
  %v1156 = vunpack.c.h.b16 %v1088
  %v1157 = vunpack.c.l.b16 %v1089
  %v1158 = vunpack.c.h.b16 %v1089
  %v1159 = vunpack.c.l.b16 %v1090
  %v1160 = vunpack.c.h.b16 %v1090
  %v1161 = vunpack.c.l.b16 %v1091
  %v1162 = vunpack.c.h.b16 %v1091
  %v1163 = vunpack.c.l.b16 %v1092
  %v1164 = vunpack.c.h.b16 %v1092
  %v1165 = vunpack.c.l.b16 %v1093
  %v1166 = vunpack.c.h.b16 %v1093
  %v1167 = vunpack.c.l.b16 %v1094
  %v1168 = vunpack.c.h.b16 %v1094
  %v1169 = vunpack.c.l.b16 %v1095
  %v1170 = vunpack.c.h.b16 %v1095
  %v1171 = vunpack.c.l.b16 %v1096
  %v1172 = vunpack.c.h.b16 %v1096
  %v1173 = vunpack.c.l.b16 %v1097
  %v1174 = vunpack.c.h.b16 %v1097
  %v1175 = vunpack.c.l.b16 %v1098
  %v1176 = vunpack.c.h.b16 %v1098
  %v1177 = vunpack.c.l.b16 %v1099
  %v1178 = vunpack.c.h.b16 %v1099
  %v1179 = vunpack.c.l.b16 %v1100
  %v1180 = vunpack.c.h.b16 %v1100
  %v1181 = vunpack.c.l.b16 %v1101
  %v1182 = vunpack.c.h.b16 %v1101
  %v1183 = vunpack.c.l.b16 %v1102
  %v1184 = vunpack.c.h.b16 %v1102
  %v1185 = vunpack.c.l.b16 %v1103
  %v1186 = vunpack.c.h.b16 %v1103
  %v1187 = vunpack.c.l.b16 %v1104
  %v1188 = vunpack.c.h.b16 %v1104
  %v1189 = vunpack.c.l.b16 %v1105
  %v1190 = vunpack.c.h.b16 %v1105
  %v1191 = vunpack.c.l.b16 %v1106
  %v1192 = vunpack.c.h.b16 %v1106
  %v1193 = vunpack.c.l.b16 %v1107
  %v1194 = vunpack.c.h.b16 %v1107
  %v1195 = vunpack.c.l.b16 %v1108
  %v1196 = vunpack.c.h.b16 %v1108
  %v1197 = vunpack.c.l.b16 %v1109
  %v1198 = vunpack.c.h.b16 %v1109
  %v1199 = vunpack.c.l.b16 %v1110
  %v1200 = vunpack.c.h.b16 %v1110
  %v1201 = vunpack.c.l.b16 %v1111
  %v1202 = vunpack.c.h.b16 %v1111
  %v1203 = vunpack.c.l.b16 %v1112
  %v1204 = vunpack.c.h.b16 %v1112
  %v1205 = vunpack.c.l.b16 %v1113
  %v1206 = vunpack.c.h.b16 %v1113
  %v1207 = vunpack.c.l.b16 %v1114
  %v1208 = vunpack.c.h.b16 %v1114
  %v1209 = vunpack.c.l.b16 %v1115
  %v1210 = vunpack.c.h.b16 %v1115
  %v1211 = vunpack.c.l.b16 %v1116
  %v1212 = vunpack.c.h.b16 %v1116
  %v1213 = vpack.c.b16 %v1149, %v1149
  %v1214 = vpack.c.b16 %v1150, %v1150
  %v1215 = vpack.c.b16 %v1151, %v1151
  %v1216 = vpack.c.b16 %v1152, %v1152
  %v1217 = vpack.c.b16 %v1153, %v1153
  %v1218 = vpack.c.b16 %v1154, %v1154
  %v1219 = vpack.c.b16 %v1155, %v1155
  %v1220 = vpack.c.b16 %v1156, %v1156
  %v1221 = vpack.c.b16 %v1157, %v1157
  %v1222 = vpack.c.b16 %v1158, %v1158
  %v1223 = vpack.c.b16 %v1159, %v1159
  %v1224 = vpack.c.b16 %v1160, %v1160
  %v1225 = vpack.c.b16 %v1161, %v1161
  %v1226 = vpack.c.b16 %v1162, %v1162
  %v1227 = vpack.c.b16 %v1163, %v1163
  %v1228 = vpack.c.b16 %v1164, %v1164
  %v1229 = vpack.c.b16 %v1165, %v1165
  %v1230 = vpack.c.b16 %v1166, %v1166
  %v1231 = vpack.c.b16 %v1167, %v1167
  %v1232 = vpack.c.b16 %v1168, %v1168
  %v1233 = vpack.c.b16 %v1169, %v1169
  %v1234 = vpack.c.b16 %v1170, %v1170
  %v1235 = vpack.c.b16 %v1171, %v1171
  %v1236 = vpack.c.b16 %v1172, %v1172
  %v1237 = vpack.c.b16 %v1173, %v1173
  %v1238 = vpack.c.b16 %v1174, %v1174
  %v1239 = vpack.c.b16 %v1175, %v1175
  %v1240 = vpack.c.b16 %v1176, %v1176
  %v1241 = vpack.c.b16 %v1177, %v1177
  %v1242 = vpack.c.b16 %v1178, %v1178
  %v1243 = vpack.c.b16 %v1179, %v1179
  %v1244 = vpack.c.b16 %v1180, %v1180
  %v1245 = vpack.c.b16 %v1181, %v1181
  %v1246 = vpack.c.b16 %v1182, %v1182
  %v1247 = vpack.c.b16 %v1183, %v1183
  %v1248 = vpack.c.b16 %v1184, %v1184
  %v1249 = vpack.c.b16 %v1185, %v1185
  %v1250 = vpack.c.b16 %v1186, %v1186
  %v1251 = vpack.c.b16 %v1187, %v1187
  %v1252 = vpack.c.b16 %v1188, %v1188
  %v1253 = vpack.c.b16 %v1189, %v1189
  %v1254 = vpack.c.b16 %v1190, %v1190
  %v1255 = vpack.c.b16 %v1191, %v1191
  %v1256 = vpack.c.b16 %v1192, %v1192
  %v1257 = vpack.c.b16 %v1193, %v1193
  %v1258 = vpack.c.b16 %v1194, %v1194
  %v1259 = vpack.c.b16 %v1195, %v1195
  %v1260 = vpack.c.b16 %v1196, %v1196
  %v1261 = vpack.c.b16 %v1197, %v1197
  %v1262 = vpack.c.b16 %v1198, %v1198
  %v1263 = vpack.c.b16 %v1199, %v1199
  %v1264 = vpack.c.b16 %v1200, %v1200
  %v1265 = vpack.c.b16 %v1201, %v1201
  %v1266 = vpack.c.b16 %v1202, %v1202
  %v1267 = vpack.c.b16 %v1203, %v1203
  %v1268 = vpack.c.b16 %v1204, %v1204
  %v1269 = vpack.c.b16 %v1205, %v1205
  %v1270 = vpack.c.b16 %v1206, %v1206
  %v1271 = vpack.c.b16 %v1207, %v1207
  %v1272 = vpack.c.b16 %v1208, %v1208
  %v1273 = vpack.c.b16 %v1209, %v1209
  %v1274 = vpack.c.b16 %v1210, %v1210
  %v1275 = vpack.c.b16 %v1211, %v1211
  %v1276 = vpack.c.b16 %v1212, %v1212
  %vm1341 = vcmask 60416
  %1342 = vst.msk [vmem:[%s3] sm:$0xf] %vm1341, %v1213
  %1343 = vst.msk [vmem:[%s3 + $0x4] sm:$0xf] %vm1341, %v1214
  %1344 = vst.msk [vmem:[%s3 + $0x8] sm:$0xf] %vm1341, %v1215
  %1345 = vst.msk [vmem:[%s3 + $0xc] sm:$0xf] %vm1341, %v1216
  %1346 = vst.msk [vmem:[%s3 + $0x10] sm:$0xf] %vm1341, %v1217
  %1347 = vst.msk [vmem:[%s3 + $0x14] sm:$0xf] %vm1341, %v1218
  %1348 = vst.msk [vmem:[%s3 + $0x18] sm:$0xf] %vm1341, %v1219
  %1349 = vst.msk [vmem:[%s3 + $0x1c] sm:$0xf] %vm1341, %v1220
  %1350 = vst.msk [vmem:[%s3 + $0x20] sm:$0xf] %vm1341, %v1221
  %1351 = vst.msk [vmem:[%s3 + $0x24] sm:$0xf] %vm1341, %v1222
  %1352 = vst.msk [vmem:[%s3 + $0x28] sm:$0xf] %vm1341, %v1223
  %1353 = vst.msk [vmem:[%s3 + $0x2c] sm:$0xf] %vm1341, %v1224
  %1354 = vst.msk [vmem:[%s3 + $0x30] sm:$0xf] %vm1341, %v1225
  %1355 = vst.msk [vmem:[%s3 + $0x34] sm:$0xf] %vm1341, %v1226
  %1356 = vst.msk [vmem:[%s3 + $0x38] sm:$0xf] %vm1341, %v1227
  %1357 = vst.msk [vmem:[%s3 + $0x3c] sm:$0xf] %vm1341, %v1228
  %1358 = vst.msk [vmem:[%s3 + $0x40] sm:$0xf] %vm1341, %v1229
  %1359 = vst.msk [vmem:[%s3 + $0x44] sm:$0xf] %vm1341, %v1230
  %1360 = vst.msk [vmem:[%s3 + $0x48] sm:$0xf] %vm1341, %v1231
  %1361 = vst.msk [vmem:[%s3 + $0x4c] sm:$0xf] %vm1341, %v1232
  %1362 = vst.msk [vmem:[%s3 + $0x50] sm:$0xf] %vm1341, %v1233
  %1363 = vst.msk [vmem:[%s3 + $0x54] sm:$0xf] %vm1341, %v1234
  %1364 = vst.msk [vmem:[%s3 + $0x58] sm:$0xf] %vm1341, %v1235
  %1365 = vst.msk [vmem:[%s3 + $0x5c] sm:$0xf] %vm1341, %v1236
  %1366 = vst.msk [vmem:[%s3 + $0x60] sm:$0xf] %vm1341, %v1237
  %1367 = vst.msk [vmem:[%s3 + $0x64] sm:$0xf] %vm1341, %v1238
  %1368 = vst.msk [vmem:[%s3 + $0x68] sm:$0xf] %vm1341, %v1239
  %1369 = vst.msk [vmem:[%s3 + $0x6c] sm:$0xf] %vm1341, %v1240
  %1370 = vst.msk [vmem:[%s3 + $0x70] sm:$0xf] %vm1341, %v1241
  %1371 = vst.msk [vmem:[%s3 + $0x74] sm:$0xf] %vm1341, %v1242
  %1372 = vst.msk [vmem:[%s3 + $0x78] sm:$0xf] %vm1341, %v1243
  %1373 = vst.msk [vmem:[%s3 + $0x7c] sm:$0xf] %vm1341, %v1244
  %1374 = vst.msk [vmem:[%s3 + $0x80] sm:$0xf] %vm1341, %v1245
  %1375 = vst.msk [vmem:[%s3 + $0x84] sm:$0xf] %vm1341, %v1246
  %1376 = vst.msk [vmem:[%s3 + $0x88] sm:$0xf] %vm1341, %v1247
  %1377 = vst.msk [vmem:[%s3 + $0x8c] sm:$0xf] %vm1341, %v1248
  %1378 = vst.msk [vmem:[%s3 + $0x90] sm:$0xf] %vm1341, %v1249
  %1379 = vst.msk [vmem:[%s3 + $0x94] sm:$0xf] %vm1341, %v1250
  %1380 = vst.msk [vmem:[%s3 + $0x98] sm:$0xf] %vm1341, %v1251
  %1381 = vst.msk [vmem:[%s3 + $0x9c] sm:$0xf] %vm1341, %v1252
  %1382 = vst.msk [vmem:[%s3 + $0xa0] sm:$0xf] %vm1341, %v1253
  %1383 = vst.msk [vmem:[%s3 + $0xa4] sm:$0xf] %vm1341, %v1254
  %1384 = vst.msk [vmem:[%s3 + $0xa8] sm:$0xf] %vm1341, %v1255
  %1385 = vst.msk [vmem:[%s3 + $0xac] sm:$0xf] %vm1341, %v1256
  %1386 = vst.msk [vmem:[%s3 + $0xb0] sm:$0xf] %vm1341, %v1257
  %1387 = vst.msk [vmem:[%s3 + $0xb4] sm:$0xf] %vm1341, %v1258
  %1388 = vst.msk [vmem:[%s3 + $0xb8] sm:$0xf] %vm1341, %v1259
  %1389 = vst.msk [vmem:[%s3 + $0xbc] sm:$0xf] %vm1341, %v1260
  %1390 = vst.msk [vmem:[%s3 + $0xc0] sm:$0xf] %vm1341, %v1261
  %1391 = vst.msk [vmem:[%s3 + $0xc4] sm:$0xf] %vm1341, %v1262
  %1392 = vst.msk [vmem:[%s3 + $0xc8] sm:$0xf] %vm1341, %v1263
  %1393 = vst.msk [vmem:[%s3 + $0xcc] sm:$0xf] %vm1341, %v1264
  %1394 = vst.msk [vmem:[%s3 + $0xd0] sm:$0xf] %vm1341, %v1265
  %1395 = vst.msk [vmem:[%s3 + $0xd4] sm:$0xf] %vm1341, %v1266
  %1396 = vst.msk [vmem:[%s3 + $0xd8] sm:$0xf] %vm1341, %v1267
  %1397 = vst.msk [vmem:[%s3 + $0xdc] sm:$0xf] %vm1341, %v1268
  %1398 = vst.msk [vmem:[%s3 + $0xe0] sm:$0xf] %vm1341, %v1269
  %1399 = vst.msk [vmem:[%s3 + $0xe4] sm:$0xf] %vm1341, %v1270
  %1400 = vst.msk [vmem:[%s3 + $0xe8] sm:$0xf] %vm1341, %v1271
  %1401 = vst.msk [vmem:[%s3 + $0xec] sm:$0xf] %vm1341, %v1272
  %1402 = vst.msk [vmem:[%s3 + $0xf0] sm:$0xf] %vm1341, %v1273
  %1403 = vst.msk [vmem:[%s3 + $0xf4] sm:$0xf] %vm1341, %v1274
  %1404 = vst.msk [vmem:[%s3 + $0xf8] sm:$0xf] %vm1341, %v1275
  %1405 = vst.msk [vmem:[%s3 + $0xfc] sm:$0xf] %vm1341, %v1276
  // Predicated region
  $region14: #{_lambda_.7} parent=0 // pred_check
    _
  $region15: #{_lambda_.7} parent=0 // pred_check_branch
    %1407 = sbr.rel (0) target = $region17
  $region16: #{_lambda_.7} parent=0 // pred_region
    _
  $region17: #{_lambda_.7} parent=0 // pred_fallthru
    _
  // Predicated region
  $region18: #{_lambda_.7} parent=0 // pred_check
    _
  $region19: #{_lambda_.7} parent=0 // pred_check_branch
    %1409 = sbr.rel (0) target = $region21
  $region20: #{_lambda_.7} parent=0 // pred_region
    _
  $region21: #{_lambda_.7} parent=0 // pred_fallthru
    _

// kernel: _lambda_.10
$region0: #{_lambda_.10}
  #allocation0 [shape = 'u32[]', space=smem, size = 0x4, offset = 0x4, fixed_abs, tag = 'smem constant byte address 0x4 - core index']
  #allocation1 [shape = 'u32[144,128]{1,0:T(1,128)}', space=vmem, size = 0x12000, scoped, tag = 'internal scratch']
  %s0 = inlined_call_operand.vmem [shape: bf16[512,8], index: 0, kind: input, shape index: {}]
  %s1 = inlined_call_operand.vmem [shape: bf16[8,32], index: 1, kind: input, shape index: {}]
  %s2 = inlined_call_operand.vmem [shape: f32[1,32], index: 2, kind: input, shape index: {}]
  %s3 = inlined_call_operand.vmem [shape: bf16[512,32], index: 3, kind: input, shape index: {}]
  %s4 = inlined_call_operand.vmem [shape: bf16[512,32], index: 4, kind: output, shape index: {}]
  %s5 = sld [smem:[#allocation0]]
  $region26: #{_lambda_.10} parent=0
    _
  %s7 = ssub.s32 1, %s5
  %s8 = scalar_select 0, %s7, %s5
  // Predicated region
  $region2: #{_lambda_.10} parent=0 // pred_check
    _
  $region3: #{_lambda_.10} parent=0 // pred_check_branch
    %10 = sbr.rel (0) target = $region5
  $region4: #{_lambda_.10} parent=0 // pred_region
    _
  $region5: #{_lambda_.10} parent=0 // pred_fallthru
    _
  // Predicated region
  $region6: #{_lambda_.10} parent=0 // pred_check
    _
  $region7: #{_lambda_.10} parent=0 // pred_check_branch
    %12 = sbr.rel (0) target = $region9
  $region8: #{_lambda_.10} parent=0 // pred_region
    _
  $region9: #{_lambda_.10} parent=0 // pred_fallthru
    _
  // Predicated region
  $region10: #{_lambda_.10} parent=0 // pred_check
    _
  $region11: #{_lambda_.10} parent=0 // pred_check_branch
    %14 = sbr.rel (0) target = $region13
  $region12: #{_lambda_.10} parent=0 // pred_region
    _
  $region13: #{_lambda_.10} parent=0 // pred_fallthru
    _
  // Predicated region
  $region14: #{_lambda_.10} parent=0 // pred_check
    _
  $region15: #{_lambda_.10} parent=0 // pred_check_branch
    %16 = sbr.rel (0) target = $region17
  $region16: #{_lambda_.10} parent=0 // pred_region
    _
  $region17: #{_lambda_.10} parent=0 // pred_fallthru
    _
  %v18 = vld [vmem:[%s0] sm:$0xf]
  %v19 = vld [vmem:[%s0 + $0x4] sm:$0xf]
  %v20 = vld [vmem:[%s0 + $0x8] sm:$0xf]
  %v21 = vld [vmem:[%s0 + $0xc] sm:$0xf]
  %v22 = vld [vmem:[%s0 + $0x10] sm:$0xf]
  %v23 = vld [vmem:[%s0 + $0x14] sm:$0xf]
  %v24 = vld [vmem:[%s0 + $0x18] sm:$0xf]
  %v25 = vld [vmem:[%s0 + $0x1c] sm:$0xf]
  %v26 = vld [vmem:[%s0 + $0x20] sm:$0xf]
  %v27 = vld [vmem:[%s0 + $0x24] sm:$0xf]
  %v28 = vld [vmem:[%s0 + $0x28] sm:$0xf]
  %v29 = vld [vmem:[%s0 + $0x2c] sm:$0xf]
  %v30 = vld [vmem:[%s0 + $0x30] sm:$0xf]
  %v31 = vld [vmem:[%s0 + $0x34] sm:$0xf]
  %v32 = vld [vmem:[%s0 + $0x38] sm:$0xf]
  %v33 = vld [vmem:[%s0 + $0x3c] sm:$0xf]
  %v34 = vld [vmem:[%s0 + $0x40] sm:$0xf]
  %v35 = vld [vmem:[%s0 + $0x44] sm:$0xf]
  %v36 = vld [vmem:[%s0 + $0x48] sm:$0xf]
  %v37 = vld [vmem:[%s0 + $0x4c] sm:$0xf]
  %v38 = vld [vmem:[%s0 + $0x50] sm:$0xf]
  %v39 = vld [vmem:[%s0 + $0x54] sm:$0xf]
  %v40 = vld [vmem:[%s0 + $0x58] sm:$0xf]
  %v41 = vld [vmem:[%s0 + $0x5c] sm:$0xf]
  %v42 = vld [vmem:[%s0 + $0x60] sm:$0xf]
  %v43 = vld [vmem:[%s0 + $0x64] sm:$0xf]
  %v44 = vld [vmem:[%s0 + $0x68] sm:$0xf]
  %v45 = vld [vmem:[%s0 + $0x6c] sm:$0xf]
  %v46 = vld [vmem:[%s0 + $0x70] sm:$0xf]
  %v47 = vld [vmem:[%s0 + $0x74] sm:$0xf]
  %v48 = vld [vmem:[%s0 + $0x78] sm:$0xf]
  %v49 = vld [vmem:[%s0 + $0x7c] sm:$0xf]
  %v50 = vld [vmem:[%s0 + $0x80] sm:$0xf]
  %v51 = vld [vmem:[%s0 + $0x84] sm:$0xf]
  %v52 = vld [vmem:[%s0 + $0x88] sm:$0xf]
  %v53 = vld [vmem:[%s0 + $0x8c] sm:$0xf]
  %v54 = vld [vmem:[%s0 + $0x90] sm:$0xf]
  %v55 = vld [vmem:[%s0 + $0x94] sm:$0xf]
  %v56 = vld [vmem:[%s0 + $0x98] sm:$0xf]
  %v57 = vld [vmem:[%s0 + $0x9c] sm:$0xf]
  %v58 = vld [vmem:[%s0 + $0xa0] sm:$0xf]
  %v59 = vld [vmem:[%s0 + $0xa4] sm:$0xf]
  %v60 = vld [vmem:[%s0 + $0xa8] sm:$0xf]
  %v61 = vld [vmem:[%s0 + $0xac] sm:$0xf]
  %v62 = vld [vmem:[%s0 + $0xb0] sm:$0xf]
  %v63 = vld [vmem:[%s0 + $0xb4] sm:$0xf]
  %v64 = vld [vmem:[%s0 + $0xb8] sm:$0xf]
  %v65 = vld [vmem:[%s0 + $0xbc] sm:$0xf]
  %v66 = vld [vmem:[%s0 + $0xc0] sm:$0xf]
  %v67 = vld [vmem:[%s0 + $0xc4] sm:$0xf]
  %v68 = vld [vmem:[%s0 + $0xc8] sm:$0xf]
  %v69 = vld [vmem:[%s0 + $0xcc] sm:$0xf]
  %v70 = vld [vmem:[%s0 + $0xd0] sm:$0xf]
  %v71 = vld [vmem:[%s0 + $0xd4] sm:$0xf]
  %v72 = vld [vmem:[%s0 + $0xd8] sm:$0xf]
  %v73 = vld [vmem:[%s0 + $0xdc] sm:$0xf]
  %v74 = vld [vmem:[%s0 + $0xe0] sm:$0xf]
  %v75 = vld [vmem:[%s0 + $0xe4] sm:$0xf]
  %v76 = vld [vmem:[%s0 + $0xe8] sm:$0xf]
  %v77 = vld [vmem:[%s0 + $0xec] sm:$0xf]
  %v78 = vld [vmem:[%s0 + $0xf0] sm:$0xf]
  %v79 = vld [vmem:[%s0 + $0xf4] sm:$0xf]
  %v80 = vld [vmem:[%s0 + $0xf8] sm:$0xf]
  %v81 = vld [vmem:[%s0 + $0xfc] sm:$0xf]
  %v82 = vld [vmem:[%s1] sm:$0xf]
  %v83 = vld [vmem:[%s2] sm:$0x1]
  %v85 = vlaneseq
  %v86 = vshrl.u32 %v85, 7
  %v87 = vsub.s32 0, %v86
  %v88 = vrot.slane %v83, %v87
  %v154 = vunpack.c.l.b16 %v18
  %v155 = vunpack.c.l.b16 %v19
  %v156 = vunpack.c.l.b16 %v20
  %v157 = vunpack.c.l.b16 %v21
  %v158 = vunpack.c.l.b16 %v22
  %v159 = vunpack.c.l.b16 %v23
  %v160 = vunpack.c.l.b16 %v24
  %v161 = vunpack.c.l.b16 %v25
  %v162 = vunpack.c.l.b16 %v26
  %v163 = vunpack.c.l.b16 %v27
  %v164 = vunpack.c.l.b16 %v28
  %v165 = vunpack.c.l.b16 %v29
  %v166 = vunpack.c.l.b16 %v30
  %v167 = vunpack.c.l.b16 %v31
  %v168 = vunpack.c.l.b16 %v32
  %v169 = vunpack.c.l.b16 %v33
  %v170 = vunpack.c.l.b16 %v34
  %v171 = vunpack.c.l.b16 %v35
  %v172 = vunpack.c.l.b16 %v36
  %v173 = vunpack.c.l.b16 %v37
  %v174 = vunpack.c.l.b16 %v38
  %v175 = vunpack.c.l.b16 %v39
  %v176 = vunpack.c.l.b16 %v40
  %v177 = vunpack.c.l.b16 %v41
  %v178 = vunpack.c.l.b16 %v42
  %v179 = vunpack.c.l.b16 %v43
  %v180 = vunpack.c.l.b16 %v44
  %v181 = vunpack.c.l.b16 %v45
  %v182 = vunpack.c.l.b16 %v46
  %v183 = vunpack.c.l.b16 %v47
  %v184 = vunpack.c.l.b16 %v48
  %v185 = vunpack.c.l.b16 %v49
  %v186 = vunpack.c.l.b16 %v50
  %v187 = vunpack.c.l.b16 %v51
  %v188 = vunpack.c.l.b16 %v52
  %v189 = vunpack.c.l.b16 %v53
  %v190 = vunpack.c.l.b16 %v54
  %v191 = vunpack.c.l.b16 %v55
  %v192 = vunpack.c.l.b16 %v56
  %v193 = vunpack.c.l.b16 %v57
  %v194 = vunpack.c.l.b16 %v58
  %v195 = vunpack.c.l.b16 %v59
  %v196 = vunpack.c.l.b16 %v60
  %v197 = vunpack.c.l.b16 %v61
  %v198 = vunpack.c.l.b16 %v62
  %v199 = vunpack.c.l.b16 %v63
  %v200 = vunpack.c.l.b16 %v64
  %v201 = vunpack.c.l.b16 %v65
  %v202 = vunpack.c.l.b16 %v66
  %v203 = vunpack.c.l.b16 %v67
  %v204 = vunpack.c.l.b16 %v68
  %v205 = vunpack.c.l.b16 %v69
  %v206 = vunpack.c.l.b16 %v70
  %v207 = vunpack.c.l.b16 %v71
  %v208 = vunpack.c.l.b16 %v72
  %v209 = vunpack.c.l.b16 %v73
  %v210 = vunpack.c.l.b16 %v74
  %v211 = vunpack.c.l.b16 %v75
  %v212 = vunpack.c.l.b16 %v76
  %v213 = vunpack.c.l.b16 %v77
  %v214 = vunpack.c.l.b16 %v78
  %v215 = vunpack.c.l.b16 %v79
  %v216 = vunpack.c.l.b16 %v80
  %v217 = vunpack.c.l.b16 %v81
  %v218 = vpack.c.b16 %v155, %v154
  %v219 = vpack.c.b16 %v157, %v156
  %v220 = vpack.c.b16 %v159, %v158
  %v221 = vpack.c.b16 %v161, %v160
  %v222 = vpack.c.b16 %v163, %v162
  %v223 = vpack.c.b16 %v165, %v164
  %v224 = vpack.c.b16 %v167, %v166
  %v225 = vpack.c.b16 %v169, %v168
  %v226 = vpack.c.b16 %v171, %v170
  %v227 = vpack.c.b16 %v173, %v172
  %v228 = vpack.c.b16 %v175, %v174
  %v229 = vpack.c.b16 %v177, %v176
  %v230 = vpack.c.b16 %v179, %v178
  %v231 = vpack.c.b16 %v181, %v180
  %v232 = vpack.c.b16 %v183, %v182
  %v233 = vpack.c.b16 %v185, %v184
  %v234 = vpack.c.b16 %v187, %v186
  %v235 = vpack.c.b16 %v189, %v188
  %v236 = vpack.c.b16 %v191, %v190
  %v237 = vpack.c.b16 %v193, %v192
  %v238 = vpack.c.b16 %v195, %v194
  %v239 = vpack.c.b16 %v197, %v196
  %v240 = vpack.c.b16 %v199, %v198
  %v241 = vpack.c.b16 %v201, %v200
  %v242 = vpack.c.b16 %v203, %v202
  %v243 = vpack.c.b16 %v205, %v204
  %v244 = vpack.c.b16 %v207, %v206
  %v245 = vpack.c.b16 %v209, %v208
  %v246 = vpack.c.b16 %v211, %v210
  %v247 = vpack.c.b16 %v213, %v212
  %v248 = vpack.c.b16 %v215, %v214
  %v249 = vpack.c.b16 %v217, %v216
  %vm250 = vcmask 64512
  %v252 = vsel %vm250, %v218, 0
  %v255 = vsel %vm250, %v219, 0
  %v258 = vsel %vm250, %v220, 0
  %v261 = vsel %vm250, %v221, 0
  %v264 = vsel %vm250, %v222, 0
  %v267 = vsel %vm250, %v223, 0
  %v270 = vsel %vm250, %v224, 0
  %v273 = vsel %vm250, %v225, 0
  %v276 = vsel %vm250, %v226, 0
  %v279 = vsel %vm250, %v227, 0
  %v282 = vsel %vm250, %v228, 0
  %v285 = vsel %vm250, %v229, 0
  %v288 = vsel %vm250, %v230, 0
  %v291 = vsel %vm250, %v231, 0
  %v294 = vsel %vm250, %v232, 0
  %v297 = vsel %vm250, %v233, 0
  %v300 = vsel %vm250, %v234, 0
  %v303 = vsel %vm250, %v235, 0
  %v306 = vsel %vm250, %v236, 0
  %v309 = vsel %vm250, %v237, 0
  %v312 = vsel %vm250, %v238, 0
  %v315 = vsel %vm250, %v239, 0
  %v318 = vsel %vm250, %v240, 0
  %v321 = vsel %vm250, %v241, 0
  %v324 = vsel %vm250, %v242, 0
  %v327 = vsel %vm250, %v243, 0
  %v330 = vsel %vm250, %v244, 0
  %v333 = vsel %vm250, %v245, 0
  %v336 = vsel %vm250, %v246, 0
  %v339 = vsel %vm250, %v247, 0
  %v342 = vsel %vm250, %v248, 0
  %v345 = vsel %vm250, %v249, 0
  %vm347 = vcmask 1043456
  %v349 = vsel %vm347, %v82, 0
  %351 = vmatprep.subr.bf16.mxu0 0
  %352 = vmatpush1.bf16.msra.mxu0 %v349
  %353 = vmatprep.subr.bf16.mxu0 0
  %354 = vmatpush1.bf16.msra.mxu0 0
  %355 = vmatprep.subr.bf16.mxu0 0
  %356 = vmatpush1.bf16.msra.mxu0 0
  %357 = vmatprep.subr.bf16.mxu0 0
  %358 = vmatpush1.bf16.msra.mxu0 0
  %359 = vmatprep.subr.bf16.mxu0 0
  %360 = vmatpush1.bf16.msra.mxu0 0
  %361 = vmatprep.subr.bf16.mxu0 0
  %362 = vmatpush1.bf16.msra.mxu0 0
  %363 = vmatprep.subr.bf16.mxu0 0
  %364 = vmatpush1.bf16.msra.mxu0 0
  %365 = vmatprep.subr.bf16.mxu0 0
  %366 = vmatpush1.bf16.msra.mxu0 0
  %367 = vmatprep.subr.bf16.mxu0 0
  %368 = vmatpush1.bf16.msra.mxu0 0
  %369 = vmatprep.subr.bf16.mxu0 0
  %370 = vmatpush1.bf16.msra.mxu0 0
  %371 = vmatprep.subr.bf16.mxu0 0
  %372 = vmatpush1.bf16.msra.mxu0 0
  %373 = vmatprep.subr.bf16.mxu0 0
  %374 = vmatpush1.bf16.msra.mxu0 0
  %375 = vmatprep.subr.bf16.mxu0 0
  %376 = vmatpush1.bf16.msra.mxu0 0
  %377 = vmatprep.subr.bf16.mxu0 0
  %378 = vmatpush1.bf16.msra.mxu0 0
  %379 = vmatprep.subr.bf16.mxu0 0
  %380 = vmatpush1.bf16.msra.mxu0 0
  %381 = vmatprep.subr.bf16.mxu0 0
  %382 = vmatpush1.bf16.msra.mxu0 0
  %383 = vmatprep.mubr.bf16.mxu0 0
  %384 = vmatmul.mubr.bf16.gmra.mrb[0].mxu0 %v252
  %v385 = vpop.f32.mrb[0].mxu0
  %v386 = vadd.f32 %v88, %v385
  %v387 = vpop.f32.mrb[0].mxu0
  %v388 = vpop.f32.mrb[0].mxu0
  %v389 = vadd.f32 %v88, %v388
  %v390 = vpop.f32.mrb[0].mxu0
  %391 = vmatprep.mubr.bf16.mxu0 0
  %392 = vmatmul.mubr.bf16.gmra.mrb[0].mxu0 %v255
  %v393 = vpop.f32.mrb[0].mxu0
  %v394 = vadd.f32 %v88, %v393
  %v395 = vpop.f32.mrb[0].mxu0
  %v396 = vpop.f32.mrb[0].mxu0
  %v397 = vadd.f32 %v88, %v396
  %v398 = vpop.f32.mrb[0].mxu0
  %399 = vmatprep.mubr.bf16.mxu0 0
  %400 = vmatmul.mubr.bf16.gmra.mrb[0].mxu0 %v258
  %v401 = vpop.f32.mrb[0].mxu0
  %v402 = vadd.f32 %v88, %v401
  %v403 = vpop.f32.mrb[0].mxu0
  %v404 = vpop.f32.mrb[0].mxu0
  %v405 = vadd.f32 %v88, %v404
  %v406 = vpop.f32.mrb[0].mxu0
  %407 = vmatprep.mubr.bf16.mxu0 0
  %408 = vmatmul.mubr.bf16.gmra.mrb[0].mxu0 %v261
  %v409 = vpop.f32.mrb[0].mxu0
  %v410 = vadd.f32 %v88, %v409
  %v411 = vpop.f32.mrb[0].mxu0
  %v412 = vpop.f32.mrb[0].mxu0
  %v413 = vadd.f32 %v88, %v412
  %v414 = vpop.f32.mrb[0].mxu0
  %415 = vmatprep.mubr.bf16.mxu0 0
  %416 = vmatmul.mubr.bf16.gmra.mrb[0].mxu0 %v264
  %v417 = vpop.f32.mrb[0].mxu0
  %v418 = vadd.f32 %v88, %v417
  %v419 = vpop.f32.mrb[0].mxu0
  %v420 = vpop.f32.mrb[0].mxu0
  %v421 = vadd.f32 %v88, %v420
  %v422 = vpop.f32.mrb[0].mxu0
  %423 = vmatprep.mubr.bf16.mxu0 0
  %424 = vmatmul.mubr.bf16.gmra.mrb[0].mxu0 %v267
  %v425 = vpop.f32.mrb[0].mxu0
  %v426 = vadd.f32 %v88, %v425
  %v427 = vpop.f32.mrb[0].mxu0
  %v428 = vpop.f32.mrb[0].mxu0
  %v429 = vadd.f32 %v88, %v428
  %v430 = vpop.f32.mrb[0].mxu0
  %431 = vmatprep.mubr.bf16.mxu0 0
  %432 = vmatmul.mubr.bf16.gmra.mrb[0].mxu0 %v270
  %v433 = vpop.f32.mrb[0].mxu0
  %v434 = vadd.f32 %v88, %v433
  %v435 = vpop.f32.mrb[0].mxu0
  %v436 = vpop.f32.mrb[0].mxu0
  %v437 = vadd.f32 %v88, %v436
  %v438 = vpop.f32.mrb[0].mxu0
  %439 = vmatprep.mubr.bf16.mxu0 0
  %440 = vmatmul.mubr.bf16.gmra.mrb[0].mxu0 %v273
  %v441 = vpop.f32.mrb[0].mxu0
  %v442 = vadd.f32 %v88, %v441
  %v443 = vpop.f32.mrb[0].mxu0
  %v444 = vpop.f32.mrb[0].mxu0
  %v445 = vadd.f32 %v88, %v444
  %v446 = vpop.f32.mrb[0].mxu0
  %447 = vmatprep.mubr.bf16.mxu0 0
  %448 = vmatmul.mubr.bf16.gmra.mrb[0].mxu0 %v276
  %v449 = vpop.f32.mrb[0].mxu0
  %v450 = vadd.f32 %v88, %v449
  %v451 = vpop.f32.mrb[0].mxu0
  %v452 = vpop.f32.mrb[0].mxu0
  %v453 = vadd.f32 %v88, %v452
  %v454 = vpop.f32.mrb[0].mxu0
  %455 = vmatprep.mubr.bf16.mxu0 0
  %456 = vmatmul.mubr.bf16.gmra.mrb[0].mxu0 %v279
  %v457 = vpop.f32.mrb[0].mxu0
  %v458 = vadd.f32 %v88, %v457
  %v459 = vpop.f32.mrb[0].mxu0
  %v460 = vpop.f32.mrb[0].mxu0
  %v461 = vadd.f32 %v88, %v460
  %v462 = vpop.f32.mrb[0].mxu0
  %463 = vmatprep.mubr.bf16.mxu0 0
  %464 = vmatmul.mubr.bf16.gmra.mrb[0].mxu0 %v282
  %v465 = vpop.f32.mrb[0].mxu0
  %v466 = vadd.f32 %v88, %v465
  %v467 = vpop.f32.mrb[0].mxu0
  %v468 = vpop.f32.mrb[0].mxu0
  %v469 = vadd.f32 %v88, %v468
  %v470 = vpop.f32.mrb[0].mxu0
  %471 = vmatprep.mubr.bf16.mxu0 0
  %472 = vmatmul.mubr.bf16.gmra.mrb[0].mxu0 %v285
  %v473 = vpop.f32.mrb[0].mxu0
  %v474 = vadd.f32 %v88, %v473
  %v475 = vpop.f32.mrb[0].mxu0
  %v476 = vpop.f32.mrb[0].mxu0
  %v477 = vadd.f32 %v88, %v476
  %v478 = vpop.f32.mrb[0].mxu0
  %479 = vmatprep.mubr.bf16.mxu0 0
  %480 = vmatmul.mubr.bf16.gmra.mrb[0].mxu0 %v288
  %v481 = vpop.f32.mrb[0].mxu0
  %v482 = vadd.f32 %v88, %v481
  %v483 = vpop.f32.mrb[0].mxu0
  %v484 = vpop.f32.mrb[0].mxu0
  %v485 = vadd.f32 %v88, %v484
  %v486 = vpop.f32.mrb[0].mxu0
  %487 = vmatprep.mubr.bf16.mxu0 0
  %488 = vmatmul.mubr.bf16.gmra.mrb[0].mxu0 %v291
  %v489 = vpop.f32.mrb[0].mxu0
  %v490 = vadd.f32 %v88, %v489
  %v491 = vpop.f32.mrb[0].mxu0
  %v492 = vpop.f32.mrb[0].mxu0
  %v493 = vadd.f32 %v88, %v492
  %v494 = vpop.f32.mrb[0].mxu0
  %495 = vmatprep.mubr.bf16.mxu0 0
  %496 = vmatmul.mubr.bf16.gmra.mrb[0].mxu0 %v294
  %v497 = vpop.f32.mrb[0].mxu0
  %v498 = vadd.f32 %v88, %v497
  %v499 = vpop.f32.mrb[0].mxu0
  %v500 = vpop.f32.mrb[0].mxu0
  %v501 = vadd.f32 %v88, %v500
  %v502 = vpop.f32.mrb[0].mxu0
  %503 = vmatprep.mubr.bf16.mxu0 0
  %504 = vmatmul.mubr.bf16.gmra.mrb[0].mxu0 %v297
  %v505 = vpop.f32.mrb[0].mxu0
  %v506 = vadd.f32 %v88, %v505
  %v507 = vpop.f32.mrb[0].mxu0
  %v508 = vpop.f32.mrb[0].mxu0
  %v509 = vadd.f32 %v88, %v508
  %v510 = vpop.f32.mrb[0].mxu0
  %511 = vmatprep.mubr.bf16.mxu0 0
  %512 = vmatmul.mubr.bf16.gmra.mrb[0].mxu0 %v300
  %v513 = vpop.f32.mrb[0].mxu0
  %v514 = vadd.f32 %v88, %v513
  %v515 = vpop.f32.mrb[0].mxu0
  %v516 = vpop.f32.mrb[0].mxu0
  %v517 = vadd.f32 %v88, %v516
  %v518 = vpop.f32.mrb[0].mxu0
  %519 = vmatprep.mubr.bf16.mxu0 0
  %520 = vmatmul.mubr.bf16.gmra.mrb[0].mxu0 %v303
  %v521 = vpop.f32.mrb[0].mxu0
  %v522 = vadd.f32 %v88, %v521
  %v523 = vpop.f32.mrb[0].mxu0
  %v524 = vpop.f32.mrb[0].mxu0
  %v525 = vadd.f32 %v88, %v524
  %v526 = vpop.f32.mrb[0].mxu0
  %527 = vmatprep.mubr.bf16.mxu0 0
  %528 = vmatmul.mubr.bf16.gmra.mrb[0].mxu0 %v306
  %v529 = vpop.f32.mrb[0].mxu0
  %v530 = vadd.f32 %v88, %v529
  %v531 = vpop.f32.mrb[0].mxu0
  %v532 = vpop.f32.mrb[0].mxu0
  %v533 = vadd.f32 %v88, %v532
  %v534 = vpop.f32.mrb[0].mxu0
  %535 = vmatprep.mubr.bf16.mxu0 0
  %536 = vmatmul.mubr.bf16.gmra.mrb[0].mxu0 %v309
  %v537 = vpop.f32.mrb[0].mxu0
  %v538 = vadd.f32 %v88, %v537
  %v539 = vpop.f32.mrb[0].mxu0
  %v540 = vpop.f32.mrb[0].mxu0
  %v541 = vadd.f32 %v88, %v540
  %v542 = vpop.f32.mrb[0].mxu0
  %543 = vmatprep.mubr.bf16.mxu0 0
  %544 = vmatmul.mubr.bf16.gmra.mrb[0].mxu0 %v312
  %v545 = vpop.f32.mrb[0].mxu0
  %v546 = vadd.f32 %v88, %v545
  %v547 = vpop.f32.mrb[0].mxu0
  %v548 = vpop.f32.mrb[0].mxu0
  %v549 = vadd.f32 %v88, %v548
  %v550 = vpop.f32.mrb[0].mxu0
  %551 = vmatprep.mubr.bf16.mxu0 0
  %552 = vmatmul.mubr.bf16.gmra.mrb[0].mxu0 %v315
  %v553 = vpop.f32.mrb[0].mxu0
  %v554 = vadd.f32 %v88, %v553
  %v555 = vpop.f32.mrb[0].mxu0
  %v556 = vpop.f32.mrb[0].mxu0
  %v557 = vadd.f32 %v88, %v556
  %v558 = vpop.f32.mrb[0].mxu0
  %559 = vmatprep.mubr.bf16.mxu0 0
  %560 = vmatmul.mubr.bf16.gmra.mrb[0].mxu0 %v318
  %v561 = vpop.f32.mrb[0].mxu0
  %v562 = vadd.f32 %v88, %v561
  %v563 = vpop.f32.mrb[0].mxu0
  %v564 = vpop.f32.mrb[0].mxu0
  %v565 = vadd.f32 %v88, %v564
  %v566 = vpop.f32.mrb[0].mxu0
  %567 = vmatprep.mubr.bf16.mxu0 0
  %568 = vmatmul.mubr.bf16.gmra.mrb[0].mxu0 %v321
  %v569 = vpop.f32.mrb[0].mxu0
  %v570 = vadd.f32 %v88, %v569
  %v571 = vpop.f32.mrb[0].mxu0
  %v572 = vpop.f32.mrb[0].mxu0
  %v573 = vadd.f32 %v88, %v572
  %v574 = vpop.f32.mrb[0].mxu0
  %575 = vmatprep.mubr.bf16.mxu0 0
  %576 = vmatmul.mubr.bf16.gmra.mrb[0].mxu0 %v324
  %v577 = vpop.f32.mrb[0].mxu0
  %v578 = vadd.f32 %v88, %v577
  %v579 = vpop.f32.mrb[0].mxu0
  %v580 = vpop.f32.mrb[0].mxu0
  %v581 = vadd.f32 %v88, %v580
  %v582 = vpop.f32.mrb[0].mxu0
  %583 = vmatprep.mubr.bf16.mxu0 0
  %584 = vmatmul.mubr.bf16.gmra.mrb[0].mxu0 %v327
  %v585 = vpop.f32.mrb[0].mxu0
  %v586 = vadd.f32 %v88, %v585
  %v587 = vpop.f32.mrb[0].mxu0
  %v588 = vpop.f32.mrb[0].mxu0
  %v589 = vadd.f32 %v88, %v588
  %v590 = vpop.f32.mrb[0].mxu0
  %591 = vmatprep.mubr.bf16.mxu0 0
  %592 = vmatmul.mubr.bf16.gmra.mrb[0].mxu0 %v330
  %v593 = vpop.f32.mrb[0].mxu0
  %v594 = vadd.f32 %v88, %v593
  %v595 = vpop.f32.mrb[0].mxu0
  %v596 = vpop.f32.mrb[0].mxu0
  %v597 = vadd.f32 %v88, %v596
  %v598 = vpop.f32.mrb[0].mxu0
  %599 = vmatprep.mubr.bf16.mxu0 0
  %600 = vmatmul.mubr.bf16.gmra.mrb[0].mxu0 %v333
  %v601 = vpop.f32.mrb[0].mxu0
  %v602 = vadd.f32 %v88, %v601
  %v603 = vpop.f32.mrb[0].mxu0
  %v604 = vpop.f32.mrb[0].mxu0
  %v605 = vadd.f32 %v88, %v604
  %v606 = vpop.f32.mrb[0].mxu0
  %607 = vmatprep.mubr.bf16.mxu0 0
  %608 = vmatmul.mubr.bf16.gmra.mrb[0].mxu0 %v336
  %v609 = vpop.f32.mrb[0].mxu0
  %v610 = vadd.f32 %v88, %v609
  %v611 = vpop.f32.mrb[0].mxu0
  %v612 = vpop.f32.mrb[0].mxu0
  %v613 = vadd.f32 %v88, %v612
  %v614 = vpop.f32.mrb[0].mxu0
  %615 = vmatprep.mubr.bf16.mxu0 0
  %616 = vmatmul.mubr.bf16.gmra.mrb[0].mxu0 %v339
  %v617 = vpop.f32.mrb[0].mxu0
  %v618 = vadd.f32 %v88, %v617
  %v619 = vpop.f32.mrb[0].mxu0
  %v620 = vpop.f32.mrb[0].mxu0
  %v621 = vadd.f32 %v88, %v620
  %v622 = vpop.f32.mrb[0].mxu0
  %623 = vmatprep.mubr.bf16.mxu0 0
  %624 = vmatmul.mubr.bf16.gmra.mrb[0].mxu0 %v342
  %v625 = vpop.f32.mrb[0].mxu0
  %v626 = vadd.f32 %v88, %v625
  %v627 = vpop.f32.mrb[0].mxu0
  %v628 = vpop.f32.mrb[0].mxu0
  %v629 = vadd.f32 %v88, %v628
  %v630 = vpop.f32.mrb[0].mxu0
  %631 = vmatprep.mubr.bf16.mxu0 0
  %632 = vmatmul.mubr.bf16.gmra.mrb[0].mxu0 %v345
  %v633 = vpop.f32.mrb[0].mxu0
  %v634 = vadd.f32 %v88, %v633
  %v635 = vpop.f32.mrb[0].mxu0
  %v636 = vpop.f32.mrb[0].mxu0
  %v637 = vadd.f32 %v88, %v636
  %v638 = vpop.f32.mrb[0].mxu0
  %639 = vdwg.mxu0
  %v640 = vld [vmem:[%s3] sm:$0xf]
  %v641 = vld [vmem:[%s3 + $0x4] sm:$0xf]
  %v642 = vld [vmem:[%s3 + $0x8] sm:$0xf]
  %v643 = vld [vmem:[%s3 + $0xc] sm:$0xf]
  %v644 = vld [vmem:[%s3 + $0x10] sm:$0xf]
  %v645 = vld [vmem:[%s3 + $0x14] sm:$0xf]
  %v646 = vld [vmem:[%s3 + $0x18] sm:$0xf]
  %v647 = vld [vmem:[%s3 + $0x1c] sm:$0xf]
  %v648 = vld [vmem:[%s3 + $0x20] sm:$0xf]
  %v649 = vld [vmem:[%s3 + $0x24] sm:$0xf]
  %v650 = vld [vmem:[%s3 + $0x28] sm:$0xf]
  %v651 = vld [vmem:[%s3 + $0x2c] sm:$0xf]
  %v652 = vld [vmem:[%s3 + $0x30] sm:$0xf]
  %v653 = vld [vmem:[%s3 + $0x34] sm:$0xf]
  %v654 = vld [vmem:[%s3 + $0x38] sm:$0xf]
  %v655 = vld [vmem:[%s3 + $0x3c] sm:$0xf]
  %v656 = vld [vmem:[%s3 + $0x40] sm:$0xf]
  %v657 = vld [vmem:[%s3 + $0x44] sm:$0xf]
  %v658 = vld [vmem:[%s3 + $0x48] sm:$0xf]
  %v659 = vld [vmem:[%s3 + $0x4c] sm:$0xf]
  %v660 = vld [vmem:[%s3 + $0x50] sm:$0xf]
  %v661 = vld [vmem:[%s3 + $0x54] sm:$0xf]
  %v662 = vld [vmem:[%s3 + $0x58] sm:$0xf]
  %v663 = vld [vmem:[%s3 + $0x5c] sm:$0xf]
  %v664 = vld [vmem:[%s3 + $0x60] sm:$0xf]
  %v665 = vld [vmem:[%s3 + $0x64] sm:$0xf]
  %v666 = vld [vmem:[%s3 + $0x68] sm:$0xf]
  %v667 = vld [vmem:[%s3 + $0x6c] sm:$0xf]
  %v668 = vld [vmem:[%s3 + $0x70] sm:$0xf]
  %v669 = vld [vmem:[%s3 + $0x74] sm:$0xf]
  %v670 = vld [vmem:[%s3 + $0x78] sm:$0xf]
  %v671 = vld [vmem:[%s3 + $0x7c] sm:$0xf]
  %v672 = vld [vmem:[%s3 + $0x80] sm:$0xf]
  %v673 = vld [vmem:[%s3 + $0x84] sm:$0xf]
  %v674 = vld [vmem:[%s3 + $0x88] sm:$0xf]
  %v675 = vld [vmem:[%s3 + $0x8c] sm:$0xf]
  %v676 = vld [vmem:[%s3 + $0x90] sm:$0xf]
  %v677 = vld [vmem:[%s3 + $0x94] sm:$0xf]
  %v678 = vld [vmem:[%s3 + $0x98] sm:$0xf]
  %v679 = vld [vmem:[%s3 + $0x9c] sm:$0xf]
  %v680 = vld [vmem:[%s3 + $0xa0] sm:$0xf]
  %v681 = vld [vmem:[%s3 + $0xa4] sm:$0xf]
  %v682 = vld [vmem:[%s3 + $0xa8] sm:$0xf]
  %v683 = vld [vmem:[%s3 + $0xac] sm:$0xf]
  %v684 = vld [vmem:[%s3 + $0xb0] sm:$0xf]
  %v685 = vld [vmem:[%s3 + $0xb4] sm:$0xf]
  %v686 = vld [vmem:[%s3 + $0xb8] sm:$0xf]
  %v687 = vld [vmem:[%s3 + $0xbc] sm:$0xf]
  %v688 = vld [vmem:[%s3 + $0xc0] sm:$0xf]
  %v689 = vld [vmem:[%s3 + $0xc4] sm:$0xf]
  %v690 = vld [vmem:[%s3 + $0xc8] sm:$0xf]
  %v691 = vld [vmem:[%s3 + $0xcc] sm:$0xf]
  %v692 = vld [vmem:[%s3 + $0xd0] sm:$0xf]
  %v693 = vld [vmem:[%s3 + $0xd4] sm:$0xf]
  %v694 = vld [vmem:[%s3 + $0xd8] sm:$0xf]
  %v695 = vld [vmem:[%s3 + $0xdc] sm:$0xf]
  %v696 = vld [vmem:[%s3 + $0xe0] sm:$0xf]
  %v697 = vld [vmem:[%s3 + $0xe4] sm:$0xf]
  %v698 = vld [vmem:[%s3 + $0xe8] sm:$0xf]
  %v699 = vld [vmem:[%s3 + $0xec] sm:$0xf]
  %v700 = vld [vmem:[%s3 + $0xf0] sm:$0xf]
  %v701 = vld [vmem:[%s3 + $0xf4] sm:$0xf]
  %v702 = vld [vmem:[%s3 + $0xf8] sm:$0xf]
  %v703 = vld [vmem:[%s3 + $0xfc] sm:$0xf]
  %v704 = vunpack.c.l.bf16 %v640
  %v705 = vunpack.c.l.bf16 %v641
  %v706 = vunpack.c.l.bf16 %v642
  %v707 = vunpack.c.l.bf16 %v643
  %v708 = vunpack.c.l.bf16 %v644
  %v709 = vunpack.c.l.bf16 %v645
  %v710 = vunpack.c.l.bf16 %v646
  %v711 = vunpack.c.l.bf16 %v647
  %v712 = vunpack.c.l.bf16 %v648
  %v713 = vunpack.c.l.bf16 %v649
  %v714 = vunpack.c.l.bf16 %v650
  %v715 = vunpack.c.l.bf16 %v651
  %v716 = vunpack.c.l.bf16 %v652
  %v717 = vunpack.c.l.bf16 %v653
  %v718 = vunpack.c.l.bf16 %v654
  %v719 = vunpack.c.l.bf16 %v655
  %v720 = vunpack.c.l.bf16 %v656
  %v721 = vunpack.c.l.bf16 %v657
  %v722 = vunpack.c.l.bf16 %v658
  %v723 = vunpack.c.l.bf16 %v659
  %v724 = vunpack.c.l.bf16 %v660
  %v725 = vunpack.c.l.bf16 %v661
  %v726 = vunpack.c.l.bf16 %v662
  %v727 = vunpack.c.l.bf16 %v663
  %v728 = vunpack.c.l.bf16 %v664
  %v729 = vunpack.c.l.bf16 %v665
  %v730 = vunpack.c.l.bf16 %v666
  %v731 = vunpack.c.l.bf16 %v667
  %v732 = vunpack.c.l.bf16 %v668
  %v733 = vunpack.c.l.bf16 %v669
  %v734 = vunpack.c.l.bf16 %v670
  %v735 = vunpack.c.l.bf16 %v671
  %v736 = vunpack.c.l.bf16 %v672
  %v737 = vunpack.c.l.bf16 %v673
  %v738 = vunpack.c.l.bf16 %v674
  %v739 = vunpack.c.l.bf16 %v675
  %v740 = vunpack.c.l.bf16 %v676
  %v741 = vunpack.c.l.bf16 %v677
  %v742 = vunpack.c.l.bf16 %v678
  %v743 = vunpack.c.l.bf16 %v679
  %v744 = vunpack.c.l.bf16 %v680
  %v745 = vunpack.c.l.bf16 %v681
  %v746 = vunpack.c.l.bf16 %v682
  %v747 = vunpack.c.l.bf16 %v683
  %v748 = vunpack.c.l.bf16 %v684
  %v749 = vunpack.c.l.bf16 %v685
  %v750 = vunpack.c.l.bf16 %v686
  %v751 = vunpack.c.l.bf16 %v687
  %v752 = vunpack.c.l.bf16 %v688
  %v753 = vunpack.c.l.bf16 %v689
  %v754 = vunpack.c.l.bf16 %v690
  %v755 = vunpack.c.l.bf16 %v691
  %v756 = vunpack.c.l.bf16 %v692
  %v757 = vunpack.c.l.bf16 %v693
  %v758 = vunpack.c.l.bf16 %v694
  %v759 = vunpack.c.l.bf16 %v695
  %v760 = vunpack.c.l.bf16 %v696
  %v761 = vunpack.c.l.bf16 %v697
  %v762 = vunpack.c.l.bf16 %v698
  %v763 = vunpack.c.l.bf16 %v699
  %v764 = vunpack.c.l.bf16 %v700
  %v765 = vunpack.c.l.bf16 %v701
  %v766 = vunpack.c.l.bf16 %v702
  %v767 = vunpack.c.l.bf16 %v703
  %v768 = vadd.f32 %v386, %v704
  %v769 = vadd.f32 %v389, %v705
  %v770 = vadd.f32 %v394, %v706
  %v771 = vadd.f32 %v397, %v707
  %v772 = vadd.f32 %v402, %v708
  %v773 = vadd.f32 %v405, %v709
  %v774 = vadd.f32 %v410, %v710
  %v775 = vadd.f32 %v413, %v711
  %v776 = vadd.f32 %v418, %v712
  %v777 = vadd.f32 %v421, %v713
  %v778 = vadd.f32 %v426, %v714
  %v779 = vadd.f32 %v429, %v715
  %v780 = vadd.f32 %v434, %v716
  %v781 = vadd.f32 %v437, %v717
  %v782 = vadd.f32 %v442, %v718
  %v783 = vadd.f32 %v445, %v719
  %v784 = vadd.f32 %v450, %v720
  %v785 = vadd.f32 %v453, %v721
  %v786 = vadd.f32 %v458, %v722
  %v787 = vadd.f32 %v461, %v723
  %v788 = vadd.f32 %v466, %v724
  %v789 = vadd.f32 %v469, %v725
  %v790 = vadd.f32 %v474, %v726
  %v791 = vadd.f32 %v477, %v727
  %v792 = vadd.f32 %v482, %v728
  %v793 = vadd.f32 %v485, %v729
  %v794 = vadd.f32 %v490, %v730
  %v795 = vadd.f32 %v493, %v731
  %v796 = vadd.f32 %v498, %v732
  %v797 = vadd.f32 %v501, %v733
  %v798 = vadd.f32 %v506, %v734
  %v799 = vadd.f32 %v509, %v735
  %v800 = vadd.f32 %v514, %v736
  %v801 = vadd.f32 %v517, %v737
  %v802 = vadd.f32 %v522, %v738
  %v803 = vadd.f32 %v525, %v739
  %v804 = vadd.f32 %v530, %v740
  %v805 = vadd.f32 %v533, %v741
  %v806 = vadd.f32 %v538, %v742
  %v807 = vadd.f32 %v541, %v743
  %v808 = vadd.f32 %v546, %v744
  %v809 = vadd.f32 %v549, %v745
  %v810 = vadd.f32 %v554, %v746
  %v811 = vadd.f32 %v557, %v747
  %v812 = vadd.f32 %v562, %v748
  %v813 = vadd.f32 %v565, %v749
  %v814 = vadd.f32 %v570, %v750
  %v815 = vadd.f32 %v573, %v751
  %v816 = vadd.f32 %v578, %v752
  %v817 = vadd.f32 %v581, %v753
  %v818 = vadd.f32 %v586, %v754
  %v819 = vadd.f32 %v589, %v755
  %v820 = vadd.f32 %v594, %v756
  %v821 = vadd.f32 %v597, %v757
  %v822 = vadd.f32 %v602, %v758
  %v823 = vadd.f32 %v605, %v759
  %v824 = vadd.f32 %v610, %v760
  %v825 = vadd.f32 %v613, %v761
  %v826 = vadd.f32 %v618, %v762
  %v827 = vadd.f32 %v621, %v763
  %v828 = vadd.f32 %v626, %v764
  %v829 = vadd.f32 %v629, %v765
  %v830 = vadd.f32 %v634, %v766
  %v831 = vadd.f32 %v637, %v767
  %v832 = vmax.f32 %v768, 0.0
  %v833 = vmax.f32 %v769, 0.0
  %v834 = vmax.f32 %v770, 0.0
  %v835 = vmax.f32 %v771, 0.0
  %v836 = vmax.f32 %v772, 0.0
  %v837 = vmax.f32 %v773, 0.0
  %v838 = vmax.f32 %v774, 0.0
  %v839 = vmax.f32 %v775, 0.0
  %v840 = vmax.f32 %v776, 0.0
  %v841 = vmax.f32 %v777, 0.0
  %v842 = vmax.f32 %v778, 0.0
  %v843 = vmax.f32 %v779, 0.0
  %v844 = vmax.f32 %v780, 0.0
  %v845 = vmax.f32 %v781, 0.0
  %v846 = vmax.f32 %v782, 0.0
  %v847 = vmax.f32 %v783, 0.0
  %v848 = vmax.f32 %v784, 0.0
  %v849 = vmax.f32 %v785, 0.0
  %v850 = vmax.f32 %v786, 0.0
  %v851 = vmax.f32 %v787, 0.0
  %v852 = vmax.f32 %v788, 0.0
  %v853 = vmax.f32 %v789, 0.0
  %v854 = vmax.f32 %v790, 0.0
  %v855 = vmax.f32 %v791, 0.0
  %v856 = vmax.f32 %v792, 0.0
  %v857 = vmax.f32 %v793, 0.0
  %v858 = vmax.f32 %v794, 0.0
  %v859 = vmax.f32 %v795, 0.0
  %v860 = vmax.f32 %v796, 0.0
  %v861 = vmax.f32 %v797, 0.0
  %v862 = vmax.f32 %v798, 0.0
  %v863 = vmax.f32 %v799, 0.0
  %v864 = vmax.f32 %v800, 0.0
  %v865 = vmax.f32 %v801, 0.0
  %v866 = vmax.f32 %v802, 0.0
  %v867 = vmax.f32 %v803, 0.0
  %v868 = vmax.f32 %v804, 0.0
  %v869 = vmax.f32 %v805, 0.0
  %v870 = vmax.f32 %v806, 0.0
  %v871 = vmax.f32 %v807, 0.0
  %v872 = vmax.f32 %v808, 0.0
  %v873 = vmax.f32 %v809, 0.0
  %v874 = vmax.f32 %v810, 0.0
  %v875 = vmax.f32 %v811, 0.0
  %v876 = vmax.f32 %v812, 0.0
  %v877 = vmax.f32 %v813, 0.0
  %v878 = vmax.f32 %v814, 0.0
  %v879 = vmax.f32 %v815, 0.0
  %v880 = vmax.f32 %v816, 0.0
  %v881 = vmax.f32 %v817, 0.0
  %v882 = vmax.f32 %v818, 0.0
  %v883 = vmax.f32 %v819, 0.0
  %v884 = vmax.f32 %v820, 0.0
  %v885 = vmax.f32 %v821, 0.0
  %v886 = vmax.f32 %v822, 0.0
  %v887 = vmax.f32 %v823, 0.0
  %v888 = vmax.f32 %v824, 0.0
  %v889 = vmax.f32 %v825, 0.0
  %v890 = vmax.f32 %v826, 0.0
  %v891 = vmax.f32 %v827, 0.0
  %v892 = vmax.f32 %v828, 0.0
  %v893 = vmax.f32 %v829, 0.0
  %v894 = vmax.f32 %v830, 0.0
  %v895 = vmax.f32 %v831, 0.0
  %v896 = vpack.c.bf16 %v833, %v832
  %v897 = vpack.c.bf16 %v835, %v834
  %v898 = vpack.c.bf16 %v837, %v836
  %v899 = vpack.c.bf16 %v839, %v838
  %v900 = vpack.c.bf16 %v841, %v840
  %v901 = vpack.c.bf16 %v843, %v842
  %v902 = vpack.c.bf16 %v845, %v844
  %v903 = vpack.c.bf16 %v847, %v846
  %v904 = vpack.c.bf16 %v849, %v848
  %v905 = vpack.c.bf16 %v851, %v850
  %v906 = vpack.c.bf16 %v853, %v852
  %v907 = vpack.c.bf16 %v855, %v854
  %v908 = vpack.c.bf16 %v857, %v856
  %v909 = vpack.c.bf16 %v859, %v858
  %v910 = vpack.c.bf16 %v861, %v860
  %v911 = vpack.c.bf16 %v863, %v862
  %v912 = vpack.c.bf16 %v865, %v864
  %v913 = vpack.c.bf16 %v867, %v866
  %v914 = vpack.c.bf16 %v869, %v868
  %v915 = vpack.c.bf16 %v871, %v870
  %v916 = vpack.c.bf16 %v873, %v872
  %v917 = vpack.c.bf16 %v875, %v874
  %v918 = vpack.c.bf16 %v877, %v876
  %v919 = vpack.c.bf16 %v879, %v878
  %v920 = vpack.c.bf16 %v881, %v880
  %v921 = vpack.c.bf16 %v883, %v882
  %v922 = vpack.c.bf16 %v885, %v884
  %v923 = vpack.c.bf16 %v887, %v886
  %v924 = vpack.c.bf16 %v889, %v888
  %v925 = vpack.c.bf16 %v891, %v890
  %v926 = vpack.c.bf16 %v893, %v892
  %v927 = vpack.c.bf16 %v895, %v894
  %v960 = vunpack.c.l.b16 %v896
  %v961 = vunpack.c.h.b16 %v896
  %v962 = vunpack.c.l.b16 %v897
  %v963 = vunpack.c.h.b16 %v897
  %v964 = vunpack.c.l.b16 %v898
  %v965 = vunpack.c.h.b16 %v898
  %v966 = vunpack.c.l.b16 %v899
  %v967 = vunpack.c.h.b16 %v899
  %v968 = vunpack.c.l.b16 %v900
  %v969 = vunpack.c.h.b16 %v900
  %v970 = vunpack.c.l.b16 %v901
  %v971 = vunpack.c.h.b16 %v901
  %v972 = vunpack.c.l.b16 %v902
  %v973 = vunpack.c.h.b16 %v902
  %v974 = vunpack.c.l.b16 %v903
  %v975 = vunpack.c.h.b16 %v903
  %v976 = vunpack.c.l.b16 %v904
  %v977 = vunpack.c.h.b16 %v904
  %v978 = vunpack.c.l.b16 %v905
  %v979 = vunpack.c.h.b16 %v905
  %v980 = vunpack.c.l.b16 %v906
  %v981 = vunpack.c.h.b16 %v906
  %v982 = vunpack.c.l.b16 %v907
  %v983 = vunpack.c.h.b16 %v907
  %v984 = vunpack.c.l.b16 %v908
  %v985 = vunpack.c.h.b16 %v908
  %v986 = vunpack.c.l.b16 %v909
  %v987 = vunpack.c.h.b16 %v909
  %v988 = vunpack.c.l.b16 %v910
  %v989 = vunpack.c.h.b16 %v910
  %v990 = vunpack.c.l.b16 %v911
  %v991 = vunpack.c.h.b16 %v911
  %v992 = vunpack.c.l.b16 %v912
  %v993 = vunpack.c.h.b16 %v912
  %v994 = vunpack.c.l.b16 %v913
  %v995 = vunpack.c.h.b16 %v913
  %v996 = vunpack.c.l.b16 %v914
  %v997 = vunpack.c.h.b16 %v914
  %v998 = vunpack.c.l.b16 %v915
  %v999 = vunpack.c.h.b16 %v915
  %v1000 = vunpack.c.l.b16 %v916
  %v1001 = vunpack.c.h.b16 %v916
  %v1002 = vunpack.c.l.b16 %v917
  %v1003 = vunpack.c.h.b16 %v917
  %v1004 = vunpack.c.l.b16 %v918
  %v1005 = vunpack.c.h.b16 %v918
  %v1006 = vunpack.c.l.b16 %v919
  %v1007 = vunpack.c.h.b16 %v919
  %v1008 = vunpack.c.l.b16 %v920
  %v1009 = vunpack.c.h.b16 %v920
  %v1010 = vunpack.c.l.b16 %v921
  %v1011 = vunpack.c.h.b16 %v921
  %v1012 = vunpack.c.l.b16 %v922
  %v1013 = vunpack.c.h.b16 %v922
  %v1014 = vunpack.c.l.b16 %v923
  %v1015 = vunpack.c.h.b16 %v923
  %v1016 = vunpack.c.l.b16 %v924
  %v1017 = vunpack.c.h.b16 %v924
  %v1018 = vunpack.c.l.b16 %v925
  %v1019 = vunpack.c.h.b16 %v925
  %v1020 = vunpack.c.l.b16 %v926
  %v1021 = vunpack.c.h.b16 %v926
  %v1022 = vunpack.c.l.b16 %v927
  %v1023 = vunpack.c.h.b16 %v927
  %v1024 = vpack.c.b16 %v960, %v960
  %v1025 = vpack.c.b16 %v961, %v961
  %v1026 = vpack.c.b16 %v962, %v962
  %v1027 = vpack.c.b16 %v963, %v963
  %v1028 = vpack.c.b16 %v964, %v964
  %v1029 = vpack.c.b16 %v965, %v965
  %v1030 = vpack.c.b16 %v966, %v966
  %v1031 = vpack.c.b16 %v967, %v967
  %v1032 = vpack.c.b16 %v968, %v968
  %v1033 = vpack.c.b16 %v969, %v969
  %v1034 = vpack.c.b16 %v970, %v970
  %v1035 = vpack.c.b16 %v971, %v971
  %v1036 = vpack.c.b16 %v972, %v972
  %v1037 = vpack.c.b16 %v973, %v973
  %v1038 = vpack.c.b16 %v974, %v974
  %v1039 = vpack.c.b16 %v975, %v975
  %v1040 = vpack.c.b16 %v976, %v976
  %v1041 = vpack.c.b16 %v977, %v977
  %v1042 = vpack.c.b16 %v978, %v978
  %v1043 = vpack.c.b16 %v979, %v979
  %v1044 = vpack.c.b16 %v980, %v980
  %v1045 = vpack.c.b16 %v981, %v981
  %v1046 = vpack.c.b16 %v982, %v982
  %v1047 = vpack.c.b16 %v983, %v983
  %v1048 = vpack.c.b16 %v984, %v984
  %v1049 = vpack.c.b16 %v985, %v985
  %v1050 = vpack.c.b16 %v986, %v986
  %v1051 = vpack.c.b16 %v987, %v987
  %v1052 = vpack.c.b16 %v988, %v988
  %v1053 = vpack.c.b16 %v989, %v989
  %v1054 = vpack.c.b16 %v990, %v990
  %v1055 = vpack.c.b16 %v991, %v991
  %v1056 = vpack.c.b16 %v992, %v992
  %v1057 = vpack.c.b16 %v993, %v993
  %v1058 = vpack.c.b16 %v994, %v994
  %v1059 = vpack.c.b16 %v995, %v995
  %v1060 = vpack.c.b16 %v996, %v996
  %v1061 = vpack.c.b16 %v997, %v997
  %v1062 = vpack.c.b16 %v998, %v998
  %v1063 = vpack.c.b16 %v999, %v999
  %v1064 = vpack.c.b16 %v1000, %v1000
  %v1065 = vpack.c.b16 %v1001, %v1001
  %v1066 = vpack.c.b16 %v1002, %v1002
  %v1067 = vpack.c.b16 %v1003, %v1003
  %v1068 = vpack.c.b16 %v1004, %v1004
  %v1069 = vpack.c.b16 %v1005, %v1005
  %v1070 = vpack.c.b16 %v1006, %v1006
  %v1071 = vpack.c.b16 %v1007, %v1007
  %v1072 = vpack.c.b16 %v1008, %v1008
  %v1073 = vpack.c.b16 %v1009, %v1009
  %v1074 = vpack.c.b16 %v1010, %v1010
  %v1075 = vpack.c.b16 %v1011, %v1011
  %v1076 = vpack.c.b16 %v1012, %v1012
  %v1077 = vpack.c.b16 %v1013, %v1013
  %v1078 = vpack.c.b16 %v1014, %v1014
  %v1079 = vpack.c.b16 %v1015, %v1015
  %v1080 = vpack.c.b16 %v1016, %v1016
  %v1081 = vpack.c.b16 %v1017, %v1017
  %v1082 = vpack.c.b16 %v1018, %v1018
  %v1083 = vpack.c.b16 %v1019, %v1019
  %v1084 = vpack.c.b16 %v1020, %v1020
  %v1085 = vpack.c.b16 %v1021, %v1021
  %v1086 = vpack.c.b16 %v1022, %v1022
  %v1087 = vpack.c.b16 %v1023, %v1023
  %vm1152 = vcmask 257024
  %1153 = vst.msk [vmem:[%s4] sm:$0xf] %vm1152, %v1024
  %1154 = vst.msk [vmem:[%s4 + $0x4] sm:$0xf] %vm1152, %v1025
  %1155 = vst.msk [vmem:[%s4 + $0x8] sm:$0xf] %vm1152, %v1026
  %1156 = vst.msk [vmem:[%s4 + $0xc] sm:$0xf] %vm1152, %v1027
  %1157 = vst.msk [vmem:[%s4 + $0x10] sm:$0xf] %vm1152, %v1028
  %1158 = vst.msk [vmem:[%s4 + $0x14] sm:$0xf] %vm1152, %v1029
  %1159 = vst.msk [vmem:[%s4 + $0x18] sm:$0xf] %vm1152, %v1030
  %1160 = vst.msk [vmem:[%s4 + $0x1c] sm:$0xf] %vm1152, %v1031
  %1161 = vst.msk [vmem:[%s4 + $0x20] sm:$0xf] %vm1152, %v1032
  %1162 = vst.msk [vmem:[%s4 + $0x24] sm:$0xf] %vm1152, %v1033
  %1163 = vst.msk [vmem:[%s4 + $0x28] sm:$0xf] %vm1152, %v1034
  %1164 = vst.msk [vmem:[%s4 + $0x2c] sm:$0xf] %vm1152, %v1035
  %1165 = vst.msk [vmem:[%s4 + $0x30] sm:$0xf] %vm1152, %v1036
  %1166 = vst.msk [vmem:[%s4 + $0x34] sm:$0xf] %vm1152, %v1037
  %1167 = vst.msk [vmem:[%s4 + $0x38] sm:$0xf] %vm1152, %v1038
  %1168 = vst.msk [vmem:[%s4 + $0x3c] sm:$0xf] %vm1152, %v1039
  %1169 = vst.msk [vmem:[%s4 + $0x40] sm:$0xf] %vm1152, %v1040
  %1170 = vst.msk [vmem:[%s4 + $0x44] sm:$0xf] %vm1152, %v1041
  %1171 = vst.msk [vmem:[%s4 + $0x48] sm:$0xf] %vm1152, %v1042
  %1172 = vst.msk [vmem:[%s4 + $0x4c] sm:$0xf] %vm1152, %v1043
  %1173 = vst.msk [vmem:[%s4 + $0x50] sm:$0xf] %vm1152, %v1044
  %1174 = vst.msk [vmem:[%s4 + $0x54] sm:$0xf] %vm1152, %v1045
  %1175 = vst.msk [vmem:[%s4 + $0x58] sm:$0xf] %vm1152, %v1046
  %1176 = vst.msk [vmem:[%s4 + $0x5c] sm:$0xf] %vm1152, %v1047
  %1177 = vst.msk [vmem:[%s4 + $0x60] sm:$0xf] %vm1152, %v1048
  %1178 = vst.msk [vmem:[%s4 + $0x64] sm:$0xf] %vm1152, %v1049
  %1179 = vst.msk [vmem:[%s4 + $0x68] sm:$0xf] %vm1152, %v1050
  %1180 = vst.msk [vmem:[%s4 + $0x6c] sm:$0xf] %vm1152, %v1051
  %1181 = vst.msk [vmem:[%s4 + $0x70] sm:$0xf] %vm1152, %v1052
  %1182 = vst.msk [vmem:[%s4 + $0x74] sm:$0xf] %vm1152, %v1053
  %1183 = vst.msk [vmem:[%s4 + $0x78] sm:$0xf] %vm1152, %v1054
  %1184 = vst.msk [vmem:[%s4 + $0x7c] sm:$0xf] %vm1152, %v1055
  %1185 = vst.msk [vmem:[%s4 + $0x80] sm:$0xf] %vm1152, %v1056
  %1186 = vst.msk [vmem:[%s4 + $0x84] sm:$0xf] %vm1152, %v1057
  %1187 = vst.msk [vmem:[%s4 + $0x88] sm:$0xf] %vm1152, %v1058
  %1188 = vst.msk [vmem:[%s4 + $0x8c] sm:$0xf] %vm1152, %v1059
  %1189 = vst.msk [vmem:[%s4 + $0x90] sm:$0xf] %vm1152, %v1060
  %1190 = vst.msk [vmem:[%s4 + $0x94] sm:$0xf] %vm1152, %v1061
  %1191 = vst.msk [vmem:[%s4 + $0x98] sm:$0xf] %vm1152, %v1062
  %1192 = vst.msk [vmem:[%s4 + $0x9c] sm:$0xf] %vm1152, %v1063
  %1193 = vst.msk [vmem:[%s4 + $0xa0] sm:$0xf] %vm1152, %v1064
  %1194 = vst.msk [vmem:[%s4 + $0xa4] sm:$0xf] %vm1152, %v1065
  %1195 = vst.msk [vmem:[%s4 + $0xa8] sm:$0xf] %vm1152, %v1066
  %1196 = vst.msk [vmem:[%s4 + $0xac] sm:$0xf] %vm1152, %v1067
  %1197 = vst.msk [vmem:[%s4 + $0xb0] sm:$0xf] %vm1152, %v1068
  %1198 = vst.msk [vmem:[%s4 + $0xb4] sm:$0xf] %vm1152, %v1069
  %1199 = vst.msk [vmem:[%s4 + $0xb8] sm:$0xf] %vm1152, %v1070
  %1200 = vst.msk [vmem:[%s4 + $0xbc] sm:$0xf] %vm1152, %v1071
  %1201 = vst.msk [vmem:[%s4 + $0xc0] sm:$0xf] %vm1152, %v1072
  %1202 = vst.msk [vmem:[%s4 + $0xc4] sm:$0xf] %vm1152, %v1073
  %1203 = vst.msk [vmem:[%s4 + $0xc8] sm:$0xf] %vm1152, %v1074
  %1204 = vst.msk [vmem:[%s4 + $0xcc] sm:$0xf] %vm1152, %v1075
  %1205 = vst.msk [vmem:[%s4 + $0xd0] sm:$0xf] %vm1152, %v1076
  %1206 = vst.msk [vmem:[%s4 + $0xd4] sm:$0xf] %vm1152, %v1077
  %1207 = vst.msk [vmem:[%s4 + $0xd8] sm:$0xf] %vm1152, %v1078
  %1208 = vst.msk [vmem:[%s4 + $0xdc] sm:$0xf] %vm1152, %v1079
  %1209 = vst.msk [vmem:[%s4 + $0xe0] sm:$0xf] %vm1152, %v1080
  %1210 = vst.msk [vmem:[%s4 + $0xe4] sm:$0xf] %vm1152, %v1081
  %1211 = vst.msk [vmem:[%s4 + $0xe8] sm:$0xf] %vm1152, %v1082
  %1212 = vst.msk [vmem:[%s4 + $0xec] sm:$0xf] %vm1152, %v1083
  %1213 = vst.msk [vmem:[%s4 + $0xf0] sm:$0xf] %vm1152, %v1084
  %1214 = vst.msk [vmem:[%s4 + $0xf4] sm:$0xf] %vm1152, %v1085
  %1215 = vst.msk [vmem:[%s4 + $0xf8] sm:$0xf] %vm1152, %v1086
  %1216 = vst.msk [vmem:[%s4 + $0xfc] sm:$0xf] %vm1152, %v1087
  // Predicated region
  $region18: #{_lambda_.10} parent=0 // pred_check
    _
  $region19: #{_lambda_.10} parent=0 // pred_check_branch
    %1218 = sbr.rel (0) target = $region21
  $region20: #{_lambda_.10} parent=0 // pred_region
    _
  $region21: #{_lambda_.10} parent=0 // pred_fallthru
    _
  // Predicated region
  $region22: #{_lambda_.10} parent=0 // pred_check
    _
  $region23: #{_lambda_.10} parent=0 // pred_check_branch
    %1220 = sbr.rel (0) target = $region25
  $region24: #{_lambda_.10} parent=0 // pred_region
    _
  $region25: #{_lambda_.10} parent=0 // pred_fallthru
    _

// kernel: _lambda_.11
$region0: #{_lambda_.11}
  #allocation0 [shape = 'u32[]', space=smem, size = 0x4, offset = 0x4, fixed_abs, tag = 'smem constant byte address 0x4 - core index']
  #allocation1 [shape = 'u32[144,128]{1,0:T(1,128)}', space=vmem, size = 0x12000, scoped, tag = 'internal scratch']
  %s0 = inlined_call_operand.vmem [shape: bf16[512,32], index: 0, kind: input, shape index: {}]
  %s1 = inlined_call_operand.vmem [shape: bf16[32,8], index: 1, kind: input, shape index: {}]
  %s2 = inlined_call_operand.vmem [shape: f32[1,8], index: 2, kind: input, shape index: {}]
  %s3 = inlined_call_operand.vmem [shape: bf16[512,8], index: 3, kind: output, shape index: {}]
  %s4 = sld [smem:[#allocation0]]
  $region22: #{_lambda_.11} parent=0
    _
  %s6 = ssub.s32 1, %s4
  %s7 = scalar_select 0, %s6, %s4
  // Predicated region
  $region2: #{_lambda_.11} parent=0 // pred_check
    _
  $region3: #{_lambda_.11} parent=0 // pred_check_branch
    %9 = sbr.rel (0) target = $region5
  $region4: #{_lambda_.11} parent=0 // pred_region
    _
  $region5: #{_lambda_.11} parent=0 // pred_fallthru
    _
  // Predicated region
  $region6: #{_lambda_.11} parent=0 // pred_check
    _
  $region7: #{_lambda_.11} parent=0 // pred_check_branch
    %11 = sbr.rel (0) target = $region9
  $region8: #{_lambda_.11} parent=0 // pred_region
    _
  $region9: #{_lambda_.11} parent=0 // pred_fallthru
    _
  // Predicated region
  $region10: #{_lambda_.11} parent=0 // pred_check
    _
  $region11: #{_lambda_.11} parent=0 // pred_check_branch
    %13 = sbr.rel (0) target = $region13
  $region12: #{_lambda_.11} parent=0 // pred_region
    _
  $region13: #{_lambda_.11} parent=0 // pred_fallthru
    _
  %v15 = vld [vmem:[%s0] sm:$0xf]
  %v16 = vld [vmem:[%s0 + $0x4] sm:$0xf]
  %v17 = vld [vmem:[%s0 + $0x8] sm:$0xf]
  %v18 = vld [vmem:[%s0 + $0xc] sm:$0xf]
  %v19 = vld [vmem:[%s0 + $0x10] sm:$0xf]
  %v20 = vld [vmem:[%s0 + $0x14] sm:$0xf]
  %v21 = vld [vmem:[%s0 + $0x18] sm:$0xf]
  %v22 = vld [vmem:[%s0 + $0x1c] sm:$0xf]
  %v23 = vld [vmem:[%s0 + $0x20] sm:$0xf]
  %v24 = vld [vmem:[%s0 + $0x24] sm:$0xf]
  %v25 = vld [vmem:[%s0 + $0x28] sm:$0xf]
  %v26 = vld [vmem:[%s0 + $0x2c] sm:$0xf]
  %v27 = vld [vmem:[%s0 + $0x30] sm:$0xf]
  %v28 = vld [vmem:[%s0 + $0x34] sm:$0xf]
  %v29 = vld [vmem:[%s0 + $0x38] sm:$0xf]
  %v30 = vld [vmem:[%s0 + $0x3c] sm:$0xf]
  %v31 = vld [vmem:[%s0 + $0x40] sm:$0xf]
  %v32 = vld [vmem:[%s0 + $0x44] sm:$0xf]
  %v33 = vld [vmem:[%s0 + $0x48] sm:$0xf]
  %v34 = vld [vmem:[%s0 + $0x4c] sm:$0xf]
  %v35 = vld [vmem:[%s0 + $0x50] sm:$0xf]
  %v36 = vld [vmem:[%s0 + $0x54] sm:$0xf]
  %v37 = vld [vmem:[%s0 + $0x58] sm:$0xf]
  %v38 = vld [vmem:[%s0 + $0x5c] sm:$0xf]
  %v39 = vld [vmem:[%s0 + $0x60] sm:$0xf]
  %v40 = vld [vmem:[%s0 + $0x64] sm:$0xf]
  %v41 = vld [vmem:[%s0 + $0x68] sm:$0xf]
  %v42 = vld [vmem:[%s0 + $0x6c] sm:$0xf]
  %v43 = vld [vmem:[%s0 + $0x70] sm:$0xf]
  %v44 = vld [vmem:[%s0 + $0x74] sm:$0xf]
  %v45 = vld [vmem:[%s0 + $0x78] sm:$0xf]
  %v46 = vld [vmem:[%s0 + $0x7c] sm:$0xf]
  %v47 = vld [vmem:[%s0 + $0x80] sm:$0xf]
  %v48 = vld [vmem:[%s0 + $0x84] sm:$0xf]
  %v49 = vld [vmem:[%s0 + $0x88] sm:$0xf]
  %v50 = vld [vmem:[%s0 + $0x8c] sm:$0xf]
  %v51 = vld [vmem:[%s0 + $0x90] sm:$0xf]
  %v52 = vld [vmem:[%s0 + $0x94] sm:$0xf]
  %v53 = vld [vmem:[%s0 + $0x98] sm:$0xf]
  %v54 = vld [vmem:[%s0 + $0x9c] sm:$0xf]
  %v55 = vld [vmem:[%s0 + $0xa0] sm:$0xf]
  %v56 = vld [vmem:[%s0 + $0xa4] sm:$0xf]
  %v57 = vld [vmem:[%s0 + $0xa8] sm:$0xf]
  %v58 = vld [vmem:[%s0 + $0xac] sm:$0xf]
  %v59 = vld [vmem:[%s0 + $0xb0] sm:$0xf]
  %v60 = vld [vmem:[%s0 + $0xb4] sm:$0xf]
  %v61 = vld [vmem:[%s0 + $0xb8] sm:$0xf]
  %v62 = vld [vmem:[%s0 + $0xbc] sm:$0xf]
  %v63 = vld [vmem:[%s0 + $0xc0] sm:$0xf]
  %v64 = vld [vmem:[%s0 + $0xc4] sm:$0xf]
  %v65 = vld [vmem:[%s0 + $0xc8] sm:$0xf]
  %v66 = vld [vmem:[%s0 + $0xcc] sm:$0xf]
  %v67 = vld [vmem:[%s0 + $0xd0] sm:$0xf]
  %v68 = vld [vmem:[%s0 + $0xd4] sm:$0xf]
  %v69 = vld [vmem:[%s0 + $0xd8] sm:$0xf]
  %v70 = vld [vmem:[%s0 + $0xdc] sm:$0xf]
  %v71 = vld [vmem:[%s0 + $0xe0] sm:$0xf]
  %v72 = vld [vmem:[%s0 + $0xe4] sm:$0xf]
  %v73 = vld [vmem:[%s0 + $0xe8] sm:$0xf]
  %v74 = vld [vmem:[%s0 + $0xec] sm:$0xf]
  %v75 = vld [vmem:[%s0 + $0xf0] sm:$0xf]
  %v76 = vld [vmem:[%s0 + $0xf4] sm:$0xf]
  %v77 = vld [vmem:[%s0 + $0xf8] sm:$0xf]
  %v78 = vld [vmem:[%s0 + $0xfc] sm:$0xf]
  %v79 = vld [vmem:[%s1] sm:$0xf]
  %v80 = vld [vmem:[%s1 + $0x4] sm:$0xf]
  %v81 = vld [vmem:[%s1 + $0x8] sm:$0xf]
  %v82 = vld [vmem:[%s1 + $0xc] sm:$0xf]
  %v83 = vld [vmem:[%s2] sm:$0x1]
  %v85 = vlaneseq
  %v86 = vshrl.u32 %v85, 7
  %v87 = vsub.s32 0, %v86
  %v88 = vrot.slane %v83, %v87
  %v154 = vunpack.c.l.b16 %v15
  %v155 = vunpack.c.l.b16 %v16
  %v156 = vunpack.c.l.b16 %v17
  %v157 = vunpack.c.l.b16 %v18
  %v158 = vunpack.c.l.b16 %v19
  %v159 = vunpack.c.l.b16 %v20
  %v160 = vunpack.c.l.b16 %v21
  %v161 = vunpack.c.l.b16 %v22
  %v162 = vunpack.c.l.b16 %v23
  %v163 = vunpack.c.l.b16 %v24
  %v164 = vunpack.c.l.b16 %v25
  %v165 = vunpack.c.l.b16 %v26
  %v166 = vunpack.c.l.b16 %v27
  %v167 = vunpack.c.l.b16 %v28
  %v168 = vunpack.c.l.b16 %v29
  %v169 = vunpack.c.l.b16 %v30
  %v170 = vunpack.c.l.b16 %v31
  %v171 = vunpack.c.l.b16 %v32
  %v172 = vunpack.c.l.b16 %v33
  %v173 = vunpack.c.l.b16 %v34
  %v174 = vunpack.c.l.b16 %v35
  %v175 = vunpack.c.l.b16 %v36
  %v176 = vunpack.c.l.b16 %v37
  %v177 = vunpack.c.l.b16 %v38
  %v178 = vunpack.c.l.b16 %v39
  %v179 = vunpack.c.l.b16 %v40
  %v180 = vunpack.c.l.b16 %v41
  %v181 = vunpack.c.l.b16 %v42
  %v182 = vunpack.c.l.b16 %v43
  %v183 = vunpack.c.l.b16 %v44
  %v184 = vunpack.c.l.b16 %v45
  %v185 = vunpack.c.l.b16 %v46
  %v186 = vunpack.c.l.b16 %v47
  %v187 = vunpack.c.l.b16 %v48
  %v188 = vunpack.c.l.b16 %v49
  %v189 = vunpack.c.l.b16 %v50
  %v190 = vunpack.c.l.b16 %v51
  %v191 = vunpack.c.l.b16 %v52
  %v192 = vunpack.c.l.b16 %v53
  %v193 = vunpack.c.l.b16 %v54
  %v194 = vunpack.c.l.b16 %v55
  %v195 = vunpack.c.l.b16 %v56
  %v196 = vunpack.c.l.b16 %v57
  %v197 = vunpack.c.l.b16 %v58
  %v198 = vunpack.c.l.b16 %v59
  %v199 = vunpack.c.l.b16 %v60
  %v200 = vunpack.c.l.b16 %v61
  %v201 = vunpack.c.l.b16 %v62
  %v202 = vunpack.c.l.b16 %v63
  %v203 = vunpack.c.l.b16 %v64
  %v204 = vunpack.c.l.b16 %v65
  %v205 = vunpack.c.l.b16 %v66
  %v206 = vunpack.c.l.b16 %v67
  %v207 = vunpack.c.l.b16 %v68
  %v208 = vunpack.c.l.b16 %v69
  %v209 = vunpack.c.l.b16 %v70
  %v210 = vunpack.c.l.b16 %v71
  %v211 = vunpack.c.l.b16 %v72
  %v212 = vunpack.c.l.b16 %v73
  %v213 = vunpack.c.l.b16 %v74
  %v214 = vunpack.c.l.b16 %v75
  %v215 = vunpack.c.l.b16 %v76
  %v216 = vunpack.c.l.b16 %v77
  %v217 = vunpack.c.l.b16 %v78
  %v218 = vpack.c.b16 %v155, %v154
  %v219 = vpack.c.b16 %v157, %v156
  %v220 = vpack.c.b16 %v159, %v158
  %v221 = vpack.c.b16 %v161, %v160
  %v222 = vpack.c.b16 %v163, %v162
  %v223 = vpack.c.b16 %v165, %v164
  %v224 = vpack.c.b16 %v167, %v166
  %v225 = vpack.c.b16 %v169, %v168
  %v226 = vpack.c.b16 %v171, %v170
  %v227 = vpack.c.b16 %v173, %v172
  %v228 = vpack.c.b16 %v175, %v174
  %v229 = vpack.c.b16 %v177, %v176
  %v230 = vpack.c.b16 %v179, %v178
  %v231 = vpack.c.b16 %v181, %v180
  %v232 = vpack.c.b16 %v183, %v182
  %v233 = vpack.c.b16 %v185, %v184
  %v234 = vpack.c.b16 %v187, %v186
  %v235 = vpack.c.b16 %v189, %v188
  %v236 = vpack.c.b16 %v191, %v190
  %v237 = vpack.c.b16 %v193, %v192
  %v238 = vpack.c.b16 %v195, %v194
  %v239 = vpack.c.b16 %v197, %v196
  %v240 = vpack.c.b16 %v199, %v198
  %v241 = vpack.c.b16 %v201, %v200
  %v242 = vpack.c.b16 %v203, %v202
  %v243 = vpack.c.b16 %v205, %v204
  %v244 = vpack.c.b16 %v207, %v206
  %v245 = vpack.c.b16 %v209, %v208
  %v246 = vpack.c.b16 %v211, %v210
  %v247 = vpack.c.b16 %v213, %v212
  %v248 = vpack.c.b16 %v215, %v214
  %v249 = vpack.c.b16 %v217, %v216
  %v254 = vunpack.c.l.b16 %v79
  %v255 = vunpack.c.l.b16 %v80
  %v256 = vunpack.c.l.b16 %v81
  %v257 = vunpack.c.l.b16 %v82
  %v258 = vpack.c.b16 %v255, %v254
  %v259 = vpack.c.b16 %v257, %v256
  %vm262 = vcmask 261120
  %v264 = vsel %vm262, %v218, 0
  %v267 = vsel %vm262, %v219, 0
  %v270 = vsel %vm262, %v220, 0
  %v273 = vsel %vm262, %v221, 0
  %v276 = vsel %vm262, %v222, 0
  %v279 = vsel %vm262, %v223, 0
  %v282 = vsel %vm262, %v224, 0
  %v285 = vsel %vm262, %v225, 0
  %v288 = vsel %vm262, %v226, 0
  %v291 = vsel %vm262, %v227, 0
  %v294 = vsel %vm262, %v228, 0
  %v297 = vsel %vm262, %v229, 0
  %v300 = vsel %vm262, %v230, 0
  %v303 = vsel %vm262, %v231, 0
  %v306 = vsel %vm262, %v232, 0
  %v309 = vsel %vm262, %v233, 0
  %v312 = vsel %vm262, %v234, 0
  %v315 = vsel %vm262, %v235, 0
  %v318 = vsel %vm262, %v236, 0
  %v321 = vsel %vm262, %v237, 0
  %v324 = vsel %vm262, %v238, 0
  %v327 = vsel %vm262, %v239, 0
  %v330 = vsel %vm262, %v240, 0
  %v333 = vsel %vm262, %v241, 0
  %v336 = vsel %vm262, %v242, 0
  %v339 = vsel %vm262, %v243, 0
  %v342 = vsel %vm262, %v244, 0
  %v345 = vsel %vm262, %v245, 0
  %v348 = vsel %vm262, %v246, 0
  %v351 = vsel %vm262, %v247, 0
  %v354 = vsel %vm262, %v248, 0
  %v357 = vsel %vm262, %v249, 0
  %359 = vmatprep.subr.bf16.mxu0 0
  %360 = vmatpush1.bf16.msra.mxu0 %v258
  %361 = vmatprep.subr.bf16.mxu0 0
  %362 = vmatpush1.bf16.msra.mxu0 %v259
  %363 = vmatprep.subr.bf16.mxu0 0
  %364 = vmatpush1.bf16.msra.mxu0 0
  %365 = vmatprep.subr.bf16.mxu0 0
  %366 = vmatpush1.bf16.msra.mxu0 0
  %367 = vmatprep.subr.bf16.mxu0 0
  %368 = vmatpush1.bf16.msra.mxu0 0
  %369 = vmatprep.subr.bf16.mxu0 0
  %370 = vmatpush1.bf16.msra.mxu0 0
  %371 = vmatprep.subr.bf16.mxu0 0
  %372 = vmatpush1.bf16.msra.mxu0 0
  %373 = vmatprep.subr.bf16.mxu0 0
  %374 = vmatpush1.bf16.msra.mxu0 0
  %375 = vmatprep.subr.bf16.mxu0 0
  %376 = vmatpush1.bf16.msra.mxu0 0
  %377 = vmatprep.subr.bf16.mxu0 0
  %378 = vmatpush1.bf16.msra.mxu0 0
  %379 = vmatprep.subr.bf16.mxu0 0
  %380 = vmatpush1.bf16.msra.mxu0 0
  %381 = vmatprep.subr.bf16.mxu0 0
  %382 = vmatpush1.bf16.msra.mxu0 0
  %383 = vmatprep.subr.bf16.mxu0 0
  %384 = vmatpush1.bf16.msra.mxu0 0
  %385 = vmatprep.subr.bf16.mxu0 0
  %386 = vmatpush1.bf16.msra.mxu0 0
  %387 = vmatprep.subr.bf16.mxu0 0
  %388 = vmatpush1.bf16.msra.mxu0 0
  %389 = vmatprep.subr.bf16.mxu0 0
  %390 = vmatpush1.bf16.msra.mxu0 0
  %391 = vmatprep.mubr.bf16.mxu0 0
  %392 = vmatmul.mubr.bf16.gmra.mrb[0].mxu0 %v264
  %v393 = vpop.f32.mrb[0].mxu0
  %v394 = vadd.f32 %v88, %v393
  %v395 = vpop.f32.mrb[0].mxu0
  %v396 = vpop.f32.mrb[0].mxu0
  %v397 = vadd.f32 %v88, %v396
  %v398 = vpop.f32.mrb[0].mxu0
  %399 = vmatprep.mubr.bf16.mxu0 0
  %400 = vmatmul.mubr.bf16.gmra.mrb[0].mxu0 %v267
  %v401 = vpop.f32.mrb[0].mxu0
  %v402 = vadd.f32 %v88, %v401
  %v403 = vpop.f32.mrb[0].mxu0
  %v404 = vpop.f32.mrb[0].mxu0
  %v405 = vadd.f32 %v88, %v404
  %v406 = vpop.f32.mrb[0].mxu0
  %407 = vmatprep.mubr.bf16.mxu0 0
  %408 = vmatmul.mubr.bf16.gmra.mrb[0].mxu0 %v270
  %v409 = vpop.f32.mrb[0].mxu0
  %v410 = vadd.f32 %v88, %v409
  %v411 = vpop.f32.mrb[0].mxu0
  %v412 = vpop.f32.mrb[0].mxu0
  %v413 = vadd.f32 %v88, %v412
  %v414 = vpop.f32.mrb[0].mxu0
  %415 = vmatprep.mubr.bf16.mxu0 0
  %416 = vmatmul.mubr.bf16.gmra.mrb[0].mxu0 %v273
  %v417 = vpop.f32.mrb[0].mxu0
  %v418 = vadd.f32 %v88, %v417
  %v419 = vpop.f32.mrb[0].mxu0
  %v420 = vpop.f32.mrb[0].mxu0
  %v421 = vadd.f32 %v88, %v420
  %v422 = vpop.f32.mrb[0].mxu0
  %423 = vmatprep.mubr.bf16.mxu0 0
  %424 = vmatmul.mubr.bf16.gmra.mrb[0].mxu0 %v276
  %v425 = vpop.f32.mrb[0].mxu0
  %v426 = vadd.f32 %v88, %v425
  %v427 = vpop.f32.mrb[0].mxu0
  %v428 = vpop.f32.mrb[0].mxu0
  %v429 = vadd.f32 %v88, %v428
  %v430 = vpop.f32.mrb[0].mxu0
  %431 = vmatprep.mubr.bf16.mxu0 0
  %432 = vmatmul.mubr.bf16.gmra.mrb[0].mxu0 %v279
  %v433 = vpop.f32.mrb[0].mxu0
  %v434 = vadd.f32 %v88, %v433
  %v435 = vpop.f32.mrb[0].mxu0
  %v436 = vpop.f32.mrb[0].mxu0
  %v437 = vadd.f32 %v88, %v436
  %v438 = vpop.f32.mrb[0].mxu0
  %439 = vmatprep.mubr.bf16.mxu0 0
  %440 = vmatmul.mubr.bf16.gmra.mrb[0].mxu0 %v282
  %v441 = vpop.f32.mrb[0].mxu0
  %v442 = vadd.f32 %v88, %v441
  %v443 = vpop.f32.mrb[0].mxu0
  %v444 = vpop.f32.mrb[0].mxu0
  %v445 = vadd.f32 %v88, %v444
  %v446 = vpop.f32.mrb[0].mxu0
  %447 = vmatprep.mubr.bf16.mxu0 0
  %448 = vmatmul.mubr.bf16.gmra.mrb[0].mxu0 %v285
  %v449 = vpop.f32.mrb[0].mxu0
  %v450 = vadd.f32 %v88, %v449
  %v451 = vpop.f32.mrb[0].mxu0
  %v452 = vpop.f32.mrb[0].mxu0
  %v453 = vadd.f32 %v88, %v452
  %v454 = vpop.f32.mrb[0].mxu0
  %455 = vmatprep.mubr.bf16.mxu0 0
  %456 = vmatmul.mubr.bf16.gmra.mrb[0].mxu0 %v288
  %v457 = vpop.f32.mrb[0].mxu0
  %v458 = vadd.f32 %v88, %v457
  %v459 = vpop.f32.mrb[0].mxu0
  %v460 = vpop.f32.mrb[0].mxu0
  %v461 = vadd.f32 %v88, %v460
  %v462 = vpop.f32.mrb[0].mxu0
  %463 = vmatprep.mubr.bf16.mxu0 0
  %464 = vmatmul.mubr.bf16.gmra.mrb[0].mxu0 %v291
  %v465 = vpop.f32.mrb[0].mxu0
  %v466 = vadd.f32 %v88, %v465
  %v467 = vpop.f32.mrb[0].mxu0
  %v468 = vpop.f32.mrb[0].mxu0
  %v469 = vadd.f32 %v88, %v468
  %v470 = vpop.f32.mrb[0].mxu0
  %471 = vmatprep.mubr.bf16.mxu0 0
  %472 = vmatmul.mubr.bf16.gmra.mrb[0].mxu0 %v294
  %v473 = vpop.f32.mrb[0].mxu0
  %v474 = vadd.f32 %v88, %v473
  %v475 = vpop.f32.mrb[0].mxu0
  %v476 = vpop.f32.mrb[0].mxu0
  %v477 = vadd.f32 %v88, %v476
  %v478 = vpop.f32.mrb[0].mxu0
  %479 = vmatprep.mubr.bf16.mxu0 0
  %480 = vmatmul.mubr.bf16.gmra.mrb[0].mxu0 %v297
  %v481 = vpop.f32.mrb[0].mxu0
  %v482 = vadd.f32 %v88, %v481
  %v483 = vpop.f32.mrb[0].mxu0
  %v484 = vpop.f32.mrb[0].mxu0
  %v485 = vadd.f32 %v88, %v484
  %v486 = vpop.f32.mrb[0].mxu0
  %487 = vmatprep.mubr.bf16.mxu0 0
  %488 = vmatmul.mubr.bf16.gmra.mrb[0].mxu0 %v300
  %v489 = vpop.f32.mrb[0].mxu0
  %v490 = vadd.f32 %v88, %v489
  %v491 = vpop.f32.mrb[0].mxu0
  %v492 = vpop.f32.mrb[0].mxu0
  %v493 = vadd.f32 %v88, %v492
  %v494 = vpop.f32.mrb[0].mxu0
  %495 = vmatprep.mubr.bf16.mxu0 0
  %496 = vmatmul.mubr.bf16.gmra.mrb[0].mxu0 %v303
  %v497 = vpop.f32.mrb[0].mxu0
  %v498 = vadd.f32 %v88, %v497
  %v499 = vpop.f32.mrb[0].mxu0
  %v500 = vpop.f32.mrb[0].mxu0
  %v501 = vadd.f32 %v88, %v500
  %v502 = vpop.f32.mrb[0].mxu0
  %503 = vmatprep.mubr.bf16.mxu0 0
  %504 = vmatmul.mubr.bf16.gmra.mrb[0].mxu0 %v306
  %v505 = vpop.f32.mrb[0].mxu0
  %v506 = vadd.f32 %v88, %v505
  %v507 = vpop.f32.mrb[0].mxu0
  %v508 = vpop.f32.mrb[0].mxu0
  %v509 = vadd.f32 %v88, %v508
  %v510 = vpop.f32.mrb[0].mxu0
  %511 = vmatprep.mubr.bf16.mxu0 0
  %512 = vmatmul.mubr.bf16.gmra.mrb[0].mxu0 %v309
  %v513 = vpop.f32.mrb[0].mxu0
  %v514 = vadd.f32 %v88, %v513
  %v515 = vpop.f32.mrb[0].mxu0
  %v516 = vpop.f32.mrb[0].mxu0
  %v517 = vadd.f32 %v88, %v516
  %v518 = vpop.f32.mrb[0].mxu0
  %519 = vmatprep.mubr.bf16.mxu0 0
  %520 = vmatmul.mubr.bf16.gmra.mrb[0].mxu0 %v312
  %v521 = vpop.f32.mrb[0].mxu0
  %v522 = vadd.f32 %v88, %v521
  %v523 = vpop.f32.mrb[0].mxu0
  %v524 = vpop.f32.mrb[0].mxu0
  %v525 = vadd.f32 %v88, %v524
  %v526 = vpop.f32.mrb[0].mxu0
  %527 = vmatprep.mubr.bf16.mxu0 0
  %528 = vmatmul.mubr.bf16.gmra.mrb[0].mxu0 %v315
  %v529 = vpop.f32.mrb[0].mxu0
  %v530 = vadd.f32 %v88, %v529
  %v531 = vpop.f32.mrb[0].mxu0
  %v532 = vpop.f32.mrb[0].mxu0
  %v533 = vadd.f32 %v88, %v532
  %v534 = vpop.f32.mrb[0].mxu0
  %535 = vmatprep.mubr.bf16.mxu0 0
  %536 = vmatmul.mubr.bf16.gmra.mrb[0].mxu0 %v318
  %v537 = vpop.f32.mrb[0].mxu0
  %v538 = vadd.f32 %v88, %v537
  %v539 = vpop.f32.mrb[0].mxu0
  %v540 = vpop.f32.mrb[0].mxu0
  %v541 = vadd.f32 %v88, %v540
  %v542 = vpop.f32.mrb[0].mxu0
  %543 = vmatprep.mubr.bf16.mxu0 0
  %544 = vmatmul.mubr.bf16.gmra.mrb[0].mxu0 %v321
  %v545 = vpop.f32.mrb[0].mxu0
  %v546 = vadd.f32 %v88, %v545
  %v547 = vpop.f32.mrb[0].mxu0
  %v548 = vpop.f32.mrb[0].mxu0
  %v549 = vadd.f32 %v88, %v548
  %v550 = vpop.f32.mrb[0].mxu0
  %551 = vmatprep.mubr.bf16.mxu0 0
  %552 = vmatmul.mubr.bf16.gmra.mrb[0].mxu0 %v324
  %v553 = vpop.f32.mrb[0].mxu0
  %v554 = vadd.f32 %v88, %v553
  %v555 = vpop.f32.mrb[0].mxu0
  %v556 = vpop.f32.mrb[0].mxu0
  %v557 = vadd.f32 %v88, %v556
  %v558 = vpop.f32.mrb[0].mxu0
  %559 = vmatprep.mubr.bf16.mxu0 0
  %560 = vmatmul.mubr.bf16.gmra.mrb[0].mxu0 %v327
  %v561 = vpop.f32.mrb[0].mxu0
  %v562 = vadd.f32 %v88, %v561
  %v563 = vpop.f32.mrb[0].mxu0
  %v564 = vpop.f32.mrb[0].mxu0
  %v565 = vadd.f32 %v88, %v564
  %v566 = vpop.f32.mrb[0].mxu0
  %567 = vmatprep.mubr.bf16.mxu0 0
  %568 = vmatmul.mubr.bf16.gmra.mrb[0].mxu0 %v330
  %v569 = vpop.f32.mrb[0].mxu0
  %v570 = vadd.f32 %v88, %v569
  %v571 = vpop.f32.mrb[0].mxu0
  %v572 = vpop.f32.mrb[0].mxu0
  %v573 = vadd.f32 %v88, %v572
  %v574 = vpop.f32.mrb[0].mxu0
  %575 = vmatprep.mubr.bf16.mxu0 0
  %576 = vmatmul.mubr.bf16.gmra.mrb[0].mxu0 %v333
  %v577 = vpop.f32.mrb[0].mxu0
  %v578 = vadd.f32 %v88, %v577
  %v579 = vpop.f32.mrb[0].mxu0
  %v580 = vpop.f32.mrb[0].mxu0
  %v581 = vadd.f32 %v88, %v580
  %v582 = vpop.f32.mrb[0].mxu0
  %583 = vmatprep.mubr.bf16.mxu0 0
  %584 = vmatmul.mubr.bf16.gmra.mrb[0].mxu0 %v336
  %v585 = vpop.f32.mrb[0].mxu0
  %v586 = vadd.f32 %v88, %v585
  %v587 = vpop.f32.mrb[0].mxu0
  %v588 = vpop.f32.mrb[0].mxu0
  %v589 = vadd.f32 %v88, %v588
  %v590 = vpop.f32.mrb[0].mxu0
  %591 = vmatprep.mubr.bf16.mxu0 0
  %592 = vmatmul.mubr.bf16.gmra.mrb[0].mxu0 %v339
  %v593 = vpop.f32.mrb[0].mxu0
  %v594 = vadd.f32 %v88, %v593
  %v595 = vpop.f32.mrb[0].mxu0
  %v596 = vpop.f32.mrb[0].mxu0
  %v597 = vadd.f32 %v88, %v596
  %v598 = vpop.f32.mrb[0].mxu0
  %599 = vmatprep.mubr.bf16.mxu0 0
  %600 = vmatmul.mubr.bf16.gmra.mrb[0].mxu0 %v342
  %v601 = vpop.f32.mrb[0].mxu0
  %v602 = vadd.f32 %v88, %v601
  %v603 = vpop.f32.mrb[0].mxu0
  %v604 = vpop.f32.mrb[0].mxu0
  %v605 = vadd.f32 %v88, %v604
  %v606 = vpop.f32.mrb[0].mxu0
  %607 = vmatprep.mubr.bf16.mxu0 0
  %608 = vmatmul.mubr.bf16.gmra.mrb[0].mxu0 %v345
  %v609 = vpop.f32.mrb[0].mxu0
  %v610 = vadd.f32 %v88, %v609
  %v611 = vpop.f32.mrb[0].mxu0
  %v612 = vpop.f32.mrb[0].mxu0
  %v613 = vadd.f32 %v88, %v612
  %v614 = vpop.f32.mrb[0].mxu0
  %615 = vmatprep.mubr.bf16.mxu0 0
  %616 = vmatmul.mubr.bf16.gmra.mrb[0].mxu0 %v348
  %v617 = vpop.f32.mrb[0].mxu0
  %v618 = vadd.f32 %v88, %v617
  %v619 = vpop.f32.mrb[0].mxu0
  %v620 = vpop.f32.mrb[0].mxu0
  %v621 = vadd.f32 %v88, %v620
  %v622 = vpop.f32.mrb[0].mxu0
  %623 = vmatprep.mubr.bf16.mxu0 0
  %624 = vmatmul.mubr.bf16.gmra.mrb[0].mxu0 %v351
  %v625 = vpop.f32.mrb[0].mxu0
  %v626 = vadd.f32 %v88, %v625
  %v627 = vpop.f32.mrb[0].mxu0
  %v628 = vpop.f32.mrb[0].mxu0
  %v629 = vadd.f32 %v88, %v628
  %v630 = vpop.f32.mrb[0].mxu0
  %631 = vmatprep.mubr.bf16.mxu0 0
  %632 = vmatmul.mubr.bf16.gmra.mrb[0].mxu0 %v354
  %v633 = vpop.f32.mrb[0].mxu0
  %v634 = vadd.f32 %v88, %v633
  %v635 = vpop.f32.mrb[0].mxu0
  %v636 = vpop.f32.mrb[0].mxu0
  %v637 = vadd.f32 %v88, %v636
  %v638 = vpop.f32.mrb[0].mxu0
  %639 = vmatprep.mubr.bf16.mxu0 0
  %640 = vmatmul.mubr.bf16.gmra.mrb[0].mxu0 %v357
  %v641 = vpop.f32.mrb[0].mxu0
  %v642 = vadd.f32 %v88, %v641
  %v643 = vpop.f32.mrb[0].mxu0
  %v644 = vpop.f32.mrb[0].mxu0
  %v645 = vadd.f32 %v88, %v644
  %v646 = vpop.f32.mrb[0].mxu0
  %647 = vdwg.mxu0
  %v648 = vxor.u32 %v394, 2147483648
  %v649 = vxor.u32 %v397, 2147483648
  %v650 = vxor.u32 %v402, 2147483648
  %v651 = vxor.u32 %v405, 2147483648
  %v652 = vxor.u32 %v410, 2147483648
  %v653 = vxor.u32 %v413, 2147483648
  %v654 = vxor.u32 %v418, 2147483648
  %v655 = vxor.u32 %v421, 2147483648
  %v656 = vxor.u32 %v426, 2147483648
  %v657 = vxor.u32 %v429, 2147483648
  %v658 = vxor.u32 %v434, 2147483648
  %v659 = vxor.u32 %v437, 2147483648
  %v660 = vxor.u32 %v442, 2147483648
  %v661 = vxor.u32 %v445, 2147483648
  %v662 = vxor.u32 %v450, 2147483648
  %v663 = vxor.u32 %v453, 2147483648
  %v664 = vxor.u32 %v458, 2147483648
  %v665 = vxor.u32 %v461, 2147483648
  %v666 = vxor.u32 %v466, 2147483648
  %v667 = vxor.u32 %v469, 2147483648
  %v668 = vxor.u32 %v474, 2147483648
  %v669 = vxor.u32 %v477, 2147483648
  %v670 = vxor.u32 %v482, 2147483648
  %v671 = vxor.u32 %v485, 2147483648
  %v672 = vxor.u32 %v490, 2147483648
  %v673 = vxor.u32 %v493, 2147483648
  %v674 = vxor.u32 %v498, 2147483648
  %v675 = vxor.u32 %v501, 2147483648
  %v676 = vxor.u32 %v506, 2147483648
  %v677 = vxor.u32 %v509, 2147483648
  %v678 = vxor.u32 %v514, 2147483648
  %v679 = vxor.u32 %v517, 2147483648
  %v680 = vxor.u32 %v522, 2147483648
  %v681 = vxor.u32 %v525, 2147483648
  %v682 = vxor.u32 %v530, 2147483648
  %v683 = vxor.u32 %v533, 2147483648
  %v684 = vxor.u32 %v538, 2147483648
  %v685 = vxor.u32 %v541, 2147483648
  %v686 = vxor.u32 %v546, 2147483648
  %v687 = vxor.u32 %v549, 2147483648
  %v688 = vxor.u32 %v554, 2147483648
  %v689 = vxor.u32 %v557, 2147483648
  %v690 = vxor.u32 %v562, 2147483648
  %v691 = vxor.u32 %v565, 2147483648
  %v692 = vxor.u32 %v570, 2147483648
  %v693 = vxor.u32 %v573, 2147483648
  %v694 = vxor.u32 %v578, 2147483648
  %v695 = vxor.u32 %v581, 2147483648
  %v696 = vxor.u32 %v586, 2147483648
  %v697 = vxor.u32 %v589, 2147483648
  %v698 = vxor.u32 %v594, 2147483648
  %v699 = vxor.u32 %v597, 2147483648
  %v700 = vxor.u32 %v602, 2147483648
  %v701 = vxor.u32 %v605, 2147483648
  %v702 = vxor.u32 %v610, 2147483648
  %v703 = vxor.u32 %v613, 2147483648
  %v704 = vxor.u32 %v618, 2147483648
  %v705 = vxor.u32 %v621, 2147483648
  %v706 = vxor.u32 %v626, 2147483648
  %v707 = vxor.u32 %v629, 2147483648
  %v708 = vxor.u32 %v634, 2147483648
  %v709 = vxor.u32 %v637, 2147483648
  %v710 = vxor.u32 %v642, 2147483648
  %v711 = vxor.u32 %v645, 2147483648
  %v712 = vmul.f32 %v648, 1.442695
  %v713 = vpow.pop %v712
  %v714 = vmul.f32 %v649, 1.442695
  %v715 = vpow.pop %v714
  %v716 = vmul.f32 %v650, 1.442695
  %v717 = vpow.pop %v716
  %v718 = vmul.f32 %v651, 1.442695
  %v719 = vpow.pop %v718
  %v720 = vmul.f32 %v652, 1.442695
  %v721 = vpow.pop %v720
  %v722 = vmul.f32 %v653, 1.442695
  %v723 = vpow.pop %v722
  %v724 = vmul.f32 %v654, 1.442695
  %v725 = vpow.pop %v724
  %v726 = vmul.f32 %v655, 1.442695
  %v727 = vpow.pop %v726
  %v728 = vmul.f32 %v656, 1.442695
  %v729 = vpow.pop %v728
  %v730 = vmul.f32 %v657, 1.442695
  %v731 = vpow.pop %v730
  %v732 = vmul.f32 %v658, 1.442695
  %v733 = vpow.pop %v732
  %v734 = vmul.f32 %v659, 1.442695
  %v735 = vpow.pop %v734
  %v736 = vmul.f32 %v660, 1.442695
  %v737 = vpow.pop %v736
  %v738 = vmul.f32 %v661, 1.442695
  %v739 = vpow.pop %v738
  %v740 = vmul.f32 %v662, 1.442695
  %v741 = vpow.pop %v740
  %v742 = vmul.f32 %v663, 1.442695
  %v743 = vpow.pop %v742
  %v744 = vmul.f32 %v664, 1.442695
  %v745 = vpow.pop %v744
  %v746 = vmul.f32 %v665, 1.442695
  %v747 = vpow.pop %v746
  %v748 = vmul.f32 %v666, 1.442695
  %v749 = vpow.pop %v748
  %v750 = vmul.f32 %v667, 1.442695
  %v751 = vpow.pop %v750
  %v752 = vmul.f32 %v668, 1.442695
  %v753 = vpow.pop %v752
  %v754 = vmul.f32 %v669, 1.442695
  %v755 = vpow.pop %v754
  %v756 = vmul.f32 %v670, 1.442695
  %v757 = vpow.pop %v756
  %v758 = vmul.f32 %v671, 1.442695
  %v759 = vpow.pop %v758
  %v760 = vmul.f32 %v672, 1.442695
  %v761 = vpow.pop %v760
  %v762 = vmul.f32 %v673, 1.442695
  %v763 = vpow.pop %v762
  %v764 = vmul.f32 %v674, 1.442695
  %v765 = vpow.pop %v764
  %v766 = vmul.f32 %v675, 1.442695
  %v767 = vpow.pop %v766
  %v768 = vmul.f32 %v676, 1.442695
  %v769 = vpow.pop %v768
  %v770 = vmul.f32 %v677, 1.442695
  %v771 = vpow.pop %v770
  %v772 = vmul.f32 %v678, 1.442695
  %v773 = vpow.pop %v772
  %v774 = vmul.f32 %v679, 1.442695
  %v775 = vpow.pop %v774
  %v776 = vmul.f32 %v680, 1.442695
  %v777 = vpow.pop %v776
  %v778 = vmul.f32 %v681, 1.442695
  %v779 = vpow.pop %v778
  %v780 = vmul.f32 %v682, 1.442695
  %v781 = vpow.pop %v780
  %v782 = vmul.f32 %v683, 1.442695
  %v783 = vpow.pop %v782
  %v784 = vmul.f32 %v684, 1.442695
  %v785 = vpow.pop %v784
  %v786 = vmul.f32 %v685, 1.442695
  %v787 = vpow.pop %v786
  %v788 = vmul.f32 %v686, 1.442695
  %v789 = vpow.pop %v788
  %v790 = vmul.f32 %v687, 1.442695
  %v791 = vpow.pop %v790
  %v792 = vmul.f32 %v688, 1.442695
  %v793 = vpow.pop %v792
  %v794 = vmul.f32 %v689, 1.442695
  %v795 = vpow.pop %v794
  %v796 = vmul.f32 %v690, 1.442695
  %v797 = vpow.pop %v796
  %v798 = vmul.f32 %v691, 1.442695
  %v799 = vpow.pop %v798
  %v800 = vmul.f32 %v692, 1.442695
  %v801 = vpow.pop %v800
  %v802 = vmul.f32 %v693, 1.442695
  %v803 = vpow.pop %v802
  %v804 = vmul.f32 %v694, 1.442695
  %v805 = vpow.pop %v804
  %v806 = vmul.f32 %v695, 1.442695
  %v807 = vpow.pop %v806
  %v808 = vmul.f32 %v696, 1.442695
  %v809 = vpow.pop %v808
  %v810 = vmul.f32 %v697, 1.442695
  %v811 = vpow.pop %v810
  %v812 = vmul.f32 %v698, 1.442695
  %v813 = vpow.pop %v812
  %v814 = vmul.f32 %v699, 1.442695
  %v815 = vpow.pop %v814
  %v816 = vmul.f32 %v700, 1.442695
  %v817 = vpow.pop %v816
  %v818 = vmul.f32 %v701, 1.442695
  %v819 = vpow.pop %v818
  %v820 = vmul.f32 %v702, 1.442695
  %v821 = vpow.pop %v820
  %v822 = vmul.f32 %v703, 1.442695
  %v823 = vpow.pop %v822
  %v824 = vmul.f32 %v704, 1.442695
  %v825 = vpow.pop %v824
  %v826 = vmul.f32 %v705, 1.442695
  %v827 = vpow.pop %v826
  %v828 = vmul.f32 %v706, 1.442695
  %v829 = vpow.pop %v828
  %v830 = vmul.f32 %v707, 1.442695
  %v831 = vpow.pop %v830
  %v832 = vmul.f32 %v708, 1.442695
  %v833 = vpow.pop %v832
  %v834 = vmul.f32 %v709, 1.442695
  %v835 = vpow.pop %v834
  %v836 = vmul.f32 %v710, 1.442695
  %v837 = vpow.pop %v836
  %v838 = vmul.f32 %v711, 1.442695
  %v839 = vpow.pop %v838
  %v840 = vadd.f32 %v713, 1.0
  %v841 = vadd.f32 %v715, 1.0
  %v842 = vadd.f32 %v717, 1.0
  %v843 = vadd.f32 %v719, 1.0
  %v844 = vadd.f32 %v721, 1.0
  %v845 = vadd.f32 %v723, 1.0
  %v846 = vadd.f32 %v725, 1.0
  %v847 = vadd.f32 %v727, 1.0
  %v848 = vadd.f32 %v729, 1.0
  %v849 = vadd.f32 %v731, 1.0
  %v850 = vadd.f32 %v733, 1.0
  %v851 = vadd.f32 %v735, 1.0
  %v852 = vadd.f32 %v737, 1.0
  %v853 = vadd.f32 %v739, 1.0
  %v854 = vadd.f32 %v741, 1.0
  %v855 = vadd.f32 %v743, 1.0
  %v856 = vadd.f32 %v745, 1.0
  %v857 = vadd.f32 %v747, 1.0
  %v858 = vadd.f32 %v749, 1.0
  %v859 = vadd.f32 %v751, 1.0
  %v860 = vadd.f32 %v753, 1.0
  %v861 = vadd.f32 %v755, 1.0
  %v862 = vadd.f32 %v757, 1.0
  %v863 = vadd.f32 %v759, 1.0
  %v864 = vadd.f32 %v761, 1.0
  %v865 = vadd.f32 %v763, 1.0
  %v866 = vadd.f32 %v765, 1.0
  %v867 = vadd.f32 %v767, 1.0
  %v868 = vadd.f32 %v769, 1.0
  %v869 = vadd.f32 %v771, 1.0
  %v870 = vadd.f32 %v773, 1.0
  %v871 = vadd.f32 %v775, 1.0
  %v872 = vadd.f32 %v777, 1.0
  %v873 = vadd.f32 %v779, 1.0
  %v874 = vadd.f32 %v781, 1.0
  %v875 = vadd.f32 %v783, 1.0
  %v876 = vadd.f32 %v785, 1.0
  %v877 = vadd.f32 %v787, 1.0
  %v878 = vadd.f32 %v789, 1.0
  %v879 = vadd.f32 %v791, 1.0
  %v880 = vadd.f32 %v793, 1.0
  %v881 = vadd.f32 %v795, 1.0
  %v882 = vadd.f32 %v797, 1.0
  %v883 = vadd.f32 %v799, 1.0
  %v884 = vadd.f32 %v801, 1.0
  %v885 = vadd.f32 %v803, 1.0
  %v886 = vadd.f32 %v805, 1.0
  %v887 = vadd.f32 %v807, 1.0
  %v888 = vadd.f32 %v809, 1.0
  %v889 = vadd.f32 %v811, 1.0
  %v890 = vadd.f32 %v813, 1.0
  %v891 = vadd.f32 %v815, 1.0
  %v892 = vadd.f32 %v817, 1.0
  %v893 = vadd.f32 %v819, 1.0
  %v894 = vadd.f32 %v821, 1.0
  %v895 = vadd.f32 %v823, 1.0
  %v896 = vadd.f32 %v825, 1.0
  %v897 = vadd.f32 %v827, 1.0
  %v898 = vadd.f32 %v829, 1.0
  %v899 = vadd.f32 %v831, 1.0
  %v900 = vadd.f32 %v833, 1.0
  %v901 = vadd.f32 %v835, 1.0
  %v902 = vadd.f32 %v837, 1.0
  %v903 = vadd.f32 %v839, 1.0
  %v904 = vrcp.pop %v840
  %v905 = vmul.f32 1.0, %v904
  %v906 = vrcp.pop %v841
  %v907 = vmul.f32 1.0, %v906
  %v908 = vrcp.pop %v842
  %v909 = vmul.f32 1.0, %v908
  %v910 = vrcp.pop %v843
  %v911 = vmul.f32 1.0, %v910
  %v912 = vrcp.pop %v844
  %v913 = vmul.f32 1.0, %v912
  %v914 = vrcp.pop %v845
  %v915 = vmul.f32 1.0, %v914
  %v916 = vrcp.pop %v846
  %v917 = vmul.f32 1.0, %v916
  %v918 = vrcp.pop %v847
  %v919 = vmul.f32 1.0, %v918
  %v920 = vrcp.pop %v848
  %v921 = vmul.f32 1.0, %v920
  %v922 = vrcp.pop %v849
  %v923 = vmul.f32 1.0, %v922
  %v924 = vrcp.pop %v850
  %v925 = vmul.f32 1.0, %v924
  %v926 = vrcp.pop %v851
  %v927 = vmul.f32 1.0, %v926
  %v928 = vrcp.pop %v852
  %v929 = vmul.f32 1.0, %v928
  %v930 = vrcp.pop %v853
  %v931 = vmul.f32 1.0, %v930
  %v932 = vrcp.pop %v854
  %v933 = vmul.f32 1.0, %v932
  %v934 = vrcp.pop %v855
  %v935 = vmul.f32 1.0, %v934
  %v936 = vrcp.pop %v856
  %v937 = vmul.f32 1.0, %v936
  %v938 = vrcp.pop %v857
  %v939 = vmul.f32 1.0, %v938
  %v940 = vrcp.pop %v858
  %v941 = vmul.f32 1.0, %v940
  %v942 = vrcp.pop %v859
  %v943 = vmul.f32 1.0, %v942
  %v944 = vrcp.pop %v860
  %v945 = vmul.f32 1.0, %v944
  %v946 = vrcp.pop %v861
  %v947 = vmul.f32 1.0, %v946
  %v948 = vrcp.pop %v862
  %v949 = vmul.f32 1.0, %v948
  %v950 = vrcp.pop %v863
  %v951 = vmul.f32 1.0, %v950
  %v952 = vrcp.pop %v864
  %v953 = vmul.f32 1.0, %v952
  %v954 = vrcp.pop %v865
  %v955 = vmul.f32 1.0, %v954
  %v956 = vrcp.pop %v866
  %v957 = vmul.f32 1.0, %v956
  %v958 = vrcp.pop %v867
  %v959 = vmul.f32 1.0, %v958
  %v960 = vrcp.pop %v868
  %v961 = vmul.f32 1.0, %v960
  %v962 = vrcp.pop %v869
  %v963 = vmul.f32 1.0, %v962
  %v964 = vrcp.pop %v870
  %v965 = vmul.f32 1.0, %v964
  %v966 = vrcp.pop %v871
  %v967 = vmul.f32 1.0, %v966
  %v968 = vrcp.pop %v872
  %v969 = vmul.f32 1.0, %v968
  %v970 = vrcp.pop %v873
  %v971 = vmul.f32 1.0, %v970
  %v972 = vrcp.pop %v874
  %v973 = vmul.f32 1.0, %v972
  %v974 = vrcp.pop %v875
  %v975 = vmul.f32 1.0, %v974
  %v976 = vrcp.pop %v876
  %v977 = vmul.f32 1.0, %v976
  %v978 = vrcp.pop %v877
  %v979 = vmul.f32 1.0, %v978
  %v980 = vrcp.pop %v878
  %v981 = vmul.f32 1.0, %v980
  %v982 = vrcp.pop %v879
  %v983 = vmul.f32 1.0, %v982
  %v984 = vrcp.pop %v880
  %v985 = vmul.f32 1.0, %v984
  %v986 = vrcp.pop %v881
  %v987 = vmul.f32 1.0, %v986
  %v988 = vrcp.pop %v882
  %v989 = vmul.f32 1.0, %v988
  %v990 = vrcp.pop %v883
  %v991 = vmul.f32 1.0, %v990
  %v992 = vrcp.pop %v884
  %v993 = vmul.f32 1.0, %v992
  %v994 = vrcp.pop %v885
  %v995 = vmul.f32 1.0, %v994
  %v996 = vrcp.pop %v886
  %v997 = vmul.f32 1.0, %v996
  %v998 = vrcp.pop %v887
  %v999 = vmul.f32 1.0, %v998
  %v1000 = vrcp.pop %v888
  %v1001 = vmul.f32 1.0, %v1000
  %v1002 = vrcp.pop %v889
  %v1003 = vmul.f32 1.0, %v1002
  %v1004 = vrcp.pop %v890
  %v1005 = vmul.f32 1.0, %v1004
  %v1006 = vrcp.pop %v891
  %v1007 = vmul.f32 1.0, %v1006
  %v1008 = vrcp.pop %v892
  %v1009 = vmul.f32 1.0, %v1008
  %v1010 = vrcp.pop %v893
  %v1011 = vmul.f32 1.0, %v1010
  %v1012 = vrcp.pop %v894
  %v1013 = vmul.f32 1.0, %v1012
  %v1014 = vrcp.pop %v895
  %v1015 = vmul.f32 1.0, %v1014
  %v1016 = vrcp.pop %v896
  %v1017 = vmul.f32 1.0, %v1016
  %v1018 = vrcp.pop %v897
  %v1019 = vmul.f32 1.0, %v1018
  %v1020 = vrcp.pop %v898
  %v1021 = vmul.f32 1.0, %v1020
  %v1022 = vrcp.pop %v899
  %v1023 = vmul.f32 1.0, %v1022
  %v1024 = vrcp.pop %v900
  %v1025 = vmul.f32 1.0, %v1024
  %v1026 = vrcp.pop %v901
  %v1027 = vmul.f32 1.0, %v1026
  %v1028 = vrcp.pop %v902
  %v1029 = vmul.f32 1.0, %v1028
  %v1030 = vrcp.pop %v903
  %v1031 = vmul.f32 1.0, %v1030
  %v1032 = vmul.f32 %v394, %v905
  %v1033 = vmul.f32 %v397, %v907
  %v1034 = vmul.f32 %v402, %v909
  %v1035 = vmul.f32 %v405, %v911
  %v1036 = vmul.f32 %v410, %v913
  %v1037 = vmul.f32 %v413, %v915
  %v1038 = vmul.f32 %v418, %v917
  %v1039 = vmul.f32 %v421, %v919
  %v1040 = vmul.f32 %v426, %v921
  %v1041 = vmul.f32 %v429, %v923
  %v1042 = vmul.f32 %v434, %v925
  %v1043 = vmul.f32 %v437, %v927
  %v1044 = vmul.f32 %v442, %v929
  %v1045 = vmul.f32 %v445, %v931
  %v1046 = vmul.f32 %v450, %v933
  %v1047 = vmul.f32 %v453, %v935
  %v1048 = vmul.f32 %v458, %v937
  %v1049 = vmul.f32 %v461, %v939
  %v1050 = vmul.f32 %v466, %v941
  %v1051 = vmul.f32 %v469, %v943
  %v1052 = vmul.f32 %v474, %v945
  %v1053 = vmul.f32 %v477, %v947
  %v1054 = vmul.f32 %v482, %v949
  %v1055 = vmul.f32 %v485, %v951
  %v1056 = vmul.f32 %v490, %v953
  %v1057 = vmul.f32 %v493, %v955
  %v1058 = vmul.f32 %v498, %v957
  %v1059 = vmul.f32 %v501, %v959
  %v1060 = vmul.f32 %v506, %v961
  %v1061 = vmul.f32 %v509, %v963
  %v1062 = vmul.f32 %v514, %v965
  %v1063 = vmul.f32 %v517, %v967
  %v1064 = vmul.f32 %v522, %v969
  %v1065 = vmul.f32 %v525, %v971
  %v1066 = vmul.f32 %v530, %v973
  %v1067 = vmul.f32 %v533, %v975
  %v1068 = vmul.f32 %v538, %v977
  %v1069 = vmul.f32 %v541, %v979
  %v1070 = vmul.f32 %v546, %v981
  %v1071 = vmul.f32 %v549, %v983
  %v1072 = vmul.f32 %v554, %v985
  %v1073 = vmul.f32 %v557, %v987
  %v1074 = vmul.f32 %v562, %v989
  %v1075 = vmul.f32 %v565, %v991
  %v1076 = vmul.f32 %v570, %v993
  %v1077 = vmul.f32 %v573, %v995
  %v1078 = vmul.f32 %v578, %v997
  %v1079 = vmul.f32 %v581, %v999
  %v1080 = vmul.f32 %v586, %v1001
  %v1081 = vmul.f32 %v589, %v1003
  %v1082 = vmul.f32 %v594, %v1005
  %v1083 = vmul.f32 %v597, %v1007
  %v1084 = vmul.f32 %v602, %v1009
  %v1085 = vmul.f32 %v605, %v1011
  %v1086 = vmul.f32 %v610, %v1013
  %v1087 = vmul.f32 %v613, %v1015
  %v1088 = vmul.f32 %v618, %v1017
  %v1089 = vmul.f32 %v621, %v1019
  %v1090 = vmul.f32 %v626, %v1021
  %v1091 = vmul.f32 %v629, %v1023
  %v1092 = vmul.f32 %v634, %v1025
  %v1093 = vmul.f32 %v637, %v1027
  %v1094 = vmul.f32 %v642, %v1029
  %v1095 = vmul.f32 %v645, %v1031
  %v1096 = vpack.c.bf16 %v1033, %v1032
  %v1097 = vpack.c.bf16 %v1035, %v1034
  %v1098 = vpack.c.bf16 %v1037, %v1036
  %v1099 = vpack.c.bf16 %v1039, %v1038
  %v1100 = vpack.c.bf16 %v1041, %v1040
  %v1101 = vpack.c.bf16 %v1043, %v1042
  %v1102 = vpack.c.bf16 %v1045, %v1044
  %v1103 = vpack.c.bf16 %v1047, %v1046
  %v1104 = vpack.c.bf16 %v1049, %v1048
  %v1105 = vpack.c.bf16 %v1051, %v1050
  %v1106 = vpack.c.bf16 %v1053, %v1052
  %v1107 = vpack.c.bf16 %v1055, %v1054
  %v1108 = vpack.c.bf16 %v1057, %v1056
  %v1109 = vpack.c.bf16 %v1059, %v1058
  %v1110 = vpack.c.bf16 %v1061, %v1060
  %v1111 = vpack.c.bf16 %v1063, %v1062
  %v1112 = vpack.c.bf16 %v1065, %v1064
  %v1113 = vpack.c.bf16 %v1067, %v1066
  %v1114 = vpack.c.bf16 %v1069, %v1068
  %v1115 = vpack.c.bf16 %v1071, %v1070
  %v1116 = vpack.c.bf16 %v1073, %v1072
  %v1117 = vpack.c.bf16 %v1075, %v1074
  %v1118 = vpack.c.bf16 %v1077, %v1076
  %v1119 = vpack.c.bf16 %v1079, %v1078
  %v1120 = vpack.c.bf16 %v1081, %v1080
  %v1121 = vpack.c.bf16 %v1083, %v1082
  %v1122 = vpack.c.bf16 %v1085, %v1084
  %v1123 = vpack.c.bf16 %v1087, %v1086
  %v1124 = vpack.c.bf16 %v1089, %v1088
  %v1125 = vpack.c.bf16 %v1091, %v1090
  %v1126 = vpack.c.bf16 %v1093, %v1092
  %v1127 = vpack.c.bf16 %v1095, %v1094
  %v1160 = vunpack.c.l.b16 %v1096
  %v1161 = vunpack.c.h.b16 %v1096
  %v1162 = vunpack.c.l.b16 %v1097
  %v1163 = vunpack.c.h.b16 %v1097
  %v1164 = vunpack.c.l.b16 %v1098
  %v1165 = vunpack.c.h.b16 %v1098
  %v1166 = vunpack.c.l.b16 %v1099
  %v1167 = vunpack.c.h.b16 %v1099
  %v1168 = vunpack.c.l.b16 %v1100
  %v1169 = vunpack.c.h.b16 %v1100
  %v1170 = vunpack.c.l.b16 %v1101
  %v1171 = vunpack.c.h.b16 %v1101
  %v1172 = vunpack.c.l.b16 %v1102
  %v1173 = vunpack.c.h.b16 %v1102
  %v1174 = vunpack.c.l.b16 %v1103
  %v1175 = vunpack.c.h.b16 %v1103
  %v1176 = vunpack.c.l.b16 %v1104
  %v1177 = vunpack.c.h.b16 %v1104
  %v1178 = vunpack.c.l.b16 %v1105
  %v1179 = vunpack.c.h.b16 %v1105
  %v1180 = vunpack.c.l.b16 %v1106
  %v1181 = vunpack.c.h.b16 %v1106
  %v1182 = vunpack.c.l.b16 %v1107
  %v1183 = vunpack.c.h.b16 %v1107
  %v1184 = vunpack.c.l.b16 %v1108
  %v1185 = vunpack.c.h.b16 %v1108
  %v1186 = vunpack.c.l.b16 %v1109
  %v1187 = vunpack.c.h.b16 %v1109
  %v1188 = vunpack.c.l.b16 %v1110
  %v1189 = vunpack.c.h.b16 %v1110
  %v1190 = vunpack.c.l.b16 %v1111
  %v1191 = vunpack.c.h.b16 %v1111
  %v1192 = vunpack.c.l.b16 %v1112
  %v1193 = vunpack.c.h.b16 %v1112
  %v1194 = vunpack.c.l.b16 %v1113
  %v1195 = vunpack.c.h.b16 %v1113
  %v1196 = vunpack.c.l.b16 %v1114
  %v1197 = vunpack.c.h.b16 %v1114
  %v1198 = vunpack.c.l.b16 %v1115
  %v1199 = vunpack.c.h.b16 %v1115
  %v1200 = vunpack.c.l.b16 %v1116
  %v1201 = vunpack.c.h.b16 %v1116
  %v1202 = vunpack.c.l.b16 %v1117
  %v1203 = vunpack.c.h.b16 %v1117
  %v1204 = vunpack.c.l.b16 %v1118
  %v1205 = vunpack.c.h.b16 %v1118
  %v1206 = vunpack.c.l.b16 %v1119
  %v1207 = vunpack.c.h.b16 %v1119
  %v1208 = vunpack.c.l.b16 %v1120
  %v1209 = vunpack.c.h.b16 %v1120
  %v1210 = vunpack.c.l.b16 %v1121
  %v1211 = vunpack.c.h.b16 %v1121
  %v1212 = vunpack.c.l.b16 %v1122
  %v1213 = vunpack.c.h.b16 %v1122
  %v1214 = vunpack.c.l.b16 %v1123
  %v1215 = vunpack.c.h.b16 %v1123
  %v1216 = vunpack.c.l.b16 %v1124
  %v1217 = vunpack.c.h.b16 %v1124
  %v1218 = vunpack.c.l.b16 %v1125
  %v1219 = vunpack.c.h.b16 %v1125
  %v1220 = vunpack.c.l.b16 %v1126
  %v1221 = vunpack.c.h.b16 %v1126
  %v1222 = vunpack.c.l.b16 %v1127
  %v1223 = vunpack.c.h.b16 %v1127
  %v1224 = vpack.c.b16 %v1160, %v1160
  %v1225 = vpack.c.b16 %v1161, %v1161
  %v1226 = vpack.c.b16 %v1162, %v1162
  %v1227 = vpack.c.b16 %v1163, %v1163
  %v1228 = vpack.c.b16 %v1164, %v1164
  %v1229 = vpack.c.b16 %v1165, %v1165
  %v1230 = vpack.c.b16 %v1166, %v1166
  %v1231 = vpack.c.b16 %v1167, %v1167
  %v1232 = vpack.c.b16 %v1168, %v1168
  %v1233 = vpack.c.b16 %v1169, %v1169
  %v1234 = vpack.c.b16 %v1170, %v1170
  %v1235 = vpack.c.b16 %v1171, %v1171
  %v1236 = vpack.c.b16 %v1172, %v1172
  %v1237 = vpack.c.b16 %v1173, %v1173
  %v1238 = vpack.c.b16 %v1174, %v1174
  %v1239 = vpack.c.b16 %v1175, %v1175
  %v1240 = vpack.c.b16 %v1176, %v1176
  %v1241 = vpack.c.b16 %v1177, %v1177
  %v1242 = vpack.c.b16 %v1178, %v1178
  %v1243 = vpack.c.b16 %v1179, %v1179
  %v1244 = vpack.c.b16 %v1180, %v1180
  %v1245 = vpack.c.b16 %v1181, %v1181
  %v1246 = vpack.c.b16 %v1182, %v1182
  %v1247 = vpack.c.b16 %v1183, %v1183
  %v1248 = vpack.c.b16 %v1184, %v1184
  %v1249 = vpack.c.b16 %v1185, %v1185
  %v1250 = vpack.c.b16 %v1186, %v1186
  %v1251 = vpack.c.b16 %v1187, %v1187
  %v1252 = vpack.c.b16 %v1188, %v1188
  %v1253 = vpack.c.b16 %v1189, %v1189
  %v1254 = vpack.c.b16 %v1190, %v1190
  %v1255 = vpack.c.b16 %v1191, %v1191
  %v1256 = vpack.c.b16 %v1192, %v1192
  %v1257 = vpack.c.b16 %v1193, %v1193
  %v1258 = vpack.c.b16 %v1194, %v1194
  %v1259 = vpack.c.b16 %v1195, %v1195
  %v1260 = vpack.c.b16 %v1196, %v1196
  %v1261 = vpack.c.b16 %v1197, %v1197
  %v1262 = vpack.c.b16 %v1198, %v1198
  %v1263 = vpack.c.b16 %v1199, %v1199
  %v1264 = vpack.c.b16 %v1200, %v1200
  %v1265 = vpack.c.b16 %v1201, %v1201
  %v1266 = vpack.c.b16 %v1202, %v1202
  %v1267 = vpack.c.b16 %v1203, %v1203
  %v1268 = vpack.c.b16 %v1204, %v1204
  %v1269 = vpack.c.b16 %v1205, %v1205
  %v1270 = vpack.c.b16 %v1206, %v1206
  %v1271 = vpack.c.b16 %v1207, %v1207
  %v1272 = vpack.c.b16 %v1208, %v1208
  %v1273 = vpack.c.b16 %v1209, %v1209
  %v1274 = vpack.c.b16 %v1210, %v1210
  %v1275 = vpack.c.b16 %v1211, %v1211
  %v1276 = vpack.c.b16 %v1212, %v1212
  %v1277 = vpack.c.b16 %v1213, %v1213
  %v1278 = vpack.c.b16 %v1214, %v1214
  %v1279 = vpack.c.b16 %v1215, %v1215
  %v1280 = vpack.c.b16 %v1216, %v1216
  %v1281 = vpack.c.b16 %v1217, %v1217
  %v1282 = vpack.c.b16 %v1218, %v1218
  %v1283 = vpack.c.b16 %v1219, %v1219
  %v1284 = vpack.c.b16 %v1220, %v1220
  %v1285 = vpack.c.b16 %v1221, %v1221
  %v1286 = vpack.c.b16 %v1222, %v1222
  %v1287 = vpack.c.b16 %v1223, %v1223
  %vm1352 = vcmask 60416
  %1353 = vst.msk [vmem:[%s3] sm:$0xf] %vm1352, %v1224
  %1354 = vst.msk [vmem:[%s3 + $0x4] sm:$0xf] %vm1352, %v1225
  %1355 = vst.msk [vmem:[%s3 + $0x8] sm:$0xf] %vm1352, %v1226
  %1356 = vst.msk [vmem:[%s3 + $0xc] sm:$0xf] %vm1352, %v1227
  %1357 = vst.msk [vmem:[%s3 + $0x10] sm:$0xf] %vm1352, %v1228
  %1358 = vst.msk [vmem:[%s3 + $0x14] sm:$0xf] %vm1352, %v1229
  %1359 = vst.msk [vmem:[%s3 + $0x18] sm:$0xf] %vm1352, %v1230
  %1360 = vst.msk [vmem:[%s3 + $0x1c] sm:$0xf] %vm1352, %v1231
  %1361 = vst.msk [vmem:[%s3 + $0x20] sm:$0xf] %vm1352, %v1232
  %1362 = vst.msk [vmem:[%s3 + $0x24] sm:$0xf] %vm1352, %v1233
  %1363 = vst.msk [vmem:[%s3 + $0x28] sm:$0xf] %vm1352, %v1234
  %1364 = vst.msk [vmem:[%s3 + $0x2c] sm:$0xf] %vm1352, %v1235
  %1365 = vst.msk [vmem:[%s3 + $0x30] sm:$0xf] %vm1352, %v1236
  %1366 = vst.msk [vmem:[%s3 + $0x34] sm:$0xf] %vm1352, %v1237
  %1367 = vst.msk [vmem:[%s3 + $0x38] sm:$0xf] %vm1352, %v1238
  %1368 = vst.msk [vmem:[%s3 + $0x3c] sm:$0xf] %vm1352, %v1239
  %1369 = vst.msk [vmem:[%s3 + $0x40] sm:$0xf] %vm1352, %v1240
  %1370 = vst.msk [vmem:[%s3 + $0x44] sm:$0xf] %vm1352, %v1241
  %1371 = vst.msk [vmem:[%s3 + $0x48] sm:$0xf] %vm1352, %v1242
  %1372 = vst.msk [vmem:[%s3 + $0x4c] sm:$0xf] %vm1352, %v1243
  %1373 = vst.msk [vmem:[%s3 + $0x50] sm:$0xf] %vm1352, %v1244
  %1374 = vst.msk [vmem:[%s3 + $0x54] sm:$0xf] %vm1352, %v1245
  %1375 = vst.msk [vmem:[%s3 + $0x58] sm:$0xf] %vm1352, %v1246
  %1376 = vst.msk [vmem:[%s3 + $0x5c] sm:$0xf] %vm1352, %v1247
  %1377 = vst.msk [vmem:[%s3 + $0x60] sm:$0xf] %vm1352, %v1248
  %1378 = vst.msk [vmem:[%s3 + $0x64] sm:$0xf] %vm1352, %v1249
  %1379 = vst.msk [vmem:[%s3 + $0x68] sm:$0xf] %vm1352, %v1250
  %1380 = vst.msk [vmem:[%s3 + $0x6c] sm:$0xf] %vm1352, %v1251
  %1381 = vst.msk [vmem:[%s3 + $0x70] sm:$0xf] %vm1352, %v1252
  %1382 = vst.msk [vmem:[%s3 + $0x74] sm:$0xf] %vm1352, %v1253
  %1383 = vst.msk [vmem:[%s3 + $0x78] sm:$0xf] %vm1352, %v1254
  %1384 = vst.msk [vmem:[%s3 + $0x7c] sm:$0xf] %vm1352, %v1255
  %1385 = vst.msk [vmem:[%s3 + $0x80] sm:$0xf] %vm1352, %v1256
  %1386 = vst.msk [vmem:[%s3 + $0x84] sm:$0xf] %vm1352, %v1257
  %1387 = vst.msk [vmem:[%s3 + $0x88] sm:$0xf] %vm1352, %v1258
  %1388 = vst.msk [vmem:[%s3 + $0x8c] sm:$0xf] %vm1352, %v1259
  %1389 = vst.msk [vmem:[%s3 + $0x90] sm:$0xf] %vm1352, %v1260
  %1390 = vst.msk [vmem:[%s3 + $0x94] sm:$0xf] %vm1352, %v1261
  %1391 = vst.msk [vmem:[%s3 + $0x98] sm:$0xf] %vm1352, %v1262
  %1392 = vst.msk [vmem:[%s3 + $0x9c] sm:$0xf] %vm1352, %v1263
  %1393 = vst.msk [vmem:[%s3 + $0xa0] sm:$0xf] %vm1352, %v1264
  %1394 = vst.msk [vmem:[%s3 + $0xa4] sm:$0xf] %vm1352, %v1265
  %1395 = vst.msk [vmem:[%s3 + $0xa8] sm:$0xf] %vm1352, %v1266
  %1396 = vst.msk [vmem:[%s3 + $0xac] sm:$0xf] %vm1352, %v1267
  %1397 = vst.msk [vmem:[%s3 + $0xb0] sm:$0xf] %vm1352, %v1268
  %1398 = vst.msk [vmem:[%s3 + $0xb4] sm:$0xf] %vm1352, %v1269
  %1399 = vst.msk [vmem:[%s3 + $0xb8] sm:$0xf] %vm1352, %v1270
  %1400 = vst.msk [vmem:[%s3 + $0xbc] sm:$0xf] %vm1352, %v1271
  %1401 = vst.msk [vmem:[%s3 + $0xc0] sm:$0xf] %vm1352, %v1272
  %1402 = vst.msk [vmem:[%s3 + $0xc4] sm:$0xf] %vm1352, %v1273
  %1403 = vst.msk [vmem:[%s3 + $0xc8] sm:$0xf] %vm1352, %v1274
  %1404 = vst.msk [vmem:[%s3 + $0xcc] sm:$0xf] %vm1352, %v1275
  %1405 = vst.msk [vmem:[%s3 + $0xd0] sm:$0xf] %vm1352, %v1276
  %1406 = vst.msk [vmem:[%s3 + $0xd4] sm:$0xf] %vm1352, %v1277
  %1407 = vst.msk [vmem:[%s3 + $0xd8] sm:$0xf] %vm1352, %v1278
  %1408 = vst.msk [vmem:[%s3 + $0xdc] sm:$0xf] %vm1352, %v1279
  %1409 = vst.msk [vmem:[%s3 + $0xe0] sm:$0xf] %vm1352, %v1280
  %1410 = vst.msk [vmem:[%s3 + $0xe4] sm:$0xf] %vm1352, %v1281
  %1411 = vst.msk [vmem:[%s3 + $0xe8] sm:$0xf] %vm1352, %v1282
  %1412 = vst.msk [vmem:[%s3 + $0xec] sm:$0xf] %vm1352, %v1283
  %1413 = vst.msk [vmem:[%s3 + $0xf0] sm:$0xf] %vm1352, %v1284
  %1414 = vst.msk [vmem:[%s3 + $0xf4] sm:$0xf] %vm1352, %v1285
  %1415 = vst.msk [vmem:[%s3 + $0xf8] sm:$0xf] %vm1352, %v1286
  %1416 = vst.msk [vmem:[%s3 + $0xfc] sm:$0xf] %vm1352, %v1287
  // Predicated region
  $region14: #{_lambda_.11} parent=0 // pred_check
    _
  $region15: #{_lambda_.11} parent=0 // pred_check_branch
    %1418 = sbr.rel (0) target = $region17
  $region16: #{_lambda_.11} parent=0 // pred_region
    _
  $region17: #{_lambda_.11} parent=0 // pred_fallthru
    _
  // Predicated region
  $region18: #{_lambda_.11} parent=0 // pred_check
    _
  $region19: #{_lambda_.11} parent=0 // pred_check_branch
    %1420 = sbr.rel (0) target = $region21
  $region20: #{_lambda_.11} parent=0 // pred_region
    _
  $region21: #{_lambda_.11} parent=0 // pred_fallthru
    _

// kernel: _lambda_.8
$region0: #{_lambda_.8}
  #allocation0 [shape = 'u32[]', space=smem, size = 0x4, offset = 0x4, fixed_abs, tag = 'smem constant byte address 0x4 - core index']
  #allocation1 [shape = 'u32[144,128]{1,0:T(1,128)}', space=vmem, size = 0x12000, scoped, tag = 'internal scratch']
  %s0 = inlined_call_operand.vmem [shape: bf16[2,18,1,18,8], index: 0, kind: input, shape index: {}]
  %s1 = inlined_call_operand.vmem [shape: bf16[72,8], index: 1, kind: input, shape index: {}]
  %s2 = inlined_call_operand.vmem [shape: f32[1,8], index: 2, kind: input, shape index: {}]
  %s3 = inlined_call_operand.vmem [shape: bf16[2,16,16,8], index: 3, kind: output, shape index: {}]
  %s4 = sld [smem:[#allocation0]]
  $region45: #{_lambda_.8} parent=0
    _
  %s6 = ssub.s32 1, %s4
  %s7 = scalar_select 0, %s6, %s4
  loop: start=0, step=1, limit=4
  $region2: #{_lambda_.8} parent=0 // loop_pre_header
    _
  $region3: #{_lambda_.8} parent=0 // loop_header
    %s9 = sphi 0, %s13
    %p10 = scmp.ge.s32.totalorder %s9, 4
    %s16 = sphi 0, %s28
    %s17 = sphi 0, %s24
    %s18 = sphi 0, %s16
    %s19 = sphi 0, %s17
    %s20 = sphi 0, %s18
    %s21 = sphi 0, %s19
    %s33 = sphi 0, %s35
    %s36 = sphi 0, %s33
    %s37 = sphi 0, %s36
    %s53 = sphi 0, %s37
    %s57 = sphi 0, %s57
    %s59 = sphi 0, %s57
    %s60 = sphi 0, %s59
    %s74 = sphi 0, %s60
    %s78 = sphi 0, %s78
    %s80 = sphi 0, %s78
    %s81 = sphi 0, %s80
    %s95 = sphi 0, %s81
    %s103 = sphi 0, %s105
    %s106 = sphi 0, %s103
    %s107 = sphi 0, %s106
    %s123 = sphi 0, %s107
  $region4: #{_lambda_.8} parent=0 // loop_header_branch
    %12 = sbr.rel (%p10) target = $region8
  $region5: #{_lambda_.8} parent=0 // loop_body
    %s14 = ssub.s32 %s9, 1
    %s15 = ssub.s32 %s9, 2
    %s22 = sadd.s32 1, %s17
    %p23 = scmp.ge.s32.totalorder %s22, 1
    %s24 = scalar_select %p23, 0, %s22
    %s25 = sadd.s32 1, %s16
    %s26 = scalar_select %p23, %s25, %s16
    %p27 = scmp.ge.s32.totalorder %s26, 2
    %s28 = scalar_select %p27, 0, %s26
    %s29 = sadd.s32 %s16, %s17
    %s30 = sadd.s32 %s28, %s24
    %s31 = ssub.s32 %s29, %s30
    %p32 = scmp.eq.s32.totalorder %s31, 0
    %s34 = sadd.s32 %s33, 1
    %s35 = scalar_select %p32, %s33, %s34
    %p38 = pneg %p32
    %p39 = scmp.eq.s32.totalorder %s9, 1
    %p40 = por %p38, %p39
    %p41 = scmp.ne.s32.totalorder %s33, %s36
    %p42 = scmp.eq.s32.totalorder %s9, 0
    %p43 = por %p41, %p42
    %p44 = scmp.ne.s32.totalorder %s33, %s36
    %p45 = scmp.eq.s32.totalorder %s14, 1
    %p46 = por %p44, %p45
    %p47 = scmp.ne.s32.totalorder %s36, %s37
    %p48 = scmp.eq.s32.totalorder %s14, 0
    %p49 = por %p47, %p48
    %p50 = scmp.ne.s32.totalorder %s36, %s37
    %p51 = scmp.eq.s32.totalorder %s15, 1
    %p52 = por %p50, %p51
    %p54 = scmp.ne.s32.totalorder %s37, %s53
    %p55 = scmp.eq.s32.totalorder %s15, 0
    %p56 = por %p54, %p55
    %s58 = sadd.s32 %s57, 1
    %p61 = scmp.eq.s32.totalorder %s9, 1
    %p62 = scmp.ne.s32.totalorder %s57, %s59
    %p63 = scmp.eq.s32.totalorder %s9, 0
    %p64 = por %p62, %p63
    %p65 = scmp.ne.s32.totalorder %s57, %s59
    %p66 = scmp.eq.s32.totalorder %s14, 1
    %p67 = por %p65, %p66
    %p68 = scmp.ne.s32.totalorder %s59, %s60
    %p69 = scmp.eq.s32.totalorder %s14, 0
    %p70 = por %p68, %p69
    %p71 = scmp.ne.s32.totalorder %s59, %s60
    %p72 = scmp.eq.s32.totalorder %s15, 1
    %p73 = por %p71, %p72
    %p75 = scmp.ne.s32.totalorder %s60, %s74
    %p76 = scmp.eq.s32.totalorder %s15, 0
    %p77 = por %p75, %p76
    %s79 = sadd.s32 %s78, 1
    %p82 = scmp.eq.s32.totalorder %s9, 1
    %p83 = scmp.ne.s32.totalorder %s78, %s80
    %p84 = scmp.eq.s32.totalorder %s9, 0
    %p85 = por %p83, %p84
    %p86 = scmp.ne.s32.totalorder %s78, %s80
    %p87 = scmp.eq.s32.totalorder %s14, 1
    %p88 = por %p86, %p87
    %p89 = scmp.ne.s32.totalorder %s80, %s81
    %p90 = scmp.eq.s32.totalorder %s14, 0
    %p91 = por %p89, %p90
    %p92 = scmp.ne.s32.totalorder %s80, %s81
    %p93 = scmp.eq.s32.totalorder %s15, 1
    %p94 = por %p92, %p93
    %p96 = scmp.ne.s32.totalorder %s81, %s95
    %p97 = scmp.eq.s32.totalorder %s15, 0
    %p98 = por %p96, %p97
    %s99 = ssub.s32 %s16, %s28
    %s100 = ssub.s32 %s17, %s24
    %s101 = sor.u32 %s99, %s100
    %p102 = scmp.eq.s32.totalorder %s101, 0
    %s104 = sadd.s32 %s103, 1
    %s105 = scalar_select %p102, %s103, %s104
    %p108 = pneg %p102
    %p109 = scmp.eq.s32.totalorder %s9, 1
    %p110 = por %p108, %p109
    %p111 = scmp.ne.s32.totalorder %s103, %s106
    %p112 = scmp.eq.s32.totalorder %s9, 0
    %p113 = por %p111, %p112
    %p114 = scmp.ne.s32.totalorder %s103, %s106
    %p115 = scmp.eq.s32.totalorder %s14, 1
    %p116 = por %p114, %p115
    %p117 = scmp.ne.s32.totalorder %s106, %s107
    %p118 = scmp.eq.s32.totalorder %s14, 0
    %p119 = por %p117, %p118
    %p120 = scmp.ne.s32.totalorder %s106, %s107
    %p121 = scmp.eq.s32.totalorder %s15, 1
    %p122 = por %p120, %p121
    %p124 = scmp.ne.s32.totalorder %s107, %s123
    %p125 = scmp.eq.s32.totalorder %s15, 0
    %p126 = por %p124, %p125
    %p127 = scmp.le.s32.totalorder 1, %s9
    %p128 = scmp.lt.s32.totalorder %s9, 3
    %p129 = pnand %p127, %p128
    %p130 = pneg %p129
    // Predicated region
    $region9: #{_lambda_.8} parent=5 // pred_check
      _
    $region10: #{_lambda_.8} parent=5 // pred_check_branch
      %132 = sbr.rel (%p129) target = $region12
    $region11: #{_lambda_.8} parent=5 // pred_region
      %s133 = ssub.s32 %s9, 1
      // Predicated region
      $region13: #{_lambda_.8} parent=11 // pred_check
        %p134 = pneg %p70
      $region14: #{_lambda_.8} parent=11 // pred_check_branch
        %136 = sbr.rel (%p134) target = $region16
      $region15: #{_lambda_.8} parent=11 // pred_region
        _
      $region16: #{_lambda_.8} parent=11 // pred_fallthru
        _
      // Predicated region
      $region17: #{_lambda_.8} parent=11 // pred_check
        %p137 = pneg %p91
      $region18: #{_lambda_.8} parent=11 // pred_check_branch
        %139 = sbr.rel (%p137) target = $region20
      $region19: #{_lambda_.8} parent=11 // pred_region
        _
      $region20: #{_lambda_.8} parent=11 // pred_fallthru
        _
    $region12: #{_lambda_.8} parent=5 // pred_fallthru
      _
    %p140 = scmp.lt.s32.totalorder %s9, 2
    // Predicated region
    $region21: #{_lambda_.8} parent=5 // pred_check
      %p141 = pneg %p140
    $region22: #{_lambda_.8} parent=5 // pred_check_branch
      %143 = sbr.rel (%p141) target = $region24
    $region23: #{_lambda_.8} parent=5 // pred_region
      // Predicated region
      $region25: #{_lambda_.8} parent=23 // pred_check
        %p144 = pneg %p43
      $region26: #{_lambda_.8} parent=23 // pred_check_branch
        %146 = sbr.rel (%p144) target = $region28
      $region27: #{_lambda_.8} parent=23 // pred_region
        %s147 = sadd.s32 %s16, %s17
        %p148 = scmp.lt.s32.totalorder %s147, 1
        %s149 = scalar_select %p148, %s147, 1
        %s150 = smul.addr %s149, 54
        %s151 = smul.addr %s150, 4
        %s152 = scalar_lea.vmem %s0, %s151
        %s153 = sadd.s32 %s16, %s17
      $region28: #{_lambda_.8} parent=23 // pred_fallthru
        _
    $region24: #{_lambda_.8} parent=5 // pred_fallthru
      _
    %p154 = scmp.le.s32.totalorder 1, %s9
    %p155 = scmp.lt.s32.totalorder %s9, 3
    %p156 = pnand %p154, %p155
    %p157 = pneg %p156
    // Predicated region
    $region29: #{_lambda_.8} parent=5 // pred_check
      _
    $region30: #{_lambda_.8} parent=5 // pred_check_branch
      %159 = sbr.rel (%p156) target = $region32
    $region31: #{_lambda_.8} parent=5 // pred_region
      %s160 = ssub.s32 %s9, 1
      %s161 = sadd.s32 %s18, %s19
      %p162 = scmp.lt.s32.totalorder %s161, 1
      %s163 = scalar_select %p162, %s161, 1
      %s164 = smul.addr %s163, 54
      %s165 = smul.addr %s164, 4
      %s166 = scalar_lea.vmem %s0, %s165
      %p167 = pneg %p49
      %p168 = pneg %p46
      %p169 = pneg %p70
      %p170 = pneg %p67
      %p171 = pneg %p91
      %p172 = pneg %p88
      %p173 = pneg %p119
      %p174 = pneg %p116
      %s175 = smul.u32 16, %s19
      %p176 = scmp.lt.s32.totalorder %s18, 1
      %s177 = scalar_select %p176, %s18, 1
      %p178 = scmp.lt.s32.totalorder %s175, 15
      %s179 = scalar_select %p178, %s175, 15
      %s180 = smul.addr %s179, 2
      %s181 = smul.addr %s177, 32
      %s182 = sadd.s32 %s180, %s181
      %s183 = smul.addr %s182, 4
      %s184 = scalar_lea.vmem %s3, %s183
      %s185 = sadd.s32 %s18, %s19
      %p186 = scmp.lt.s32.totalorder %s185, 1
      %s187 = scalar_select %p186, %s185, 1
      %s188 = smul.addr %s187, 54
      %s189 = smul.addr %s188, 4
      %s190 = scalar_lea.vmem %s0, %s189
      %s191 = sadd.s32 %s18, %s19
      %s192 = smul.u32 16, %s19
      %p193 = scmp.lt.s32.totalorder %s18, 1
      %s194 = scalar_select %p193, %s18, 1
      %p195 = scmp.lt.s32.totalorder %s192, 15
      %s196 = scalar_select %p195, %s192, 15
      %s197 = smul.addr %s196, 2
      %s198 = smul.addr %s194, 32
      %s199 = sadd.s32 %s197, %s198
      %s200 = smul.addr %s199, 4
      %s201 = scalar_lea.vmem %s3, %s200
      %s202 = smul.u32 16, %s19
      %v204 = vld [vmem:[%s190] sm:$0xf]
      %v205 = vld [vmem:[%s190 + $0x4] sm:$0xf]
      %v206 = vld [vmem:[%s190 + $0xc] sm:$0xf]
      %v207 = vld [vmem:[%s190 + $0x10] sm:$0xf]
      %v208 = vld [vmem:[%s190 + $0x18] sm:$0xf]
      %v209 = vld [vmem:[%s190 + $0x1c] sm:$0xf]
      %v210 = vld [vmem:[%s190 + $0x24] sm:$0xf]
      %v211 = vld [vmem:[%s190 + $0x28] sm:$0xf]
      %v212 = vld [vmem:[%s190 + $0x30] sm:$0xf]
      %v213 = vld [vmem:[%s190 + $0x34] sm:$0xf]
      %v214 = vld [vmem:[%s190 + $0x3c] sm:$0xf]
      %v215 = vld [vmem:[%s190 + $0x40] sm:$0xf]
      %v216 = vld [vmem:[%s190 + $0x48] sm:$0xf]
      %v217 = vld [vmem:[%s190 + $0x4c] sm:$0xf]
      %v218 = vld [vmem:[%s190 + $0x54] sm:$0xf]
      %v219 = vld [vmem:[%s190 + $0x58] sm:$0xf]
      %v220 = vld [vmem:[%s190 + $0x60] sm:$0xf]
      %v221 = vld [vmem:[%s190 + $0x64] sm:$0xf]
      %v222 = vld [vmem:[%s190 + $0x6c] sm:$0xf]
      %v223 = vld [vmem:[%s190 + $0x70] sm:$0xf]
      %v224 = vld [vmem:[%s190 + $0x78] sm:$0xf]
      %v225 = vld [vmem:[%s190 + $0x7c] sm:$0xf]
      %v226 = vld [vmem:[%s190 + $0x84] sm:$0xf]
      %v227 = vld [vmem:[%s190 + $0x88] sm:$0xf]
      %v228 = vld [vmem:[%s190 + $0x90] sm:$0xf]
      %v229 = vld [vmem:[%s190 + $0x94] sm:$0xf]
      %v230 = vld [vmem:[%s190 + $0x9c] sm:$0xf]
      %v231 = vld [vmem:[%s190 + $0xa0] sm:$0xf]
      %v232 = vld [vmem:[%s190 + $0xa8] sm:$0xf]
      %v233 = vld [vmem:[%s190 + $0xac] sm:$0xf]
      %v234 = vld [vmem:[%s190 + $0xb4] sm:$0xf]
      %v235 = vld [vmem:[%s190 + $0xb8] sm:$0xf]
      %v236 = vld [vmem:[%s190 + $0x8] sm:$0x1]
      %v237 = vld [vmem:[%s190 + $0x14] sm:$0x1]
      %v238 = vld [vmem:[%s190 + $0x20] sm:$0x1]
      %v239 = vld [vmem:[%s190 + $0x2c] sm:$0x1]
      %v240 = vld [vmem:[%s190 + $0x38] sm:$0x1]
      %v241 = vld [vmem:[%s190 + $0x44] sm:$0x1]
      %v242 = vld [vmem:[%s190 + $0x50] sm:$0x1]
      %v243 = vld [vmem:[%s190 + $0x5c] sm:$0x1]
      %v244 = vld [vmem:[%s190 + $0x68] sm:$0x1]
      %v245 = vld [vmem:[%s190 + $0x74] sm:$0x1]
      %v246 = vld [vmem:[%s190 + $0x80] sm:$0x1]
      %v247 = vld [vmem:[%s190 + $0x8c] sm:$0x1]
      %v248 = vld [vmem:[%s190 + $0x98] sm:$0x1]
      %v249 = vld [vmem:[%s190 + $0xa4] sm:$0x1]
      %v250 = vld [vmem:[%s190 + $0xb0] sm:$0x1]
      %v251 = vld [vmem:[%s190 + $0xbc] sm:$0x1]
      %v252 = vld [vmem:[%s190] sm:$0xe]
      %v253 = vld [vmem:[%s190 + $0xc] sm:$0xe]
      %v254 = vld [vmem:[%s190 + $0x18] sm:$0xe]
      %v255 = vld [vmem:[%s190 + $0x24] sm:$0xe]
      %v256 = vld [vmem:[%s190 + $0x30] sm:$0xe]
      %v257 = vld [vmem:[%s190 + $0x3c] sm:$0xe]
      %v258 = vld [vmem:[%s190 + $0x48] sm:$0xe]
      %v259 = vld [vmem:[%s190 + $0x54] sm:$0xe]
      %v260 = vld [vmem:[%s190 + $0x60] sm:$0xe]
      %v261 = vld [vmem:[%s190 + $0x6c] sm:$0xe]
      %v262 = vld [vmem:[%s190 + $0x78] sm:$0xe]
      %v263 = vld [vmem:[%s190 + $0x84] sm:$0xe]
      %v264 = vld [vmem:[%s190 + $0x90] sm:$0xe]
      %v265 = vld [vmem:[%s190 + $0x9c] sm:$0xe]
      %v266 = vld [vmem:[%s190 + $0xa8] sm:$0xe]
      %v267 = vld [vmem:[%s190 + $0xb4] sm:$0xe]
      %s268 = scalar_lea.vmem %s190, 12
      %v269 = vld [vmem:[%s268] sm:$0xf]
      %v270 = vld [vmem:[%s268 + $0x4] sm:$0xf]
      %v271 = vld [vmem:[%s268 + $0xc] sm:$0xf]
      %v272 = vld [vmem:[%s268 + $0x10] sm:$0xf]
      %v273 = vld [vmem:[%s268 + $0x18] sm:$0xf]
      %v274 = vld [vmem:[%s268 + $0x1c] sm:$0xf]
      %v275 = vld [vmem:[%s268 + $0x24] sm:$0xf]
      %v276 = vld [vmem:[%s268 + $0x28] sm:$0xf]
      %v277 = vld [vmem:[%s268 + $0x30] sm:$0xf]
      %v278 = vld [vmem:[%s268 + $0x34] sm:$0xf]
      %v279 = vld [vmem:[%s268 + $0x3c] sm:$0xf]
      %v280 = vld [vmem:[%s268 + $0x40] sm:$0xf]
      %v281 = vld [vmem:[%s268 + $0x48] sm:$0xf]
      %v282 = vld [vmem:[%s268 + $0x4c] sm:$0xf]
      %v283 = vld [vmem:[%s268 + $0x54] sm:$0xf]
      %v284 = vld [vmem:[%s268 + $0x58] sm:$0xf]
      %v285 = vld [vmem:[%s268 + $0x60] sm:$0xf]
      %v286 = vld [vmem:[%s268 + $0x64] sm:$0xf]
      %v287 = vld [vmem:[%s268 + $0x6c] sm:$0xf]
      %v288 = vld [vmem:[%s268 + $0x70] sm:$0xf]
      %v289 = vld [vmem:[%s268 + $0x78] sm:$0xf]
      %v290 = vld [vmem:[%s268 + $0x7c] sm:$0xf]
      %v291 = vld [vmem:[%s268 + $0x84] sm:$0xf]
      %v292 = vld [vmem:[%s268 + $0x88] sm:$0xf]
      %v293 = vld [vmem:[%s268 + $0x90] sm:$0xf]
      %v294 = vld [vmem:[%s268 + $0x94] sm:$0xf]
      %v295 = vld [vmem:[%s268 + $0x9c] sm:$0xf]
      %v296 = vld [vmem:[%s268 + $0xa0] sm:$0xf]
      %v297 = vld [vmem:[%s268 + $0xa8] sm:$0xf]
      %v298 = vld [vmem:[%s268 + $0xac] sm:$0xf]
      %v299 = vld [vmem:[%s268 + $0xb4] sm:$0xf]
      %v300 = vld [vmem:[%s268 + $0xb8] sm:$0xf]
      %v301 = vld [vmem:[%s268 + $0x8] sm:$0x1]
      %v302 = vld [vmem:[%s268 + $0x14] sm:$0x1]
      %v303 = vld [vmem:[%s268 + $0x20] sm:$0x1]
      %v304 = vld [vmem:[%s268 + $0x2c] sm:$0x1]
      %v305 = vld [vmem:[%s268 + $0x38] sm:$0x1]
      %v306 = vld [vmem:[%s268 + $0x44] sm:$0x1]
      %v307 = vld [vmem:[%s268 + $0x50] sm:$0x1]
      %v308 = vld [vmem:[%s268 + $0x5c] sm:$0x1]
      %v309 = vld [vmem:[%s268 + $0x68] sm:$0x1]
      %v310 = vld [vmem:[%s268 + $0x74] sm:$0x1]
      %v311 = vld [vmem:[%s268 + $0x80] sm:$0x1]
      %v312 = vld [vmem:[%s268 + $0x8c] sm:$0x1]
      %v313 = vld [vmem:[%s268 + $0x98] sm:$0x1]
      %v314 = vld [vmem:[%s268 + $0xa4] sm:$0x1]
      %v315 = vld [vmem:[%s268 + $0xb0] sm:$0x1]
      %v316 = vld [vmem:[%s268 + $0xbc] sm:$0x1]
      %v317 = vld [vmem:[%s268] sm:$0xe]
      %v318 = vld [vmem:[%s268 + $0xc] sm:$0xe]
      %v319 = vld [vmem:[%s268 + $0x18] sm:$0xe]
      %v320 = vld [vmem:[%s268 + $0x24] sm:$0xe]
      %v321 = vld [vmem:[%s268 + $0x30] sm:$0xe]
      %v322 = vld [vmem:[%s268 + $0x3c] sm:$0xe]
      %v323 = vld [vmem:[%s268 + $0x48] sm:$0xe]
      %v324 = vld [vmem:[%s268 + $0x54] sm:$0xe]
      %v325 = vld [vmem:[%s268 + $0x60] sm:$0xe]
      %v326 = vld [vmem:[%s268 + $0x6c] sm:$0xe]
      %v327 = vld [vmem:[%s268 + $0x78] sm:$0xe]
      %v328 = vld [vmem:[%s268 + $0x84] sm:$0xe]
      %v329 = vld [vmem:[%s268 + $0x90] sm:$0xe]
      %v330 = vld [vmem:[%s268 + $0x9c] sm:$0xe]
      %v331 = vld [vmem:[%s268 + $0xa8] sm:$0xe]
      %v332 = vld [vmem:[%s268 + $0xb4] sm:$0xe]
      %s333 = scalar_lea.vmem %s190, 24
      %v334 = vld [vmem:[%s333] sm:$0xf]
      %v335 = vld [vmem:[%s333 + $0x4] sm:$0xf]
      %v336 = vld [vmem:[%s333 + $0xc] sm:$0xf]
      %v337 = vld [vmem:[%s333 + $0x10] sm:$0xf]
      %v338 = vld [vmem:[%s333 + $0x18] sm:$0xf]
      %v339 = vld [vmem:[%s333 + $0x1c] sm:$0xf]
      %v340 = vld [vmem:[%s333 + $0x24] sm:$0xf]
      %v341 = vld [vmem:[%s333 + $0x28] sm:$0xf]
      %v342 = vld [vmem:[%s333 + $0x30] sm:$0xf]
      %v343 = vld [vmem:[%s333 + $0x34] sm:$0xf]
      %v344 = vld [vmem:[%s333 + $0x3c] sm:$0xf]
      %v345 = vld [vmem:[%s333 + $0x40] sm:$0xf]
      %v346 = vld [vmem:[%s333 + $0x48] sm:$0xf]
      %v347 = vld [vmem:[%s333 + $0x4c] sm:$0xf]
      %v348 = vld [vmem:[%s333 + $0x54] sm:$0xf]
      %v349 = vld [vmem:[%s333 + $0x58] sm:$0xf]
      %v350 = vld [vmem:[%s333 + $0x60] sm:$0xf]
      %v351 = vld [vmem:[%s333 + $0x64] sm:$0xf]
      %v352 = vld [vmem:[%s333 + $0x6c] sm:$0xf]
      %v353 = vld [vmem:[%s333 + $0x70] sm:$0xf]
      %v354 = vld [vmem:[%s333 + $0x78] sm:$0xf]
      %v355 = vld [vmem:[%s333 + $0x7c] sm:$0xf]
      %v356 = vld [vmem:[%s333 + $0x84] sm:$0xf]
      %v357 = vld [vmem:[%s333 + $0x88] sm:$0xf]
      %v358 = vld [vmem:[%s333 + $0x90] sm:$0xf]
      %v359 = vld [vmem:[%s333 + $0x94] sm:$0xf]
      %v360 = vld [vmem:[%s333 + $0x9c] sm:$0xf]
      %v361 = vld [vmem:[%s333 + $0xa0] sm:$0xf]
      %v362 = vld [vmem:[%s333 + $0xa8] sm:$0xf]
      %v363 = vld [vmem:[%s333 + $0xac] sm:$0xf]
      %v364 = vld [vmem:[%s333 + $0xb4] sm:$0xf]
      %v365 = vld [vmem:[%s333 + $0xb8] sm:$0xf]
      %v366 = vld [vmem:[%s333 + $0x8] sm:$0x1]
      %v367 = vld [vmem:[%s333 + $0x14] sm:$0x1]
      %v368 = vld [vmem:[%s333 + $0x20] sm:$0x1]
      %v369 = vld [vmem:[%s333 + $0x2c] sm:$0x1]
      %v370 = vld [vmem:[%s333 + $0x38] sm:$0x1]
      %v371 = vld [vmem:[%s333 + $0x44] sm:$0x1]
      %v372 = vld [vmem:[%s333 + $0x50] sm:$0x1]
      %v373 = vld [vmem:[%s333 + $0x5c] sm:$0x1]
      %v374 = vld [vmem:[%s333 + $0x68] sm:$0x1]
      %v375 = vld [vmem:[%s333 + $0x74] sm:$0x1]
      %v376 = vld [vmem:[%s333 + $0x80] sm:$0x1]
      %v377 = vld [vmem:[%s333 + $0x8c] sm:$0x1]
      %v378 = vld [vmem:[%s333 + $0x98] sm:$0x1]
      %v379 = vld [vmem:[%s333 + $0xa4] sm:$0x1]
      %v380 = vld [vmem:[%s333 + $0xb0] sm:$0x1]
      %v381 = vld [vmem:[%s333 + $0xbc] sm:$0x1]
      %v382 = vld [vmem:[%s333] sm:$0xe]
      %v383 = vld [vmem:[%s333 + $0xc] sm:$0xe]
      %v384 = vld [vmem:[%s333 + $0x18] sm:$0xe]
      %v385 = vld [vmem:[%s333 + $0x24] sm:$0xe]
      %v386 = vld [vmem:[%s333 + $0x30] sm:$0xe]
      %v387 = vld [vmem:[%s333 + $0x3c] sm:$0xe]
      %v388 = vld [vmem:[%s333 + $0x48] sm:$0xe]
      %v389 = vld [vmem:[%s333 + $0x54] sm:$0xe]
      %v390 = vld [vmem:[%s333 + $0x60] sm:$0xe]
      %v391 = vld [vmem:[%s333 + $0x6c] sm:$0xe]
      %v392 = vld [vmem:[%s333 + $0x78] sm:$0xe]
      %v393 = vld [vmem:[%s333 + $0x84] sm:$0xe]
      %v394 = vld [vmem:[%s333 + $0x90] sm:$0xe]
      %v395 = vld [vmem:[%s333 + $0x9c] sm:$0xe]
      %v396 = vld [vmem:[%s333 + $0xa8] sm:$0xe]
      %v397 = vld [vmem:[%s333 + $0xb4] sm:$0xe]
      %v430 = vunpack.c.l.b16 %v204
      %v431 = vunpack.c.l.b16 %v205
      %v432 = vunpack.c.l.b16 %v206
      %v433 = vunpack.c.l.b16 %v207
      %v434 = vunpack.c.l.b16 %v208
      %v435 = vunpack.c.l.b16 %v209
      %v436 = vunpack.c.l.b16 %v210
      %v437 = vunpack.c.l.b16 %v211
      %v438 = vunpack.c.l.b16 %v212
      %v439 = vunpack.c.l.b16 %v213
      %v440 = vunpack.c.l.b16 %v214
      %v441 = vunpack.c.l.b16 %v215
      %v442 = vunpack.c.l.b16 %v216
      %v443 = vunpack.c.l.b16 %v217
      %v444 = vunpack.c.l.b16 %v218
      %v445 = vunpack.c.l.b16 %v219
      %v446 = vunpack.c.l.b16 %v220
      %v447 = vunpack.c.l.b16 %v221
      %v448 = vunpack.c.l.b16 %v222
      %v449 = vunpack.c.l.b16 %v223
      %v450 = vunpack.c.l.b16 %v224
      %v451 = vunpack.c.l.b16 %v225
      %v452 = vunpack.c.l.b16 %v226
      %v453 = vunpack.c.l.b16 %v227
      %v454 = vunpack.c.l.b16 %v228
      %v455 = vunpack.c.l.b16 %v229
      %v456 = vunpack.c.l.b16 %v230
      %v457 = vunpack.c.l.b16 %v231
      %v458 = vunpack.c.l.b16 %v232
      %v459 = vunpack.c.l.b16 %v233
      %v460 = vunpack.c.l.b16 %v234
      %v461 = vunpack.c.l.b16 %v235
      %v462 = vpack.c.b16 %v431, %v430
      %v463 = vpack.c.b16 %v433, %v432
      %v464 = vpack.c.b16 %v435, %v434
      %v465 = vpack.c.b16 %v437, %v436
      %v466 = vpack.c.b16 %v439, %v438
      %v467 = vpack.c.b16 %v441, %v440
      %v468 = vpack.c.b16 %v443, %v442
      %v469 = vpack.c.b16 %v445, %v444
      %v470 = vpack.c.b16 %v447, %v446
      %v471 = vpack.c.b16 %v449, %v448
      %v472 = vpack.c.b16 %v451, %v450
      %v473 = vpack.c.b16 %v453, %v452
      %v474 = vpack.c.b16 %v455, %v454
      %v475 = vpack.c.b16 %v457, %v456
      %v476 = vpack.c.b16 %v459, %v458
      %v477 = vpack.c.b16 %v461, %v460
      %v494 = vunpack.c.l.b16 %v236
      %v495 = vunpack.c.l.b16 %v237
      %v496 = vunpack.c.l.b16 %v238
      %v497 = vunpack.c.l.b16 %v239
      %v498 = vunpack.c.l.b16 %v240
      %v499 = vunpack.c.l.b16 %v241
      %v500 = vunpack.c.l.b16 %v242
      %v501 = vunpack.c.l.b16 %v243
      %v502 = vunpack.c.l.b16 %v244
      %v503 = vunpack.c.l.b16 %v245
      %v504 = vunpack.c.l.b16 %v246
      %v505 = vunpack.c.l.b16 %v247
      %v506 = vunpack.c.l.b16 %v248
      %v507 = vunpack.c.l.b16 %v249
      %v508 = vunpack.c.l.b16 %v250
      %v509 = vunpack.c.l.b16 %v251
      %v510 = vpack.c.b16 %v494, %v494
      %v511 = vpack.c.b16 %v495, %v495
      %v512 = vpack.c.b16 %v496, %v496
      %v513 = vpack.c.b16 %v497, %v497
      %v514 = vpack.c.b16 %v498, %v498
      %v515 = vpack.c.b16 %v499, %v499
      %v516 = vpack.c.b16 %v500, %v500
      %v517 = vpack.c.b16 %v501, %v501
      %v518 = vpack.c.b16 %v502, %v502
      %v519 = vpack.c.b16 %v503, %v503
      %v520 = vpack.c.b16 %v504, %v504
      %v521 = vpack.c.b16 %v505, %v505
      %v522 = vpack.c.b16 %v506, %v506
      %v523 = vpack.c.b16 %v507, %v507
      %v524 = vpack.c.b16 %v508, %v508
      %v525 = vpack.c.b16 %v509, %v509
      %vm526 = vsmask.f32 7424
      %v528 = vshrl.u32 %v462, 16
      %v530 = vshll.u32 %v462, 16
      %v532 = vrot.slane %v530, 1
      %v533 = vor.u32 %v528, %v532
      %v535 = vshll.u32 %v510, 16
      %v537 = vrot.slane %v535, 1
      %v538 = vsel %vm526, %v533, %v537
      %v540 = vshrl.u32 %v463, 16
      %v542 = vshll.u32 %v463, 16
      %v544 = vrot.slane %v542, 1
      %v545 = vor.u32 %v540, %v544
      %v547 = vshll.u32 %v511, 16
      %v549 = vrot.slane %v547, 1
      %v550 = vsel %vm526, %v545, %v549
      %v552 = vshrl.u32 %v464, 16
      %v554 = vshll.u32 %v464, 16
      %v556 = vrot.slane %v554, 1
      %v557 = vor.u32 %v552, %v556
      %v559 = vshll.u32 %v512, 16
      %v561 = vrot.slane %v559, 1
      %v562 = vsel %vm526, %v557, %v561
      %v564 = vshrl.u32 %v465, 16
      %v566 = vshll.u32 %v465, 16
      %v568 = vrot.slane %v566, 1
      %v569 = vor.u32 %v564, %v568
      %v571 = vshll.u32 %v513, 16
      %v573 = vrot.slane %v571, 1
      %v574 = vsel %vm526, %v569, %v573
      %v576 = vshrl.u32 %v466, 16
      %v578 = vshll.u32 %v466, 16
      %v580 = vrot.slane %v578, 1
      %v581 = vor.u32 %v576, %v580
      %v583 = vshll.u32 %v514, 16
      %v585 = vrot.slane %v583, 1
      %v586 = vsel %vm526, %v581, %v585
      %v588 = vshrl.u32 %v467, 16
      %v590 = vshll.u32 %v467, 16
      %v592 = vrot.slane %v590, 1
      %v593 = vor.u32 %v588, %v592
      %v595 = vshll.u32 %v515, 16
      %v597 = vrot.slane %v595, 1
      %v598 = vsel %vm526, %v593, %v597
      %v600 = vshrl.u32 %v468, 16
      %v602 = vshll.u32 %v468, 16
      %v604 = vrot.slane %v602, 1
      %v605 = vor.u32 %v600, %v604
      %v607 = vshll.u32 %v516, 16
      %v609 = vrot.slane %v607, 1
      %v610 = vsel %vm526, %v605, %v609
      %v612 = vshrl.u32 %v469, 16
      %v614 = vshll.u32 %v469, 16
      %v616 = vrot.slane %v614, 1
      %v617 = vor.u32 %v612, %v616
      %v619 = vshll.u32 %v517, 16
      %v621 = vrot.slane %v619, 1
      %v622 = vsel %vm526, %v617, %v621
      %v624 = vshrl.u32 %v470, 16
      %v626 = vshll.u32 %v470, 16
      %v628 = vrot.slane %v626, 1
      %v629 = vor.u32 %v624, %v628
      %v631 = vshll.u32 %v518, 16
      %v633 = vrot.slane %v631, 1
      %v634 = vsel %vm526, %v629, %v633
      %v636 = vshrl.u32 %v471, 16
      %v638 = vshll.u32 %v471, 16
      %v640 = vrot.slane %v638, 1
      %v641 = vor.u32 %v636, %v640
      %v643 = vshll.u32 %v519, 16
      %v645 = vrot.slane %v643, 1
      %v646 = vsel %vm526, %v641, %v645
      %v648 = vshrl.u32 %v472, 16
      %v650 = vshll.u32 %v472, 16
      %v652 = vrot.slane %v650, 1
      %v653 = vor.u32 %v648, %v652
      %v655 = vshll.u32 %v520, 16
      %v657 = vrot.slane %v655, 1
      %v658 = vsel %vm526, %v653, %v657
      %v660 = vshrl.u32 %v473, 16
      %v662 = vshll.u32 %v473, 16
      %v664 = vrot.slane %v662, 1
      %v665 = vor.u32 %v660, %v664
      %v667 = vshll.u32 %v521, 16
      %v669 = vrot.slane %v667, 1
      %v670 = vsel %vm526, %v665, %v669
      %v672 = vshrl.u32 %v474, 16
      %v674 = vshll.u32 %v474, 16
      %v676 = vrot.slane %v674, 1
      %v677 = vor.u32 %v672, %v676
      %v679 = vshll.u32 %v522, 16
      %v681 = vrot.slane %v679, 1
      %v682 = vsel %vm526, %v677, %v681
      %v684 = vshrl.u32 %v475, 16
      %v686 = vshll.u32 %v475, 16
      %v688 = vrot.slane %v686, 1
      %v689 = vor.u32 %v684, %v688
      %v691 = vshll.u32 %v523, 16
      %v693 = vrot.slane %v691, 1
      %v694 = vsel %vm526, %v689, %v693
      %v696 = vshrl.u32 %v476, 16
      %v698 = vshll.u32 %v476, 16
      %v700 = vrot.slane %v698, 1
      %v701 = vor.u32 %v696, %v700
      %v703 = vshll.u32 %v524, 16
      %v705 = vrot.slane %v703, 1
      %v706 = vsel %vm526, %v701, %v705
      %v708 = vshrl.u32 %v477, 16
      %v710 = vshll.u32 %v477, 16
      %v712 = vrot.slane %v710, 1
      %v713 = vor.u32 %v708, %v712
      %v715 = vshll.u32 %v525, 16
      %v717 = vrot.slane %v715, 1
      %v718 = vsel %vm526, %v713, %v717
      %719 = vrot.lane.b32.xlu0 %v538, 8
      %v720 = vpop.permute.xlu0 %719
      %721 = vrot.lane.b32.xlu0 %v550, 8
      %v722 = vpop.permute.xlu0 %721
      %723 = vrot.lane.b32.xlu0 %v562, 8
      %v724 = vpop.permute.xlu0 %723
      %725 = vrot.lane.b32.xlu0 %v574, 8
      %v726 = vpop.permute.xlu0 %725
      %727 = vrot.lane.b32.xlu0 %v586, 8
      %v728 = vpop.permute.xlu0 %727
      %729 = vrot.lane.b32.xlu0 %v598, 8
      %v730 = vpop.permute.xlu0 %729
      %731 = vrot.lane.b32.xlu0 %v610, 8
      %v732 = vpop.permute.xlu0 %731
      %733 = vrot.lane.b32.xlu0 %v622, 8
      %v734 = vpop.permute.xlu0 %733
      %735 = vrot.lane.b32.xlu0 %v634, 8
      %v736 = vpop.permute.xlu0 %735
      %737 = vrot.lane.b32.xlu0 %v646, 8
      %v738 = vpop.permute.xlu0 %737
      %739 = vrot.lane.b32.xlu0 %v658, 8
      %v740 = vpop.permute.xlu0 %739
      %741 = vrot.lane.b32.xlu0 %v670, 8
      %v742 = vpop.permute.xlu0 %741
      %743 = vrot.lane.b32.xlu0 %v682, 8
      %v744 = vpop.permute.xlu0 %743
      %745 = vrot.lane.b32.xlu0 %v694, 8
      %v746 = vpop.permute.xlu0 %745
      %747 = vrot.lane.b32.xlu0 %v706, 8
      %v748 = vpop.permute.xlu0 %747
      %749 = vrot.lane.b32.xlu0 %v718, 8
      %v750 = vpop.permute.xlu0 %749
      %v767 = vunpack.c.l.b16 %v252
      %v768 = vunpack.c.l.b16 %v253
      %v769 = vunpack.c.l.b16 %v254
      %v770 = vunpack.c.l.b16 %v255
      %v771 = vunpack.c.l.b16 %v256
      %v772 = vunpack.c.l.b16 %v257
      %v773 = vunpack.c.l.b16 %v258
      %v774 = vunpack.c.l.b16 %v259
      %v775 = vunpack.c.l.b16 %v260
      %v776 = vunpack.c.l.b16 %v261
      %v777 = vunpack.c.l.b16 %v262
      %v778 = vunpack.c.l.b16 %v263
      %v779 = vunpack.c.l.b16 %v264
      %v780 = vunpack.c.l.b16 %v265
      %v781 = vunpack.c.l.b16 %v266
      %v782 = vunpack.c.l.b16 %v267
      %v783 = vpack.c.b16 %v431, %v767
      %v784 = vpack.c.b16 %v433, %v768
      %v785 = vpack.c.b16 %v435, %v769
      %v786 = vpack.c.b16 %v437, %v770
      %v787 = vpack.c.b16 %v439, %v771
      %v788 = vpack.c.b16 %v441, %v772
      %v789 = vpack.c.b16 %v443, %v773
      %v790 = vpack.c.b16 %v445, %v774
      %v791 = vpack.c.b16 %v447, %v775
      %v792 = vpack.c.b16 %v449, %v776
      %v793 = vpack.c.b16 %v451, %v777
      %v794 = vpack.c.b16 %v453, %v778
      %v795 = vpack.c.b16 %v455, %v779
      %v796 = vpack.c.b16 %v457, %v780
      %v797 = vpack.c.b16 %v459, %v781
      %v798 = vpack.c.b16 %v461, %v782
      %vm799 = vcmask 1046528
      %v800 = vrot.slane %v783, 1
      %v801 = vrot.slane %v510, 1
      %v802 = vsel %vm799, %v800, %v801
      %v803 = vrot.slane %v784, 1
      %v804 = vrot.slane %v511, 1
      %v805 = vsel %vm799, %v803, %v804
      %v806 = vrot.slane %v785, 1
      %v807 = vrot.slane %v512, 1
      %v808 = vsel %vm799, %v806, %v807
      %v809 = vrot.slane %v786, 1
      %v810 = vrot.slane %v513, 1
      %v811 = vsel %vm799, %v809, %v810
      %v812 = vrot.slane %v787, 1
      %v813 = vrot.slane %v514, 1
      %v814 = vsel %vm799, %v812, %v813
      %v815 = vrot.slane %v788, 1
      %v816 = vrot.slane %v515, 1
      %v817 = vsel %vm799, %v815, %v816
      %v818 = vrot.slane %v789, 1
      %v819 = vrot.slane %v516, 1
      %v820 = vsel %vm799, %v818, %v819
      %v821 = vrot.slane %v790, 1
      %v822 = vrot.slane %v517, 1
      %v823 = vsel %vm799, %v821, %v822
      %v824 = vrot.slane %v791, 1
      %v825 = vrot.slane %v518, 1
      %v826 = vsel %vm799, %v824, %v825
      %v827 = vrot.slane %v792, 1
      %v828 = vrot.slane %v519, 1
      %v829 = vsel %vm799, %v827, %v828
      %v830 = vrot.slane %v793, 1
      %v831 = vrot.slane %v520, 1
      %v832 = vsel %vm799, %v830, %v831
      %v833 = vrot.slane %v794, 1
      %v834 = vrot.slane %v521, 1
      %v835 = vsel %vm799, %v833, %v834
      %v836 = vrot.slane %v795, 1
      %v837 = vrot.slane %v522, 1
      %v838 = vsel %vm799, %v836, %v837
      %v839 = vrot.slane %v796, 1
      %v840 = vrot.slane %v523, 1
      %v841 = vsel %vm799, %v839, %v840
      %v842 = vrot.slane %v797, 1
      %v843 = vrot.slane %v524, 1
      %v844 = vsel %vm799, %v842, %v843
      %v845 = vrot.slane %v798, 1
      %v846 = vrot.slane %v525, 1
      %v847 = vsel %vm799, %v845, %v846
      %848 = vrot.lane.b32.xlu0 %v802, 16
      %v849 = vpop.permute.xlu0 %848
      %850 = vrot.lane.b32.xlu0 %v805, 16
      %v851 = vpop.permute.xlu0 %850
      %852 = vrot.lane.b32.xlu0 %v808, 16
      %v853 = vpop.permute.xlu0 %852
      %854 = vrot.lane.b32.xlu0 %v811, 16
      %v855 = vpop.permute.xlu0 %854
      %856 = vrot.lane.b32.xlu0 %v814, 16
      %v857 = vpop.permute.xlu0 %856
      %858 = vrot.lane.b32.xlu0 %v817, 16
      %v859 = vpop.permute.xlu0 %858
      %860 = vrot.lane.b32.xlu0 %v820, 16
      %v861 = vpop.permute.xlu0 %860
      %862 = vrot.lane.b32.xlu0 %v823, 16
      %v863 = vpop.permute.xlu0 %862
      %864 = vrot.lane.b32.xlu0 %v826, 16
      %v865 = vpop.permute.xlu0 %864
      %866 = vrot.lane.b32.xlu0 %v829, 16
      %v867 = vpop.permute.xlu0 %866
      %868 = vrot.lane.b32.xlu0 %v832, 16
      %v869 = vpop.permute.xlu0 %868
      %870 = vrot.lane.b32.xlu0 %v835, 16
      %v871 = vpop.permute.xlu0 %870
      %872 = vrot.lane.b32.xlu0 %v838, 16
      %v873 = vpop.permute.xlu0 %872
      %874 = vrot.lane.b32.xlu0 %v841, 16
      %v875 = vpop.permute.xlu0 %874
      %876 = vrot.lane.b32.xlu0 %v844, 16
      %v877 = vpop.permute.xlu0 %876
      %878 = vrot.lane.b32.xlu0 %v847, 16
      %v879 = vpop.permute.xlu0 %878
      %v912 = vunpack.c.l.b16 %v269
      %v913 = vunpack.c.l.b16 %v270
      %v914 = vunpack.c.l.b16 %v271
      %v915 = vunpack.c.l.b16 %v272
      %v916 = vunpack.c.l.b16 %v273
      %v917 = vunpack.c.l.b16 %v274
      %v918 = vunpack.c.l.b16 %v275
      %v919 = vunpack.c.l.b16 %v276
      %v920 = vunpack.c.l.b16 %v277
      %v921 = vunpack.c.l.b16 %v278
      %v922 = vunpack.c.l.b16 %v279
      %v923 = vunpack.c.l.b16 %v280
      %v924 = vunpack.c.l.b16 %v281
      %v925 = vunpack.c.l.b16 %v282
      %v926 = vunpack.c.l.b16 %v283
      %v927 = vunpack.c.l.b16 %v284
      %v928 = vunpack.c.l.b16 %v285
      %v929 = vunpack.c.l.b16 %v286
      %v930 = vunpack.c.l.b16 %v287
      %v931 = vunpack.c.l.b16 %v288
      %v932 = vunpack.c.l.b16 %v289
      %v933 = vunpack.c.l.b16 %v290
      %v934 = vunpack.c.l.b16 %v291
      %v935 = vunpack.c.l.b16 %v292
      %v936 = vunpack.c.l.b16 %v293
      %v937 = vunpack.c.l.b16 %v294
      %v938 = vunpack.c.l.b16 %v295
      %v939 = vunpack.c.l.b16 %v296
      %v940 = vunpack.c.l.b16 %v297
      %v941 = vunpack.c.l.b16 %v298
      %v942 = vunpack.c.l.b16 %v299
      %v943 = vunpack.c.l.b16 %v300
      %v944 = vpack.c.b16 %v913, %v912
      %v945 = vpack.c.b16 %v915, %v914
      %v946 = vpack.c.b16 %v917, %v916
      %v947 = vpack.c.b16 %v919, %v918
      %v948 = vpack.c.b16 %v921, %v920
      %v949 = vpack.c.b16 %v923, %v922
      %v950 = vpack.c.b16 %v925, %v924
      %v951 = vpack.c.b16 %v927, %v926
      %v952 = vpack.c.b16 %v929, %v928
      %v953 = vpack.c.b16 %v931, %v930
      %v954 = vpack.c.b16 %v933, %v932
      %v955 = vpack.c.b16 %v935, %v934
      %v956 = vpack.c.b16 %v937, %v936
      %v957 = vpack.c.b16 %v939, %v938
      %v958 = vpack.c.b16 %v941, %v940
      %v959 = vpack.c.b16 %v943, %v942
      %960 = vrot.lane.b32.xlu0 %v944, 24
      %v961 = vpop.permute.xlu0 %960
      %962 = vrot.lane.b32.xlu0 %v945, 24
      %v963 = vpop.permute.xlu0 %962
      %964 = vrot.lane.b32.xlu0 %v946, 24
      %v965 = vpop.permute.xlu0 %964
      %966 = vrot.lane.b32.xlu0 %v947, 24
      %v967 = vpop.permute.xlu0 %966
      %968 = vrot.lane.b32.xlu0 %v948, 24
      %v969 = vpop.permute.xlu0 %968
      %970 = vrot.lane.b32.xlu0 %v949, 24
      %v971 = vpop.permute.xlu0 %970
      %972 = vrot.lane.b32.xlu0 %v950, 24
      %v973 = vpop.permute.xlu0 %972
      %974 = vrot.lane.b32.xlu0 %v951, 24
      %v975 = vpop.permute.xlu0 %974
      %976 = vrot.lane.b32.xlu0 %v952, 24
      %v977 = vpop.permute.xlu0 %976
      %978 = vrot.lane.b32.xlu0 %v953, 24
      %v979 = vpop.permute.xlu0 %978
      %980 = vrot.lane.b32.xlu0 %v954, 24
      %v981 = vpop.permute.xlu0 %980
      %982 = vrot.lane.b32.xlu0 %v955, 24
      %v983 = vpop.permute.xlu0 %982
      %984 = vrot.lane.b32.xlu0 %v956, 24
      %v985 = vpop.permute.xlu0 %984
      %986 = vrot.lane.b32.xlu0 %v957, 24
      %v987 = vpop.permute.xlu0 %986
      %988 = vrot.lane.b32.xlu0 %v958, 24
      %v989 = vpop.permute.xlu0 %988
      %990 = vrot.lane.b32.xlu0 %v959, 24
      %v991 = vpop.permute.xlu0 %990
      %v1008 = vunpack.c.l.b16 %v301
      %v1009 = vunpack.c.l.b16 %v302
      %v1010 = vunpack.c.l.b16 %v303
      %v1011 = vunpack.c.l.b16 %v304
      %v1012 = vunpack.c.l.b16 %v305
      %v1013 = vunpack.c.l.b16 %v306
      %v1014 = vunpack.c.l.b16 %v307
      %v1015 = vunpack.c.l.b16 %v308
      %v1016 = vunpack.c.l.b16 %v309
      %v1017 = vunpack.c.l.b16 %v310
      %v1018 = vunpack.c.l.b16 %v311
      %v1019 = vunpack.c.l.b16 %v312
      %v1020 = vunpack.c.l.b16 %v313
      %v1021 = vunpack.c.l.b16 %v314
      %v1022 = vunpack.c.l.b16 %v315
      %v1023 = vunpack.c.l.b16 %v316
      %v1024 = vpack.c.b16 %v1008, %v1008
      %v1025 = vpack.c.b16 %v1009, %v1009
      %v1026 = vpack.c.b16 %v1010, %v1010
      %v1027 = vpack.c.b16 %v1011, %v1011
      %v1028 = vpack.c.b16 %v1012, %v1012
      %v1029 = vpack.c.b16 %v1013, %v1013
      %v1030 = vpack.c.b16 %v1014, %v1014
      %v1031 = vpack.c.b16 %v1015, %v1015
      %v1032 = vpack.c.b16 %v1016, %v1016
      %v1033 = vpack.c.b16 %v1017, %v1017
      %v1034 = vpack.c.b16 %v1018, %v1018
      %v1035 = vpack.c.b16 %v1019, %v1019
      %v1036 = vpack.c.b16 %v1020, %v1020
      %v1037 = vpack.c.b16 %v1021, %v1021
      %v1038 = vpack.c.b16 %v1022, %v1022
      %v1039 = vpack.c.b16 %v1023, %v1023
      %v1041 = vshrl.u32 %v944, 16
      %v1043 = vshll.u32 %v944, 16
      %v1045 = vrot.slane %v1043, 1
      %v1046 = vor.u32 %v1041, %v1045
      %v1048 = vshll.u32 %v1024, 16
      %v1050 = vrot.slane %v1048, 1
      %v1051 = vsel %vm526, %v1046, %v1050
      %v1053 = vshrl.u32 %v945, 16
      %v1055 = vshll.u32 %v945, 16
      %v1057 = vrot.slane %v1055, 1
      %v1058 = vor.u32 %v1053, %v1057
      %v1060 = vshll.u32 %v1025, 16
      %v1062 = vrot.slane %v1060, 1
      %v1063 = vsel %vm526, %v1058, %v1062
      %v1065 = vshrl.u32 %v946, 16
      %v1067 = vshll.u32 %v946, 16
      %v1069 = vrot.slane %v1067, 1
      %v1070 = vor.u32 %v1065, %v1069
      %v1072 = vshll.u32 %v1026, 16
      %v1074 = vrot.slane %v1072, 1
      %v1075 = vsel %vm526, %v1070, %v1074
      %v1077 = vshrl.u32 %v947, 16
      %v1079 = vshll.u32 %v947, 16
      %v1081 = vrot.slane %v1079, 1
      %v1082 = vor.u32 %v1077, %v1081
      %v1084 = vshll.u32 %v1027, 16
      %v1086 = vrot.slane %v1084, 1
      %v1087 = vsel %vm526, %v1082, %v1086
      %v1089 = vshrl.u32 %v948, 16
      %v1091 = vshll.u32 %v948, 16
      %v1093 = vrot.slane %v1091, 1
      %v1094 = vor.u32 %v1089, %v1093
      %v1096 = vshll.u32 %v1028, 16
      %v1098 = vrot.slane %v1096, 1
      %v1099 = vsel %vm526, %v1094, %v1098
      %v1101 = vshrl.u32 %v949, 16
      %v1103 = vshll.u32 %v949, 16
      %v1105 = vrot.slane %v1103, 1
      %v1106 = vor.u32 %v1101, %v1105
      %v1108 = vshll.u32 %v1029, 16
      %v1110 = vrot.slane %v1108, 1
      %v1111 = vsel %vm526, %v1106, %v1110
      %v1113 = vshrl.u32 %v950, 16
      %v1115 = vshll.u32 %v950, 16
      %v1117 = vrot.slane %v1115, 1
      %v1118 = vor.u32 %v1113, %v1117
      %v1120 = vshll.u32 %v1030, 16
      %v1122 = vrot.slane %v1120, 1
      %v1123 = vsel %vm526, %v1118, %v1122
      %v1125 = vshrl.u32 %v951, 16
      %v1127 = vshll.u32 %v951, 16
      %v1129 = vrot.slane %v1127, 1
      %v1130 = vor.u32 %v1125, %v1129
      %v1132 = vshll.u32 %v1031, 16
      %v1134 = vrot.slane %v1132, 1
      %v1135 = vsel %vm526, %v1130, %v1134
      %v1137 = vshrl.u32 %v952, 16
      %v1139 = vshll.u32 %v952, 16
      %v1141 = vrot.slane %v1139, 1
      %v1142 = vor.u32 %v1137, %v1141
      %v1144 = vshll.u32 %v1032, 16
      %v1146 = vrot.slane %v1144, 1
      %v1147 = vsel %vm526, %v1142, %v1146
      %v1149 = vshrl.u32 %v953, 16
      %v1151 = vshll.u32 %v953, 16
      %v1153 = vrot.slane %v1151, 1
      %v1154 = vor.u32 %v1149, %v1153
      %v1156 = vshll.u32 %v1033, 16
      %v1158 = vrot.slane %v1156, 1
      %v1159 = vsel %vm526, %v1154, %v1158
      %v1161 = vshrl.u32 %v954, 16
      %v1163 = vshll.u32 %v954, 16
      %v1165 = vrot.slane %v1163, 1
      %v1166 = vor.u32 %v1161, %v1165
      %v1168 = vshll.u32 %v1034, 16
      %v1170 = vrot.slane %v1168, 1
      %v1171 = vsel %vm526, %v1166, %v1170
      %v1173 = vshrl.u32 %v955, 16
      %v1175 = vshll.u32 %v955, 16
      %v1177 = vrot.slane %v1175, 1
      %v1178 = vor.u32 %v1173, %v1177
      %v1180 = vshll.u32 %v1035, 16
      %v1182 = vrot.slane %v1180, 1
      %v1183 = vsel %vm526, %v1178, %v1182
      %v1185 = vshrl.u32 %v956, 16
      %v1187 = vshll.u32 %v956, 16
      %v1189 = vrot.slane %v1187, 1
      %v1190 = vor.u32 %v1185, %v1189
      %v1192 = vshll.u32 %v1036, 16
      %v1194 = vrot.slane %v1192, 1
      %v1195 = vsel %vm526, %v1190, %v1194
      %v1197 = vshrl.u32 %v957, 16
      %v1199 = vshll.u32 %v957, 16
      %v1201 = vrot.slane %v1199, 1
      %v1202 = vor.u32 %v1197, %v1201
      %v1204 = vshll.u32 %v1037, 16
      %v1206 = vrot.slane %v1204, 1
      %v1207 = vsel %vm526, %v1202, %v1206
      %v1209 = vshrl.u32 %v958, 16
      %v1211 = vshll.u32 %v958, 16
      %v1213 = vrot.slane %v1211, 1
      %v1214 = vor.u32 %v1209, %v1213
      %v1216 = vshll.u32 %v1038, 16
      %v1218 = vrot.slane %v1216, 1
      %v1219 = vsel %vm526, %v1214, %v1218
      %v1221 = vshrl.u32 %v959, 16
      %v1223 = vshll.u32 %v959, 16
      %v1225 = vrot.slane %v1223, 1
      %v1226 = vor.u32 %v1221, %v1225
      %v1228 = vshll.u32 %v1039, 16
      %v1230 = vrot.slane %v1228, 1
      %v1231 = vsel %vm526, %v1226, %v1230
      %1232 = vrot.lane.b32.xlu0 %v1051, 32
      %v1233 = vpop.permute.xlu0 %1232
      %1234 = vrot.lane.b32.xlu0 %v1063, 32
      %v1235 = vpop.permute.xlu0 %1234
      %1236 = vrot.lane.b32.xlu0 %v1075, 32
      %v1237 = vpop.permute.xlu0 %1236
      %1238 = vrot.lane.b32.xlu0 %v1087, 32
      %v1239 = vpop.permute.xlu0 %1238
      %1240 = vrot.lane.b32.xlu0 %v1099, 32
      %v1241 = vpop.permute.xlu0 %1240
      %1242 = vrot.lane.b32.xlu0 %v1111, 32
      %v1243 = vpop.permute.xlu0 %1242
      %1244 = vrot.lane.b32.xlu0 %v1123, 32
      %v1245 = vpop.permute.xlu0 %1244
      %1246 = vrot.lane.b32.xlu0 %v1135, 32
      %v1247 = vpop.permute.xlu0 %1246
      %1248 = vrot.lane.b32.xlu0 %v1147, 32
      %v1249 = vpop.permute.xlu0 %1248
      %1250 = vrot.lane.b32.xlu0 %v1159, 32
      %v1251 = vpop.permute.xlu0 %1250
      %1252 = vrot.lane.b32.xlu0 %v1171, 32
      %v1253 = vpop.permute.xlu0 %1252
      %1254 = vrot.lane.b32.xlu0 %v1183, 32
      %v1255 = vpop.permute.xlu0 %1254
      %1256 = vrot.lane.b32.xlu0 %v1195, 32
      %v1257 = vpop.permute.xlu0 %1256
      %1258 = vrot.lane.b32.xlu0 %v1207, 32
      %v1259 = vpop.permute.xlu0 %1258
      %1260 = vrot.lane.b32.xlu0 %v1219, 32
      %v1261 = vpop.permute.xlu0 %1260
      %1262 = vrot.lane.b32.xlu0 %v1231, 32
      %v1263 = vpop.permute.xlu0 %1262
      %v1280 = vunpack.c.l.b16 %v317
      %v1281 = vunpack.c.l.b16 %v318
      %v1282 = vunpack.c.l.b16 %v319
      %v1283 = vunpack.c.l.b16 %v320
      %v1284 = vunpack.c.l.b16 %v321
      %v1285 = vunpack.c.l.b16 %v322
      %v1286 = vunpack.c.l.b16 %v323
      %v1287 = vunpack.c.l.b16 %v324
      %v1288 = vunpack.c.l.b16 %v325
      %v1289 = vunpack.c.l.b16 %v326
      %v1290 = vunpack.c.l.b16 %v327
      %v1291 = vunpack.c.l.b16 %v328
      %v1292 = vunpack.c.l.b16 %v329
      %v1293 = vunpack.c.l.b16 %v330
      %v1294 = vunpack.c.l.b16 %v331
      %v1295 = vunpack.c.l.b16 %v332
      %v1296 = vpack.c.b16 %v913, %v1280
      %v1297 = vpack.c.b16 %v915, %v1281
      %v1298 = vpack.c.b16 %v917, %v1282
      %v1299 = vpack.c.b16 %v919, %v1283
      %v1300 = vpack.c.b16 %v921, %v1284
      %v1301 = vpack.c.b16 %v923, %v1285
      %v1302 = vpack.c.b16 %v925, %v1286
      %v1303 = vpack.c.b16 %v927, %v1287
      %v1304 = vpack.c.b16 %v929, %v1288
      %v1305 = vpack.c.b16 %v931, %v1289
      %v1306 = vpack.c.b16 %v933, %v1290
      %v1307 = vpack.c.b16 %v935, %v1291
      %v1308 = vpack.c.b16 %v937, %v1292
      %v1309 = vpack.c.b16 %v939, %v1293
      %v1310 = vpack.c.b16 %v941, %v1294
      %v1311 = vpack.c.b16 %v943, %v1295
      %v1312 = vrot.slane %v1296, 1
      %v1313 = vrot.slane %v1024, 1
      %v1314 = vsel %vm799, %v1312, %v1313
      %v1315 = vrot.slane %v1297, 1
      %v1316 = vrot.slane %v1025, 1
      %v1317 = vsel %vm799, %v1315, %v1316
      %v1318 = vrot.slane %v1298, 1
      %v1319 = vrot.slane %v1026, 1
      %v1320 = vsel %vm799, %v1318, %v1319
      %v1321 = vrot.slane %v1299, 1
      %v1322 = vrot.slane %v1027, 1
      %v1323 = vsel %vm799, %v1321, %v1322
      %v1324 = vrot.slane %v1300, 1
      %v1325 = vrot.slane %v1028, 1
      %v1326 = vsel %vm799, %v1324, %v1325
      %v1327 = vrot.slane %v1301, 1
      %v1328 = vrot.slane %v1029, 1
      %v1329 = vsel %vm799, %v1327, %v1328
      %v1330 = vrot.slane %v1302, 1
      %v1331 = vrot.slane %v1030, 1
      %v1332 = vsel %vm799, %v1330, %v1331
      %v1333 = vrot.slane %v1303, 1
      %v1334 = vrot.slane %v1031, 1
      %v1335 = vsel %vm799, %v1333, %v1334
      %v1336 = vrot.slane %v1304, 1
      %v1337 = vrot.slane %v1032, 1
      %v1338 = vsel %vm799, %v1336, %v1337
      %v1339 = vrot.slane %v1305, 1
      %v1340 = vrot.slane %v1033, 1
      %v1341 = vsel %vm799, %v1339, %v1340
      %v1342 = vrot.slane %v1306, 1
      %v1343 = vrot.slane %v1034, 1
      %v1344 = vsel %vm799, %v1342, %v1343
      %v1345 = vrot.slane %v1307, 1
      %v1346 = vrot.slane %v1035, 1
      %v1347 = vsel %vm799, %v1345, %v1346
      %v1348 = vrot.slane %v1308, 1
      %v1349 = vrot.slane %v1036, 1
      %v1350 = vsel %vm799, %v1348, %v1349
      %v1351 = vrot.slane %v1309, 1
      %v1352 = vrot.slane %v1037, 1
      %v1353 = vsel %vm799, %v1351, %v1352
      %v1354 = vrot.slane %v1310, 1
      %v1355 = vrot.slane %v1038, 1
      %v1356 = vsel %vm799, %v1354, %v1355
      %v1357 = vrot.slane %v1311, 1
      %v1358 = vrot.slane %v1039, 1
      %v1359 = vsel %vm799, %v1357, %v1358
      %1360 = vrot.lane.b32.xlu0 %v1314, 40
      %v1361 = vpop.permute.xlu0 %1360
      %1362 = vrot.lane.b32.xlu0 %v1317, 40
      %v1363 = vpop.permute.xlu0 %1362
      %1364 = vrot.lane.b32.xlu0 %v1320, 40
      %v1365 = vpop.permute.xlu0 %1364
      %1366 = vrot.lane.b32.xlu0 %v1323, 40
      %v1367 = vpop.permute.xlu0 %1366
      %1368 = vrot.lane.b32.xlu0 %v1326, 40
      %v1369 = vpop.permute.xlu0 %1368
      %1370 = vrot.lane.b32.xlu0 %v1329, 40
      %v1371 = vpop.permute.xlu0 %1370
      %1372 = vrot.lane.b32.xlu0 %v1332, 40
      %v1373 = vpop.permute.xlu0 %1372
      %1374 = vrot.lane.b32.xlu0 %v1335, 40
      %v1375 = vpop.permute.xlu0 %1374
      %1376 = vrot.lane.b32.xlu0 %v1338, 40
      %v1377 = vpop.permute.xlu0 %1376
      %1378 = vrot.lane.b32.xlu0 %v1341, 40
      %v1379 = vpop.permute.xlu0 %1378
      %1380 = vrot.lane.b32.xlu0 %v1344, 40
      %v1381 = vpop.permute.xlu0 %1380
      %1382 = vrot.lane.b32.xlu0 %v1347, 40
      %v1383 = vpop.permute.xlu0 %1382
      %1384 = vrot.lane.b32.xlu0 %v1350, 40
      %v1385 = vpop.permute.xlu0 %1384
      %1386 = vrot.lane.b32.xlu0 %v1353, 40
      %v1387 = vpop.permute.xlu0 %1386
      %1388 = vrot.lane.b32.xlu0 %v1356, 40
      %v1389 = vpop.permute.xlu0 %1388
      %1390 = vrot.lane.b32.xlu0 %v1359, 40
      %v1391 = vpop.permute.xlu0 %1390
      %v1424 = vunpack.c.l.b16 %v334
      %v1425 = vunpack.c.l.b16 %v335
      %v1426 = vunpack.c.l.b16 %v336
      %v1427 = vunpack.c.l.b16 %v337
      %v1428 = vunpack.c.l.b16 %v338
      %v1429 = vunpack.c.l.b16 %v339
      %v1430 = vunpack.c.l.b16 %v340
      %v1431 = vunpack.c.l.b16 %v341
      %v1432 = vunpack.c.l.b16 %v342
      %v1433 = vunpack.c.l.b16 %v343
      %v1434 = vunpack.c.l.b16 %v344
      %v1435 = vunpack.c.l.b16 %v345
      %v1436 = vunpack.c.l.b16 %v346
      %v1437 = vunpack.c.l.b16 %v347
      %v1438 = vunpack.c.l.b16 %v348
      %v1439 = vunpack.c.l.b16 %v349
      %v1440 = vunpack.c.l.b16 %v350
      %v1441 = vunpack.c.l.b16 %v351
      %v1442 = vunpack.c.l.b16 %v352
      %v1443 = vunpack.c.l.b16 %v353
      %v1444 = vunpack.c.l.b16 %v354
      %v1445 = vunpack.c.l.b16 %v355
      %v1446 = vunpack.c.l.b16 %v356
      %v1447 = vunpack.c.l.b16 %v357
      %v1448 = vunpack.c.l.b16 %v358
      %v1449 = vunpack.c.l.b16 %v359
      %v1450 = vunpack.c.l.b16 %v360
      %v1451 = vunpack.c.l.b16 %v361
      %v1452 = vunpack.c.l.b16 %v362
      %v1453 = vunpack.c.l.b16 %v363
      %v1454 = vunpack.c.l.b16 %v364
      %v1455 = vunpack.c.l.b16 %v365
      %v1456 = vpack.c.b16 %v1425, %v1424
      %v1457 = vpack.c.b16 %v1427, %v1426
      %v1458 = vpack.c.b16 %v1429, %v1428
      %v1459 = vpack.c.b16 %v1431, %v1430
      %v1460 = vpack.c.b16 %v1433, %v1432
      %v1461 = vpack.c.b16 %v1435, %v1434
      %v1462 = vpack.c.b16 %v1437, %v1436
      %v1463 = vpack.c.b16 %v1439, %v1438
      %v1464 = vpack.c.b16 %v1441, %v1440
      %v1465 = vpack.c.b16 %v1443, %v1442
      %v1466 = vpack.c.b16 %v1445, %v1444
      %v1467 = vpack.c.b16 %v1447, %v1446
      %v1468 = vpack.c.b16 %v1449, %v1448
      %v1469 = vpack.c.b16 %v1451, %v1450
      %v1470 = vpack.c.b16 %v1453, %v1452
      %v1471 = vpack.c.b16 %v1455, %v1454
      %1472 = vrot.lane.b32.xlu0 %v1456, 48
      %v1473 = vpop.permute.xlu0 %1472
      %1474 = vrot.lane.b32.xlu0 %v1457, 48
      %v1475 = vpop.permute.xlu0 %1474
      %1476 = vrot.lane.b32.xlu0 %v1458, 48
      %v1477 = vpop.permute.xlu0 %1476
      %1478 = vrot.lane.b32.xlu0 %v1459, 48
      %v1479 = vpop.permute.xlu0 %1478
      %1480 = vrot.lane.b32.xlu0 %v1460, 48
      %v1481 = vpop.permute.xlu0 %1480
      %1482 = vrot.lane.b32.xlu0 %v1461, 48
      %v1483 = vpop.permute.xlu0 %1482
      %1484 = vrot.lane.b32.xlu0 %v1462, 48
      %v1485 = vpop.permute.xlu0 %1484
      %1486 = vrot.lane.b32.xlu0 %v1463, 48
      %v1487 = vpop.permute.xlu0 %1486
      %1488 = vrot.lane.b32.xlu0 %v1464, 48
      %v1489 = vpop.permute.xlu0 %1488
      %1490 = vrot.lane.b32.xlu0 %v1465, 48
      %v1491 = vpop.permute.xlu0 %1490
      %1492 = vrot.lane.b32.xlu0 %v1466, 48
      %v1493 = vpop.permute.xlu0 %1492
      %1494 = vrot.lane.b32.xlu0 %v1467, 48
      %v1495 = vpop.permute.xlu0 %1494
      %1496 = vrot.lane.b32.xlu0 %v1468, 48
      %v1497 = vpop.permute.xlu0 %1496
      %1498 = vrot.lane.b32.xlu0 %v1469, 48
      %v1499 = vpop.permute.xlu0 %1498
      %1500 = vrot.lane.b32.xlu0 %v1470, 48
      %v1501 = vpop.permute.xlu0 %1500
      %1502 = vrot.lane.b32.xlu0 %v1471, 48
      %v1503 = vpop.permute.xlu0 %1502
      %v1520 = vunpack.c.l.b16 %v366
      %v1521 = vunpack.c.l.b16 %v367
      %v1522 = vunpack.c.l.b16 %v368
      %v1523 = vunpack.c.l.b16 %v369
      %v1524 = vunpack.c.l.b16 %v370
      %v1525 = vunpack.c.l.b16 %v371
      %v1526 = vunpack.c.l.b16 %v372
      %v1527 = vunpack.c.l.b16 %v373
      %v1528 = vunpack.c.l.b16 %v374
      %v1529 = vunpack.c.l.b16 %v375
      %v1530 = vunpack.c.l.b16 %v376
      %v1531 = vunpack.c.l.b16 %v377
      %v1532 = vunpack.c.l.b16 %v378
      %v1533 = vunpack.c.l.b16 %v379
      %v1534 = vunpack.c.l.b16 %v380
      %v1535 = vunpack.c.l.b16 %v381
      %v1536 = vpack.c.b16 %v1520, %v1520
      %v1537 = vpack.c.b16 %v1521, %v1521
      %v1538 = vpack.c.b16 %v1522, %v1522
      %v1539 = vpack.c.b16 %v1523, %v1523
      %v1540 = vpack.c.b16 %v1524, %v1524
      %v1541 = vpack.c.b16 %v1525, %v1525
      %v1542 = vpack.c.b16 %v1526, %v1526
      %v1543 = vpack.c.b16 %v1527, %v1527
      %v1544 = vpack.c.b16 %v1528, %v1528
      %v1545 = vpack.c.b16 %v1529, %v1529
      %v1546 = vpack.c.b16 %v1530, %v1530
      %v1547 = vpack.c.b16 %v1531, %v1531
      %v1548 = vpack.c.b16 %v1532, %v1532
      %v1549 = vpack.c.b16 %v1533, %v1533
      %v1550 = vpack.c.b16 %v1534, %v1534
      %v1551 = vpack.c.b16 %v1535, %v1535
      %v1553 = vshrl.u32 %v1456, 16
      %v1555 = vshll.u32 %v1456, 16
      %v1557 = vrot.slane %v1555, 1
      %v1558 = vor.u32 %v1553, %v1557
      %v1560 = vshll.u32 %v1536, 16
      %v1562 = vrot.slane %v1560, 1
      %v1563 = vsel %vm526, %v1558, %v1562
      %v1565 = vshrl.u32 %v1457, 16
      %v1567 = vshll.u32 %v1457, 16
      %v1569 = vrot.slane %v1567, 1
      %v1570 = vor.u32 %v1565, %v1569
      %v1572 = vshll.u32 %v1537, 16
      %v1574 = vrot.slane %v1572, 1
      %v1575 = vsel %vm526, %v1570, %v1574
      %v1577 = vshrl.u32 %v1458, 16
      %v1579 = vshll.u32 %v1458, 16
      %v1581 = vrot.slane %v1579, 1
      %v1582 = vor.u32 %v1577, %v1581
      %v1584 = vshll.u32 %v1538, 16
      %v1586 = vrot.slane %v1584, 1
      %v1587 = vsel %vm526, %v1582, %v1586
      %v1589 = vshrl.u32 %v1459, 16
      %v1591 = vshll.u32 %v1459, 16
      %v1593 = vrot.slane %v1591, 1
      %v1594 = vor.u32 %v1589, %v1593
      %v1596 = vshll.u32 %v1539, 16
      %v1598 = vrot.slane %v1596, 1
      %v1599 = vsel %vm526, %v1594, %v1598
      %v1601 = vshrl.u32 %v1460, 16
      %v1603 = vshll.u32 %v1460, 16
      %v1605 = vrot.slane %v1603, 1
      %v1606 = vor.u32 %v1601, %v1605
      %v1608 = vshll.u32 %v1540, 16
      %v1610 = vrot.slane %v1608, 1
      %v1611 = vsel %vm526, %v1606, %v1610
      %v1613 = vshrl.u32 %v1461, 16
      %v1615 = vshll.u32 %v1461, 16
      %v1617 = vrot.slane %v1615, 1
      %v1618 = vor.u32 %v1613, %v1617
      %v1620 = vshll.u32 %v1541, 16
      %v1622 = vrot.slane %v1620, 1
      %v1623 = vsel %vm526, %v1618, %v1622
      %v1625 = vshrl.u32 %v1462, 16
      %v1627 = vshll.u32 %v1462, 16
      %v1629 = vrot.slane %v1627, 1
      %v1630 = vor.u32 %v1625, %v1629
      %v1632 = vshll.u32 %v1542, 16
      %v1634 = vrot.slane %v1632, 1
      %v1635 = vsel %vm526, %v1630, %v1634
      %v1637 = vshrl.u32 %v1463, 16
      %v1639 = vshll.u32 %v1463, 16
      %v1641 = vrot.slane %v1639, 1
      %v1642 = vor.u32 %v1637, %v1641
      %v1644 = vshll.u32 %v1543, 16
      %v1646 = vrot.slane %v1644, 1
      %v1647 = vsel %vm526, %v1642, %v1646
      %v1649 = vshrl.u32 %v1464, 16
      %v1651 = vshll.u32 %v1464, 16
      %v1653 = vrot.slane %v1651, 1
      %v1654 = vor.u32 %v1649, %v1653
      %v1656 = vshll.u32 %v1544, 16
      %v1658 = vrot.slane %v1656, 1
      %v1659 = vsel %vm526, %v1654, %v1658
      %v1661 = vshrl.u32 %v1465, 16
      %v1663 = vshll.u32 %v1465, 16
      %v1665 = vrot.slane %v1663, 1
      %v1666 = vor.u32 %v1661, %v1665
      %v1668 = vshll.u32 %v1545, 16
      %v1670 = vrot.slane %v1668, 1
      %v1671 = vsel %vm526, %v1666, %v1670
      %v1673 = vshrl.u32 %v1466, 16
      %v1675 = vshll.u32 %v1466, 16
      %v1677 = vrot.slane %v1675, 1
      %v1678 = vor.u32 %v1673, %v1677
      %v1680 = vshll.u32 %v1546, 16
      %v1682 = vrot.slane %v1680, 1
      %v1683 = vsel %vm526, %v1678, %v1682
      %v1685 = vshrl.u32 %v1467, 16
      %v1687 = vshll.u32 %v1467, 16
      %v1689 = vrot.slane %v1687, 1
      %v1690 = vor.u32 %v1685, %v1689
      %v1692 = vshll.u32 %v1547, 16
      %v1694 = vrot.slane %v1692, 1
      %v1695 = vsel %vm526, %v1690, %v1694
      %v1697 = vshrl.u32 %v1468, 16
      %v1699 = vshll.u32 %v1468, 16
      %v1701 = vrot.slane %v1699, 1
      %v1702 = vor.u32 %v1697, %v1701
      %v1704 = vshll.u32 %v1548, 16
      %v1706 = vrot.slane %v1704, 1
      %v1707 = vsel %vm526, %v1702, %v1706
      %v1709 = vshrl.u32 %v1469, 16
      %v1711 = vshll.u32 %v1469, 16
      %v1713 = vrot.slane %v1711, 1
      %v1714 = vor.u32 %v1709, %v1713
      %v1716 = vshll.u32 %v1549, 16
      %v1718 = vrot.slane %v1716, 1
      %v1719 = vsel %vm526, %v1714, %v1718
      %v1721 = vshrl.u32 %v1470, 16
      %v1723 = vshll.u32 %v1470, 16
      %v1725 = vrot.slane %v1723, 1
      %v1726 = vor.u32 %v1721, %v1725
      %v1728 = vshll.u32 %v1550, 16
      %v1730 = vrot.slane %v1728, 1
      %v1731 = vsel %vm526, %v1726, %v1730
      %v1733 = vshrl.u32 %v1471, 16
      %v1735 = vshll.u32 %v1471, 16
      %v1737 = vrot.slane %v1735, 1
      %v1738 = vor.u32 %v1733, %v1737
      %v1740 = vshll.u32 %v1551, 16
      %v1742 = vrot.slane %v1740, 1
      %v1743 = vsel %vm526, %v1738, %v1742
      %1744 = vrot.lane.b32.xlu0 %v1563, 56
      %v1745 = vpop.permute.xlu0 %1744
      %1746 = vrot.lane.b32.xlu0 %v1575, 56
      %v1747 = vpop.permute.xlu0 %1746
      %1748 = vrot.lane.b32.xlu0 %v1587, 56
      %v1749 = vpop.permute.xlu0 %1748
      %1750 = vrot.lane.b32.xlu0 %v1599, 56
      %v1751 = vpop.permute.xlu0 %1750
      %1752 = vrot.lane.b32.xlu0 %v1611, 56
      %v1753 = vpop.permute.xlu0 %1752
      %1754 = vrot.lane.b32.xlu0 %v1623, 56
      %v1755 = vpop.permute.xlu0 %1754
      %1756 = vrot.lane.b32.xlu0 %v1635, 56
      %v1757 = vpop.permute.xlu0 %1756
      %1758 = vrot.lane.b32.xlu0 %v1647, 56
      %v1759 = vpop.permute.xlu0 %1758
      %1760 = vrot.lane.b32.xlu0 %v1659, 56
      %v1761 = vpop.permute.xlu0 %1760
      %1762 = vrot.lane.b32.xlu0 %v1671, 56
      %v1763 = vpop.permute.xlu0 %1762
      %1764 = vrot.lane.b32.xlu0 %v1683, 56
      %v1765 = vpop.permute.xlu0 %1764
      %1766 = vrot.lane.b32.xlu0 %v1695, 56
      %v1767 = vpop.permute.xlu0 %1766
      %1768 = vrot.lane.b32.xlu0 %v1707, 56
      %v1769 = vpop.permute.xlu0 %1768
      %1770 = vrot.lane.b32.xlu0 %v1719, 56
      %v1771 = vpop.permute.xlu0 %1770
      %1772 = vrot.lane.b32.xlu0 %v1731, 56
      %v1773 = vpop.permute.xlu0 %1772
      %1774 = vrot.lane.b32.xlu0 %v1743, 56
      %v1775 = vpop.permute.xlu0 %1774
      %v1792 = vunpack.c.l.b16 %v382
      %v1793 = vunpack.c.l.b16 %v383
      %v1794 = vunpack.c.l.b16 %v384
      %v1795 = vunpack.c.l.b16 %v385
      %v1796 = vunpack.c.l.b16 %v386
      %v1797 = vunpack.c.l.b16 %v387
      %v1798 = vunpack.c.l.b16 %v388
      %v1799 = vunpack.c.l.b16 %v389
      %v1800 = vunpack.c.l.b16 %v390
      %v1801 = vunpack.c.l.b16 %v391
      %v1802 = vunpack.c.l.b16 %v392
      %v1803 = vunpack.c.l.b16 %v393
      %v1804 = vunpack.c.l.b16 %v394
      %v1805 = vunpack.c.l.b16 %v395
      %v1806 = vunpack.c.l.b16 %v396
      %v1807 = vunpack.c.l.b16 %v397
      %v1808 = vpack.c.b16 %v1425, %v1792
      %v1809 = vpack.c.b16 %v1427, %v1793
      %v1810 = vpack.c.b16 %v1429, %v1794
      %v1811 = vpack.c.b16 %v1431, %v1795
      %v1812 = vpack.c.b16 %v1433, %v1796
      %v1813 = vpack.c.b16 %v1435, %v1797
      %v1814 = vpack.c.b16 %v1437, %v1798
      %v1815 = vpack.c.b16 %v1439, %v1799
      %v1816 = vpack.c.b16 %v1441, %v1800
      %v1817 = vpack.c.b16 %v1443, %v1801
      %v1818 = vpack.c.b16 %v1445, %v1802
      %v1819 = vpack.c.b16 %v1447, %v1803
      %v1820 = vpack.c.b16 %v1449, %v1804
      %v1821 = vpack.c.b16 %v1451, %v1805
      %v1822 = vpack.c.b16 %v1453, %v1806
      %v1823 = vpack.c.b16 %v1455, %v1807
      %v1824 = vrot.slane %v1808, 1
      %v1825 = vrot.slane %v1536, 1
      %v1826 = vsel %vm799, %v1824, %v1825
      %v1827 = vrot.slane %v1809, 1
      %v1828 = vrot.slane %v1537, 1
      %v1829 = vsel %vm799, %v1827, %v1828
      %v1830 = vrot.slane %v1810, 1
      %v1831 = vrot.slane %v1538, 1
      %v1832 = vsel %vm799, %v1830, %v1831
      %v1833 = vrot.slane %v1811, 1
      %v1834 = vrot.slane %v1539, 1
      %v1835 = vsel %vm799, %v1833, %v1834
      %v1836 = vrot.slane %v1812, 1
      %v1837 = vrot.slane %v1540, 1
      %v1838 = vsel %vm799, %v1836, %v1837
      %v1839 = vrot.slane %v1813, 1
      %v1840 = vrot.slane %v1541, 1
      %v1841 = vsel %vm799, %v1839, %v1840
      %v1842 = vrot.slane %v1814, 1
      %v1843 = vrot.slane %v1542, 1
      %v1844 = vsel %vm799, %v1842, %v1843
      %v1845 = vrot.slane %v1815, 1
      %v1846 = vrot.slane %v1543, 1
      %v1847 = vsel %vm799, %v1845, %v1846
      %v1848 = vrot.slane %v1816, 1
      %v1849 = vrot.slane %v1544, 1
      %v1850 = vsel %vm799, %v1848, %v1849
      %v1851 = vrot.slane %v1817, 1
      %v1852 = vrot.slane %v1545, 1
      %v1853 = vsel %vm799, %v1851, %v1852
      %v1854 = vrot.slane %v1818, 1
      %v1855 = vrot.slane %v1546, 1
      %v1856 = vsel %vm799, %v1854, %v1855
      %v1857 = vrot.slane %v1819, 1
      %v1858 = vrot.slane %v1547, 1
      %v1859 = vsel %vm799, %v1857, %v1858
      %v1860 = vrot.slane %v1820, 1
      %v1861 = vrot.slane %v1548, 1
      %v1862 = vsel %vm799, %v1860, %v1861
      %v1863 = vrot.slane %v1821, 1
      %v1864 = vrot.slane %v1549, 1
      %v1865 = vsel %vm799, %v1863, %v1864
      %v1866 = vrot.slane %v1822, 1
      %v1867 = vrot.slane %v1550, 1
      %v1868 = vsel %vm799, %v1866, %v1867
      %v1869 = vrot.slane %v1823, 1
      %v1870 = vrot.slane %v1551, 1
      %v1871 = vsel %vm799, %v1869, %v1870
      %1872 = vrot.lane.b32.xlu0 %v1826, 64
      %v1873 = vpop.permute.xlu0 %1872
      %1874 = vrot.lane.b32.xlu0 %v1829, 64
      %v1875 = vpop.permute.xlu0 %1874
      %1876 = vrot.lane.b32.xlu0 %v1832, 64
      %v1877 = vpop.permute.xlu0 %1876
      %1878 = vrot.lane.b32.xlu0 %v1835, 64
      %v1879 = vpop.permute.xlu0 %1878
      %1880 = vrot.lane.b32.xlu0 %v1838, 64
      %v1881 = vpop.permute.xlu0 %1880
      %1882 = vrot.lane.b32.xlu0 %v1841, 64
      %v1883 = vpop.permute.xlu0 %1882
      %1884 = vrot.lane.b32.xlu0 %v1844, 64
      %v1885 = vpop.permute.xlu0 %1884
      %1886 = vrot.lane.b32.xlu0 %v1847, 64
      %v1887 = vpop.permute.xlu0 %1886
      %1888 = vrot.lane.b32.xlu0 %v1850, 64
      %v1889 = vpop.permute.xlu0 %1888
      %1890 = vrot.lane.b32.xlu0 %v1853, 64
      %v1891 = vpop.permute.xlu0 %1890
      %1892 = vrot.lane.b32.xlu0 %v1856, 64
      %v1893 = vpop.permute.xlu0 %1892
      %1894 = vrot.lane.b32.xlu0 %v1859, 64
      %v1895 = vpop.permute.xlu0 %1894
      %1896 = vrot.lane.b32.xlu0 %v1862, 64
      %v1897 = vpop.permute.xlu0 %1896
      %1898 = vrot.lane.b32.xlu0 %v1865, 64
      %v1899 = vpop.permute.xlu0 %1898
      %1900 = vrot.lane.b32.xlu0 %v1868, 64
      %v1901 = vpop.permute.xlu0 %1900
      %1902 = vrot.lane.b32.xlu0 %v1871, 64
      %v1903 = vpop.permute.xlu0 %1902
      %vm1904 = vcmask 64512
      %v1906 = vsel %vm1904, %v462, %v720
      %v1908 = vsel %vm1904, %v463, %v722
      %v1910 = vsel %vm1904, %v464, %v724
      %v1912 = vsel %vm1904, %v465, %v726
      %v1914 = vsel %vm1904, %v466, %v728
      %v1916 = vsel %vm1904, %v467, %v730
      %v1918 = vsel %vm1904, %v468, %v732
      %v1920 = vsel %vm1904, %v469, %v734
      %v1922 = vsel %vm1904, %v470, %v736
      %v1924 = vsel %vm1904, %v471, %v738
      %v1926 = vsel %vm1904, %v472, %v740
      %v1928 = vsel %vm1904, %v473, %v742
      %v1930 = vsel %vm1904, %v474, %v744
      %v1932 = vsel %vm1904, %v475, %v746
      %v1934 = vsel %vm1904, %v476, %v748
      %v1936 = vsel %vm1904, %v477, %v750
      %vm1937 = vcmask 130048
      %v1939 = vsel %vm1937, %v1906, %v849
      %v1941 = vsel %vm1937, %v1908, %v851
      %v1943 = vsel %vm1937, %v1910, %v853
      %v1945 = vsel %vm1937, %v1912, %v855
      %v1947 = vsel %vm1937, %v1914, %v857
      %v1949 = vsel %vm1937, %v1916, %v859
      %v1951 = vsel %vm1937, %v1918, %v861
      %v1953 = vsel %vm1937, %v1920, %v863
      %v1955 = vsel %vm1937, %v1922, %v865
      %v1957 = vsel %vm1937, %v1924, %v867
      %v1959 = vsel %vm1937, %v1926, %v869
      %v1961 = vsel %vm1937, %v1928, %v871
      %v1963 = vsel %vm1937, %v1930, %v873
      %v1965 = vsel %vm1937, %v1932, %v875
      %v1967 = vsel %vm1937, %v1934, %v877
      %v1969 = vsel %vm1937, %v1936, %v879
      %vm1970 = vcmask 195584
      %v1972 = vsel %vm1970, %v1939, %v961
      %v1974 = vsel %vm1970, %v1941, %v963
      %v1976 = vsel %vm1970, %v1943, %v965
      %v1978 = vsel %vm1970, %v1945, %v967
      %v1980 = vsel %vm1970, %v1947, %v969
      %v1982 = vsel %vm1970, %v1949, %v971
      %v1984 = vsel %vm1970, %v1951, %v973
      %v1986 = vsel %vm1970, %v1953, %v975
      %v1988 = vsel %vm1970, %v1955, %v977
      %v1990 = vsel %vm1970, %v1957, %v979
      %v1992 = vsel %vm1970, %v1959, %v981
      %v1994 = vsel %vm1970, %v1961, %v983
      %v1996 = vsel %vm1970, %v1963, %v985
      %v1998 = vsel %vm1970, %v1965, %v987
      %v2000 = vsel %vm1970, %v1967, %v989
      %v2002 = vsel %vm1970, %v1969, %v991
      %vm2003 = vcmask 261120
      %v2005 = vsel %vm2003, %v1972, %v1233
      %v2007 = vsel %vm2003, %v1974, %v1235
      %v2009 = vsel %vm2003, %v1976, %v1237
      %v2011 = vsel %vm2003, %v1978, %v1239
      %v2013 = vsel %vm2003, %v1980, %v1241
      %v2015 = vsel %vm2003, %v1982, %v1243
      %v2017 = vsel %vm2003, %v1984, %v1245
      %v2019 = vsel %vm2003, %v1986, %v1247
      %v2021 = vsel %vm2003, %v1988, %v1249
      %v2023 = vsel %vm2003, %v1990, %v1251
      %v2025 = vsel %vm2003, %v1992, %v1253
      %v2027 = vsel %vm2003, %v1994, %v1255
      %v2029 = vsel %vm2003, %v1996, %v1257
      %v2031 = vsel %vm2003, %v1998, %v1259
      %v2033 = vsel %vm2003, %v2000, %v1261
      %v2035 = vsel %vm2003, %v2002, %v1263
      %vm2036 = vcmask 326656
      %v2038 = vsel %vm2036, %v2005, %v1361
      %v2040 = vsel %vm2036, %v2007, %v1363
      %v2042 = vsel %vm2036, %v2009, %v1365
      %v2044 = vsel %vm2036, %v2011, %v1367
      %v2046 = vsel %vm2036, %v2013, %v1369
      %v2048 = vsel %vm2036, %v2015, %v1371
      %v2050 = vsel %vm2036, %v2017, %v1373
      %v2052 = vsel %vm2036, %v2019, %v1375
      %v2054 = vsel %vm2036, %v2021, %v1377
      %v2056 = vsel %vm2036, %v2023, %v1379
      %v2058 = vsel %vm2036, %v2025, %v1381
      %v2060 = vsel %vm2036, %v2027, %v1383
      %v2062 = vsel %vm2036, %v2029, %v1385
      %v2064 = vsel %vm2036, %v2031, %v1387
      %v2066 = vsel %vm2036, %v2033, %v1389
      %v2068 = vsel %vm2036, %v2035, %v1391
      %vm2069 = vcmask 392192
      %v2071 = vsel %vm2069, %v2038, %v1473
      %v2073 = vsel %vm2069, %v2040, %v1475
      %v2075 = vsel %vm2069, %v2042, %v1477
      %v2077 = vsel %vm2069, %v2044, %v1479
      %v2079 = vsel %vm2069, %v2046, %v1481
      %v2081 = vsel %vm2069, %v2048, %v1483
      %v2083 = vsel %vm2069, %v2050, %v1485
      %v2085 = vsel %vm2069, %v2052, %v1487
      %v2087 = vsel %vm2069, %v2054, %v1489
      %v2089 = vsel %vm2069, %v2056, %v1491
      %v2091 = vsel %vm2069, %v2058, %v1493
      %v2093 = vsel %vm2069, %v2060, %v1495
      %v2095 = vsel %vm2069, %v2062, %v1497
      %v2097 = vsel %vm2069, %v2064, %v1499
      %v2099 = vsel %vm2069, %v2066, %v1501
      %v2101 = vsel %vm2069, %v2068, %v1503
      %vm2102 = vcmask 457728
      %v2104 = vsel %vm2102, %v2071, %v1745
      %v2106 = vsel %vm2102, %v2073, %v1747
      %v2108 = vsel %vm2102, %v2075, %v1749
      %v2110 = vsel %vm2102, %v2077, %v1751
      %v2112 = vsel %vm2102, %v2079, %v1753
      %v2114 = vsel %vm2102, %v2081, %v1755
      %v2116 = vsel %vm2102, %v2083, %v1757
      %v2118 = vsel %vm2102, %v2085, %v1759
      %v2120 = vsel %vm2102, %v2087, %v1761
      %v2122 = vsel %vm2102, %v2089, %v1763
      %v2124 = vsel %vm2102, %v2091, %v1765
      %v2126 = vsel %vm2102, %v2093, %v1767
      %v2128 = vsel %vm2102, %v2095, %v1769
      %v2130 = vsel %vm2102, %v2097, %v1771
      %v2132 = vsel %vm2102, %v2099, %v1773
      %v2134 = vsel %vm2102, %v2101, %v1775
      %vm2135 = vcmask 523264
      %v2137 = vsel %vm2135, %v2104, %v1873
      %v2139 = vsel %vm2135, %v2106, %v1875
      %v2141 = vsel %vm2135, %v2108, %v1877
      %v2143 = vsel %vm2135, %v2110, %v1879
      %v2145 = vsel %vm2135, %v2112, %v1881
      %v2147 = vsel %vm2135, %v2114, %v1883
      %v2149 = vsel %vm2135, %v2116, %v1885
      %v2151 = vsel %vm2135, %v2118, %v1887
      %v2153 = vsel %vm2135, %v2120, %v1889
      %v2155 = vsel %vm2135, %v2122, %v1891
      %v2157 = vsel %vm2135, %v2124, %v1893
      %v2159 = vsel %vm2135, %v2126, %v1895
      %v2161 = vsel %vm2135, %v2128, %v1897
      %v2163 = vsel %vm2135, %v2130, %v1899
      %v2165 = vsel %vm2135, %v2132, %v1901
      %v2167 = vsel %vm2135, %v2134, %v1903
      %v2168 = vld [vmem:[%s1] sm:$0xf]
      %v2169 = vld [vmem:[%s1 + $0x4] sm:$0xf]
      %v2170 = vld [vmem:[%s1 + $0x8] sm:$0xf]
      %v2171 = vld [vmem:[%s1 + $0xc] sm:$0xf]
      %v2172 = vld [vmem:[%s1 + $0x10] sm:$0xf]
      %v2173 = vld [vmem:[%s1 + $0x14] sm:$0xf]
      %v2174 = vld [vmem:[%s1 + $0x18] sm:$0xf]
      %v2175 = vld [vmem:[%s1 + $0x1c] sm:$0xf]
      %v2176 = vld [vmem:[%s1 + $0x20] sm:$0xf]
      %v2177 = vld [vmem:[%s2] sm:$0x1]
      %v2179 = vlaneseq
      %v2180 = vshrl.u32 %v2179, 7
      %v2181 = vsub.s32 0, %v2180
      %v2182 = vrot.slane %v2177, %v2181
      %v2193 = vunpack.c.l.b16 %v2168
      %v2194 = vunpack.c.l.b16 %v2169
      %v2195 = vunpack.c.l.b16 %v2170
      %v2196 = vunpack.c.l.b16 %v2171
      %v2197 = vunpack.c.l.b16 %v2172
      %v2198 = vunpack.c.l.b16 %v2173
      %v2199 = vunpack.c.l.b16 %v2174
      %v2200 = vunpack.c.l.b16 %v2175
      %v2201 = vunpack.c.l.b16 %v2176
      %v2202 = vpack.c.b16 %v2194, %v2193
      %v2203 = vpack.c.b16 %v2196, %v2195
      %v2204 = vpack.c.b16 %v2198, %v2197
      %v2205 = vpack.c.b16 %v2200, %v2199
      %v2206 = vpack.c.b16 %v2201, %v2201
      %vm2211 = vcmask 588800
      %v2212 = vsel %vm2211, %v2137, 0
      %v2214 = vsel %vm2211, %v2139, 0
      %v2216 = vsel %vm2211, %v2141, 0
      %v2218 = vsel %vm2211, %v2143, 0
      %v2220 = vsel %vm2211, %v2145, 0
      %v2222 = vsel %vm2211, %v2147, 0
      %v2224 = vsel %vm2211, %v2149, 0
      %v2226 = vsel %vm2211, %v2151, 0
      %v2228 = vsel %vm2211, %v2153, 0
      %v2230 = vsel %vm2211, %v2155, 0
      %v2232 = vsel %vm2211, %v2157, 0
      %v2234 = vsel %vm2211, %v2159, 0
      %v2236 = vsel %vm2211, %v2161, 0
      %v2238 = vsel %vm2211, %v2163, 0
      %v2240 = vsel %vm2211, %v2165, 0
      %v2242 = vsel %vm2211, %v2167, 0
      %vm2244 = vcmask 1043456
      %v2246 = vsel %vm2244, %v2206, 0
      %2248 = vmatprep.subr.bf16.mxu0 0
      %2249 = vmatpush1.bf16.msra.mxu0 %v2202
      %2250 = vmatprep.subr.bf16.mxu0 0
      %2251 = vmatpush1.bf16.msra.mxu0 %v2203
      %2252 = vmatprep.subr.bf16.mxu0 0
      %2253 = vmatpush1.bf16.msra.mxu0 %v2204
      %2254 = vmatprep.subr.bf16.mxu0 0
      %2255 = vmatpush1.bf16.msra.mxu0 %v2205
      %2256 = vmatprep.subr.bf16.mxu0 0
      %2257 = vmatpush1.bf16.msra.mxu0 %v2246
      %2258 = vmatprep.subr.bf16.mxu0 0
      %2259 = vmatpush1.bf16.msra.mxu0 0
      %2260 = vmatprep.subr.bf16.mxu0 0
      %2261 = vmatpush1.bf16.msra.mxu0 0
      %2262 = vmatprep.subr.bf16.mxu0 0
      %2263 = vmatpush1.bf16.msra.mxu0 0
      %2264 = vmatprep.subr.bf16.mxu0 0
      %2265 = vmatpush1.bf16.msra.mxu0 0
      %2266 = vmatprep.subr.bf16.mxu0 0
      %2267 = vmatpush1.bf16.msra.mxu0 0
      %2268 = vmatprep.subr.bf16.mxu0 0
      %2269 = vmatpush1.bf16.msra.mxu0 0
      %2270 = vmatprep.subr.bf16.mxu0 0
      %2271 = vmatpush1.bf16.msra.mxu0 0
      %2272 = vmatprep.subr.bf16.mxu0 0
      %2273 = vmatpush1.bf16.msra.mxu0 0
      %2274 = vmatprep.subr.bf16.mxu0 0
      %2275 = vmatpush1.bf16.msra.mxu0 0
      %2276 = vmatprep.subr.bf16.mxu0 0
      %2277 = vmatpush1.bf16.msra.mxu0 0
      %2278 = vmatprep.subr.bf16.mxu0 0
      %2279 = vmatpush1.bf16.msra.mxu0 0
      %2280 = vmatprep.mubr.bf16.mxu0 0
      %2281 = vmatmul.mubr.bf16.gmra.mrb[0].mxu0 %v2212
      %v2282 = vpop.f32.mrb[0].mxu0
      %v2283 = vadd.f32 %v2182, %v2282
      %v2284 = vpop.f32.mrb[0].mxu0
      %v2285 = vpop.f32.mrb[0].mxu0
      %v2286 = vadd.f32 %v2182, %v2285
      %v2287 = vpop.f32.mrb[0].mxu0
      %2288 = vmatprep.mubr.bf16.mxu0 0
      %2289 = vmatmul.mubr.bf16.gmra.mrb[0].mxu0 %v2214
      %v2290 = vpop.f32.mrb[0].mxu0
      %v2291 = vadd.f32 %v2182, %v2290
      %v2292 = vpop.f32.mrb[0].mxu0
      %v2293 = vpop.f32.mrb[0].mxu0
      %v2294 = vadd.f32 %v2182, %v2293
      %v2295 = vpop.f32.mrb[0].mxu0
      %2296 = vmatprep.mubr.bf16.mxu0 0
      %2297 = vmatmul.mubr.bf16.gmra.mrb[0].mxu0 %v2216
      %v2298 = vpop.f32.mrb[0].mxu0
      %v2299 = vadd.f32 %v2182, %v2298
      %v2300 = vpop.f32.mrb[0].mxu0
      %v2301 = vpop.f32.mrb[0].mxu0
      %v2302 = vadd.f32 %v2182, %v2301
      %v2303 = vpop.f32.mrb[0].mxu0
      %2304 = vmatprep.mubr.bf16.mxu0 0
      %2305 = vmatmul.mubr.bf16.gmra.mrb[0].mxu0 %v2218
      %v2306 = vpop.f32.mrb[0].mxu0
      %v2307 = vadd.f32 %v2182, %v2306
      %v2308 = vpop.f32.mrb[0].mxu0
      %v2309 = vpop.f32.mrb[0].mxu0
      %v2310 = vadd.f32 %v2182, %v2309
      %v2311 = vpop.f32.mrb[0].mxu0
      %2312 = vmatprep.mubr.bf16.mxu0 0
      %2313 = vmatmul.mubr.bf16.gmra.mrb[0].mxu0 %v2220
      %v2314 = vpop.f32.mrb[0].mxu0
      %v2315 = vadd.f32 %v2182, %v2314
      %v2316 = vpop.f32.mrb[0].mxu0
      %v2317 = vpop.f32.mrb[0].mxu0
      %v2318 = vadd.f32 %v2182, %v2317
      %v2319 = vpop.f32.mrb[0].mxu0
      %2320 = vmatprep.mubr.bf16.mxu0 0
      %2321 = vmatmul.mubr.bf16.gmra.mrb[0].mxu0 %v2222
      %v2322 = vpop.f32.mrb[0].mxu0
      %v2323 = vadd.f32 %v2182, %v2322
      %v2324 = vpop.f32.mrb[0].mxu0
      %v2325 = vpop.f32.mrb[0].mxu0
      %v2326 = vadd.f32 %v2182, %v2325
      %v2327 = vpop.f32.mrb[0].mxu0
      %2328 = vmatprep.mubr.bf16.mxu0 0
      %2329 = vmatmul.mubr.bf16.gmra.mrb[0].mxu0 %v2224
      %v2330 = vpop.f32.mrb[0].mxu0
      %v2331 = vadd.f32 %v2182, %v2330
      %v2332 = vpop.f32.mrb[0].mxu0
      %v2333 = vpop.f32.mrb[0].mxu0
      %v2334 = vadd.f32 %v2182, %v2333
      %v2335 = vpop.f32.mrb[0].mxu0
      %2336 = vmatprep.mubr.bf16.mxu0 0
      %2337 = vmatmul.mubr.bf16.gmra.mrb[0].mxu0 %v2226
      %v2338 = vpop.f32.mrb[0].mxu0
      %v2339 = vadd.f32 %v2182, %v2338
      %v2340 = vpop.f32.mrb[0].mxu0
      %v2341 = vpop.f32.mrb[0].mxu0
      %v2342 = vadd.f32 %v2182, %v2341
      %v2343 = vpop.f32.mrb[0].mxu0
      %2344 = vmatprep.mubr.bf16.mxu0 0
      %2345 = vmatmul.mubr.bf16.gmra.mrb[0].mxu0 %v2228
      %v2346 = vpop.f32.mrb[0].mxu0
      %v2347 = vadd.f32 %v2182, %v2346
      %v2348 = vpop.f32.mrb[0].mxu0
      %v2349 = vpop.f32.mrb[0].mxu0
      %v2350 = vadd.f32 %v2182, %v2349
      %v2351 = vpop.f32.mrb[0].mxu0
      %2352 = vmatprep.mubr.bf16.mxu0 0
      %2353 = vmatmul.mubr.bf16.gmra.mrb[0].mxu0 %v2230
      %v2354 = vpop.f32.mrb[0].mxu0
      %v2355 = vadd.f32 %v2182, %v2354
      %v2356 = vpop.f32.mrb[0].mxu0
      %v2357 = vpop.f32.mrb[0].mxu0
      %v2358 = vadd.f32 %v2182, %v2357
      %v2359 = vpop.f32.mrb[0].mxu0
      %2360 = vmatprep.mubr.bf16.mxu0 0
      %2361 = vmatmul.mubr.bf16.gmra.mrb[0].mxu0 %v2232
      %v2362 = vpop.f32.mrb[0].mxu0
      %v2363 = vadd.f32 %v2182, %v2362
      %v2364 = vpop.f32.mrb[0].mxu0
      %v2365 = vpop.f32.mrb[0].mxu0
      %v2366 = vadd.f32 %v2182, %v2365
      %v2367 = vpop.f32.mrb[0].mxu0
      %2368 = vmatprep.mubr.bf16.mxu0 0
      %2369 = vmatmul.mubr.bf16.gmra.mrb[0].mxu0 %v2234
      %v2370 = vpop.f32.mrb[0].mxu0
      %v2371 = vadd.f32 %v2182, %v2370
      %v2372 = vpop.f32.mrb[0].mxu0
      %v2373 = vpop.f32.mrb[0].mxu0
      %v2374 = vadd.f32 %v2182, %v2373
      %v2375 = vpop.f32.mrb[0].mxu0
      %2376 = vmatprep.mubr.bf16.mxu0 0
      %2377 = vmatmul.mubr.bf16.gmra.mrb[0].mxu0 %v2236
      %v2378 = vpop.f32.mrb[0].mxu0
      %v2379 = vadd.f32 %v2182, %v2378
      %v2380 = vpop.f32.mrb[0].mxu0
      %v2381 = vpop.f32.mrb[0].mxu0
      %v2382 = vadd.f32 %v2182, %v2381
      %v2383 = vpop.f32.mrb[0].mxu0
      %2384 = vmatprep.mubr.bf16.mxu0 0
      %2385 = vmatmul.mubr.bf16.gmra.mrb[0].mxu0 %v2238
      %v2386 = vpop.f32.mrb[0].mxu0
      %v2387 = vadd.f32 %v2182, %v2386
      %v2388 = vpop.f32.mrb[0].mxu0
      %v2389 = vpop.f32.mrb[0].mxu0
      %v2390 = vadd.f32 %v2182, %v2389
      %v2391 = vpop.f32.mrb[0].mxu0
      %2392 = vmatprep.mubr.bf16.mxu0 0
      %2393 = vmatmul.mubr.bf16.gmra.mrb[0].mxu0 %v2240
      %v2394 = vpop.f32.mrb[0].mxu0
      %v2395 = vadd.f32 %v2182, %v2394
      %v2396 = vpop.f32.mrb[0].mxu0
      %v2397 = vpop.f32.mrb[0].mxu0
      %v2398 = vadd.f32 %v2182, %v2397
      %v2399 = vpop.f32.mrb[0].mxu0
      %2400 = vmatprep.mubr.bf16.mxu0 0
      %2401 = vmatmul.mubr.bf16.gmra.mrb[0].mxu0 %v2242
      %v2402 = vpop.f32.mrb[0].mxu0
      %v2403 = vadd.f32 %v2182, %v2402
      %v2404 = vpop.f32.mrb[0].mxu0
      %v2405 = vpop.f32.mrb[0].mxu0
      %v2406 = vadd.f32 %v2182, %v2405
      %v2407 = vpop.f32.mrb[0].mxu0
      %2408 = vdwg.mxu0
      %v2409 = vxor.u32 %v2283, 2147483648
      %v2410 = vxor.u32 %v2286, 2147483648
      %v2411 = vxor.u32 %v2291, 2147483648
      %v2412 = vxor.u32 %v2294, 2147483648
      %v2413 = vxor.u32 %v2299, 2147483648
      %v2414 = vxor.u32 %v2302, 2147483648
      %v2415 = vxor.u32 %v2307, 2147483648
      %v2416 = vxor.u32 %v2310, 2147483648
      %v2417 = vxor.u32 %v2315, 2147483648
      %v2418 = vxor.u32 %v2318, 2147483648
      %v2419 = vxor.u32 %v2323, 2147483648
      %v2420 = vxor.u32 %v2326, 2147483648
      %v2421 = vxor.u32 %v2331, 2147483648
      %v2422 = vxor.u32 %v2334, 2147483648
      %v2423 = vxor.u32 %v2339, 2147483648
      %v2424 = vxor.u32 %v2342, 2147483648
      %v2425 = vxor.u32 %v2347, 2147483648
      %v2426 = vxor.u32 %v2350, 2147483648
      %v2427 = vxor.u32 %v2355, 2147483648
      %v2428 = vxor.u32 %v2358, 2147483648
      %v2429 = vxor.u32 %v2363, 2147483648
      %v2430 = vxor.u32 %v2366, 2147483648
      %v2431 = vxor.u32 %v2371, 2147483648
      %v2432 = vxor.u32 %v2374, 2147483648
      %v2433 = vxor.u32 %v2379, 2147483648
      %v2434 = vxor.u32 %v2382, 2147483648
      %v2435 = vxor.u32 %v2387, 2147483648
      %v2436 = vxor.u32 %v2390, 2147483648
      %v2437 = vxor.u32 %v2395, 2147483648
      %v2438 = vxor.u32 %v2398, 2147483648
      %v2439 = vxor.u32 %v2403, 2147483648
      %v2440 = vxor.u32 %v2406, 2147483648
      %v2441 = vmul.f32 %v2409, 1.442695
      %v2442 = vpow.pop %v2441
      %v2443 = vmul.f32 %v2410, 1.442695
      %v2444 = vpow.pop %v2443
      %v2445 = vmul.f32 %v2411, 1.442695
      %v2446 = vpow.pop %v2445
      %v2447 = vmul.f32 %v2412, 1.442695
      %v2448 = vpow.pop %v2447
      %v2449 = vmul.f32 %v2413, 1.442695
      %v2450 = vpow.pop %v2449
      %v2451 = vmul.f32 %v2414, 1.442695
      %v2452 = vpow.pop %v2451
      %v2453 = vmul.f32 %v2415, 1.442695
      %v2454 = vpow.pop %v2453
      %v2455 = vmul.f32 %v2416, 1.442695
      %v2456 = vpow.pop %v2455
      %v2457 = vmul.f32 %v2417, 1.442695
      %v2458 = vpow.pop %v2457
      %v2459 = vmul.f32 %v2418, 1.442695
      %v2460 = vpow.pop %v2459
      %v2461 = vmul.f32 %v2419, 1.442695
      %v2462 = vpow.pop %v2461
      %v2463 = vmul.f32 %v2420, 1.442695
      %v2464 = vpow.pop %v2463
      %v2465 = vmul.f32 %v2421, 1.442695
      %v2466 = vpow.pop %v2465
      %v2467 = vmul.f32 %v2422, 1.442695
      %v2468 = vpow.pop %v2467
      %v2469 = vmul.f32 %v2423, 1.442695
      %v2470 = vpow.pop %v2469
      %v2471 = vmul.f32 %v2424, 1.442695
      %v2472 = vpow.pop %v2471
      %v2473 = vmul.f32 %v2425, 1.442695
      %v2474 = vpow.pop %v2473
      %v2475 = vmul.f32 %v2426, 1.442695
      %v2476 = vpow.pop %v2475
      %v2477 = vmul.f32 %v2427, 1.442695
      %v2478 = vpow.pop %v2477
      %v2479 = vmul.f32 %v2428, 1.442695
      %v2480 = vpow.pop %v2479
      %v2481 = vmul.f32 %v2429, 1.442695
      %v2482 = vpow.pop %v2481
      %v2483 = vmul.f32 %v2430, 1.442695
      %v2484 = vpow.pop %v2483
      %v2485 = vmul.f32 %v2431, 1.442695
      %v2486 = vpow.pop %v2485
      %v2487 = vmul.f32 %v2432, 1.442695
      %v2488 = vpow.pop %v2487
      %v2489 = vmul.f32 %v2433, 1.442695
      %v2490 = vpow.pop %v2489
      %v2491 = vmul.f32 %v2434, 1.442695
      %v2492 = vpow.pop %v2491
      %v2493 = vmul.f32 %v2435, 1.442695
      %v2494 = vpow.pop %v2493
      %v2495 = vmul.f32 %v2436, 1.442695
      %v2496 = vpow.pop %v2495
      %v2497 = vmul.f32 %v2437, 1.442695
      %v2498 = vpow.pop %v2497
      %v2499 = vmul.f32 %v2438, 1.442695
      %v2500 = vpow.pop %v2499
      %v2501 = vmul.f32 %v2439, 1.442695
      %v2502 = vpow.pop %v2501
      %v2503 = vmul.f32 %v2440, 1.442695
      %v2504 = vpow.pop %v2503
      %v2505 = vadd.f32 %v2442, 1.0
      %v2506 = vadd.f32 %v2444, 1.0
      %v2507 = vadd.f32 %v2446, 1.0
      %v2508 = vadd.f32 %v2448, 1.0
      %v2509 = vadd.f32 %v2450, 1.0
      %v2510 = vadd.f32 %v2452, 1.0
      %v2511 = vadd.f32 %v2454, 1.0
      %v2512 = vadd.f32 %v2456, 1.0
      %v2513 = vadd.f32 %v2458, 1.0
      %v2514 = vadd.f32 %v2460, 1.0
      %v2515 = vadd.f32 %v2462, 1.0
      %v2516 = vadd.f32 %v2464, 1.0
      %v2517 = vadd.f32 %v2466, 1.0
      %v2518 = vadd.f32 %v2468, 1.0
      %v2519 = vadd.f32 %v2470, 1.0
      %v2520 = vadd.f32 %v2472, 1.0
      %v2521 = vadd.f32 %v2474, 1.0
      %v2522 = vadd.f32 %v2476, 1.0
      %v2523 = vadd.f32 %v2478, 1.0
      %v2524 = vadd.f32 %v2480, 1.0
      %v2525 = vadd.f32 %v2482, 1.0
      %v2526 = vadd.f32 %v2484, 1.0
      %v2527 = vadd.f32 %v2486, 1.0
      %v2528 = vadd.f32 %v2488, 1.0
      %v2529 = vadd.f32 %v2490, 1.0
      %v2530 = vadd.f32 %v2492, 1.0
      %v2531 = vadd.f32 %v2494, 1.0
      %v2532 = vadd.f32 %v2496, 1.0
      %v2533 = vadd.f32 %v2498, 1.0
      %v2534 = vadd.f32 %v2500, 1.0
      %v2535 = vadd.f32 %v2502, 1.0
      %v2536 = vadd.f32 %v2504, 1.0
      %v2537 = vrcp.pop %v2505
      %v2538 = vmul.f32 1.0, %v2537
      %v2539 = vrcp.pop %v2506
      %v2540 = vmul.f32 1.0, %v2539
      %v2541 = vrcp.pop %v2507
      %v2542 = vmul.f32 1.0, %v2541
      %v2543 = vrcp.pop %v2508
      %v2544 = vmul.f32 1.0, %v2543
      %v2545 = vrcp.pop %v2509
      %v2546 = vmul.f32 1.0, %v2545
      %v2547 = vrcp.pop %v2510
      %v2548 = vmul.f32 1.0, %v2547
      %v2549 = vrcp.pop %v2511
      %v2550 = vmul.f32 1.0, %v2549
      %v2551 = vrcp.pop %v2512
      %v2552 = vmul.f32 1.0, %v2551
      %v2553 = vrcp.pop %v2513
      %v2554 = vmul.f32 1.0, %v2553
      %v2555 = vrcp.pop %v2514
      %v2556 = vmul.f32 1.0, %v2555
      %v2557 = vrcp.pop %v2515
      %v2558 = vmul.f32 1.0, %v2557
      %v2559 = vrcp.pop %v2516
      %v2560 = vmul.f32 1.0, %v2559
      %v2561 = vrcp.pop %v2517
      %v2562 = vmul.f32 1.0, %v2561
      %v2563 = vrcp.pop %v2518
      %v2564 = vmul.f32 1.0, %v2563
      %v2565 = vrcp.pop %v2519
      %v2566 = vmul.f32 1.0, %v2565
      %v2567 = vrcp.pop %v2520
      %v2568 = vmul.f32 1.0, %v2567
      %v2569 = vrcp.pop %v2521
      %v2570 = vmul.f32 1.0, %v2569
      %v2571 = vrcp.pop %v2522
      %v2572 = vmul.f32 1.0, %v2571
      %v2573 = vrcp.pop %v2523
      %v2574 = vmul.f32 1.0, %v2573
      %v2575 = vrcp.pop %v2524
      %v2576 = vmul.f32 1.0, %v2575
      %v2577 = vrcp.pop %v2525
      %v2578 = vmul.f32 1.0, %v2577
      %v2579 = vrcp.pop %v2526
      %v2580 = vmul.f32 1.0, %v2579
      %v2581 = vrcp.pop %v2527
      %v2582 = vmul.f32 1.0, %v2581
      %v2583 = vrcp.pop %v2528
      %v2584 = vmul.f32 1.0, %v2583
      %v2585 = vrcp.pop %v2529
      %v2586 = vmul.f32 1.0, %v2585
      %v2587 = vrcp.pop %v2530
      %v2588 = vmul.f32 1.0, %v2587
      %v2589 = vrcp.pop %v2531
      %v2590 = vmul.f32 1.0, %v2589
      %v2591 = vrcp.pop %v2532
      %v2592 = vmul.f32 1.0, %v2591
      %v2593 = vrcp.pop %v2533
      %v2594 = vmul.f32 1.0, %v2593
      %v2595 = vrcp.pop %v2534
      %v2596 = vmul.f32 1.0, %v2595
      %v2597 = vrcp.pop %v2535
      %v2598 = vmul.f32 1.0, %v2597
      %v2599 = vrcp.pop %v2536
      %v2600 = vmul.f32 1.0, %v2599
      %v2601 = vmul.f32 %v2283, %v2538
      %v2602 = vmul.f32 %v2286, %v2540
      %v2603 = vmul.f32 %v2291, %v2542
      %v2604 = vmul.f32 %v2294, %v2544
      %v2605 = vmul.f32 %v2299, %v2546
      %v2606 = vmul.f32 %v2302, %v2548
      %v2607 = vmul.f32 %v2307, %v2550
      %v2608 = vmul.f32 %v2310, %v2552
      %v2609 = vmul.f32 %v2315, %v2554
      %v2610 = vmul.f32 %v2318, %v2556
      %v2611 = vmul.f32 %v2323, %v2558
      %v2612 = vmul.f32 %v2326, %v2560
      %v2613 = vmul.f32 %v2331, %v2562
      %v2614 = vmul.f32 %v2334, %v2564
      %v2615 = vmul.f32 %v2339, %v2566
      %v2616 = vmul.f32 %v2342, %v2568
      %v2617 = vmul.f32 %v2347, %v2570
      %v2618 = vmul.f32 %v2350, %v2572
      %v2619 = vmul.f32 %v2355, %v2574
      %v2620 = vmul.f32 %v2358, %v2576
      %v2621 = vmul.f32 %v2363, %v2578
      %v2622 = vmul.f32 %v2366, %v2580
      %v2623 = vmul.f32 %v2371, %v2582
      %v2624 = vmul.f32 %v2374, %v2584
      %v2625 = vmul.f32 %v2379, %v2586
      %v2626 = vmul.f32 %v2382, %v2588
      %v2627 = vmul.f32 %v2387, %v2590
      %v2628 = vmul.f32 %v2390, %v2592
      %v2629 = vmul.f32 %v2395, %v2594
      %v2630 = vmul.f32 %v2398, %v2596
      %v2631 = vmul.f32 %v2403, %v2598
      %v2632 = vmul.f32 %v2406, %v2600
      %v2633 = vpack.c.bf16 %v2602, %v2601
      %v2634 = vpack.c.bf16 %v2604, %v2603
      %v2635 = vpack.c.bf16 %v2606, %v2605
      %v2636 = vpack.c.bf16 %v2608, %v2607
      %v2637 = vpack.c.bf16 %v2610, %v2609
      %v2638 = vpack.c.bf16 %v2612, %v2611
      %v2639 = vpack.c.bf16 %v2614, %v2613
      %v2640 = vpack.c.bf16 %v2616, %v2615
      %v2641 = vpack.c.bf16 %v2618, %v2617
      %v2642 = vpack.c.bf16 %v2620, %v2619
      %v2643 = vpack.c.bf16 %v2622, %v2621
      %v2644 = vpack.c.bf16 %v2624, %v2623
      %v2645 = vpack.c.bf16 %v2626, %v2625
      %v2646 = vpack.c.bf16 %v2628, %v2627
      %v2647 = vpack.c.bf16 %v2630, %v2629
      %v2648 = vpack.c.bf16 %v2632, %v2631
      %v2665 = vunpack.c.l.b16 %v2633
      %v2666 = vunpack.c.h.b16 %v2633
      %v2667 = vunpack.c.l.b16 %v2634
      %v2668 = vunpack.c.h.b16 %v2634
      %v2669 = vunpack.c.l.b16 %v2635
      %v2670 = vunpack.c.h.b16 %v2635
      %v2671 = vunpack.c.l.b16 %v2636
      %v2672 = vunpack.c.h.b16 %v2636
      %v2673 = vunpack.c.l.b16 %v2637
      %v2674 = vunpack.c.h.b16 %v2637
      %v2675 = vunpack.c.l.b16 %v2638
      %v2676 = vunpack.c.h.b16 %v2638
      %v2677 = vunpack.c.l.b16 %v2639
      %v2678 = vunpack.c.h.b16 %v2639
      %v2679 = vunpack.c.l.b16 %v2640
      %v2680 = vunpack.c.h.b16 %v2640
      %v2681 = vunpack.c.l.b16 %v2641
      %v2682 = vunpack.c.h.b16 %v2641
      %v2683 = vunpack.c.l.b16 %v2642
      %v2684 = vunpack.c.h.b16 %v2642
      %v2685 = vunpack.c.l.b16 %v2643
      %v2686 = vunpack.c.h.b16 %v2643
      %v2687 = vunpack.c.l.b16 %v2644
      %v2688 = vunpack.c.h.b16 %v2644
      %v2689 = vunpack.c.l.b16 %v2645
      %v2690 = vunpack.c.h.b16 %v2645
      %v2691 = vunpack.c.l.b16 %v2646
      %v2692 = vunpack.c.h.b16 %v2646
      %v2693 = vunpack.c.l.b16 %v2647
      %v2694 = vunpack.c.h.b16 %v2647
      %v2695 = vunpack.c.l.b16 %v2648
      %v2696 = vunpack.c.h.b16 %v2648
      %v2697 = vpack.c.b16 %v2665, %v2665
      %v2698 = vpack.c.b16 %v2666, %v2666
      %v2699 = vpack.c.b16 %v2667, %v2667
      %v2700 = vpack.c.b16 %v2668, %v2668
      %v2701 = vpack.c.b16 %v2669, %v2669
      %v2702 = vpack.c.b16 %v2670, %v2670
      %v2703 = vpack.c.b16 %v2671, %v2671
      %v2704 = vpack.c.b16 %v2672, %v2672
      %v2705 = vpack.c.b16 %v2673, %v2673
      %v2706 = vpack.c.b16 %v2674, %v2674
      %v2707 = vpack.c.b16 %v2675, %v2675
      %v2708 = vpack.c.b16 %v2676, %v2676
      %v2709 = vpack.c.b16 %v2677, %v2677
      %v2710 = vpack.c.b16 %v2678, %v2678
      %v2711 = vpack.c.b16 %v2679, %v2679
      %v2712 = vpack.c.b16 %v2680, %v2680
      %v2713 = vpack.c.b16 %v2681, %v2681
      %v2714 = vpack.c.b16 %v2682, %v2682
      %v2715 = vpack.c.b16 %v2683, %v2683
      %v2716 = vpack.c.b16 %v2684, %v2684
      %v2717 = vpack.c.b16 %v2685, %v2685
      %v2718 = vpack.c.b16 %v2686, %v2686
      %v2719 = vpack.c.b16 %v2687, %v2687
      %v2720 = vpack.c.b16 %v2688, %v2688
      %v2721 = vpack.c.b16 %v2689, %v2689
      %v2722 = vpack.c.b16 %v2690, %v2690
      %v2723 = vpack.c.b16 %v2691, %v2691
      %v2724 = vpack.c.b16 %v2692, %v2692
      %v2725 = vpack.c.b16 %v2693, %v2693
      %v2726 = vpack.c.b16 %v2694, %v2694
      %v2727 = vpack.c.b16 %v2695, %v2695
      %v2728 = vpack.c.b16 %v2696, %v2696
      %vm2761 = vcmask 60416
      %2762 = vst.msk [vmem:[%s201] sm:$0xf] %vm2761, %v2697
      %2763 = vst.msk [vmem:[%s201 + $0x4] sm:$0xf] %vm2761, %v2698
      %2764 = vst.msk [vmem:[%s201 + $0x8] sm:$0xf] %vm2761, %v2699
      %2765 = vst.msk [vmem:[%s201 + $0xc] sm:$0xf] %vm2761, %v2700
      %2766 = vst.msk [vmem:[%s201 + $0x10] sm:$0xf] %vm2761, %v2701
      %2767 = vst.msk [vmem:[%s201 + $0x14] sm:$0xf] %vm2761, %v2702
      %2768 = vst.msk [vmem:[%s201 + $0x18] sm:$0xf] %vm2761, %v2703
      %2769 = vst.msk [vmem:[%s201 + $0x1c] sm:$0xf] %vm2761, %v2704
      %2770 = vst.msk [vmem:[%s201 + $0x20] sm:$0xf] %vm2761, %v2705
      %2771 = vst.msk [vmem:[%s201 + $0x24] sm:$0xf] %vm2761, %v2706
      %2772 = vst.msk [vmem:[%s201 + $0x28] sm:$0xf] %vm2761, %v2707
      %2773 = vst.msk [vmem:[%s201 + $0x2c] sm:$0xf] %vm2761, %v2708
      %2774 = vst.msk [vmem:[%s201 + $0x30] sm:$0xf] %vm2761, %v2709
      %2775 = vst.msk [vmem:[%s201 + $0x34] sm:$0xf] %vm2761, %v2710
      %2776 = vst.msk [vmem:[%s201 + $0x38] sm:$0xf] %vm2761, %v2711
      %2777 = vst.msk [vmem:[%s201 + $0x3c] sm:$0xf] %vm2761, %v2712
      %2778 = vst.msk [vmem:[%s201 + $0x40] sm:$0xf] %vm2761, %v2713
      %2779 = vst.msk [vmem:[%s201 + $0x44] sm:$0xf] %vm2761, %v2714
      %2780 = vst.msk [vmem:[%s201 + $0x48] sm:$0xf] %vm2761, %v2715
      %2781 = vst.msk [vmem:[%s201 + $0x4c] sm:$0xf] %vm2761, %v2716
      %2782 = vst.msk [vmem:[%s201 + $0x50] sm:$0xf] %vm2761, %v2717
      %2783 = vst.msk [vmem:[%s201 + $0x54] sm:$0xf] %vm2761, %v2718
      %2784 = vst.msk [vmem:[%s201 + $0x58] sm:$0xf] %vm2761, %v2719
      %2785 = vst.msk [vmem:[%s201 + $0x5c] sm:$0xf] %vm2761, %v2720
      %2786 = vst.msk [vmem:[%s201 + $0x60] sm:$0xf] %vm2761, %v2721
      %2787 = vst.msk [vmem:[%s201 + $0x64] sm:$0xf] %vm2761, %v2722
      %2788 = vst.msk [vmem:[%s201 + $0x68] sm:$0xf] %vm2761, %v2723
      %2789 = vst.msk [vmem:[%s201 + $0x6c] sm:$0xf] %vm2761, %v2724
      %2790 = vst.msk [vmem:[%s201 + $0x70] sm:$0xf] %vm2761, %v2725
      %2791 = vst.msk [vmem:[%s201 + $0x74] sm:$0xf] %vm2761, %v2726
      %2792 = vst.msk [vmem:[%s201 + $0x78] sm:$0xf] %vm2761, %v2727
      %2793 = vst.msk [vmem:[%s201 + $0x7c] sm:$0xf] %vm2761, %v2728
      %s2794 = smul.u32 16, %s19
      %p2795 = scmp.lt.s32.totalorder %s18, 1
      %s2796 = scalar_select %p2795, %s18, 1
      %p2797 = scmp.lt.s32.totalorder %s2794, 15
      %s2798 = scalar_select %p2797, %s2794, 15
      %s2799 = smul.addr %s2798, 2
      %s2800 = smul.addr %s2796, 32
      %s2801 = sadd.s32 %s2799, %s2800
      %s2802 = smul.addr %s2801, 4
      %s2803 = scalar_lea.vmem %s3, %s2802
      // Predicated region
      $region33: #{_lambda_.8} parent=31 // pred_check
        %p2804 = pneg %p116
      $region34: #{_lambda_.8} parent=31 // pred_check_branch
        %2806 = sbr.rel (%p2804) target = $region36
      $region35: #{_lambda_.8} parent=31 // pred_region
        %s2807 = smul.u32 16, %s19
      $region36: #{_lambda_.8} parent=31 // pred_fallthru
        _
    $region32: #{_lambda_.8} parent=5 // pred_fallthru
      _
    %p2808 = scmp.le.s32.totalorder 2, %s9
    // Predicated region
    $region37: #{_lambda_.8} parent=5 // pred_check
      %p2809 = pneg %p2808
    $region38: #{_lambda_.8} parent=5 // pred_check_branch
      %2811 = sbr.rel (%p2809) target = $region40
    $region39: #{_lambda_.8} parent=5 // pred_region
      %s2812 = ssub.s32 %s9, 2
      // Predicated region
      $region41: #{_lambda_.8} parent=39 // pred_check
        %p2813 = pneg %p122
      $region42: #{_lambda_.8} parent=39 // pred_check_branch
        %2815 = sbr.rel (%p2813) target = $region44
      $region43: #{_lambda_.8} parent=39 // pred_region
        %s2816 = smul.u32 16, %s21
        %p2817 = scmp.lt.s32.totalorder %s20, 1
        %s2818 = scalar_select %p2817, %s20, 1
        %p2819 = scmp.lt.s32.totalorder %s2816, 15
        %s2820 = scalar_select %p2819, %s2816, 15
        %s2821 = smul.addr %s2820, 2
        %s2822 = smul.addr %s2818, 32
        %s2823 = sadd.s32 %s2821, %s2822
        %s2824 = smul.addr %s2823, 4
        %s2825 = scalar_lea.vmem %s3, %s2824
      $region44: #{_lambda_.8} parent=39 // pred_fallthru
        _
    $region40: #{_lambda_.8} parent=5 // pred_fallthru
      _
  $region6: #{_lambda_.8} parent=0 // loop_footer
    %s13 = sadd.s32 1, %s9
  $region7: #{_lambda_.8} parent=0 // loop_footer_branch
    %8 = sbr.rel target = $region3
  $region8: #{_lambda_.8} parent=0 // loop_exit
    _

</llo_original>
